<compile_context>
chip_gen: v7x
topology: tpu7x:2x2x1
jax: 0.10.0
libtpu: 0.0.40
codegen_flags: <defaults>
</compile_context>

<pallas_src>
import jax
import jax.numpy as jnp
from jax.experimental import pallas as pl
from jax.experimental.pallas import tpu as pltpu

_WC = 8  # packed width columns; identical for all three conv layers (32/4, 16/2, 8/1)


# ----------------------------------------------------------------------------
# Host-side (trace-time) parameter packing
# ----------------------------------------------------------------------------
def _pack_conv_weight(w, P):
    """(3,3,Cin,Cout) conv weight -> (3*S*P*Cin, P*Cout) im2col weight for the
    P-packed width layout (S = number of packed columns spanned by the taps)."""
    Cin, Cout = w.shape[2], w.shape[3]
    S = 2 if P >= 2 else 3
    wp = jnp.zeros((3, S * P, Cin, P, Cout), w.dtype)
    for q in range(P):          # output sub-position inside a packed column
        for kw in range(3):     # horizontal tap
            wp = wp.at[:, q + kw, :, q, :].set(w[:, kw, :, :])
    return wp.reshape(3 * S * P * Cin, P * Cout)


def _pack_bias(b, P):
    return jnp.tile(b, (P,)).reshape(1, P * b.shape[0])


# ----------------------------------------------------------------------------
# In-kernel helpers
# ----------------------------------------------------------------------------
def _conv_packed(read_row, H, P, Cin, w_ref, b_ref):
    """3x3 conv (pad=1) on a P-packed, already zero-padded activation.
    read_row(r) -> (WC + S - 1, P*Cin) padded-packed row r, r in [0, H+2).
    Returns (H*WC, P*Cout) fp32 (row = h*WC + packed_col, lane = q*Cout + co)."""
    S = 2 if P >= 2 else 3
    rows = []
    for h in range(H):
        pieces = []
        for kh in range(3):
            row = read_row(h + kh)                     # (WC+S-1, P*Cin)
            for s in range(S):
                pieces.append(row[s:s + _WC, :])       # (WC, P*Cin)
        rows.append(jnp.concatenate(pieces, axis=-1))  # (WC, 3*S*P*Cin)
    patch = jnp.concatenate(rows, axis=0)              # (H*WC, K)
    y = jnp.dot(patch, w_ref[...], preferred_element_type=jnp.float32)
    return y + b_ref[...]


def _pool2x2_relu(y, P, Cout, i):
    """2x2 maxpool + relu for pooled row i of packed conv output y (H*WC, P*Cout).
    Returns (WC, (P//2)*Cout) in (P//2)-packed layout."""
    top = y[(2 * i) * _WC:(2 * i + 1) * _WC, :]
    bot = y[(2 * i + 1) * _WC:(2 * i + 2) * _WC, :]
    m = jnp.maximum(top, bot)
    halves = [jnp.maximum(m[:, (2 * g) * Cout:(2 * g + 1) * Cout],
                          m[:, (2 * g + 1) * Cout:(2 * g + 2) * Cout])
              for g in range(P // 2)]
    p = halves[0] if len(halves) == 1 else jnp.concatenate(halves, axis=-1)
    return jnp.maximum(p, 0.0)


# ----------------------------------------------------------------------------
# Fused conv tower kernel: conv1 -> pool -> relu -> conv2 -> pool -> relu ->
# conv3 -> relu.  One grid step per image; everything stays in VMEM.
# ----------------------------------------------------------------------------
def _tower_kernel(x_ref, w1_ref, b1_ref, w2_ref, b2_ref, w3_ref, b3_ref,
                  o_ref, apad2, apad3):
    # Padded scratches for layer-2 / layer-3 inputs.  Only the borders need to
    # be zero, but scratch persists across grid steps, so memset each image.
    apad2[...] = jnp.zeros_like(apad2)
    apad3[...] = jnp.zeros_like(apad3)

    # ---- conv1 (3 -> 32), 4-packed width 32, + 2x2 maxpool + relu ----------
    y1 = _conv_packed(lambda r: x_ref[0, r], 32, 4, 3, w1_ref, b1_ref)  # (256,128)
    for i in range(16):
        p = _pool2x2_relu(y1, 4, 32, i)   # (8, 64): lanes [even w2 | odd w2]
        # apad2[i+1, jj, u*32+c] = xpad2[i, 2jj+u, c] = act2[i, 2jj+u-1, c]
        apad2[i + 1, pl.ds(1, 8), pl.ds(0, 32)] = p[:, 32:64]   # odd cols 1..15
        apad2[i + 1, pl.ds(0, 8), pl.ds(32, 32)] = p[:, 0:32]   # even cols 0..14

    # ---- conv2 (32 -> 64), 2-packed width 16, + 2x2 maxpool + relu ---------
    y2 = _conv_packed(lambda r: apad2[r], 16, 2, 32, w2_ref, b2_ref)    # (128,128)
    for i in range(8):
        p = _pool2x2_relu(y2, 2, 64, i)   # (8, 64), unpacked (P=1)
        apad3[i + 1, pl.ds(1, 8), :] = p  # xpad3[i, jj] = act3[i, jj-1]

    # ---- conv3 (64 -> 64) + relu -------------------------------------------
    y3 = _conv_packed(lambda r: apad3[r], 8, 1, 64, w3_ref, b3_ref)     # (64,64)
    o_ref[0] = jnp.maximum(y3, 0.0)       # rows = h*8 + w, lanes = c  (HWC)


def conv_tower(x_packed, w1p, b1p, w2p, b2p, w3p, b3p):
    B = x_packed.shape[0]
    return pl.pallas_call(
        _tower_kernel,
        out_shape=jax.ShapeDtypeStruct((B, 64, 64), jnp.float32),
        grid=(B,),
        in_specs=[
            pl.BlockSpec((1, 34, 9, 12), lambda b: (b, 0, 0, 0)),  # packed input
            pl.BlockSpec((72, 128), lambda b: (0, 0)),             # w1 packed
            pl.BlockSpec((1, 128), lambda b: (0, 0)),
            pl.BlockSpec((384, 128), lambda b: (0, 0)),            # w2 packed
            pl.BlockSpec((1, 128), lambda b: (0, 0)),
            pl.BlockSpec((576, 64), lambda b: (0, 0)),             # w3 (im2col)
            pl.BlockSpec((1, 64), lambda b: (0, 0)),
        ],
        out_specs=pl.BlockSpec((1, 64, 64), lambda b: (b, 0, 0)),
        scratch_shapes=[pltpu.VMEM((18, 9, 64), jnp.float32),   # padded conv2 input
                        pltpu.VMEM((10, 10, 64), jnp.float32)], # padded conv3 input
        compiler_params=pltpu.CompilerParams(
            dimension_semantics=("parallel",)),
    )(x_packed, w1p, b1p, w2p, b2p, w3p, b3p)


# ----------------------------------------------------------------------------
# Fully connected: y = x @ w + b  (N already padded to a lane-dense 128)
# ----------------------------------------------------------------------------
def _fc_kernel(x_ref, w_ref, b_ref, o_ref):
    o_ref[...] = jnp.dot(x_ref[...], w_ref[...],
                         preferred_element_type=jnp.float32) + b_ref[...]


def fc(x, w, b):
    B, K = x.shape
    N = w.shape[1]
    return pl.pallas_call(
        _fc_kernel,
        out_shape=jax.ShapeDtypeStruct((B, N), jnp.float32),
        in_specs=[pl.BlockSpec((B, K), lambda: (0, 0)),
                  pl.BlockSpec((K, N), lambda: (0, 0)),
                  pl.BlockSpec((1, N), lambda: (0, 0))],
        out_specs=pl.BlockSpec((B, N), lambda: (0, 0)),
    )(x, w, b)


# ----------------------------------------------------------------------------
# Full forward pass (matches torch: conv1-pool-relu, conv2-pool-relu,
# conv3-relu, flatten(C,H,W), fc)
# ----------------------------------------------------------------------------
def forward(x_nchw, params):
    num_classes = params["bfc"].shape[0]
    B = x_nchw.shape[0]

    # One-time (trace-time) parameter repacking for the packed-width layout.
    w1p, b1p = _pack_conv_weight(params["w1"], 4), _pack_bias(params["b1"], 4)
    w2p, b2p = _pack_conv_weight(params["w2"], 2), _pack_bias(params["b2"], 2)
    w3p, b3p = _pack_conv_weight(params["w3"], 1), _pack_bias(params["b3"], 1)

    # fc weight rows are stored in torch (C,H,W) flatten order; permute them to
    # the (H,W,C) order the conv kernel produces, and pad N to lane-dense 128.
    n_pad = max(128, ((num_classes + 127) // 128) * 128)
    wfc = params["wfc"].reshape(64, 64, num_classes)          # (c, h*8+w, n)
    wfc = jnp.transpose(wfc, (1, 0, 2)).reshape(64 * 64, num_classes)
    wfc = jnp.pad(wfc, ((0, 0), (0, n_pad - num_classes)))
    bfc = jnp.pad(params["bfc"], (0, n_pad - num_classes)).reshape(1, n_pad)

    # Input: NCHW -> NHWC, zero-pad (H by 1/1, W by 1/3), 4-pack the W dim.
    x = jnp.transpose(x_nchw, (0, 2, 3, 1)).astype(jnp.float32)  # (B,32,32,3)
    x = jnp.pad(x, ((0, 0), (1, 1), (1, 3), (0, 0)))             # (B,34,36,3)
    x = x.reshape(B, 34, 9, 12)                                  # 4-packed

    act = conv_tower(x, w1p, b1p, w2p, b2p, w3p, b3p)            # (B,64,64)
    act = act.reshape(B, 64 * 64)                                # (H,W,C) flatten
    return fc(act, wfc, bfc)[:, :num_classes]


def init_params(key, output_classes):
    # kaiming_normal_(mode='fan_out', nonlinearity='relu'): std = sqrt(2/fan_out)
    k1, k2, k3, k4 = jax.random.split(key, 4)

    def conv_w(k, cin, cout):
        std = (2.0 / (cout * 3 * 3)) ** 0.5
        return jax.random.normal(k, (3, 3, cin, cout), jnp.float32) * std

    wfc_std = (2.0 / output_classes) ** 0.5
    return {
        "w1": conv_w(k1, 3, 32), "b1": jnp.zeros((32,), jnp.float32),
        "w2": conv_w(k2, 32, 64), "b2": jnp.zeros((64,), jnp.float32),
        "w3": conv_w(k3, 64, 64), "b3": jnp.zeros((64,), jnp.float32),
        # rows in torch x.view(B,-1) order: (c*64 + h*8 + w)
        "wfc": jax.random.normal(k4, (64 * 8 * 8, output_classes),
                                 jnp.float32) * wfc_std,
        "bfc": jnp.zeros((output_classes,), jnp.float32),
    }


if __name__ == "__main__":
    output_classes = 10
    key = jax.random.PRNGKey(0)
    kx, kp = jax.random.split(key)

    # input spatial size is forced to 32 by fc = Linear(64*8*8, classes)
    x = jax.random.normal(kx, (2, 3, 32, 32), jnp.float32)   # NCHW, like torch
    params = init_params(kp, output_classes)

    fwd = jax.jit(forward)
    out = fwd(x, params)
    jax.block_until_ready(out)
    assert out.shape == (2, output_classes)
    print("KERNEL_OK")
</pallas_src>

<mosaic_0001>
module attributes {stable_mosaic.version = 11 : i64} {
  func.func @_tower_kernel(%arg0: i32, %arg1: memref<1x34x9x12xf32, #tpu.memory_space<vmem>>, %arg2: memref<72x128xf32, #tpu.memory_space<vmem>>, %arg3: memref<1x128xf32, #tpu.memory_space<vmem>>, %arg4: memref<384x128xf32, #tpu.memory_space<vmem>>, %arg5: memref<1x128xf32, #tpu.memory_space<vmem>>, %arg6: memref<576x64xf32, #tpu.memory_space<vmem>>, %arg7: memref<1x64xf32, #tpu.memory_space<vmem>>, %arg8: memref<1x64x64xf32, #tpu.memory_space<vmem>>, %arg9: memref<18x9x64xf32, #tpu.memory_space<vmem>>, %arg10: memref<10x10x64xf32, #tpu.memory_space<vmem>>) attributes {dimension_semantics = [#tpu.dimension_semantics<parallel>], iteration_bounds = array<i64: 2>, scalar_prefetch = 0 : i64, scratch_operands = 2 : i64, tpu.core_type = #tpu.core_type<tc>, window_params = [{transform_indices = @transform_0, window_bounds = array<i64: 1, 34, 9, 12>}, {pipeline_mode = #tpu.pipeline_mode<synchronous>, transform_indices = @transform_1, window_bounds = array<i64: 72, 128>}, {pipeline_mode = #tpu.pipeline_mode<synchronous>, transform_indices = @transform_2, window_bounds = array<i64: 1, 128>}, {pipeline_mode = #tpu.pipeline_mode<synchronous>, transform_indices = @transform_3, window_bounds = array<i64: 384, 128>}, {pipeline_mode = #tpu.pipeline_mode<synchronous>, transform_indices = @transform_4, window_bounds = array<i64: 1, 128>}, {pipeline_mode = #tpu.pipeline_mode<synchronous>, transform_indices = @transform_5, window_bounds = array<i64: 576, 64>}, {pipeline_mode = #tpu.pipeline_mode<synchronous>, transform_indices = @transform_6, window_bounds = array<i64: 1, 64>}, {transform_indices = @transform_7, window_bounds = array<i64: 1, 64, 64>}]} {
    %cst = arith.constant 0.000000e+00 : f32
    %0 = vector.broadcast %cst : f32 to vector<18x9x64xf32>
    %c0 = arith.constant 0 : index
    %c0_0 = arith.constant 0 : index
    %c0_1 = arith.constant 0 : index
    %1 = vector.load %arg9[%c0, %c0_0, %c0_1] : memref<18x9x64xf32, #tpu.memory_space<vmem>>, vector<18x9x64xf32>
    tpu.vector_store %arg9[%c0, %c0_0, %c0_1], %0 {strides = array<i32>} : memref<18x9x64xf32, #tpu.memory_space<vmem>>, vector<18x9x64xf32>,
    %cst_2 = arith.constant 0.000000e+00 : f32
    %2 = vector.broadcast %cst_2 : f32 to vector<10x10x64xf32>
    %c0_3 = arith.constant 0 : index
    %c0_4 = arith.constant 0 : index
    %c0_5 = arith.constant 0 : index
    %3 = vector.load %arg10[%c0_3, %c0_4, %c0_5] : memref<10x10x64xf32, #tpu.memory_space<vmem>>, vector<10x10x64xf32>
    tpu.vector_store %arg10[%c0_3, %c0_4, %c0_5], %2 {strides = array<i32>} : memref<10x10x64xf32, #tpu.memory_space<vmem>>, vector<10x10x64xf32>,
    %c0_6 = arith.constant 0 : index
    %c0_7 = arith.constant 0 : index
    %c0_8 = arith.constant 0 : index
    %c0_9 = arith.constant 0 : index
    %4 = vector.load %arg1[%c0_6, %c0_7, %c0_8, %c0_9] : memref<1x34x9x12xf32, #tpu.memory_space<vmem>>, vector<1x1x9x12xf32>
    %5 = vector.shape_cast %4 : vector<1x1x9x12xf32> to vector<9x12xf32>
    %6 = vector.extract_strided_slice %5 {offsets = [0, 0], sizes = [8, 12], strides = [1, 1]} : vector<9x12xf32> to vector<8x12xf32>
    %7 = vector.extract_strided_slice %5 {offsets = [1, 0], sizes = [8, 12], strides = [1, 1]} : vector<9x12xf32> to vector<8x12xf32>
    %c0_10 = arith.constant 0 : index
    %c1 = arith.constant 1 : index
    %c0_11 = arith.constant 0 : index
    %c0_12 = arith.constant 0 : index
    %8 = vector.load %arg1[%c0_10, %c1, %c0_11, %c0_12] : memref<1x34x9x12xf32, #tpu.memory_space<vmem>>, vector<1x1x9x12xf32>
    %9 = vector.shape_cast %8 : vector<1x1x9x12xf32> to vector<9x12xf32>
    %10 = vector.extract_strided_slice %9 {offsets = [0, 0], sizes = [8, 12], strides = [1, 1]} : vector<9x12xf32> to vector<8x12xf32>
    %11 = vector.extract_strided_slice %9 {offsets = [1, 0], sizes = [8, 12], strides = [1, 1]} : vector<9x12xf32> to vector<8x12xf32>
    %c0_13 = arith.constant 0 : index
    %c2 = arith.constant 2 : index
    %c0_14 = arith.constant 0 : index
    %c0_15 = arith.constant 0 : index
    %12 = vector.load %arg1[%c0_13, %c2, %c0_14, %c0_15] : memref<1x34x9x12xf32, #tpu.memory_space<vmem>>, vector<1x1x9x12xf32>
    %13 = vector.shape_cast %12 : vector<1x1x9x12xf32> to vector<9x12xf32>
    %14 = vector.extract_strided_slice %13 {offsets = [0, 0], sizes = [8, 12], strides = [1, 1]} : vector<9x12xf32> to vector<8x12xf32>
    %15 = vector.extract_strided_slice %13 {offsets = [1, 0], sizes = [8, 12], strides = [1, 1]} : vector<9x12xf32> to vector<8x12xf32>
    %16 = tpu.concatenate %6, %7, %10, %11, %14, %15 in 1 : vector<8x12xf32>, vector<8x12xf32>, vector<8x12xf32>, vector<8x12xf32>, vector<8x12xf32>, vector<8x12xf32> -> vector<8x72xf32>
    %c0_16 = arith.constant 0 : index
    %c1_17 = arith.constant 1 : index
    %c0_18 = arith.constant 0 : index
    %c0_19 = arith.constant 0 : index
    %17 = vector.load %arg1[%c0_16, %c1_17, %c0_18, %c0_19] : memref<1x34x9x12xf32, #tpu.memory_space<vmem>>, vector<1x1x9x12xf32>
    %18 = vector.shape_cast %17 : vector<1x1x9x12xf32> to vector<9x12xf32>
    %19 = vector.extract_strided_slice %18 {offsets = [0, 0], sizes = [8, 12], strides = [1, 1]} : vector<9x12xf32> to vector<8x12xf32>
    %20 = vector.extract_strided_slice %18 {offsets = [1, 0], sizes = [8, 12], strides = [1, 1]} : vector<9x12xf32> to vector<8x12xf32>
    %c0_20 = arith.constant 0 : index
    %c2_21 = arith.constant 2 : index
    %c0_22 = arith.constant 0 : index
    %c0_23 = arith.constant 0 : index
    %21 = vector.load %arg1[%c0_20, %c2_21, %c0_22, %c0_23] : memref<1x34x9x12xf32, #tpu.memory_space<vmem>>, vector<1x1x9x12xf32>
    %22 = vector.shape_cast %21 : vector<1x1x9x12xf32> to vector<9x12xf32>
    %23 = vector.extract_strided_slice %22 {offsets = [0, 0], sizes = [8, 12], strides = [1, 1]} : vector<9x12xf32> to vector<8x12xf32>
    %24 = vector.extract_strided_slice %22 {offsets = [1, 0], sizes = [8, 12], strides = [1, 1]} : vector<9x12xf32> to vector<8x12xf32>
    %c0_24 = arith.constant 0 : index
    %c3 = arith.constant 3 : index
    %c0_25 = arith.constant 0 : index
    %c0_26 = arith.constant 0 : index
    %25 = vector.load %arg1[%c0_24, %c3, %c0_25, %c0_26] : memref<1x34x9x12xf32, #tpu.memory_space<vmem>>, vector<1x1x9x12xf32>
    %26 = vector.shape_cast %25 : vector<1x1x9x12xf32> to vector<9x12xf32>
    %27 = vector.extract_strided_slice %26 {offsets = [0, 0], sizes = [8, 12], strides = [1, 1]} : vector<9x12xf32> to vector<8x12xf32>
    %28 = vector.extract_strided_slice %26 {offsets = [1, 0], sizes = [8, 12], strides = [1, 1]} : vector<9x12xf32> to vector<8x12xf32>
    %29 = tpu.concatenate %19, %20, %23, %24, %27, %28 in 1 : vector<8x12xf32>, vector<8x12xf32>, vector<8x12xf32>, vector<8x12xf32>, vector<8x12xf32>, vector<8x12xf32> -> vector<8x72xf32>
    %c0_27 = arith.constant 0 : index
    %c2_28 = arith.constant 2 : index
    %c0_29 = arith.constant 0 : index
    %c0_30 = arith.constant 0 : index
    %30 = vector.load %arg1[%c0_27, %c2_28, %c0_29, %c0_30] : memref<1x34x9x12xf32, #tpu.memory_space<vmem>>, vector<1x1x9x12xf32>
    %31 = vector.shape_cast %30 : vector<1x1x9x12xf32> to vector<9x12xf32>
    %32 = vector.extract_strided_slice %31 {offsets = [0, 0], sizes = [8, 12], strides = [1, 1]} : vector<9x12xf32> to vector<8x12xf32>
    %33 = vector.extract_strided_slice %31 {offsets = [1, 0], sizes = [8, 12], strides = [1, 1]} : vector<9x12xf32> to vector<8x12xf32>
    %c0_31 = arith.constant 0 : index
    %c3_32 = arith.constant 3 : index
    %c0_33 = arith.constant 0 : index
    %c0_34 = arith.constant 0 : index
    %34 = vector.load %arg1[%c0_31, %c3_32, %c0_33, %c0_34] : memref<1x34x9x12xf32, #tpu.memory_space<vmem>>, vector<1x1x9x12xf32>
    %35 = vector.shape_cast %34 : vector<1x1x9x12xf32> to vector<9x12xf32>
    %36 = vector.extract_strided_slice %35 {offsets = [0, 0], sizes = [8, 12], strides = [1, 1]} : vector<9x12xf32> to vector<8x12xf32>
    %37 = vector.extract_strided_slice %35 {offsets = [1, 0], sizes = [8, 12], strides = [1, 1]} : vector<9x12xf32> to vector<8x12xf32>
    %c0_35 = arith.constant 0 : index
    %c4 = arith.constant 4 : index
    %c0_36 = arith.constant 0 : index
    %c0_37 = arith.constant 0 : index
    %38 = vector.load %arg1[%c0_35, %c4, %c0_36, %c0_37] : memref<1x34x9x12xf32, #tpu.memory_space<vmem>>, vector<1x1x9x12xf32>
    %39 = vector.shape_cast %38 : vector<1x1x9x12xf32> to vector<9x12xf32>
    %40 = vector.extract_strided_slice %39 {offsets = [0, 0], sizes = [8, 12], strides = [1, 1]} : vector<9x12xf32> to vector<8x12xf32>
    %41 = vector.extract_strided_slice %39 {offsets = [1, 0], sizes = [8, 12], strides = [1, 1]} : vector<9x12xf32> to vector<8x12xf32>
    %42 = tpu.concatenate %32, %33, %36, %37, %40, %41 in 1 : vector<8x12xf32>, vector<8x12xf32>, vector<8x12xf32>, vector<8x12xf32>, vector<8x12xf32>, vector<8x12xf32> -> vector<8x72xf32>
    %c0_38 = arith.constant 0 : index
    %c3_39 = arith.constant 3 : index
    %c0_40 = arith.constant 0 : index
    %c0_41 = arith.constant 0 : index
    %43 = vector.load %arg1[%c0_38, %c3_39, %c0_40, %c0_41] : memref<1x34x9x12xf32, #tpu.memory_space<vmem>>, vector<1x1x9x12xf32>
    %44 = vector.shape_cast %43 : vector<1x1x9x12xf32> to vector<9x12xf32>
    %45 = vector.extract_strided_slice %44 {offsets = [0, 0], sizes = [8, 12], strides = [1, 1]} : vector<9x12xf32> to vector<8x12xf32>
    %46 = vector.extract_strided_slice %44 {offsets = [1, 0], sizes = [8, 12], strides = [1, 1]} : vector<9x12xf32> to vector<8x12xf32>
    %c0_42 = arith.constant 0 : index
    %c4_43 = arith.constant 4 : index
    %c0_44 = arith.constant 0 : index
    %c0_45 = arith.constant 0 : index
    %47 = vector.load %arg1[%c0_42, %c4_43, %c0_44, %c0_45] : memref<1x34x9x12xf32, #tpu.memory_space<vmem>>, vector<1x1x9x12xf32>
    %48 = vector.shape_cast %47 : vector<1x1x9x12xf32> to vector<9x12xf32>
    %49 = vector.extract_strided_slice %48 {offsets = [0, 0], sizes = [8, 12], strides = [1, 1]} : vector<9x12xf32> to vector<8x12xf32>
    %50 = vector.extract_strided_slice %48 {offsets = [1, 0], sizes = [8, 12], strides = [1, 1]} : vector<9x12xf32> to vector<8x12xf32>
    %c0_46 = arith.constant 0 : index
    %c5 = arith.constant 5 : index
    %c0_47 = arith.constant 0 : index
    %c0_48 = arith.constant 0 : index
    %51 = vector.load %arg1[%c0_46, %c5, %c0_47, %c0_48] : memref<1x34x9x12xf32, #tpu.memory_space<vmem>>, vector<1x1x9x12xf32>
    %52 = vector.shape_cast %51 : vector<1x1x9x12xf32> to vector<9x12xf32>
    %53 = vector.extract_strided_slice %52 {offsets = [0, 0], sizes = [8, 12], strides = [1, 1]} : vector<9x12xf32> to vector<8x12xf32>
    %54 = vector.extract_strided_slice %52 {offsets = [1, 0], sizes = [8, 12], strides = [1, 1]} : vector<9x12xf32> to vector<8x12xf32>
    %55 = tpu.concatenate %45, %46, %49, %50, %53, %54 in 1 : vector<8x12xf32>, vector<8x12xf32>, vector<8x12xf32>, vector<8x12xf32>, vector<8x12xf32>, vector<8x12xf32> -> vector<8x72xf32>
    %c0_49 = arith.constant 0 : index
    %c4_50 = arith.constant 4 : index
    %c0_51 = arith.constant 0 : index
    %c0_52 = arith.constant 0 : index
    %56 = vector.load %arg1[%c0_49, %c4_50, %c0_51, %c0_52] : memref<1x34x9x12xf32, #tpu.memory_space<vmem>>, vector<1x1x9x12xf32>
    %57 = vector.shape_cast %56 : vector<1x1x9x12xf32> to vector<9x12xf32>
    %58 = vector.extract_strided_slice %57 {offsets = [0, 0], sizes = [8, 12], strides = [1, 1]} : vector<9x12xf32> to vector<8x12xf32>
    %59 = vector.extract_strided_slice %57 {offsets = [1, 0], sizes = [8, 12], strides = [1, 1]} : vector<9x12xf32> to vector<8x12xf32>
    %c0_53 = arith.constant 0 : index
    %c5_54 = arith.constant 5 : index
    %c0_55 = arith.constant 0 : index
    %c0_56 = arith.constant 0 : index
    %60 = vector.load %arg1[%c0_53, %c5_54, %c0_55, %c0_56] : memref<1x34x9x12xf32, #tpu.memory_space<vmem>>, vector<1x1x9x12xf32>
    %61 = vector.shape_cast %60 : vector<1x1x9x12xf32> to vector<9x12xf32>
    %62 = vector.extract_strided_slice %61 {offsets = [0, 0], sizes = [8, 12], strides = [1, 1]} : vector<9x12xf32> to vector<8x12xf32>
    %63 = vector.extract_strided_slice %61 {offsets = [1, 0], sizes = [8, 12], strides = [1, 1]} : vector<9x12xf32> to vector<8x12xf32>
    %c0_57 = arith.constant 0 : index
    %c6 = arith.constant 6 : index
    %c0_58 = arith.constant 0 : index
    %c0_59 = arith.constant 0 : index
    %64 = vector.load %arg1[%c0_57, %c6, %c0_58, %c0_59] : memref<1x34x9x12xf32, #tpu.memory_space<vmem>>, vector<1x1x9x12xf32>
    %65 = vector.shape_cast %64 : vector<1x1x9x12xf32> to vector<9x12xf32>
    %66 = vector.extract_strided_slice %65 {offsets = [0, 0], sizes = [8, 12], strides = [1, 1]} : vector<9x12xf32> to vector<8x12xf32>
    %67 = vector.extract_strided_slice %65 {offsets = [1, 0], sizes = [8, 12], strides = [1, 1]} : vector<9x12xf32> to vector<8x12xf32>
    %68 = tpu.concatenate %58, %59, %62, %63, %66, %67 in 1 : vector<8x12xf32>, vector<8x12xf32>, vector<8x12xf32>, vector<8x12xf32>, vector<8x12xf32>, vector<8x12xf32> -> vector<8x72xf32>
    %c0_60 = arith.constant 0 : index
    %c5_61 = arith.constant 5 : index
    %c0_62 = arith.constant 0 : index
    %c0_63 = arith.constant 0 : index
    %69 = vector.load %arg1[%c0_60, %c5_61, %c0_62, %c0_63] : memref<1x34x9x12xf32, #tpu.memory_space<vmem>>, vector<1x1x9x12xf32>
    %70 = vector.shape_cast %69 : vector<1x1x9x12xf32> to vector<9x12xf32>
    %71 = vector.extract_strided_slice %70 {offsets = [0, 0], sizes = [8, 12], strides = [1, 1]} : vector<9x12xf32> to vector<8x12xf32>
    %72 = vector.extract_strided_slice %70 {offsets = [1, 0], sizes = [8, 12], strides = [1, 1]} : vector<9x12xf32> to vector<8x12xf32>
    %c0_64 = arith.constant 0 : index
    %c6_65 = arith.constant 6 : index
    %c0_66 = arith.constant 0 : index
    %c0_67 = arith.constant 0 : index
    %73 = vector.load %arg1[%c0_64, %c6_65, %c0_66, %c0_67] : memref<1x34x9x12xf32, #tpu.memory_space<vmem>>, vector<1x1x9x12xf32>
    %74 = vector.shape_cast %73 : vector<1x1x9x12xf32> to vector<9x12xf32>
    %75 = vector.extract_strided_slice %74 {offsets = [0, 0], sizes = [8, 12], strides = [1, 1]} : vector<9x12xf32> to vector<8x12xf32>
    %76 = vector.extract_strided_slice %74 {offsets = [1, 0], sizes = [8, 12], strides = [1, 1]} : vector<9x12xf32> to vector<8x12xf32>
    %c0_68 = arith.constant 0 : index
    %c7 = arith.constant 7 : index
    %c0_69 = arith.constant 0 : index
    %c0_70 = arith.constant 0 : index
    %77 = vector.load %arg1[%c0_68, %c7, %c0_69, %c0_70] : memref<1x34x9x12xf32, #tpu.memory_space<vmem>>, vector<1x1x9x12xf32>
    %78 = vector.shape_cast %77 : vector<1x1x9x12xf32> to vector<9x12xf32>
    %79 = vector.extract_strided_slice %78 {offsets = [0, 0], sizes = [8, 12], strides = [1, 1]} : vector<9x12xf32> to vector<8x12xf32>
    %80 = vector.extract_strided_slice %78 {offsets = [1, 0], sizes = [8, 12], strides = [1, 1]} : vector<9x12xf32> to vector<8x12xf32>
    %81 = tpu.concatenate %71, %72, %75, %76, %79, %80 in 1 : vector<8x12xf32>, vector<8x12xf32>, vector<8x12xf32>, vector<8x12xf32>, vector<8x12xf32>, vector<8x12xf32> -> vector<8x72xf32>
    %c0_71 = arith.constant 0 : index
    %c6_72 = arith.constant 6 : index
    %c0_73 = arith.constant 0 : index
    %c0_74 = arith.constant 0 : index
    %82 = vector.load %arg1[%c0_71, %c6_72, %c0_73, %c0_74] : memref<1x34x9x12xf32, #tpu.memory_space<vmem>>, vector<1x1x9x12xf32>
    %83 = vector.shape_cast %82 : vector<1x1x9x12xf32> to vector<9x12xf32>
    %84 = vector.extract_strided_slice %83 {offsets = [0, 0], sizes = [8, 12], strides = [1, 1]} : vector<9x12xf32> to vector<8x12xf32>
    %85 = vector.extract_strided_slice %83 {offsets = [1, 0], sizes = [8, 12], strides = [1, 1]} : vector<9x12xf32> to vector<8x12xf32>
    %c0_75 = arith.constant 0 : index
    %c7_76 = arith.constant 7 : index
    %c0_77 = arith.constant 0 : index
    %c0_78 = arith.constant 0 : index
    %86 = vector.load %arg1[%c0_75, %c7_76, %c0_77, %c0_78] : memref<1x34x9x12xf32, #tpu.memory_space<vmem>>, vector<1x1x9x12xf32>
    %87 = vector.shape_cast %86 : vector<1x1x9x12xf32> to vector<9x12xf32>
    %88 = vector.extract_strided_slice %87 {offsets = [0, 0], sizes = [8, 12], strides = [1, 1]} : vector<9x12xf32> to vector<8x12xf32>
    %89 = vector.extract_strided_slice %87 {offsets = [1, 0], sizes = [8, 12], strides = [1, 1]} : vector<9x12xf32> to vector<8x12xf32>
    %c0_79 = arith.constant 0 : index
    %c8 = arith.constant 8 : index
    %c0_80 = arith.constant 0 : index
    %c0_81 = arith.constant 0 : index
    %90 = vector.load %arg1[%c0_79, %c8, %c0_80, %c0_81] : memref<1x34x9x12xf32, #tpu.memory_space<vmem>>, vector<1x1x9x12xf32>
    %91 = vector.shape_cast %90 : vector<1x1x9x12xf32> to vector<9x12xf32>
    %92 = vector.extract_strided_slice %91 {offsets = [0, 0], sizes = [8, 12], strides = [1, 1]} : vector<9x12xf32> to vector<8x12xf32>
    %93 = vector.extract_strided_slice %91 {offsets = [1, 0], sizes = [8, 12], strides = [1, 1]} : vector<9x12xf32> to vector<8x12xf32>
    %94 = tpu.concatenate %84, %85, %88, %89, %92, %93 in 1 : vector<8x12xf32>, vector<8x12xf32>, vector<8x12xf32>, vector<8x12xf32>, vector<8x12xf32>, vector<8x12xf32> -> vector<8x72xf32>
    %c0_82 = arith.constant 0 : index
    %c7_83 = arith.constant 7 : index
    %c0_84 = arith.constant 0 : index
    %c0_85 = arith.constant 0 : index
    %95 = vector.load %arg1[%c0_82, %c7_83, %c0_84, %c0_85] : memref<1x34x9x12xf32, #tpu.memory_space<vmem>>, vector<1x1x9x12xf32>
    %96 = vector.shape_cast %95 : vector<1x1x9x12xf32> to vector<9x12xf32>
    %97 = vector.extract_strided_slice %96 {offsets = [0, 0], sizes = [8, 12], strides = [1, 1]} : vector<9x12xf32> to vector<8x12xf32>
    %98 = vector.extract_strided_slice %96 {offsets = [1, 0], sizes = [8, 12], strides = [1, 1]} : vector<9x12xf32> to vector<8x12xf32>
    %c0_86 = arith.constant 0 : index
    %c8_87 = arith.constant 8 : index
    %c0_88 = arith.constant 0 : index
    %c0_89 = arith.constant 0 : index
    %99 = vector.load %arg1[%c0_86, %c8_87, %c0_88, %c0_89] : memref<1x34x9x12xf32, #tpu.memory_space<vmem>>, vector<1x1x9x12xf32>
    %100 = vector.shape_cast %99 : vector<1x1x9x12xf32> to vector<9x12xf32>
    %101 = vector.extract_strided_slice %100 {offsets = [0, 0], sizes = [8, 12], strides = [1, 1]} : vector<9x12xf32> to vector<8x12xf32>
    %102 = vector.extract_strided_slice %100 {offsets = [1, 0], sizes = [8, 12], strides = [1, 1]} : vector<9x12xf32> to vector<8x12xf32>
    %c0_90 = arith.constant 0 : index
    %c9 = arith.constant 9 : index
    %c0_91 = arith.constant 0 : index
    %c0_92 = arith.constant 0 : index
    %103 = vector.load %arg1[%c0_90, %c9, %c0_91, %c0_92] : memref<1x34x9x12xf32, #tpu.memory_space<vmem>>, vector<1x1x9x12xf32>
    %104 = vector.shape_cast %103 : vector<1x1x9x12xf32> to vector<9x12xf32>
    %105 = vector.extract_strided_slice %104 {offsets = [0, 0], sizes = [8, 12], strides = [1, 1]} : vector<9x12xf32> to vector<8x12xf32>
    %106 = vector.extract_strided_slice %104 {offsets = [1, 0], sizes = [8, 12], strides = [1, 1]} : vector<9x12xf32> to vector<8x12xf32>
    %107 = tpu.concatenate %97, %98, %101, %102, %105, %106 in 1 : vector<8x12xf32>, vector<8x12xf32>, vector<8x12xf32>, vector<8x12xf32>, vector<8x12xf32>, vector<8x12xf32> -> vector<8x72xf32>
    %c0_93 = arith.constant 0 : index
    %c8_94 = arith.constant 8 : index
    %c0_95 = arith.constant 0 : index
    %c0_96 = arith.constant 0 : index
    %108 = vector.load %arg1[%c0_93, %c8_94, %c0_95, %c0_96] : memref<1x34x9x12xf32, #tpu.memory_space<vmem>>, vector<1x1x9x12xf32>
    %109 = vector.shape_cast %108 : vector<1x1x9x12xf32> to vector<9x12xf32>
    %110 = vector.extract_strided_slice %109 {offsets = [0, 0], sizes = [8, 12], strides = [1, 1]} : vector<9x12xf32> to vector<8x12xf32>
    %111 = vector.extract_strided_slice %109 {offsets = [1, 0], sizes = [8, 12], strides = [1, 1]} : vector<9x12xf32> to vector<8x12xf32>
    %c0_97 = arith.constant 0 : index
    %c9_98 = arith.constant 9 : index
    %c0_99 = arith.constant 0 : index
    %c0_100 = arith.constant 0 : index
    %112 = vector.load %arg1[%c0_97, %c9_98, %c0_99, %c0_100] : memref<1x34x9x12xf32, #tpu.memory_space<vmem>>, vector<1x1x9x12xf32>
    %113 = vector.shape_cast %112 : vector<1x1x9x12xf32> to vector<9x12xf32>
    %114 = vector.extract_strided_slice %113 {offsets = [0, 0], sizes = [8, 12], strides = [1, 1]} : vector<9x12xf32> to vector<8x12xf32>
    %115 = vector.extract_strided_slice %113 {offsets = [1, 0], sizes = [8, 12], strides = [1, 1]} : vector<9x12xf32> to vector<8x12xf32>
    %c0_101 = arith.constant 0 : index
    %c10 = arith.constant 10 : index
    %c0_102 = arith.constant 0 : index
    %c0_103 = arith.constant 0 : index
    %116 = vector.load %arg1[%c0_101, %c10, %c0_102, %c0_103] : memref<1x34x9x12xf32, #tpu.memory_space<vmem>>, vector<1x1x9x12xf32>
    %117 = vector.shape_cast %116 : vector<1x1x9x12xf32> to vector<9x12xf32>
    %118 = vector.extract_strided_slice %117 {offsets = [0, 0], sizes = [8, 12], strides = [1, 1]} : vector<9x12xf32> to vector<8x12xf32>
    %119 = vector.extract_strided_slice %117 {offsets = [1, 0], sizes = [8, 12], strides = [1, 1]} : vector<9x12xf32> to vector<8x12xf32>
    %120 = tpu.concatenate %110, %111, %114, %115, %118, %119 in 1 : vector<8x12xf32>, vector<8x12xf32>, vector<8x12xf32>, vector<8x12xf32>, vector<8x12xf32>, vector<8x12xf32> -> vector<8x72xf32>
    %c0_104 = arith.constant 0 : index
    %c9_105 = arith.constant 9 : index
    %c0_106 = arith.constant 0 : index
    %c0_107 = arith.constant 0 : index
    %121 = vector.load %arg1[%c0_104, %c9_105, %c0_106, %c0_107] : memref<1x34x9x12xf32, #tpu.memory_space<vmem>>, vector<1x1x9x12xf32>
    %122 = vector.shape_cast %121 : vector<1x1x9x12xf32> to vector<9x12xf32>
    %123 = vector.extract_strided_slice %122 {offsets = [0, 0], sizes = [8, 12], strides = [1, 1]} : vector<9x12xf32> to vector<8x12xf32>
    %124 = vector.extract_strided_slice %122 {offsets = [1, 0], sizes = [8, 12], strides = [1, 1]} : vector<9x12xf32> to vector<8x12xf32>
    %c0_108 = arith.constant 0 : index
    %c10_109 = arith.constant 10 : index
    %c0_110 = arith.constant 0 : index
    %c0_111 = arith.constant 0 : index
    %125 = vector.load %arg1[%c0_108, %c10_109, %c0_110, %c0_111] : memref<1x34x9x12xf32, #tpu.memory_space<vmem>>, vector<1x1x9x12xf32>
    %126 = vector.shape_cast %125 : vector<1x1x9x12xf32> to vector<9x12xf32>
    %127 = vector.extract_strided_slice %126 {offsets = [0, 0], sizes = [8, 12], strides = [1, 1]} : vector<9x12xf32> to vector<8x12xf32>
    %128 = vector.extract_strided_slice %126 {offsets = [1, 0], sizes = [8, 12], strides = [1, 1]} : vector<9x12xf32> to vector<8x12xf32>
    %c0_112 = arith.constant 0 : index
    %c11 = arith.constant 11 : index
    %c0_113 = arith.constant 0 : index
    %c0_114 = arith.constant 0 : index
    %129 = vector.load %arg1[%c0_112, %c11, %c0_113, %c0_114] : memref<1x34x9x12xf32, #tpu.memory_space<vmem>>, vector<1x1x9x12xf32>
    %130 = vector.shape_cast %129 : vector<1x1x9x12xf32> to vector<9x12xf32>
    %131 = vector.extract_strided_slice %130 {offsets = [0, 0], sizes = [8, 12], strides = [1, 1]} : vector<9x12xf32> to vector<8x12xf32>
    %132 = vector.extract_strided_slice %130 {offsets = [1, 0], sizes = [8, 12], strides = [1, 1]} : vector<9x12xf32> to vector<8x12xf32>
    %133 = tpu.concatenate %123, %124, %127, %128, %131, %132 in 1 : vector<8x12xf32>, vector<8x12xf32>, vector<8x12xf32>, vector<8x12xf32>, vector<8x12xf32>, vector<8x12xf32> -> vector<8x72xf32>
    %c0_115 = arith.constant 0 : index
    %c10_116 = arith.constant 10 : index
    %c0_117 = arith.constant 0 : index
    %c0_118 = arith.constant 0 : index
    %134 = vector.load %arg1[%c0_115, %c10_116, %c0_117, %c0_118] : memref<1x34x9x12xf32, #tpu.memory_space<vmem>>, vector<1x1x9x12xf32>
    %135 = vector.shape_cast %134 : vector<1x1x9x12xf32> to vector<9x12xf32>
    %136 = vector.extract_strided_slice %135 {offsets = [0, 0], sizes = [8, 12], strides = [1, 1]} : vector<9x12xf32> to vector<8x12xf32>
    %137 = vector.extract_strided_slice %135 {offsets = [1, 0], sizes = [8, 12], strides = [1, 1]} : vector<9x12xf32> to vector<8x12xf32>
    %c0_119 = arith.constant 0 : index
    %c11_120 = arith.constant 11 : index
    %c0_121 = arith.constant 0 : index
    %c0_122 = arith.constant 0 : index
    %138 = vector.load %arg1[%c0_119, %c11_120, %c0_121, %c0_122] : memref<1x34x9x12xf32, #tpu.memory_space<vmem>>, vector<1x1x9x12xf32>
    %139 = vector.shape_cast %138 : vector<1x1x9x12xf32> to vector<9x12xf32>
    %140 = vector.extract_strided_slice %139 {offsets = [0, 0], sizes = [8, 12], strides = [1, 1]} : vector<9x12xf32> to vector<8x12xf32>
    %141 = vector.extract_strided_slice %139 {offsets = [1, 0], sizes = [8, 12], strides = [1, 1]} : vector<9x12xf32> to vector<8x12xf32>
    %c0_123 = arith.constant 0 : index
    %c12 = arith.constant 12 : index
    %c0_124 = arith.constant 0 : index
    %c0_125 = arith.constant 0 : index
    %142 = vector.load %arg1[%c0_123, %c12, %c0_124, %c0_125] : memref<1x34x9x12xf32, #tpu.memory_space<vmem>>, vector<1x1x9x12xf32>
    %143 = vector.shape_cast %142 : vector<1x1x9x12xf32> to vector<9x12xf32>
    %144 = vector.extract_strided_slice %143 {offsets = [0, 0], sizes = [8, 12], strides = [1, 1]} : vector<9x12xf32> to vector<8x12xf32>
    %145 = vector.extract_strided_slice %143 {offsets = [1, 0], sizes = [8, 12], strides = [1, 1]} : vector<9x12xf32> to vector<8x12xf32>
    %146 = tpu.concatenate %136, %137, %140, %141, %144, %145 in 1 : vector<8x12xf32>, vector<8x12xf32>, vector<8x12xf32>, vector<8x12xf32>, vector<8x12xf32>, vector<8x12xf32> -> vector<8x72xf32>
    %c0_126 = arith.constant 0 : index
    %c11_127 = arith.constant 11 : index
    %c0_128 = arith.constant 0 : index
    %c0_129 = arith.constant 0 : index
    %147 = vector.load %arg1[%c0_126, %c11_127, %c0_128, %c0_129] : memref<1x34x9x12xf32, #tpu.memory_space<vmem>>, vector<1x1x9x12xf32>
    %148 = vector.shape_cast %147 : vector<1x1x9x12xf32> to vector<9x12xf32>
    %149 = vector.extract_strided_slice %148 {offsets = [0, 0], sizes = [8, 12], strides = [1, 1]} : vector<9x12xf32> to vector<8x12xf32>
    %150 = vector.extract_strided_slice %148 {offsets = [1, 0], sizes = [8, 12], strides = [1, 1]} : vector<9x12xf32> to vector<8x12xf32>
    %c0_130 = arith.constant 0 : index
    %c12_131 = arith.constant 12 : index
    %c0_132 = arith.constant 0 : index
    %c0_133 = arith.constant 0 : index
    %151 = vector.load %arg1[%c0_130, %c12_131, %c0_132, %c0_133] : memref<1x34x9x12xf32, #tpu.memory_space<vmem>>, vector<1x1x9x12xf32>
    %152 = vector.shape_cast %151 : vector<1x1x9x12xf32> to vector<9x12xf32>
    %153 = vector.extract_strided_slice %152 {offsets = [0, 0], sizes = [8, 12], strides = [1, 1]} : vector<9x12xf32> to vector<8x12xf32>
    %154 = vector.extract_strided_slice %152 {offsets = [1, 0], sizes = [8, 12], strides = [1, 1]} : vector<9x12xf32> to vector<8x12xf32>
    %c0_134 = arith.constant 0 : index
    %c13 = arith.constant 13 : index
    %c0_135 = arith.constant 0 : index
    %c0_136 = arith.constant 0 : index
    %155 = vector.load %arg1[%c0_134, %c13, %c0_135, %c0_136] : memref<1x34x9x12xf32, #tpu.memory_space<vmem>>, vector<1x1x9x12xf32>
    %156 = vector.shape_cast %155 : vector<1x1x9x12xf32> to vector<9x12xf32>
    %157 = vector.extract_strided_slice %156 {offsets = [0, 0], sizes = [8, 12], strides = [1, 1]} : vector<9x12xf32> to vector<8x12xf32>
    %158 = vector.extract_strided_slice %156 {offsets = [1, 0], sizes = [8, 12], strides = [1, 1]} : vector<9x12xf32> to vector<8x12xf32>
    %159 = tpu.concatenate %149, %150, %153, %154, %157, %158 in 1 : vector<8x12xf32>, vector<8x12xf32>, vector<8x12xf32>, vector<8x12xf32>, vector<8x12xf32>, vector<8x12xf32> -> vector<8x72xf32>
    %c0_137 = arith.constant 0 : index
    %c12_138 = arith.constant 12 : index
    %c0_139 = arith.constant 0 : index
    %c0_140 = arith.constant 0 : index
    %160 = vector.load %arg1[%c0_137, %c12_138, %c0_139, %c0_140] : memref<1x34x9x12xf32, #tpu.memory_space<vmem>>, vector<1x1x9x12xf32>
    %161 = vector.shape_cast %160 : vector<1x1x9x12xf32> to vector<9x12xf32>
    %162 = vector.extract_strided_slice %161 {offsets = [0, 0], sizes = [8, 12], strides = [1, 1]} : vector<9x12xf32> to vector<8x12xf32>
    %163 = vector.extract_strided_slice %161 {offsets = [1, 0], sizes = [8, 12], strides = [1, 1]} : vector<9x12xf32> to vector<8x12xf32>
    %c0_141 = arith.constant 0 : index
    %c13_142 = arith.constant 13 : index
    %c0_143 = arith.constant 0 : index
    %c0_144 = arith.constant 0 : index
    %164 = vector.load %arg1[%c0_141, %c13_142, %c0_143, %c0_144] : memref<1x34x9x12xf32, #tpu.memory_space<vmem>>, vector<1x1x9x12xf32>
    %165 = vector.shape_cast %164 : vector<1x1x9x12xf32> to vector<9x12xf32>
    %166 = vector.extract_strided_slice %165 {offsets = [0, 0], sizes = [8, 12], strides = [1, 1]} : vector<9x12xf32> to vector<8x12xf32>
    %167 = vector.extract_strided_slice %165 {offsets = [1, 0], sizes = [8, 12], strides = [1, 1]} : vector<9x12xf32> to vector<8x12xf32>
    %c0_145 = arith.constant 0 : index
    %c14 = arith.constant 14 : index
    %c0_146 = arith.constant 0 : index
    %c0_147 = arith.constant 0 : index
    %168 = vector.load %arg1[%c0_145, %c14, %c0_146, %c0_147] : memref<1x34x9x12xf32, #tpu.memory_space<vmem>>, vector<1x1x9x12xf32>
    %169 = vector.shape_cast %168 : vector<1x1x9x12xf32> to vector<9x12xf32>
    %170 = vector.extract_strided_slice %169 {offsets = [0, 0], sizes = [8, 12], strides = [1, 1]} : vector<9x12xf32> to vector<8x12xf32>
    %171 = vector.extract_strided_slice %169 {offsets = [1, 0], sizes = [8, 12], strides = [1, 1]} : vector<9x12xf32> to vector<8x12xf32>
    %172 = tpu.concatenate %162, %163, %166, %167, %170, %171 in 1 : vector<8x12xf32>, vector<8x12xf32>, vector<8x12xf32>, vector<8x12xf32>, vector<8x12xf32>, vector<8x12xf32> -> vector<8x72xf32>
    %c0_148 = arith.constant 0 : index
    %c13_149 = arith.constant 13 : index
    %c0_150 = arith.constant 0 : index
    %c0_151 = arith.constant 0 : index
    %173 = vector.load %arg1[%c0_148, %c13_149, %c0_150, %c0_151] : memref<1x34x9x12xf32, #tpu.memory_space<vmem>>, vector<1x1x9x12xf32>
    %174 = vector.shape_cast %173 : vector<1x1x9x12xf32> to vector<9x12xf32>
    %175 = vector.extract_strided_slice %174 {offsets = [0, 0], sizes = [8, 12], strides = [1, 1]} : vector<9x12xf32> to vector<8x12xf32>
    %176 = vector.extract_strided_slice %174 {offsets = [1, 0], sizes = [8, 12], strides = [1, 1]} : vector<9x12xf32> to vector<8x12xf32>
    %c0_152 = arith.constant 0 : index
    %c14_153 = arith.constant 14 : index
    %c0_154 = arith.constant 0 : index
    %c0_155 = arith.constant 0 : index
    %177 = vector.load %arg1[%c0_152, %c14_153, %c0_154, %c0_155] : memref<1x34x9x12xf32, #tpu.memory_space<vmem>>, vector<1x1x9x12xf32>
    %178 = vector.shape_cast %177 : vector<1x1x9x12xf32> to vector<9x12xf32>
    %179 = vector.extract_strided_slice %178 {offsets = [0, 0], sizes = [8, 12], strides = [1, 1]} : vector<9x12xf32> to vector<8x12xf32>
    %180 = vector.extract_strided_slice %178 {offsets = [1, 0], sizes = [8, 12], strides = [1, 1]} : vector<9x12xf32> to vector<8x12xf32>
    %c0_156 = arith.constant 0 : index
    %c15 = arith.constant 15 : index
    %c0_157 = arith.constant 0 : index
    %c0_158 = arith.constant 0 : index
    %181 = vector.load %arg1[%c0_156, %c15, %c0_157, %c0_158] : memref<1x34x9x12xf32, #tpu.memory_space<vmem>>, vector<1x1x9x12xf32>
    %182 = vector.shape_cast %181 : vector<1x1x9x12xf32> to vector<9x12xf32>
    %183 = vector.extract_strided_slice %182 {offsets = [0, 0], sizes = [8, 12], strides = [1, 1]} : vector<9x12xf32> to vector<8x12xf32>
    %184 = vector.extract_strided_slice %182 {offsets = [1, 0], sizes = [8, 12], strides = [1, 1]} : vector<9x12xf32> to vector<8x12xf32>
    %185 = tpu.concatenate %175, %176, %179, %180, %183, %184 in 1 : vector<8x12xf32>, vector<8x12xf32>, vector<8x12xf32>, vector<8x12xf32>, vector<8x12xf32>, vector<8x12xf32> -> vector<8x72xf32>
    %c0_159 = arith.constant 0 : index
    %c14_160 = arith.constant 14 : index
    %c0_161 = arith.constant 0 : index
    %c0_162 = arith.constant 0 : index
    %186 = vector.load %arg1[%c0_159, %c14_160, %c0_161, %c0_162] : memref<1x34x9x12xf32, #tpu.memory_space<vmem>>, vector<1x1x9x12xf32>
    %187 = vector.shape_cast %186 : vector<1x1x9x12xf32> to vector<9x12xf32>
    %188 = vector.extract_strided_slice %187 {offsets = [0, 0], sizes = [8, 12], strides = [1, 1]} : vector<9x12xf32> to vector<8x12xf32>
    %189 = vector.extract_strided_slice %187 {offsets = [1, 0], sizes = [8, 12], strides = [1, 1]} : vector<9x12xf32> to vector<8x12xf32>
    %c0_163 = arith.constant 0 : index
    %c15_164 = arith.constant 15 : index
    %c0_165 = arith.constant 0 : index
    %c0_166 = arith.constant 0 : index
    %190 = vector.load %arg1[%c0_163, %c15_164, %c0_165, %c0_166] : memref<1x34x9x12xf32, #tpu.memory_space<vmem>>, vector<1x1x9x12xf32>
    %191 = vector.shape_cast %190 : vector<1x1x9x12xf32> to vector<9x12xf32>
    %192 = vector.extract_strided_slice %191 {offsets = [0, 0], sizes = [8, 12], strides = [1, 1]} : vector<9x12xf32> to vector<8x12xf32>
    %193 = vector.extract_strided_slice %191 {offsets = [1, 0], sizes = [8, 12], strides = [1, 1]} : vector<9x12xf32> to vector<8x12xf32>
    %c0_167 = arith.constant 0 : index
    %c16 = arith.constant 16 : index
    %c0_168 = arith.constant 0 : index
    %c0_169 = arith.constant 0 : index
    %194 = vector.load %arg1[%c0_167, %c16, %c0_168, %c0_169] : memref<1x34x9x12xf32, #tpu.memory_space<vmem>>, vector<1x1x9x12xf32>
    %195 = vector.shape_cast %194 : vector<1x1x9x12xf32> to vector<9x12xf32>
    %196 = vector.extract_strided_slice %195 {offsets = [0, 0], sizes = [8, 12], strides = [1, 1]} : vector<9x12xf32> to vector<8x12xf32>
    %197 = vector.extract_strided_slice %195 {offsets = [1, 0], sizes = [8, 12], strides = [1, 1]} : vector<9x12xf32> to vector<8x12xf32>
    %198 = tpu.concatenate %188, %189, %192, %193, %196, %197 in 1 : vector<8x12xf32>, vector<8x12xf32>, vector<8x12xf32>, vector<8x12xf32>, vector<8x12xf32>, vector<8x12xf32> -> vector<8x72xf32>
    %c0_170 = arith.constant 0 : index
    %c15_171 = arith.constant 15 : index
    %c0_172 = arith.constant 0 : index
    %c0_173 = arith.constant 0 : index
    %199 = vector.load %arg1[%c0_170, %c15_171, %c0_172, %c0_173] : memref<1x34x9x12xf32, #tpu.memory_space<vmem>>, vector<1x1x9x12xf32>
    %200 = vector.shape_cast %199 : vector<1x1x9x12xf32> to vector<9x12xf32>
    %201 = vector.extract_strided_slice %200 {offsets = [0, 0], sizes = [8, 12], strides = [1, 1]} : vector<9x12xf32> to vector<8x12xf32>
    %202 = vector.extract_strided_slice %200 {offsets = [1, 0], sizes = [8, 12], strides = [1, 1]} : vector<9x12xf32> to vector<8x12xf32>
    %c0_174 = arith.constant 0 : index
    %c16_175 = arith.constant 16 : index
    %c0_176 = arith.constant 0 : index
    %c0_177 = arith.constant 0 : index
    %203 = vector.load %arg1[%c0_174, %c16_175, %c0_176, %c0_177] : memref<1x34x9x12xf32, #tpu.memory_space<vmem>>, vector<1x1x9x12xf32>
    %204 = vector.shape_cast %203 : vector<1x1x9x12xf32> to vector<9x12xf32>
    %205 = vector.extract_strided_slice %204 {offsets = [0, 0], sizes = [8, 12], strides = [1, 1]} : vector<9x12xf32> to vector<8x12xf32>
    %206 = vector.extract_strided_slice %204 {offsets = [1, 0], sizes = [8, 12], strides = [1, 1]} : vector<9x12xf32> to vector<8x12xf32>
    %c0_178 = arith.constant 0 : index
    %c17 = arith.constant 17 : index
    %c0_179 = arith.constant 0 : index
    %c0_180 = arith.constant 0 : index
    %207 = vector.load %arg1[%c0_178, %c17, %c0_179, %c0_180] : memref<1x34x9x12xf32, #tpu.memory_space<vmem>>, vector<1x1x9x12xf32>
    %208 = vector.shape_cast %207 : vector<1x1x9x12xf32> to vector<9x12xf32>
    %209 = vector.extract_strided_slice %208 {offsets = [0, 0], sizes = [8, 12], strides = [1, 1]} : vector<9x12xf32> to vector<8x12xf32>
    %210 = vector.extract_strided_slice %208 {offsets = [1, 0], sizes = [8, 12], strides = [1, 1]} : vector<9x12xf32> to vector<8x12xf32>
    %211 = tpu.concatenate %201, %202, %205, %206, %209, %210 in 1 : vector<8x12xf32>, vector<8x12xf32>, vector<8x12xf32>, vector<8x12xf32>, vector<8x12xf32>, vector<8x12xf32> -> vector<8x72xf32>
    %c0_181 = arith.constant 0 : index
    %c16_182 = arith.constant 16 : index
    %c0_183 = arith.constant 0 : index
    %c0_184 = arith.constant 0 : index
    %212 = vector.load %arg1[%c0_181, %c16_182, %c0_183, %c0_184] : memref<1x34x9x12xf32, #tpu.memory_space<vmem>>, vector<1x1x9x12xf32>
    %213 = vector.shape_cast %212 : vector<1x1x9x12xf32> to vector<9x12xf32>
    %214 = vector.extract_strided_slice %213 {offsets = [0, 0], sizes = [8, 12], strides = [1, 1]} : vector<9x12xf32> to vector<8x12xf32>
    %215 = vector.extract_strided_slice %213 {offsets = [1, 0], sizes = [8, 12], strides = [1, 1]} : vector<9x12xf32> to vector<8x12xf32>
    %c0_185 = arith.constant 0 : index
    %c17_186 = arith.constant 17 : index
    %c0_187 = arith.constant 0 : index
    %c0_188 = arith.constant 0 : index
    %216 = vector.load %arg1[%c0_185, %c17_186, %c0_187, %c0_188] : memref<1x34x9x12xf32, #tpu.memory_space<vmem>>, vector<1x1x9x12xf32>
    %217 = vector.shape_cast %216 : vector<1x1x9x12xf32> to vector<9x12xf32>
    %218 = vector.extract_strided_slice %217 {offsets = [0, 0], sizes = [8, 12], strides = [1, 1]} : vector<9x12xf32> to vector<8x12xf32>
    %219 = vector.extract_strided_slice %217 {offsets = [1, 0], sizes = [8, 12], strides = [1, 1]} : vector<9x12xf32> to vector<8x12xf32>
    %c0_189 = arith.constant 0 : index
    %c18 = arith.constant 18 : index
    %c0_190 = arith.constant 0 : index
    %c0_191 = arith.constant 0 : index
    %220 = vector.load %arg1[%c0_189, %c18, %c0_190, %c0_191] : memref<1x34x9x12xf32, #tpu.memory_space<vmem>>, vector<1x1x9x12xf32>
    %221 = vector.shape_cast %220 : vector<1x1x9x12xf32> to vector<9x12xf32>
    %222 = vector.extract_strided_slice %221 {offsets = [0, 0], sizes = [8, 12], strides = [1, 1]} : vector<9x12xf32> to vector<8x12xf32>
    %223 = vector.extract_strided_slice %221 {offsets = [1, 0], sizes = [8, 12], strides = [1, 1]} : vector<9x12xf32> to vector<8x12xf32>
    %224 = tpu.concatenate %214, %215, %218, %219, %222, %223 in 1 : vector<8x12xf32>, vector<8x12xf32>, vector<8x12xf32>, vector<8x12xf32>, vector<8x12xf32>, vector<8x12xf32> -> vector<8x72xf32>
    %c0_192 = arith.constant 0 : index
    %c17_193 = arith.constant 17 : index
    %c0_194 = arith.constant 0 : index
    %c0_195 = arith.constant 0 : index
    %225 = vector.load %arg1[%c0_192, %c17_193, %c0_194, %c0_195] : memref<1x34x9x12xf32, #tpu.memory_space<vmem>>, vector<1x1x9x12xf32>
    %226 = vector.shape_cast %225 : vector<1x1x9x12xf32> to vector<9x12xf32>
    %227 = vector.extract_strided_slice %226 {offsets = [0, 0], sizes = [8, 12], strides = [1, 1]} : vector<9x12xf32> to vector<8x12xf32>
    %228 = vector.extract_strided_slice %226 {offsets = [1, 0], sizes = [8, 12], strides = [1, 1]} : vector<9x12xf32> to vector<8x12xf32>
    %c0_196 = arith.constant 0 : index
    %c18_197 = arith.constant 18 : index
    %c0_198 = arith.constant 0 : index
    %c0_199 = arith.constant 0 : index
    %229 = vector.load %arg1[%c0_196, %c18_197, %c0_198, %c0_199] : memref<1x34x9x12xf32, #tpu.memory_space<vmem>>, vector<1x1x9x12xf32>
    %230 = vector.shape_cast %229 : vector<1x1x9x12xf32> to vector<9x12xf32>
    %231 = vector.extract_strided_slice %230 {offsets = [0, 0], sizes = [8, 12], strides = [1, 1]} : vector<9x12xf32> to vector<8x12xf32>
    %232 = vector.extract_strided_slice %230 {offsets = [1, 0], sizes = [8, 12], strides = [1, 1]} : vector<9x12xf32> to vector<8x12xf32>
    %c0_200 = arith.constant 0 : index
    %c19 = arith.constant 19 : index
    %c0_201 = arith.constant 0 : index
    %c0_202 = arith.constant 0 : index
    %233 = vector.load %arg1[%c0_200, %c19, %c0_201, %c0_202] : memref<1x34x9x12xf32, #tpu.memory_space<vmem>>, vector<1x1x9x12xf32>
    %234 = vector.shape_cast %233 : vector<1x1x9x12xf32> to vector<9x12xf32>
    %235 = vector.extract_strided_slice %234 {offsets = [0, 0], sizes = [8, 12], strides = [1, 1]} : vector<9x12xf32> to vector<8x12xf32>
    %236 = vector.extract_strided_slice %234 {offsets = [1, 0], sizes = [8, 12], strides = [1, 1]} : vector<9x12xf32> to vector<8x12xf32>
    %237 = tpu.concatenate %227, %228, %231, %232, %235, %236 in 1 : vector<8x12xf32>, vector<8x12xf32>, vector<8x12xf32>, vector<8x12xf32>, vector<8x12xf32>, vector<8x12xf32> -> vector<8x72xf32>
    %c0_203 = arith.constant 0 : index
    %c18_204 = arith.constant 18 : index
    %c0_205 = arith.constant 0 : index
    %c0_206 = arith.constant 0 : index
    %238 = vector.load %arg1[%c0_203, %c18_204, %c0_205, %c0_206] : memref<1x34x9x12xf32, #tpu.memory_space<vmem>>, vector<1x1x9x12xf32>
    %239 = vector.shape_cast %238 : vector<1x1x9x12xf32> to vector<9x12xf32>
    %240 = vector.extract_strided_slice %239 {offsets = [0, 0], sizes = [8, 12], strides = [1, 1]} : vector<9x12xf32> to vector<8x12xf32>
    %241 = vector.extract_strided_slice %239 {offsets = [1, 0], sizes = [8, 12], strides = [1, 1]} : vector<9x12xf32> to vector<8x12xf32>
    %c0_207 = arith.constant 0 : index
    %c19_208 = arith.constant 19 : index
    %c0_209 = arith.constant 0 : index
    %c0_210 = arith.constant 0 : index
    %242 = vector.load %arg1[%c0_207, %c19_208, %c0_209, %c0_210] : memref<1x34x9x12xf32, #tpu.memory_space<vmem>>, vector<1x1x9x12xf32>
    %243 = vector.shape_cast %242 : vector<1x1x9x12xf32> to vector<9x12xf32>
    %244 = vector.extract_strided_slice %243 {offsets = [0, 0], sizes = [8, 12], strides = [1, 1]} : vector<9x12xf32> to vector<8x12xf32>
    %245 = vector.extract_strided_slice %243 {offsets = [1, 0], sizes = [8, 12], strides = [1, 1]} : vector<9x12xf32> to vector<8x12xf32>
    %c0_211 = arith.constant 0 : index
    %c20 = arith.constant 20 : index
    %c0_212 = arith.constant 0 : index
    %c0_213 = arith.constant 0 : index
    %246 = vector.load %arg1[%c0_211, %c20, %c0_212, %c0_213] : memref<1x34x9x12xf32, #tpu.memory_space<vmem>>, vector<1x1x9x12xf32>
    %247 = vector.shape_cast %246 : vector<1x1x9x12xf32> to vector<9x12xf32>
    %248 = vector.extract_strided_slice %247 {offsets = [0, 0], sizes = [8, 12], strides = [1, 1]} : vector<9x12xf32> to vector<8x12xf32>
    %249 = vector.extract_strided_slice %247 {offsets = [1, 0], sizes = [8, 12], strides = [1, 1]} : vector<9x12xf32> to vector<8x12xf32>
    %250 = tpu.concatenate %240, %241, %244, %245, %248, %249 in 1 : vector<8x12xf32>, vector<8x12xf32>, vector<8x12xf32>, vector<8x12xf32>, vector<8x12xf32>, vector<8x12xf32> -> vector<8x72xf32>
    %c0_214 = arith.constant 0 : index
    %c19_215 = arith.constant 19 : index
    %c0_216 = arith.constant 0 : index
    %c0_217 = arith.constant 0 : index
    %251 = vector.load %arg1[%c0_214, %c19_215, %c0_216, %c0_217] : memref<1x34x9x12xf32, #tpu.memory_space<vmem>>, vector<1x1x9x12xf32>
    %252 = vector.shape_cast %251 : vector<1x1x9x12xf32> to vector<9x12xf32>
    %253 = vector.extract_strided_slice %252 {offsets = [0, 0], sizes = [8, 12], strides = [1, 1]} : vector<9x12xf32> to vector<8x12xf32>
    %254 = vector.extract_strided_slice %252 {offsets = [1, 0], sizes = [8, 12], strides = [1, 1]} : vector<9x12xf32> to vector<8x12xf32>
    %c0_218 = arith.constant 0 : index
    %c20_219 = arith.constant 20 : index
    %c0_220 = arith.constant 0 : index
    %c0_221 = arith.constant 0 : index
    %255 = vector.load %arg1[%c0_218, %c20_219, %c0_220, %c0_221] : memref<1x34x9x12xf32, #tpu.memory_space<vmem>>, vector<1x1x9x12xf32>
    %256 = vector.shape_cast %255 : vector<1x1x9x12xf32> to vector<9x12xf32>
    %257 = vector.extract_strided_slice %256 {offsets = [0, 0], sizes = [8, 12], strides = [1, 1]} : vector<9x12xf32> to vector<8x12xf32>
    %258 = vector.extract_strided_slice %256 {offsets = [1, 0], sizes = [8, 12], strides = [1, 1]} : vector<9x12xf32> to vector<8x12xf32>
    %c0_222 = arith.constant 0 : index
    %c21 = arith.constant 21 : index
    %c0_223 = arith.constant 0 : index
    %c0_224 = arith.constant 0 : index
    %259 = vector.load %arg1[%c0_222, %c21, %c0_223, %c0_224] : memref<1x34x9x12xf32, #tpu.memory_space<vmem>>, vector<1x1x9x12xf32>
    %260 = vector.shape_cast %259 : vector<1x1x9x12xf32> to vector<9x12xf32>
    %261 = vector.extract_strided_slice %260 {offsets = [0, 0], sizes = [8, 12], strides = [1, 1]} : vector<9x12xf32> to vector<8x12xf32>
    %262 = vector.extract_strided_slice %260 {offsets = [1, 0], sizes = [8, 12], strides = [1, 1]} : vector<9x12xf32> to vector<8x12xf32>
    %263 = tpu.concatenate %253, %254, %257, %258, %261, %262 in 1 : vector<8x12xf32>, vector<8x12xf32>, vector<8x12xf32>, vector<8x12xf32>, vector<8x12xf32>, vector<8x12xf32> -> vector<8x72xf32>
    %c0_225 = arith.constant 0 : index
    %c20_226 = arith.constant 20 : index
    %c0_227 = arith.constant 0 : index
    %c0_228 = arith.constant 0 : index
    %264 = vector.load %arg1[%c0_225, %c20_226, %c0_227, %c0_228] : memref<1x34x9x12xf32, #tpu.memory_space<vmem>>, vector<1x1x9x12xf32>
    %265 = vector.shape_cast %264 : vector<1x1x9x12xf32> to vector<9x12xf32>
    %266 = vector.extract_strided_slice %265 {offsets = [0, 0], sizes = [8, 12], strides = [1, 1]} : vector<9x12xf32> to vector<8x12xf32>
    %267 = vector.extract_strided_slice %265 {offsets = [1, 0], sizes = [8, 12], strides = [1, 1]} : vector<9x12xf32> to vector<8x12xf32>
    %c0_229 = arith.constant 0 : index
    %c21_230 = arith.constant 21 : index
    %c0_231 = arith.constant 0 : index
    %c0_232 = arith.constant 0 : index
    %268 = vector.load %arg1[%c0_229, %c21_230, %c0_231, %c0_232] : memref<1x34x9x12xf32, #tpu.memory_space<vmem>>, vector<1x1x9x12xf32>
    %269 = vector.shape_cast %268 : vector<1x1x9x12xf32> to vector<9x12xf32>
    %270 = vector.extract_strided_slice %269 {offsets = [0, 0], sizes = [8, 12], strides = [1, 1]} : vector<9x12xf32> to vector<8x12xf32>
    %271 = vector.extract_strided_slice %269 {offsets = [1, 0], sizes = [8, 12], strides = [1, 1]} : vector<9x12xf32> to vector<8x12xf32>
    %c0_233 = arith.constant 0 : index
    %c22 = arith.constant 22 : index
    %c0_234 = arith.constant 0 : index
    %c0_235 = arith.constant 0 : index
    %272 = vector.load %arg1[%c0_233, %c22, %c0_234, %c0_235] : memref<1x34x9x12xf32, #tpu.memory_space<vmem>>, vector<1x1x9x12xf32>
    %273 = vector.shape_cast %272 : vector<1x1x9x12xf32> to vector<9x12xf32>
    %274 = vector.extract_strided_slice %273 {offsets = [0, 0], sizes = [8, 12], strides = [1, 1]} : vector<9x12xf32> to vector<8x12xf32>
    %275 = vector.extract_strided_slice %273 {offsets = [1, 0], sizes = [8, 12], strides = [1, 1]} : vector<9x12xf32> to vector<8x12xf32>
    %276 = tpu.concatenate %266, %267, %270, %271, %274, %275 in 1 : vector<8x12xf32>, vector<8x12xf32>, vector<8x12xf32>, vector<8x12xf32>, vector<8x12xf32>, vector<8x12xf32> -> vector<8x72xf32>
    %c0_236 = arith.constant 0 : index
    %c21_237 = arith.constant 21 : index
    %c0_238 = arith.constant 0 : index
    %c0_239 = arith.constant 0 : index
    %277 = vector.load %arg1[%c0_236, %c21_237, %c0_238, %c0_239] : memref<1x34x9x12xf32, #tpu.memory_space<vmem>>, vector<1x1x9x12xf32>
    %278 = vector.shape_cast %277 : vector<1x1x9x12xf32> to vector<9x12xf32>
    %279 = vector.extract_strided_slice %278 {offsets = [0, 0], sizes = [8, 12], strides = [1, 1]} : vector<9x12xf32> to vector<8x12xf32>
    %280 = vector.extract_strided_slice %278 {offsets = [1, 0], sizes = [8, 12], strides = [1, 1]} : vector<9x12xf32> to vector<8x12xf32>
    %c0_240 = arith.constant 0 : index
    %c22_241 = arith.constant 22 : index
    %c0_242 = arith.constant 0 : index
    %c0_243 = arith.constant 0 : index
    %281 = vector.load %arg1[%c0_240, %c22_241, %c0_242, %c0_243] : memref<1x34x9x12xf32, #tpu.memory_space<vmem>>, vector<1x1x9x12xf32>
    %282 = vector.shape_cast %281 : vector<1x1x9x12xf32> to vector<9x12xf32>
    %283 = vector.extract_strided_slice %282 {offsets = [0, 0], sizes = [8, 12], strides = [1, 1]} : vector<9x12xf32> to vector<8x12xf32>
    %284 = vector.extract_strided_slice %282 {offsets = [1, 0], sizes = [8, 12], strides = [1, 1]} : vector<9x12xf32> to vector<8x12xf32>
    %c0_244 = arith.constant 0 : index
    %c23 = arith.constant 23 : index
    %c0_245 = arith.constant 0 : index
    %c0_246 = arith.constant 0 : index
    %285 = vector.load %arg1[%c0_244, %c23, %c0_245, %c0_246] : memref<1x34x9x12xf32, #tpu.memory_space<vmem>>, vector<1x1x9x12xf32>
    %286 = vector.shape_cast %285 : vector<1x1x9x12xf32> to vector<9x12xf32>
    %287 = vector.extract_strided_slice %286 {offsets = [0, 0], sizes = [8, 12], strides = [1, 1]} : vector<9x12xf32> to vector<8x12xf32>
    %288 = vector.extract_strided_slice %286 {offsets = [1, 0], sizes = [8, 12], strides = [1, 1]} : vector<9x12xf32> to vector<8x12xf32>
    %289 = tpu.concatenate %279, %280, %283, %284, %287, %288 in 1 : vector<8x12xf32>, vector<8x12xf32>, vector<8x12xf32>, vector<8x12xf32>, vector<8x12xf32>, vector<8x12xf32> -> vector<8x72xf32>
    %c0_247 = arith.constant 0 : index
    %c22_248 = arith.constant 22 : index
    %c0_249 = arith.constant 0 : index
    %c0_250 = arith.constant 0 : index
    %290 = vector.load %arg1[%c0_247, %c22_248, %c0_249, %c0_250] : memref<1x34x9x12xf32, #tpu.memory_space<vmem>>, vector<1x1x9x12xf32>
    %291 = vector.shape_cast %290 : vector<1x1x9x12xf32> to vector<9x12xf32>
    %292 = vector.extract_strided_slice %291 {offsets = [0, 0], sizes = [8, 12], strides = [1, 1]} : vector<9x12xf32> to vector<8x12xf32>
    %293 = vector.extract_strided_slice %291 {offsets = [1, 0], sizes = [8, 12], strides = [1, 1]} : vector<9x12xf32> to vector<8x12xf32>
    %c0_251 = arith.constant 0 : index
    %c23_252 = arith.constant 23 : index
    %c0_253 = arith.constant 0 : index
    %c0_254 = arith.constant 0 : index
    %294 = vector.load %arg1[%c0_251, %c23_252, %c0_253, %c0_254] : memref<1x34x9x12xf32, #tpu.memory_space<vmem>>, vector<1x1x9x12xf32>
    %295 = vector.shape_cast %294 : vector<1x1x9x12xf32> to vector<9x12xf32>
    %296 = vector.extract_strided_slice %295 {offsets = [0, 0], sizes = [8, 12], strides = [1, 1]} : vector<9x12xf32> to vector<8x12xf32>
    %297 = vector.extract_strided_slice %295 {offsets = [1, 0], sizes = [8, 12], strides = [1, 1]} : vector<9x12xf32> to vector<8x12xf32>
    %c0_255 = arith.constant 0 : index
    %c24 = arith.constant 24 : index
    %c0_256 = arith.constant 0 : index
    %c0_257 = arith.constant 0 : index
    %298 = vector.load %arg1[%c0_255, %c24, %c0_256, %c0_257] : memref<1x34x9x12xf32, #tpu.memory_space<vmem>>, vector<1x1x9x12xf32>
    %299 = vector.shape_cast %298 : vector<1x1x9x12xf32> to vector<9x12xf32>
    %300 = vector.extract_strided_slice %299 {offsets = [0, 0], sizes = [8, 12], strides = [1, 1]} : vector<9x12xf32> to vector<8x12xf32>
    %301 = vector.extract_strided_slice %299 {offsets = [1, 0], sizes = [8, 12], strides = [1, 1]} : vector<9x12xf32> to vector<8x12xf32>
    %302 = tpu.concatenate %292, %293, %296, %297, %300, %301 in 1 : vector<8x12xf32>, vector<8x12xf32>, vector<8x12xf32>, vector<8x12xf32>, vector<8x12xf32>, vector<8x12xf32> -> vector<8x72xf32>
    %c0_258 = arith.constant 0 : index
    %c23_259 = arith.constant 23 : index
    %c0_260 = arith.constant 0 : index
    %c0_261 = arith.constant 0 : index
    %303 = vector.load %arg1[%c0_258, %c23_259, %c0_260, %c0_261] : memref<1x34x9x12xf32, #tpu.memory_space<vmem>>, vector<1x1x9x12xf32>
    %304 = vector.shape_cast %303 : vector<1x1x9x12xf32> to vector<9x12xf32>
    %305 = vector.extract_strided_slice %304 {offsets = [0, 0], sizes = [8, 12], strides = [1, 1]} : vector<9x12xf32> to vector<8x12xf32>
    %306 = vector.extract_strided_slice %304 {offsets = [1, 0], sizes = [8, 12], strides = [1, 1]} : vector<9x12xf32> to vector<8x12xf32>
    %c0_262 = arith.constant 0 : index
    %c24_263 = arith.constant 24 : index
    %c0_264 = arith.constant 0 : index
    %c0_265 = arith.constant 0 : index
    %307 = vector.load %arg1[%c0_262, %c24_263, %c0_264, %c0_265] : memref<1x34x9x12xf32, #tpu.memory_space<vmem>>, vector<1x1x9x12xf32>
    %308 = vector.shape_cast %307 : vector<1x1x9x12xf32> to vector<9x12xf32>
    %309 = vector.extract_strided_slice %308 {offsets = [0, 0], sizes = [8, 12], strides = [1, 1]} : vector<9x12xf32> to vector<8x12xf32>
    %310 = vector.extract_strided_slice %308 {offsets = [1, 0], sizes = [8, 12], strides = [1, 1]} : vector<9x12xf32> to vector<8x12xf32>
    %c0_266 = arith.constant 0 : index
    %c25 = arith.constant 25 : index
    %c0_267 = arith.constant 0 : index
    %c0_268 = arith.constant 0 : index
    %311 = vector.load %arg1[%c0_266, %c25, %c0_267, %c0_268] : memref<1x34x9x12xf32, #tpu.memory_space<vmem>>, vector<1x1x9x12xf32>
    %312 = vector.shape_cast %311 : vector<1x1x9x12xf32> to vector<9x12xf32>
    %313 = vector.extract_strided_slice %312 {offsets = [0, 0], sizes = [8, 12], strides = [1, 1]} : vector<9x12xf32> to vector<8x12xf32>
    %314 = vector.extract_strided_slice %312 {offsets = [1, 0], sizes = [8, 12], strides = [1, 1]} : vector<9x12xf32> to vector<8x12xf32>
    %315 = tpu.concatenate %305, %306, %309, %310, %313, %314 in 1 : vector<8x12xf32>, vector<8x12xf32>, vector<8x12xf32>, vector<8x12xf32>, vector<8x12xf32>, vector<8x12xf32> -> vector<8x72xf32>
    %c0_269 = arith.constant 0 : index
    %c24_270 = arith.constant 24 : index
    %c0_271 = arith.constant 0 : index
    %c0_272 = arith.constant 0 : index
    %316 = vector.load %arg1[%c0_269, %c24_270, %c0_271, %c0_272] : memref<1x34x9x12xf32, #tpu.memory_space<vmem>>, vector<1x1x9x12xf32>
    %317 = vector.shape_cast %316 : vector<1x1x9x12xf32> to vector<9x12xf32>
    %318 = vector.extract_strided_slice %317 {offsets = [0, 0], sizes = [8, 12], strides = [1, 1]} : vector<9x12xf32> to vector<8x12xf32>
    %319 = vector.extract_strided_slice %317 {offsets = [1, 0], sizes = [8, 12], strides = [1, 1]} : vector<9x12xf32> to vector<8x12xf32>
    %c0_273 = arith.constant 0 : index
    %c25_274 = arith.constant 25 : index
    %c0_275 = arith.constant 0 : index
    %c0_276 = arith.constant 0 : index
    %320 = vector.load %arg1[%c0_273, %c25_274, %c0_275, %c0_276] : memref<1x34x9x12xf32, #tpu.memory_space<vmem>>, vector<1x1x9x12xf32>
    %321 = vector.shape_cast %320 : vector<1x1x9x12xf32> to vector<9x12xf32>
    %322 = vector.extract_strided_slice %321 {offsets = [0, 0], sizes = [8, 12], strides = [1, 1]} : vector<9x12xf32> to vector<8x12xf32>
    %323 = vector.extract_strided_slice %321 {offsets = [1, 0], sizes = [8, 12], strides = [1, 1]} : vector<9x12xf32> to vector<8x12xf32>
    %c0_277 = arith.constant 0 : index
    %c26 = arith.constant 26 : index
    %c0_278 = arith.constant 0 : index
    %c0_279 = arith.constant 0 : index
    %324 = vector.load %arg1[%c0_277, %c26, %c0_278, %c0_279] : memref<1x34x9x12xf32, #tpu.memory_space<vmem>>, vector<1x1x9x12xf32>
    %325 = vector.shape_cast %324 : vector<1x1x9x12xf32> to vector<9x12xf32>
    %326 = vector.extract_strided_slice %325 {offsets = [0, 0], sizes = [8, 12], strides = [1, 1]} : vector<9x12xf32> to vector<8x12xf32>
    %327 = vector.extract_strided_slice %325 {offsets = [1, 0], sizes = [8, 12], strides = [1, 1]} : vector<9x12xf32> to vector<8x12xf32>
    %328 = tpu.concatenate %318, %319, %322, %323, %326, %327 in 1 : vector<8x12xf32>, vector<8x12xf32>, vector<8x12xf32>, vector<8x12xf32>, vector<8x12xf32>, vector<8x12xf32> -> vector<8x72xf32>
    %c0_280 = arith.constant 0 : index
    %c25_281 = arith.constant 25 : index
    %c0_282 = arith.constant 0 : index
    %c0_283 = arith.constant 0 : index
    %329 = vector.load %arg1[%c0_280, %c25_281, %c0_282, %c0_283] : memref<1x34x9x12xf32, #tpu.memory_space<vmem>>, vector<1x1x9x12xf32>
    %330 = vector.shape_cast %329 : vector<1x1x9x12xf32> to vector<9x12xf32>
    %331 = vector.extract_strided_slice %330 {offsets = [0, 0], sizes = [8, 12], strides = [1, 1]} : vector<9x12xf32> to vector<8x12xf32>
    %332 = vector.extract_strided_slice %330 {offsets = [1, 0], sizes = [8, 12], strides = [1, 1]} : vector<9x12xf32> to vector<8x12xf32>
    %c0_284 = arith.constant 0 : index
    %c26_285 = arith.constant 26 : index
    %c0_286 = arith.constant 0 : index
    %c0_287 = arith.constant 0 : index
    %333 = vector.load %arg1[%c0_284, %c26_285, %c0_286, %c0_287] : memref<1x34x9x12xf32, #tpu.memory_space<vmem>>, vector<1x1x9x12xf32>
    %334 = vector.shape_cast %333 : vector<1x1x9x12xf32> to vector<9x12xf32>
    %335 = vector.extract_strided_slice %334 {offsets = [0, 0], sizes = [8, 12], strides = [1, 1]} : vector<9x12xf32> to vector<8x12xf32>
    %336 = vector.extract_strided_slice %334 {offsets = [1, 0], sizes = [8, 12], strides = [1, 1]} : vector<9x12xf32> to vector<8x12xf32>
    %c0_288 = arith.constant 0 : index
    %c27 = arith.constant 27 : index
    %c0_289 = arith.constant 0 : index
    %c0_290 = arith.constant 0 : index
    %337 = vector.load %arg1[%c0_288, %c27, %c0_289, %c0_290] : memref<1x34x9x12xf32, #tpu.memory_space<vmem>>, vector<1x1x9x12xf32>
    %338 = vector.shape_cast %337 : vector<1x1x9x12xf32> to vector<9x12xf32>
    %339 = vector.extract_strided_slice %338 {offsets = [0, 0], sizes = [8, 12], strides = [1, 1]} : vector<9x12xf32> to vector<8x12xf32>
    %340 = vector.extract_strided_slice %338 {offsets = [1, 0], sizes = [8, 12], strides = [1, 1]} : vector<9x12xf32> to vector<8x12xf32>
    %341 = tpu.concatenate %331, %332, %335, %336, %339, %340 in 1 : vector<8x12xf32>, vector<8x12xf32>, vector<8x12xf32>, vector<8x12xf32>, vector<8x12xf32>, vector<8x12xf32> -> vector<8x72xf32>
    %c0_291 = arith.constant 0 : index
    %c26_292 = arith.constant 26 : index
    %c0_293 = arith.constant 0 : index
    %c0_294 = arith.constant 0 : index
    %342 = vector.load %arg1[%c0_291, %c26_292, %c0_293, %c0_294] : memref<1x34x9x12xf32, #tpu.memory_space<vmem>>, vector<1x1x9x12xf32>
    %343 = vector.shape_cast %342 : vector<1x1x9x12xf32> to vector<9x12xf32>
    %344 = vector.extract_strided_slice %343 {offsets = [0, 0], sizes = [8, 12], strides = [1, 1]} : vector<9x12xf32> to vector<8x12xf32>
    %345 = vector.extract_strided_slice %343 {offsets = [1, 0], sizes = [8, 12], strides = [1, 1]} : vector<9x12xf32> to vector<8x12xf32>
    %c0_295 = arith.constant 0 : index
    %c27_296 = arith.constant 27 : index
    %c0_297 = arith.constant 0 : index
    %c0_298 = arith.constant 0 : index
    %346 = vector.load %arg1[%c0_295, %c27_296, %c0_297, %c0_298] : memref<1x34x9x12xf32, #tpu.memory_space<vmem>>, vector<1x1x9x12xf32>
    %347 = vector.shape_cast %346 : vector<1x1x9x12xf32> to vector<9x12xf32>
    %348 = vector.extract_strided_slice %347 {offsets = [0, 0], sizes = [8, 12], strides = [1, 1]} : vector<9x12xf32> to vector<8x12xf32>
    %349 = vector.extract_strided_slice %347 {offsets = [1, 0], sizes = [8, 12], strides = [1, 1]} : vector<9x12xf32> to vector<8x12xf32>
    %c0_299 = arith.constant 0 : index
    %c28 = arith.constant 28 : index
    %c0_300 = arith.constant 0 : index
    %c0_301 = arith.constant 0 : index
    %350 = vector.load %arg1[%c0_299, %c28, %c0_300, %c0_301] : memref<1x34x9x12xf32, #tpu.memory_space<vmem>>, vector<1x1x9x12xf32>
    %351 = vector.shape_cast %350 : vector<1x1x9x12xf32> to vector<9x12xf32>
    %352 = vector.extract_strided_slice %351 {offsets = [0, 0], sizes = [8, 12], strides = [1, 1]} : vector<9x12xf32> to vector<8x12xf32>
    %353 = vector.extract_strided_slice %351 {offsets = [1, 0], sizes = [8, 12], strides = [1, 1]} : vector<9x12xf32> to vector<8x12xf32>
    %354 = tpu.concatenate %344, %345, %348, %349, %352, %353 in 1 : vector<8x12xf32>, vector<8x12xf32>, vector<8x12xf32>, vector<8x12xf32>, vector<8x12xf32>, vector<8x12xf32> -> vector<8x72xf32>
    %c0_302 = arith.constant 0 : index
    %c27_303 = arith.constant 27 : index
    %c0_304 = arith.constant 0 : index
    %c0_305 = arith.constant 0 : index
    %355 = vector.load %arg1[%c0_302, %c27_303, %c0_304, %c0_305] : memref<1x34x9x12xf32, #tpu.memory_space<vmem>>, vector<1x1x9x12xf32>
    %356 = vector.shape_cast %355 : vector<1x1x9x12xf32> to vector<9x12xf32>
    %357 = vector.extract_strided_slice %356 {offsets = [0, 0], sizes = [8, 12], strides = [1, 1]} : vector<9x12xf32> to vector<8x12xf32>
    %358 = vector.extract_strided_slice %356 {offsets = [1, 0], sizes = [8, 12], strides = [1, 1]} : vector<9x12xf32> to vector<8x12xf32>
    %c0_306 = arith.constant 0 : index
    %c28_307 = arith.constant 28 : index
    %c0_308 = arith.constant 0 : index
    %c0_309 = arith.constant 0 : index
    %359 = vector.load %arg1[%c0_306, %c28_307, %c0_308, %c0_309] : memref<1x34x9x12xf32, #tpu.memory_space<vmem>>, vector<1x1x9x12xf32>
    %360 = vector.shape_cast %359 : vector<1x1x9x12xf32> to vector<9x12xf32>
    %361 = vector.extract_strided_slice %360 {offsets = [0, 0], sizes = [8, 12], strides = [1, 1]} : vector<9x12xf32> to vector<8x12xf32>
    %362 = vector.extract_strided_slice %360 {offsets = [1, 0], sizes = [8, 12], strides = [1, 1]} : vector<9x12xf32> to vector<8x12xf32>
    %c0_310 = arith.constant 0 : index
    %c29 = arith.constant 29 : index
    %c0_311 = arith.constant 0 : index
    %c0_312 = arith.constant 0 : index
    %363 = vector.load %arg1[%c0_310, %c29, %c0_311, %c0_312] : memref<1x34x9x12xf32, #tpu.memory_space<vmem>>, vector<1x1x9x12xf32>
    %364 = vector.shape_cast %363 : vector<1x1x9x12xf32> to vector<9x12xf32>
    %365 = vector.extract_strided_slice %364 {offsets = [0, 0], sizes = [8, 12], strides = [1, 1]} : vector<9x12xf32> to vector<8x12xf32>
    %366 = vector.extract_strided_slice %364 {offsets = [1, 0], sizes = [8, 12], strides = [1, 1]} : vector<9x12xf32> to vector<8x12xf32>
    %367 = tpu.concatenate %357, %358, %361, %362, %365, %366 in 1 : vector<8x12xf32>, vector<8x12xf32>, vector<8x12xf32>, vector<8x12xf32>, vector<8x12xf32>, vector<8x12xf32> -> vector<8x72xf32>
    %c0_313 = arith.constant 0 : index
    %c28_314 = arith.constant 28 : index
    %c0_315 = arith.constant 0 : index
    %c0_316 = arith.constant 0 : index
    %368 = vector.load %arg1[%c0_313, %c28_314, %c0_315, %c0_316] : memref<1x34x9x12xf32, #tpu.memory_space<vmem>>, vector<1x1x9x12xf32>
    %369 = vector.shape_cast %368 : vector<1x1x9x12xf32> to vector<9x12xf32>
    %370 = vector.extract_strided_slice %369 {offsets = [0, 0], sizes = [8, 12], strides = [1, 1]} : vector<9x12xf32> to vector<8x12xf32>
    %371 = vector.extract_strided_slice %369 {offsets = [1, 0], sizes = [8, 12], strides = [1, 1]} : vector<9x12xf32> to vector<8x12xf32>
    %c0_317 = arith.constant 0 : index
    %c29_318 = arith.constant 29 : index
    %c0_319 = arith.constant 0 : index
    %c0_320 = arith.constant 0 : index
    %372 = vector.load %arg1[%c0_317, %c29_318, %c0_319, %c0_320] : memref<1x34x9x12xf32, #tpu.memory_space<vmem>>, vector<1x1x9x12xf32>
    %373 = vector.shape_cast %372 : vector<1x1x9x12xf32> to vector<9x12xf32>
    %374 = vector.extract_strided_slice %373 {offsets = [0, 0], sizes = [8, 12], strides = [1, 1]} : vector<9x12xf32> to vector<8x12xf32>
    %375 = vector.extract_strided_slice %373 {offsets = [1, 0], sizes = [8, 12], strides = [1, 1]} : vector<9x12xf32> to vector<8x12xf32>
    %c0_321 = arith.constant 0 : index
    %c30 = arith.constant 30 : index
    %c0_322 = arith.constant 0 : index
    %c0_323 = arith.constant 0 : index
    %376 = vector.load %arg1[%c0_321, %c30, %c0_322, %c0_323] : memref<1x34x9x12xf32, #tpu.memory_space<vmem>>, vector<1x1x9x12xf32>
    %377 = vector.shape_cast %376 : vector<1x1x9x12xf32> to vector<9x12xf32>
    %378 = vector.extract_strided_slice %377 {offsets = [0, 0], sizes = [8, 12], strides = [1, 1]} : vector<9x12xf32> to vector<8x12xf32>
    %379 = vector.extract_strided_slice %377 {offsets = [1, 0], sizes = [8, 12], strides = [1, 1]} : vector<9x12xf32> to vector<8x12xf32>
    %380 = tpu.concatenate %370, %371, %374, %375, %378, %379 in 1 : vector<8x12xf32>, vector<8x12xf32>, vector<8x12xf32>, vector<8x12xf32>, vector<8x12xf32>, vector<8x12xf32> -> vector<8x72xf32>
    %c0_324 = arith.constant 0 : index
    %c29_325 = arith.constant 29 : index
    %c0_326 = arith.constant 0 : index
    %c0_327 = arith.constant 0 : index
    %381 = vector.load %arg1[%c0_324, %c29_325, %c0_326, %c0_327] : memref<1x34x9x12xf32, #tpu.memory_space<vmem>>, vector<1x1x9x12xf32>
    %382 = vector.shape_cast %381 : vector<1x1x9x12xf32> to vector<9x12xf32>
    %383 = vector.extract_strided_slice %382 {offsets = [0, 0], sizes = [8, 12], strides = [1, 1]} : vector<9x12xf32> to vector<8x12xf32>
    %384 = vector.extract_strided_slice %382 {offsets = [1, 0], sizes = [8, 12], strides = [1, 1]} : vector<9x12xf32> to vector<8x12xf32>
    %c0_328 = arith.constant 0 : index
    %c30_329 = arith.constant 30 : index
    %c0_330 = arith.constant 0 : index
    %c0_331 = arith.constant 0 : index
    %385 = vector.load %arg1[%c0_328, %c30_329, %c0_330, %c0_331] : memref<1x34x9x12xf32, #tpu.memory_space<vmem>>, vector<1x1x9x12xf32>
    %386 = vector.shape_cast %385 : vector<1x1x9x12xf32> to vector<9x12xf32>
    %387 = vector.extract_strided_slice %386 {offsets = [0, 0], sizes = [8, 12], strides = [1, 1]} : vector<9x12xf32> to vector<8x12xf32>
    %388 = vector.extract_strided_slice %386 {offsets = [1, 0], sizes = [8, 12], strides = [1, 1]} : vector<9x12xf32> to vector<8x12xf32>
    %c0_332 = arith.constant 0 : index
    %c31 = arith.constant 31 : index
    %c0_333 = arith.constant 0 : index
    %c0_334 = arith.constant 0 : index
    %389 = vector.load %arg1[%c0_332, %c31, %c0_333, %c0_334] : memref<1x34x9x12xf32, #tpu.memory_space<vmem>>, vector<1x1x9x12xf32>
    %390 = vector.shape_cast %389 : vector<1x1x9x12xf32> to vector<9x12xf32>
    %391 = vector.extract_strided_slice %390 {offsets = [0, 0], sizes = [8, 12], strides = [1, 1]} : vector<9x12xf32> to vector<8x12xf32>
    %392 = vector.extract_strided_slice %390 {offsets = [1, 0], sizes = [8, 12], strides = [1, 1]} : vector<9x12xf32> to vector<8x12xf32>
    %393 = tpu.concatenate %383, %384, %387, %388, %391, %392 in 1 : vector<8x12xf32>, vector<8x12xf32>, vector<8x12xf32>, vector<8x12xf32>, vector<8x12xf32>, vector<8x12xf32> -> vector<8x72xf32>
    %c0_335 = arith.constant 0 : index
    %c30_336 = arith.constant 30 : index
    %c0_337 = arith.constant 0 : index
    %c0_338 = arith.constant 0 : index
    %394 = vector.load %arg1[%c0_335, %c30_336, %c0_337, %c0_338] : memref<1x34x9x12xf32, #tpu.memory_space<vmem>>, vector<1x1x9x12xf32>
    %395 = vector.shape_cast %394 : vector<1x1x9x12xf32> to vector<9x12xf32>
    %396 = vector.extract_strided_slice %395 {offsets = [0, 0], sizes = [8, 12], strides = [1, 1]} : vector<9x12xf32> to vector<8x12xf32>
    %397 = vector.extract_strided_slice %395 {offsets = [1, 0], sizes = [8, 12], strides = [1, 1]} : vector<9x12xf32> to vector<8x12xf32>
    %c0_339 = arith.constant 0 : index
    %c31_340 = arith.constant 31 : index
    %c0_341 = arith.constant 0 : index
    %c0_342 = arith.constant 0 : index
    %398 = vector.load %arg1[%c0_339, %c31_340, %c0_341, %c0_342] : memref<1x34x9x12xf32, #tpu.memory_space<vmem>>, vector<1x1x9x12xf32>
    %399 = vector.shape_cast %398 : vector<1x1x9x12xf32> to vector<9x12xf32>
    %400 = vector.extract_strided_slice %399 {offsets = [0, 0], sizes = [8, 12], strides = [1, 1]} : vector<9x12xf32> to vector<8x12xf32>
    %401 = vector.extract_strided_slice %399 {offsets = [1, 0], sizes = [8, 12], strides = [1, 1]} : vector<9x12xf32> to vector<8x12xf32>
    %c0_343 = arith.constant 0 : index
    %c32 = arith.constant 32 : index
    %c0_344 = arith.constant 0 : index
    %c0_345 = arith.constant 0 : index
    %402 = vector.load %arg1[%c0_343, %c32, %c0_344, %c0_345] : memref<1x34x9x12xf32, #tpu.memory_space<vmem>>, vector<1x1x9x12xf32>
    %403 = vector.shape_cast %402 : vector<1x1x9x12xf32> to vector<9x12xf32>
    %404 = vector.extract_strided_slice %403 {offsets = [0, 0], sizes = [8, 12], strides = [1, 1]} : vector<9x12xf32> to vector<8x12xf32>
    %405 = vector.extract_strided_slice %403 {offsets = [1, 0], sizes = [8, 12], strides = [1, 1]} : vector<9x12xf32> to vector<8x12xf32>
    %406 = tpu.concatenate %396, %397, %400, %401, %404, %405 in 1 : vector<8x12xf32>, vector<8x12xf32>, vector<8x12xf32>, vector<8x12xf32>, vector<8x12xf32>, vector<8x12xf32> -> vector<8x72xf32>
    %c0_346 = arith.constant 0 : index
    %c31_347 = arith.constant 31 : index
    %c0_348 = arith.constant 0 : index
    %c0_349 = arith.constant 0 : index
    %407 = vector.load %arg1[%c0_346, %c31_347, %c0_348, %c0_349] : memref<1x34x9x12xf32, #tpu.memory_space<vmem>>, vector<1x1x9x12xf32>
    %408 = vector.shape_cast %407 : vector<1x1x9x12xf32> to vector<9x12xf32>
    %409 = vector.extract_strided_slice %408 {offsets = [0, 0], sizes = [8, 12], strides = [1, 1]} : vector<9x12xf32> to vector<8x12xf32>
    %410 = vector.extract_strided_slice %408 {offsets = [1, 0], sizes = [8, 12], strides = [1, 1]} : vector<9x12xf32> to vector<8x12xf32>
    %c0_350 = arith.constant 0 : index
    %c32_351 = arith.constant 32 : index
    %c0_352 = arith.constant 0 : index
    %c0_353 = arith.constant 0 : index
    %411 = vector.load %arg1[%c0_350, %c32_351, %c0_352, %c0_353] : memref<1x34x9x12xf32, #tpu.memory_space<vmem>>, vector<1x1x9x12xf32>
    %412 = vector.shape_cast %411 : vector<1x1x9x12xf32> to vector<9x12xf32>
    %413 = vector.extract_strided_slice %412 {offsets = [0, 0], sizes = [8, 12], strides = [1, 1]} : vector<9x12xf32> to vector<8x12xf32>
    %414 = vector.extract_strided_slice %412 {offsets = [1, 0], sizes = [8, 12], strides = [1, 1]} : vector<9x12xf32> to vector<8x12xf32>
    %c0_354 = arith.constant 0 : index
    %c33 = arith.constant 33 : index
    %c0_355 = arith.constant 0 : index
    %c0_356 = arith.constant 0 : index
    %415 = vector.load %arg1[%c0_354, %c33, %c0_355, %c0_356] : memref<1x34x9x12xf32, #tpu.memory_space<vmem>>, vector<1x1x9x12xf32>
    %416 = vector.shape_cast %415 : vector<1x1x9x12xf32> to vector<9x12xf32>
    %417 = vector.extract_strided_slice %416 {offsets = [0, 0], sizes = [8, 12], strides = [1, 1]} : vector<9x12xf32> to vector<8x12xf32>
    %418 = vector.extract_strided_slice %416 {offsets = [1, 0], sizes = [8, 12], strides = [1, 1]} : vector<9x12xf32> to vector<8x12xf32>
    %419 = tpu.concatenate %409, %410, %413, %414, %417, %418 in 1 : vector<8x12xf32>, vector<8x12xf32>, vector<8x12xf32>, vector<8x12xf32>, vector<8x12xf32>, vector<8x12xf32> -> vector<8x72xf32>
    %420 = tpu.concatenate %16, %29, %42, %55, %68, %81, %94, %107, %120, %133, %146, %159, %172, %185, %198, %211 in 0 : vector<8x72xf32>, vector<8x72xf32>, vector<8x72xf32>, vector<8x72xf32>, vector<8x72xf32>, vector<8x72xf32>, vector<8x72xf32>, vector<8x72xf32>, vector<8x72xf32>, vector<8x72xf32>, vector<8x72xf32>, vector<8x72xf32>, vector<8x72xf32>, vector<8x72xf32>, vector<8x72xf32>, vector<8x72xf32> -> vector<128x72xf32>
    %421 = tpu.concatenate %224, %237, %250, %263, %276, %289, %302, %315, %328, %341, %354, %367, %380, %393, %406, %419 in 0 : vector<8x72xf32>, vector<8x72xf32>, vector<8x72xf32>, vector<8x72xf32>, vector<8x72xf32>, vector<8x72xf32>, vector<8x72xf32>, vector<8x72xf32>, vector<8x72xf32>, vector<8x72xf32>, vector<8x72xf32>, vector<8x72xf32>, vector<8x72xf32>, vector<8x72xf32>, vector<8x72xf32>, vector<8x72xf32> -> vector<128x72xf32>
    %422 = tpu.concatenate %420, %421 in 0 : vector<128x72xf32>, vector<128x72xf32> -> vector<256x72xf32>
    %c0_357 = arith.constant 0 : index
    %c0_358 = arith.constant 0 : index
    %423 = vector.load %arg2[%c0_357, %c0_358] : memref<72x128xf32, #tpu.memory_space<vmem>>, vector<72x128xf32>
    %cst_359 = arith.constant dense<0.000000e+00> : vector<256x128xf32>
    %424 = tpu.matmul %422, %423, %cst_359 {dimension_numbers = #tpu.dot_dimension_numbers<[1], [0], [0], [1], [0, 0, 1, 1], [], []>} : vector<256x72xf32>, vector<72x128xf32>, vector<256x128xf32> -> vector<256x128xf32>
    %c0_360 = arith.constant 0 : index
    %c0_361 = arith.constant 0 : index
    %425 = vector.load %arg3[%c0_360, %c0_361] : memref<1x128xf32, #tpu.memory_space<vmem>>, vector<1x128xf32>
    %426 = vector.broadcast %425 : vector<1x128xf32> to vector<256x128xf32>
    %427 = arith.addf %424, %426 : vector<256x128xf32>
    %428 = vector.extract_strided_slice %427 {offsets = [0, 0], sizes = [8, 128], strides = [1, 1]} : vector<256x128xf32> to vector<8x128xf32>
    %429 = vector.extract_strided_slice %427 {offsets = [8, 0], sizes = [8, 128], strides = [1, 1]} : vector<256x128xf32> to vector<8x128xf32>
    %430 = arith.maximumf %428, %429 : vector<8x128xf32>
    %431 = vector.extract_strided_slice %430 {offsets = [0, 0], sizes = [8, 32], strides = [1, 1]} : vector<8x128xf32> to vector<8x32xf32>
    %432 = vector.extract_strided_slice %430 {offsets = [0, 32], sizes = [8, 32], strides = [1, 1]} : vector<8x128xf32> to vector<8x32xf32>
    %433 = arith.maximumf %431, %432 : vector<8x32xf32>
    %434 = vector.extract_strided_slice %430 {offsets = [0, 64], sizes = [8, 32], strides = [1, 1]} : vector<8x128xf32> to vector<8x32xf32>
    %435 = vector.extract_strided_slice %430 {offsets = [0, 96], sizes = [8, 32], strides = [1, 1]} : vector<8x128xf32> to vector<8x32xf32>
    %436 = arith.maximumf %434, %435 : vector<8x32xf32>
    %437 = tpu.concatenate %433, %436 in 1 : vector<8x32xf32>, vector<8x32xf32> -> vector<8x64xf32>
    %cst_362 = arith.constant 0.000000e+00 : f32
    %438 = vector.broadcast %cst_362 : f32 to vector<8x64xf32>
    %439 = arith.maximumf %437, %438 : vector<8x64xf32>
    %440 = vector.extract_strided_slice %439 {offsets = [0, 32], sizes = [8, 32], strides = [1, 1]} : vector<8x64xf32> to vector<8x32xf32>
    %c1_363 = arith.constant 1 : index
    %c1_364 = arith.constant 1 : index
    %c0_365 = arith.constant 0 : index
    %441 = vector.load %arg9[%c1_363, %c1_364, %c0_365] : memref<18x9x64xf32, #tpu.memory_space<vmem>>, vector<1x8x32xf32>
    %442 = vector.shape_cast %441 : vector<1x8x32xf32> to vector<8x32xf32>
    %443 = vector.shape_cast %440 : vector<8x32xf32> to vector<1x8x32xf32>
    tpu.vector_store %arg9[%c1_363, %c1_364, %c0_365], %443 {strides = array<i32>} : memref<18x9x64xf32, #tpu.memory_space<vmem>>, vector<1x8x32xf32>,
    %444 = vector.extract_strided_slice %439 {offsets = [0, 0], sizes = [8, 32], strides = [1, 1]} : vector<8x64xf32> to vector<8x32xf32>
    %c1_366 = arith.constant 1 : index
    %c0_367 = arith.constant 0 : index
    %c32_368 = arith.constant 32 : index
    %445 = vector.load %arg9[%c1_366, %c0_367, %c32_368] : memref<18x9x64xf32, #tpu.memory_space<vmem>>, vector<1x8x32xf32>
    %446 = vector.shape_cast %445 : vector<1x8x32xf32> to vector<8x32xf32>
    %447 = vector.shape_cast %444 : vector<8x32xf32> to vector<1x8x32xf32>
    tpu.vector_store %arg9[%c1_366, %c0_367, %c32_368], %447 {strides = array<i32>} : memref<18x9x64xf32, #tpu.memory_space<vmem>>, vector<1x8x32xf32>,
    %448 = vector.extract_strided_slice %427 {offsets = [16, 0], sizes = [8, 128], strides = [1, 1]} : vector<256x128xf32> to vector<8x128xf32>
    %449 = vector.extract_strided_slice %427 {offsets = [24, 0], sizes = [8, 128], strides = [1, 1]} : vector<256x128xf32> to vector<8x128xf32>
    %450 = arith.maximumf %448, %449 : vector<8x128xf32>
    %451 = vector.extract_strided_slice %450 {offsets = [0, 0], sizes = [8, 32], strides = [1, 1]} : vector<8x128xf32> to vector<8x32xf32>
    %452 = vector.extract_strided_slice %450 {offsets = [0, 32], sizes = [8, 32], strides = [1, 1]} : vector<8x128xf32> to vector<8x32xf32>
    %453 = arith.maximumf %451, %452 : vector<8x32xf32>
    %454 = vector.extract_strided_slice %450 {offsets = [0, 64], sizes = [8, 32], strides = [1, 1]} : vector<8x128xf32> to vector<8x32xf32>
    %455 = vector.extract_strided_slice %450 {offsets = [0, 96], sizes = [8, 32], strides = [1, 1]} : vector<8x128xf32> to vector<8x32xf32>
    %456 = arith.maximumf %454, %455 : vector<8x32xf32>
    %457 = tpu.concatenate %453, %456 in 1 : vector<8x32xf32>, vector<8x32xf32> -> vector<8x64xf32>
    %cst_369 = arith.constant 0.000000e+00 : f32
    %458 = vector.broadcast %cst_369 : f32 to vector<8x64xf32>
    %459 = arith.maximumf %457, %458 : vector<8x64xf32>
    %460 = vector.extract_strided_slice %459 {offsets = [0, 32], sizes = [8, 32], strides = [1, 1]} : vector<8x64xf32> to vector<8x32xf32>
    %c2_370 = arith.constant 2 : index
    %c1_371 = arith.constant 1 : index
    %c0_372 = arith.constant 0 : index
    %461 = vector.load %arg9[%c2_370, %c1_371, %c0_372] : memref<18x9x64xf32, #tpu.memory_space<vmem>>, vector<1x8x32xf32>
    %462 = vector.shape_cast %461 : vector<1x8x32xf32> to vector<8x32xf32>
    %463 = vector.shape_cast %460 : vector<8x32xf32> to vector<1x8x32xf32>
    tpu.vector_store %arg9[%c2_370, %c1_371, %c0_372], %463 {strides = array<i32>} : memref<18x9x64xf32, #tpu.memory_space<vmem>>, vector<1x8x32xf32>,
    %464 = vector.extract_strided_slice %459 {offsets = [0, 0], sizes = [8, 32], strides = [1, 1]} : vector<8x64xf32> to vector<8x32xf32>
    %c2_373 = arith.constant 2 : index
    %c0_374 = arith.constant 0 : index
    %c32_375 = arith.constant 32 : index
    %465 = vector.load %arg9[%c2_373, %c0_374, %c32_375] : memref<18x9x64xf32, #tpu.memory_space<vmem>>, vector<1x8x32xf32>
    %466 = vector.shape_cast %465 : vector<1x8x32xf32> to vector<8x32xf32>
    %467 = vector.shape_cast %464 : vector<8x32xf32> to vector<1x8x32xf32>
    tpu.vector_store %arg9[%c2_373, %c0_374, %c32_375], %467 {strides = array<i32>} : memref<18x9x64xf32, #tpu.memory_space<vmem>>, vector<1x8x32xf32>,
    %468 = vector.extract_strided_slice %427 {offsets = [32, 0], sizes = [8, 128], strides = [1, 1]} : vector<256x128xf32> to vector<8x128xf32>
    %469 = vector.extract_strided_slice %427 {offsets = [40, 0], sizes = [8, 128], strides = [1, 1]} : vector<256x128xf32> to vector<8x128xf32>
    %470 = arith.maximumf %468, %469 : vector<8x128xf32>
    %471 = vector.extract_strided_slice %470 {offsets = [0, 0], sizes = [8, 32], strides = [1, 1]} : vector<8x128xf32> to vector<8x32xf32>
    %472 = vector.extract_strided_slice %470 {offsets = [0, 32], sizes = [8, 32], strides = [1, 1]} : vector<8x128xf32> to vector<8x32xf32>
    %473 = arith.maximumf %471, %472 : vector<8x32xf32>
    %474 = vector.extract_strided_slice %470 {offsets = [0, 64], sizes = [8, 32], strides = [1, 1]} : vector<8x128xf32> to vector<8x32xf32>
    %475 = vector.extract_strided_slice %470 {offsets = [0, 96], sizes = [8, 32], strides = [1, 1]} : vector<8x128xf32> to vector<8x32xf32>
    %476 = arith.maximumf %474, %475 : vector<8x32xf32>
    %477 = tpu.concatenate %473, %476 in 1 : vector<8x32xf32>, vector<8x32xf32> -> vector<8x64xf32>
    %cst_376 = arith.constant 0.000000e+00 : f32
    %478 = vector.broadcast %cst_376 : f32 to vector<8x64xf32>
    %479 = arith.maximumf %477, %478 : vector<8x64xf32>
    %480 = vector.extract_strided_slice %479 {offsets = [0, 32], sizes = [8, 32], strides = [1, 1]} : vector<8x64xf32> to vector<8x32xf32>
    %c3_377 = arith.constant 3 : index
    %c1_378 = arith.constant 1 : index
    %c0_379 = arith.constant 0 : index
    %481 = vector.load %arg9[%c3_377, %c1_378, %c0_379] : memref<18x9x64xf32, #tpu.memory_space<vmem>>, vector<1x8x32xf32>
    %482 = vector.shape_cast %481 : vector<1x8x32xf32> to vector<8x32xf32>
    %483 = vector.shape_cast %480 : vector<8x32xf32> to vector<1x8x32xf32>
    tpu.vector_store %arg9[%c3_377, %c1_378, %c0_379], %483 {strides = array<i32>} : memref<18x9x64xf32, #tpu.memory_space<vmem>>, vector<1x8x32xf32>,
    %484 = vector.extract_strided_slice %479 {offsets = [0, 0], sizes = [8, 32], strides = [1, 1]} : vector<8x64xf32> to vector<8x32xf32>
    %c3_380 = arith.constant 3 : index
    %c0_381 = arith.constant 0 : index
    %c32_382 = arith.constant 32 : index
    %485 = vector.load %arg9[%c3_380, %c0_381, %c32_382] : memref<18x9x64xf32, #tpu.memory_space<vmem>>, vector<1x8x32xf32>
    %486 = vector.shape_cast %485 : vector<1x8x32xf32> to vector<8x32xf32>
    %487 = vector.shape_cast %484 : vector<8x32xf32> to vector<1x8x32xf32>
    tpu.vector_store %arg9[%c3_380, %c0_381, %c32_382], %487 {strides = array<i32>} : memref<18x9x64xf32, #tpu.memory_space<vmem>>, vector<1x8x32xf32>,
    %488 = vector.extract_strided_slice %427 {offsets = [48, 0], sizes = [8, 128], strides = [1, 1]} : vector<256x128xf32> to vector<8x128xf32>
    %489 = vector.extract_strided_slice %427 {offsets = [56, 0], sizes = [8, 128], strides = [1, 1]} : vector<256x128xf32> to vector<8x128xf32>
    %490 = arith.maximumf %488, %489 : vector<8x128xf32>
    %491 = vector.extract_strided_slice %490 {offsets = [0, 0], sizes = [8, 32], strides = [1, 1]} : vector<8x128xf32> to vector<8x32xf32>
    %492 = vector.extract_strided_slice %490 {offsets = [0, 32], sizes = [8, 32], strides = [1, 1]} : vector<8x128xf32> to vector<8x32xf32>
    %493 = arith.maximumf %491, %492 : vector<8x32xf32>
    %494 = vector.extract_strided_slice %490 {offsets = [0, 64], sizes = [8, 32], strides = [1, 1]} : vector<8x128xf32> to vector<8x32xf32>
    %495 = vector.extract_strided_slice %490 {offsets = [0, 96], sizes = [8, 32], strides = [1, 1]} : vector<8x128xf32> to vector<8x32xf32>
    %496 = arith.maximumf %494, %495 : vector<8x32xf32>
    %497 = tpu.concatenate %493, %496 in 1 : vector<8x32xf32>, vector<8x32xf32> -> vector<8x64xf32>
    %cst_383 = arith.constant 0.000000e+00 : f32
    %498 = vector.broadcast %cst_383 : f32 to vector<8x64xf32>
    %499 = arith.maximumf %497, %498 : vector<8x64xf32>
    %500 = vector.extract_strided_slice %499 {offsets = [0, 32], sizes = [8, 32], strides = [1, 1]} : vector<8x64xf32> to vector<8x32xf32>
    %c4_384 = arith.constant 4 : index
    %c1_385 = arith.constant 1 : index
    %c0_386 = arith.constant 0 : index
    %501 = vector.load %arg9[%c4_384, %c1_385, %c0_386] : memref<18x9x64xf32, #tpu.memory_space<vmem>>, vector<1x8x32xf32>
    %502 = vector.shape_cast %501 : vector<1x8x32xf32> to vector<8x32xf32>
    %503 = vector.shape_cast %500 : vector<8x32xf32> to vector<1x8x32xf32>
    tpu.vector_store %arg9[%c4_384, %c1_385, %c0_386], %503 {strides = array<i32>} : memref<18x9x64xf32, #tpu.memory_space<vmem>>, vector<1x8x32xf32>,
    %504 = vector.extract_strided_slice %499 {offsets = [0, 0], sizes = [8, 32], strides = [1, 1]} : vector<8x64xf32> to vector<8x32xf32>
    %c4_387 = arith.constant 4 : index
    %c0_388 = arith.constant 0 : index
    %c32_389 = arith.constant 32 : index
    %505 = vector.load %arg9[%c4_387, %c0_388, %c32_389] : memref<18x9x64xf32, #tpu.memory_space<vmem>>, vector<1x8x32xf32>
    %506 = vector.shape_cast %505 : vector<1x8x32xf32> to vector<8x32xf32>
    %507 = vector.shape_cast %504 : vector<8x32xf32> to vector<1x8x32xf32>
    tpu.vector_store %arg9[%c4_387, %c0_388, %c32_389], %507 {strides = array<i32>} : memref<18x9x64xf32, #tpu.memory_space<vmem>>, vector<1x8x32xf32>,
    %508 = vector.extract_strided_slice %427 {offsets = [64, 0], sizes = [8, 128], strides = [1, 1]} : vector<256x128xf32> to vector<8x128xf32>
    %509 = vector.extract_strided_slice %427 {offsets = [72, 0], sizes = [8, 128], strides = [1, 1]} : vector<256x128xf32> to vector<8x128xf32>
    %510 = arith.maximumf %508, %509 : vector<8x128xf32>
    %511 = vector.extract_strided_slice %510 {offsets = [0, 0], sizes = [8, 32], strides = [1, 1]} : vector<8x128xf32> to vector<8x32xf32>
    %512 = vector.extract_strided_slice %510 {offsets = [0, 32], sizes = [8, 32], strides = [1, 1]} : vector<8x128xf32> to vector<8x32xf32>
    %513 = arith.maximumf %511, %512 : vector<8x32xf32>
    %514 = vector.extract_strided_slice %510 {offsets = [0, 64], sizes = [8, 32], strides = [1, 1]} : vector<8x128xf32> to vector<8x32xf32>
    %515 = vector.extract_strided_slice %510 {offsets = [0, 96], sizes = [8, 32], strides = [1, 1]} : vector<8x128xf32> to vector<8x32xf32>
    %516 = arith.maximumf %514, %515 : vector<8x32xf32>
    %517 = tpu.concatenate %513, %516 in 1 : vector<8x32xf32>, vector<8x32xf32> -> vector<8x64xf32>
    %cst_390 = arith.constant 0.000000e+00 : f32
    %518 = vector.broadcast %cst_390 : f32 to vector<8x64xf32>
    %519 = arith.maximumf %517, %518 : vector<8x64xf32>
    %520 = vector.extract_strided_slice %519 {offsets = [0, 32], sizes = [8, 32], strides = [1, 1]} : vector<8x64xf32> to vector<8x32xf32>
    %c5_391 = arith.constant 5 : index
    %c1_392 = arith.constant 1 : index
    %c0_393 = arith.constant 0 : index
    %521 = vector.load %arg9[%c5_391, %c1_392, %c0_393] : memref<18x9x64xf32, #tpu.memory_space<vmem>>, vector<1x8x32xf32>
    %522 = vector.shape_cast %521 : vector<1x8x32xf32> to vector<8x32xf32>
    %523 = vector.shape_cast %520 : vector<8x32xf32> to vector<1x8x32xf32>
    tpu.vector_store %arg9[%c5_391, %c1_392, %c0_393], %523 {strides = array<i32>} : memref<18x9x64xf32, #tpu.memory_space<vmem>>, vector<1x8x32xf32>,
    %524 = vector.extract_strided_slice %519 {offsets = [0, 0], sizes = [8, 32], strides = [1, 1]} : vector<8x64xf32> to vector<8x32xf32>
    %c5_394 = arith.constant 5 : index
    %c0_395 = arith.constant 0 : index
    %c32_396 = arith.constant 32 : index
    %525 = vector.load %arg9[%c5_394, %c0_395, %c32_396] : memref<18x9x64xf32, #tpu.memory_space<vmem>>, vector<1x8x32xf32>
    %526 = vector.shape_cast %525 : vector<1x8x32xf32> to vector<8x32xf32>
    %527 = vector.shape_cast %524 : vector<8x32xf32> to vector<1x8x32xf32>
    tpu.vector_store %arg9[%c5_394, %c0_395, %c32_396], %527 {strides = array<i32>} : memref<18x9x64xf32, #tpu.memory_space<vmem>>, vector<1x8x32xf32>,
    %528 = vector.extract_strided_slice %427 {offsets = [80, 0], sizes = [8, 128], strides = [1, 1]} : vector<256x128xf32> to vector<8x128xf32>
    %529 = vector.extract_strided_slice %427 {offsets = [88, 0], sizes = [8, 128], strides = [1, 1]} : vector<256x128xf32> to vector<8x128xf32>
    %530 = arith.maximumf %528, %529 : vector<8x128xf32>
    %531 = vector.extract_strided_slice %530 {offsets = [0, 0], sizes = [8, 32], strides = [1, 1]} : vector<8x128xf32> to vector<8x32xf32>
    %532 = vector.extract_strided_slice %530 {offsets = [0, 32], sizes = [8, 32], strides = [1, 1]} : vector<8x128xf32> to vector<8x32xf32>
    %533 = arith.maximumf %531, %532 : vector<8x32xf32>
    %534 = vector.extract_strided_slice %530 {offsets = [0, 64], sizes = [8, 32], strides = [1, 1]} : vector<8x128xf32> to vector<8x32xf32>
    %535 = vector.extract_strided_slice %530 {offsets = [0, 96], sizes = [8, 32], strides = [1, 1]} : vector<8x128xf32> to vector<8x32xf32>
    %536 = arith.maximumf %534, %535 : vector<8x32xf32>
    %537 = tpu.concatenate %533, %536 in 1 : vector<8x32xf32>, vector<8x32xf32> -> vector<8x64xf32>
    %cst_397 = arith.constant 0.000000e+00 : f32
    %538 = vector.broadcast %cst_397 : f32 to vector<8x64xf32>
    %539 = arith.maximumf %537, %538 : vector<8x64xf32>
    %540 = vector.extract_strided_slice %539 {offsets = [0, 32], sizes = [8, 32], strides = [1, 1]} : vector<8x64xf32> to vector<8x32xf32>
    %c6_398 = arith.constant 6 : index
    %c1_399 = arith.constant 1 : index
    %c0_400 = arith.constant 0 : index
    %541 = vector.load %arg9[%c6_398, %c1_399, %c0_400] : memref<18x9x64xf32, #tpu.memory_space<vmem>>, vector<1x8x32xf32>
    %542 = vector.shape_cast %541 : vector<1x8x32xf32> to vector<8x32xf32>
    %543 = vector.shape_cast %540 : vector<8x32xf32> to vector<1x8x32xf32>
    tpu.vector_store %arg9[%c6_398, %c1_399, %c0_400], %543 {strides = array<i32>} : memref<18x9x64xf32, #tpu.memory_space<vmem>>, vector<1x8x32xf32>,
    %544 = vector.extract_strided_slice %539 {offsets = [0, 0], sizes = [8, 32], strides = [1, 1]} : vector<8x64xf32> to vector<8x32xf32>
    %c6_401 = arith.constant 6 : index
    %c0_402 = arith.constant 0 : index
    %c32_403 = arith.constant 32 : index
    %545 = vector.load %arg9[%c6_401, %c0_402, %c32_403] : memref<18x9x64xf32, #tpu.memory_space<vmem>>, vector<1x8x32xf32>
    %546 = vector.shape_cast %545 : vector<1x8x32xf32> to vector<8x32xf32>
    %547 = vector.shape_cast %544 : vector<8x32xf32> to vector<1x8x32xf32>
    tpu.vector_store %arg9[%c6_401, %c0_402, %c32_403], %547 {strides = array<i32>} : memref<18x9x64xf32, #tpu.memory_space<vmem>>, vector<1x8x32xf32>,
    %548 = vector.extract_strided_slice %427 {offsets = [96, 0], sizes = [8, 128], strides = [1, 1]} : vector<256x128xf32> to vector<8x128xf32>
    %549 = vector.extract_strided_slice %427 {offsets = [104, 0], sizes = [8, 128], strides = [1, 1]} : vector<256x128xf32> to vector<8x128xf32>
    %550 = arith.maximumf %548, %549 : vector<8x128xf32>
    %551 = vector.extract_strided_slice %550 {offsets = [0, 0], sizes = [8, 32], strides = [1, 1]} : vector<8x128xf32> to vector<8x32xf32>
    %552 = vector.extract_strided_slice %550 {offsets = [0, 32], sizes = [8, 32], strides = [1, 1]} : vector<8x128xf32> to vector<8x32xf32>
    %553 = arith.maximumf %551, %552 : vector<8x32xf32>
    %554 = vector.extract_strided_slice %550 {offsets = [0, 64], sizes = [8, 32], strides = [1, 1]} : vector<8x128xf32> to vector<8x32xf32>
    %555 = vector.extract_strided_slice %550 {offsets = [0, 96], sizes = [8, 32], strides = [1, 1]} : vector<8x128xf32> to vector<8x32xf32>
    %556 = arith.maximumf %554, %555 : vector<8x32xf32>
    %557 = tpu.concatenate %553, %556 in 1 : vector<8x32xf32>, vector<8x32xf32> -> vector<8x64xf32>
    %cst_404 = arith.constant 0.000000e+00 : f32
    %558 = vector.broadcast %cst_404 : f32 to vector<8x64xf32>
    %559 = arith.maximumf %557, %558 : vector<8x64xf32>
    %560 = vector.extract_strided_slice %559 {offsets = [0, 32], sizes = [8, 32], strides = [1, 1]} : vector<8x64xf32> to vector<8x32xf32>
    %c7_405 = arith.constant 7 : index
    %c1_406 = arith.constant 1 : index
    %c0_407 = arith.constant 0 : index
    %561 = vector.load %arg9[%c7_405, %c1_406, %c0_407] : memref<18x9x64xf32, #tpu.memory_space<vmem>>, vector<1x8x32xf32>
    %562 = vector.shape_cast %561 : vector<1x8x32xf32> to vector<8x32xf32>
    %563 = vector.shape_cast %560 : vector<8x32xf32> to vector<1x8x32xf32>
    tpu.vector_store %arg9[%c7_405, %c1_406, %c0_407], %563 {strides = array<i32>} : memref<18x9x64xf32, #tpu.memory_space<vmem>>, vector<1x8x32xf32>,
    %564 = vector.extract_strided_slice %559 {offsets = [0, 0], sizes = [8, 32], strides = [1, 1]} : vector<8x64xf32> to vector<8x32xf32>
    %c7_408 = arith.constant 7 : index
    %c0_409 = arith.constant 0 : index
    %c32_410 = arith.constant 32 : index
    %565 = vector.load %arg9[%c7_408, %c0_409, %c32_410] : memref<18x9x64xf32, #tpu.memory_space<vmem>>, vector<1x8x32xf32>
    %566 = vector.shape_cast %565 : vector<1x8x32xf32> to vector<8x32xf32>
    %567 = vector.shape_cast %564 : vector<8x32xf32> to vector<1x8x32xf32>
    tpu.vector_store %arg9[%c7_408, %c0_409, %c32_410], %567 {strides = array<i32>} : memref<18x9x64xf32, #tpu.memory_space<vmem>>, vector<1x8x32xf32>,
    %568 = vector.extract_strided_slice %427 {offsets = [112, 0], sizes = [8, 128], strides = [1, 1]} : vector<256x128xf32> to vector<8x128xf32>
    %569 = vector.extract_strided_slice %427 {offsets = [120, 0], sizes = [8, 128], strides = [1, 1]} : vector<256x128xf32> to vector<8x128xf32>
    %570 = arith.maximumf %568, %569 : vector<8x128xf32>
    %571 = vector.extract_strided_slice %570 {offsets = [0, 0], sizes = [8, 32], strides = [1, 1]} : vector<8x128xf32> to vector<8x32xf32>
    %572 = vector.extract_strided_slice %570 {offsets = [0, 32], sizes = [8, 32], strides = [1, 1]} : vector<8x128xf32> to vector<8x32xf32>
    %573 = arith.maximumf %571, %572 : vector<8x32xf32>
    %574 = vector.extract_strided_slice %570 {offsets = [0, 64], sizes = [8, 32], strides = [1, 1]} : vector<8x128xf32> to vector<8x32xf32>
    %575 = vector.extract_strided_slice %570 {offsets = [0, 96], sizes = [8, 32], strides = [1, 1]} : vector<8x128xf32> to vector<8x32xf32>
    %576 = arith.maximumf %574, %575 : vector<8x32xf32>
    %577 = tpu.concatenate %573, %576 in 1 : vector<8x32xf32>, vector<8x32xf32> -> vector<8x64xf32>
    %cst_411 = arith.constant 0.000000e+00 : f32
    %578 = vector.broadcast %cst_411 : f32 to vector<8x64xf32>
    %579 = arith.maximumf %577, %578 : vector<8x64xf32>
    %580 = vector.extract_strided_slice %579 {offsets = [0, 32], sizes = [8, 32], strides = [1, 1]} : vector<8x64xf32> to vector<8x32xf32>
    %c8_412 = arith.constant 8 : index
    %c1_413 = arith.constant 1 : index
    %c0_414 = arith.constant 0 : index
    %581 = vector.load %arg9[%c8_412, %c1_413, %c0_414] : memref<18x9x64xf32, #tpu.memory_space<vmem>>, vector<1x8x32xf32>
    %582 = vector.shape_cast %581 : vector<1x8x32xf32> to vector<8x32xf32>
    %583 = vector.shape_cast %580 : vector<8x32xf32> to vector<1x8x32xf32>
    tpu.vector_store %arg9[%c8_412, %c1_413, %c0_414], %583 {strides = array<i32>} : memref<18x9x64xf32, #tpu.memory_space<vmem>>, vector<1x8x32xf32>,
    %584 = vector.extract_strided_slice %579 {offsets = [0, 0], sizes = [8, 32], strides = [1, 1]} : vector<8x64xf32> to vector<8x32xf32>
    %c8_415 = arith.constant 8 : index
    %c0_416 = arith.constant 0 : index
    %c32_417 = arith.constant 32 : index
    %585 = vector.load %arg9[%c8_415, %c0_416, %c32_417] : memref<18x9x64xf32, #tpu.memory_space<vmem>>, vector<1x8x32xf32>
    %586 = vector.shape_cast %585 : vector<1x8x32xf32> to vector<8x32xf32>
    %587 = vector.shape_cast %584 : vector<8x32xf32> to vector<1x8x32xf32>
    tpu.vector_store %arg9[%c8_415, %c0_416, %c32_417], %587 {strides = array<i32>} : memref<18x9x64xf32, #tpu.memory_space<vmem>>, vector<1x8x32xf32>,
    %588 = vector.extract_strided_slice %427 {offsets = [128, 0], sizes = [8, 128], strides = [1, 1]} : vector<256x128xf32> to vector<8x128xf32>
    %589 = vector.extract_strided_slice %427 {offsets = [136, 0], sizes = [8, 128], strides = [1, 1]} : vector<256x128xf32> to vector<8x128xf32>
    %590 = arith.maximumf %588, %589 : vector<8x128xf32>
    %591 = vector.extract_strided_slice %590 {offsets = [0, 0], sizes = [8, 32], strides = [1, 1]} : vector<8x128xf32> to vector<8x32xf32>
    %592 = vector.extract_strided_slice %590 {offsets = [0, 32], sizes = [8, 32], strides = [1, 1]} : vector<8x128xf32> to vector<8x32xf32>
    %593 = arith.maximumf %591, %592 : vector<8x32xf32>
    %594 = vector.extract_strided_slice %590 {offsets = [0, 64], sizes = [8, 32], strides = [1, 1]} : vector<8x128xf32> to vector<8x32xf32>
    %595 = vector.extract_strided_slice %590 {offsets = [0, 96], sizes = [8, 32], strides = [1, 1]} : vector<8x128xf32> to vector<8x32xf32>
    %596 = arith.maximumf %594, %595 : vector<8x32xf32>
    %597 = tpu.concatenate %593, %596 in 1 : vector<8x32xf32>, vector<8x32xf32> -> vector<8x64xf32>
    %cst_418 = arith.constant 0.000000e+00 : f32
    %598 = vector.broadcast %cst_418 : f32 to vector<8x64xf32>
    %599 = arith.maximumf %597, %598 : vector<8x64xf32>
    %600 = vector.extract_strided_slice %599 {offsets = [0, 32], sizes = [8, 32], strides = [1, 1]} : vector<8x64xf32> to vector<8x32xf32>
    %c9_419 = arith.constant 9 : index
    %c1_420 = arith.constant 1 : index
    %c0_421 = arith.constant 0 : index
    %601 = vector.load %arg9[%c9_419, %c1_420, %c0_421] : memref<18x9x64xf32, #tpu.memory_space<vmem>>, vector<1x8x32xf32>
    %602 = vector.shape_cast %601 : vector<1x8x32xf32> to vector<8x32xf32>
    %603 = vector.shape_cast %600 : vector<8x32xf32> to vector<1x8x32xf32>
    tpu.vector_store %arg9[%c9_419, %c1_420, %c0_421], %603 {strides = array<i32>} : memref<18x9x64xf32, #tpu.memory_space<vmem>>, vector<1x8x32xf32>,
    %604 = vector.extract_strided_slice %599 {offsets = [0, 0], sizes = [8, 32], strides = [1, 1]} : vector<8x64xf32> to vector<8x32xf32>
    %c9_422 = arith.constant 9 : index
    %c0_423 = arith.constant 0 : index
    %c32_424 = arith.constant 32 : index
    %605 = vector.load %arg9[%c9_422, %c0_423, %c32_424] : memref<18x9x64xf32, #tpu.memory_space<vmem>>, vector<1x8x32xf32>
    %606 = vector.shape_cast %605 : vector<1x8x32xf32> to vector<8x32xf32>
    %607 = vector.shape_cast %604 : vector<8x32xf32> to vector<1x8x32xf32>
    tpu.vector_store %arg9[%c9_422, %c0_423, %c32_424], %607 {strides = array<i32>} : memref<18x9x64xf32, #tpu.memory_space<vmem>>, vector<1x8x32xf32>,
    %608 = vector.extract_strided_slice %427 {offsets = [144, 0], sizes = [8, 128], strides = [1, 1]} : vector<256x128xf32> to vector<8x128xf32>
    %609 = vector.extract_strided_slice %427 {offsets = [152, 0], sizes = [8, 128], strides = [1, 1]} : vector<256x128xf32> to vector<8x128xf32>
    %610 = arith.maximumf %608, %609 : vector<8x128xf32>
    %611 = vector.extract_strided_slice %610 {offsets = [0, 0], sizes = [8, 32], strides = [1, 1]} : vector<8x128xf32> to vector<8x32xf32>
    %612 = vector.extract_strided_slice %610 {offsets = [0, 32], sizes = [8, 32], strides = [1, 1]} : vector<8x128xf32> to vector<8x32xf32>
    %613 = arith.maximumf %611, %612 : vector<8x32xf32>
    %614 = vector.extract_strided_slice %610 {offsets = [0, 64], sizes = [8, 32], strides = [1, 1]} : vector<8x128xf32> to vector<8x32xf32>
    %615 = vector.extract_strided_slice %610 {offsets = [0, 96], sizes = [8, 32], strides = [1, 1]} : vector<8x128xf32> to vector<8x32xf32>
    %616 = arith.maximumf %614, %615 : vector<8x32xf32>
    %617 = tpu.concatenate %613, %616 in 1 : vector<8x32xf32>, vector<8x32xf32> -> vector<8x64xf32>
    %cst_425 = arith.constant 0.000000e+00 : f32
    %618 = vector.broadcast %cst_425 : f32 to vector<8x64xf32>
    %619 = arith.maximumf %617, %618 : vector<8x64xf32>
    %620 = vector.extract_strided_slice %619 {offsets = [0, 32], sizes = [8, 32], strides = [1, 1]} : vector<8x64xf32> to vector<8x32xf32>
    %c10_426 = arith.constant 10 : index
    %c1_427 = arith.constant 1 : index
    %c0_428 = arith.constant 0 : index
    %621 = vector.load %arg9[%c10_426, %c1_427, %c0_428] : memref<18x9x64xf32, #tpu.memory_space<vmem>>, vector<1x8x32xf32>
    %622 = vector.shape_cast %621 : vector<1x8x32xf32> to vector<8x32xf32>
    %623 = vector.shape_cast %620 : vector<8x32xf32> to vector<1x8x32xf32>
    tpu.vector_store %arg9[%c10_426, %c1_427, %c0_428], %623 {strides = array<i32>} : memref<18x9x64xf32, #tpu.memory_space<vmem>>, vector<1x8x32xf32>,
    %624 = vector.extract_strided_slice %619 {offsets = [0, 0], sizes = [8, 32], strides = [1, 1]} : vector<8x64xf32> to vector<8x32xf32>
    %c10_429 = arith.constant 10 : index
    %c0_430 = arith.constant 0 : index
    %c32_431 = arith.constant 32 : index
    %625 = vector.load %arg9[%c10_429, %c0_430, %c32_431] : memref<18x9x64xf32, #tpu.memory_space<vmem>>, vector<1x8x32xf32>
    %626 = vector.shape_cast %625 : vector<1x8x32xf32> to vector<8x32xf32>
    %627 = vector.shape_cast %624 : vector<8x32xf32> to vector<1x8x32xf32>
    tpu.vector_store %arg9[%c10_429, %c0_430, %c32_431], %627 {strides = array<i32>} : memref<18x9x64xf32, #tpu.memory_space<vmem>>, vector<1x8x32xf32>,
    %628 = vector.extract_strided_slice %427 {offsets = [160, 0], sizes = [8, 128], strides = [1, 1]} : vector<256x128xf32> to vector<8x128xf32>
    %629 = vector.extract_strided_slice %427 {offsets = [168, 0], sizes = [8, 128], strides = [1, 1]} : vector<256x128xf32> to vector<8x128xf32>
    %630 = arith.maximumf %628, %629 : vector<8x128xf32>
    %631 = vector.extract_strided_slice %630 {offsets = [0, 0], sizes = [8, 32], strides = [1, 1]} : vector<8x128xf32> to vector<8x32xf32>
    %632 = vector.extract_strided_slice %630 {offsets = [0, 32], sizes = [8, 32], strides = [1, 1]} : vector<8x128xf32> to vector<8x32xf32>
    %633 = arith.maximumf %631, %632 : vector<8x32xf32>
    %634 = vector.extract_strided_slice %630 {offsets = [0, 64], sizes = [8, 32], strides = [1, 1]} : vector<8x128xf32> to vector<8x32xf32>
    %635 = vector.extract_strided_slice %630 {offsets = [0, 96], sizes = [8, 32], strides = [1, 1]} : vector<8x128xf32> to vector<8x32xf32>
    %636 = arith.maximumf %634, %635 : vector<8x32xf32>
    %637 = tpu.concatenate %633, %636 in 1 : vector<8x32xf32>, vector<8x32xf32> -> vector<8x64xf32>
    %cst_432 = arith.constant 0.000000e+00 : f32
    %638 = vector.broadcast %cst_432 : f32 to vector<8x64xf32>
    %639 = arith.maximumf %637, %638 : vector<8x64xf32>
    %640 = vector.extract_strided_slice %639 {offsets = [0, 32], sizes = [8, 32], strides = [1, 1]} : vector<8x64xf32> to vector<8x32xf32>
    %c11_433 = arith.constant 11 : index
    %c1_434 = arith.constant 1 : index
    %c0_435 = arith.constant 0 : index
    %641 = vector.load %arg9[%c11_433, %c1_434, %c0_435] : memref<18x9x64xf32, #tpu.memory_space<vmem>>, vector<1x8x32xf32>
    %642 = vector.shape_cast %641 : vector<1x8x32xf32> to vector<8x32xf32>
    %643 = vector.shape_cast %640 : vector<8x32xf32> to vector<1x8x32xf32>
    tpu.vector_store %arg9[%c11_433, %c1_434, %c0_435], %643 {strides = array<i32>} : memref<18x9x64xf32, #tpu.memory_space<vmem>>, vector<1x8x32xf32>,
    %644 = vector.extract_strided_slice %639 {offsets = [0, 0], sizes = [8, 32], strides = [1, 1]} : vector<8x64xf32> to vector<8x32xf32>
    %c11_436 = arith.constant 11 : index
    %c0_437 = arith.constant 0 : index
    %c32_438 = arith.constant 32 : index
    %645 = vector.load %arg9[%c11_436, %c0_437, %c32_438] : memref<18x9x64xf32, #tpu.memory_space<vmem>>, vector<1x8x32xf32>
    %646 = vector.shape_cast %645 : vector<1x8x32xf32> to vector<8x32xf32>
    %647 = vector.shape_cast %644 : vector<8x32xf32> to vector<1x8x32xf32>
    tpu.vector_store %arg9[%c11_436, %c0_437, %c32_438], %647 {strides = array<i32>} : memref<18x9x64xf32, #tpu.memory_space<vmem>>, vector<1x8x32xf32>,
    %648 = vector.extract_strided_slice %427 {offsets = [176, 0], sizes = [8, 128], strides = [1, 1]} : vector<256x128xf32> to vector<8x128xf32>
    %649 = vector.extract_strided_slice %427 {offsets = [184, 0], sizes = [8, 128], strides = [1, 1]} : vector<256x128xf32> to vector<8x128xf32>
    %650 = arith.maximumf %648, %649 : vector<8x128xf32>
    %651 = vector.extract_strided_slice %650 {offsets = [0, 0], sizes = [8, 32], strides = [1, 1]} : vector<8x128xf32> to vector<8x32xf32>
    %652 = vector.extract_strided_slice %650 {offsets = [0, 32], sizes = [8, 32], strides = [1, 1]} : vector<8x128xf32> to vector<8x32xf32>
    %653 = arith.maximumf %651, %652 : vector<8x32xf32>
    %654 = vector.extract_strided_slice %650 {offsets = [0, 64], sizes = [8, 32], strides = [1, 1]} : vector<8x128xf32> to vector<8x32xf32>
    %655 = vector.extract_strided_slice %650 {offsets = [0, 96], sizes = [8, 32], strides = [1, 1]} : vector<8x128xf32> to vector<8x32xf32>
    %656 = arith.maximumf %654, %655 : vector<8x32xf32>
    %657 = tpu.concatenate %653, %656 in 1 : vector<8x32xf32>, vector<8x32xf32> -> vector<8x64xf32>
    %cst_439 = arith.constant 0.000000e+00 : f32
    %658 = vector.broadcast %cst_439 : f32 to vector<8x64xf32>
    %659 = arith.maximumf %657, %658 : vector<8x64xf32>
    %660 = vector.extract_strided_slice %659 {offsets = [0, 32], sizes = [8, 32], strides = [1, 1]} : vector<8x64xf32> to vector<8x32xf32>
    %c12_440 = arith.constant 12 : index
    %c1_441 = arith.constant 1 : index
    %c0_442 = arith.constant 0 : index
    %661 = vector.load %arg9[%c12_440, %c1_441, %c0_442] : memref<18x9x64xf32, #tpu.memory_space<vmem>>, vector<1x8x32xf32>
    %662 = vector.shape_cast %661 : vector<1x8x32xf32> to vector<8x32xf32>
    %663 = vector.shape_cast %660 : vector<8x32xf32> to vector<1x8x32xf32>
    tpu.vector_store %arg9[%c12_440, %c1_441, %c0_442], %663 {strides = array<i32>} : memref<18x9x64xf32, #tpu.memory_space<vmem>>, vector<1x8x32xf32>,
    %664 = vector.extract_strided_slice %659 {offsets = [0, 0], sizes = [8, 32], strides = [1, 1]} : vector<8x64xf32> to vector<8x32xf32>
    %c12_443 = arith.constant 12 : index
    %c0_444 = arith.constant 0 : index
    %c32_445 = arith.constant 32 : index
    %665 = vector.load %arg9[%c12_443, %c0_444, %c32_445] : memref<18x9x64xf32, #tpu.memory_space<vmem>>, vector<1x8x32xf32>
    %666 = vector.shape_cast %665 : vector<1x8x32xf32> to vector<8x32xf32>
    %667 = vector.shape_cast %664 : vector<8x32xf32> to vector<1x8x32xf32>
    tpu.vector_store %arg9[%c12_443, %c0_444, %c32_445], %667 {strides = array<i32>} : memref<18x9x64xf32, #tpu.memory_space<vmem>>, vector<1x8x32xf32>,
    %668 = vector.extract_strided_slice %427 {offsets = [192, 0], sizes = [8, 128], strides = [1, 1]} : vector<256x128xf32> to vector<8x128xf32>
    %669 = vector.extract_strided_slice %427 {offsets = [200, 0], sizes = [8, 128], strides = [1, 1]} : vector<256x128xf32> to vector<8x128xf32>
    %670 = arith.maximumf %668, %669 : vector<8x128xf32>
    %671 = vector.extract_strided_slice %670 {offsets = [0, 0], sizes = [8, 32], strides = [1, 1]} : vector<8x128xf32> to vector<8x32xf32>
    %672 = vector.extract_strided_slice %670 {offsets = [0, 32], sizes = [8, 32], strides = [1, 1]} : vector<8x128xf32> to vector<8x32xf32>
    %673 = arith.maximumf %671, %672 : vector<8x32xf32>
    %674 = vector.extract_strided_slice %670 {offsets = [0, 64], sizes = [8, 32], strides = [1, 1]} : vector<8x128xf32> to vector<8x32xf32>
    %675 = vector.extract_strided_slice %670 {offsets = [0, 96], sizes = [8, 32], strides = [1, 1]} : vector<8x128xf32> to vector<8x32xf32>
    %676 = arith.maximumf %674, %675 : vector<8x32xf32>
    %677 = tpu.concatenate %673, %676 in 1 : vector<8x32xf32>, vector<8x32xf32> -> vector<8x64xf32>
    %cst_446 = arith.constant 0.000000e+00 : f32
    %678 = vector.broadcast %cst_446 : f32 to vector<8x64xf32>
    %679 = arith.maximumf %677, %678 : vector<8x64xf32>
    %680 = vector.extract_strided_slice %679 {offsets = [0, 32], sizes = [8, 32], strides = [1, 1]} : vector<8x64xf32> to vector<8x32xf32>
    %c13_447 = arith.constant 13 : index
    %c1_448 = arith.constant 1 : index
    %c0_449 = arith.constant 0 : index
    %681 = vector.load %arg9[%c13_447, %c1_448, %c0_449] : memref<18x9x64xf32, #tpu.memory_space<vmem>>, vector<1x8x32xf32>
    %682 = vector.shape_cast %681 : vector<1x8x32xf32> to vector<8x32xf32>
    %683 = vector.shape_cast %680 : vector<8x32xf32> to vector<1x8x32xf32>
    tpu.vector_store %arg9[%c13_447, %c1_448, %c0_449], %683 {strides = array<i32>} : memref<18x9x64xf32, #tpu.memory_space<vmem>>, vector<1x8x32xf32>,
    %684 = vector.extract_strided_slice %679 {offsets = [0, 0], sizes = [8, 32], strides = [1, 1]} : vector<8x64xf32> to vector<8x32xf32>
    %c13_450 = arith.constant 13 : index
    %c0_451 = arith.constant 0 : index
    %c32_452 = arith.constant 32 : index
    %685 = vector.load %arg9[%c13_450, %c0_451, %c32_452] : memref<18x9x64xf32, #tpu.memory_space<vmem>>, vector<1x8x32xf32>
    %686 = vector.shape_cast %685 : vector<1x8x32xf32> to vector<8x32xf32>
    %687 = vector.shape_cast %684 : vector<8x32xf32> to vector<1x8x32xf32>
    tpu.vector_store %arg9[%c13_450, %c0_451, %c32_452], %687 {strides = array<i32>} : memref<18x9x64xf32, #tpu.memory_space<vmem>>, vector<1x8x32xf32>,
    %688 = vector.extract_strided_slice %427 {offsets = [208, 0], sizes = [8, 128], strides = [1, 1]} : vector<256x128xf32> to vector<8x128xf32>
    %689 = vector.extract_strided_slice %427 {offsets = [216, 0], sizes = [8, 128], strides = [1, 1]} : vector<256x128xf32> to vector<8x128xf32>
    %690 = arith.maximumf %688, %689 : vector<8x128xf32>
    %691 = vector.extract_strided_slice %690 {offsets = [0, 0], sizes = [8, 32], strides = [1, 1]} : vector<8x128xf32> to vector<8x32xf32>
    %692 = vector.extract_strided_slice %690 {offsets = [0, 32], sizes = [8, 32], strides = [1, 1]} : vector<8x128xf32> to vector<8x32xf32>
    %693 = arith.maximumf %691, %692 : vector<8x32xf32>
    %694 = vector.extract_strided_slice %690 {offsets = [0, 64], sizes = [8, 32], strides = [1, 1]} : vector<8x128xf32> to vector<8x32xf32>
    %695 = vector.extract_strided_slice %690 {offsets = [0, 96], sizes = [8, 32], strides = [1, 1]} : vector<8x128xf32> to vector<8x32xf32>
    %696 = arith.maximumf %694, %695 : vector<8x32xf32>
    %697 = tpu.concatenate %693, %696 in 1 : vector<8x32xf32>, vector<8x32xf32> -> vector<8x64xf32>
    %cst_453 = arith.constant 0.000000e+00 : f32
    %698 = vector.broadcast %cst_453 : f32 to vector<8x64xf32>
    %699 = arith.maximumf %697, %698 : vector<8x64xf32>
    %700 = vector.extract_strided_slice %699 {offsets = [0, 32], sizes = [8, 32], strides = [1, 1]} : vector<8x64xf32> to vector<8x32xf32>
    %c14_454 = arith.constant 14 : index
    %c1_455 = arith.constant 1 : index
    %c0_456 = arith.constant 0 : index
    %701 = vector.load %arg9[%c14_454, %c1_455, %c0_456] : memref<18x9x64xf32, #tpu.memory_space<vmem>>, vector<1x8x32xf32>
    %702 = vector.shape_cast %701 : vector<1x8x32xf32> to vector<8x32xf32>
    %703 = vector.shape_cast %700 : vector<8x32xf32> to vector<1x8x32xf32>
    tpu.vector_store %arg9[%c14_454, %c1_455, %c0_456], %703 {strides = array<i32>} : memref<18x9x64xf32, #tpu.memory_space<vmem>>, vector<1x8x32xf32>,
    %704 = vector.extract_strided_slice %699 {offsets = [0, 0], sizes = [8, 32], strides = [1, 1]} : vector<8x64xf32> to vector<8x32xf32>
    %c14_457 = arith.constant 14 : index
    %c0_458 = arith.constant 0 : index
    %c32_459 = arith.constant 32 : index
    %705 = vector.load %arg9[%c14_457, %c0_458, %c32_459] : memref<18x9x64xf32, #tpu.memory_space<vmem>>, vector<1x8x32xf32>
    %706 = vector.shape_cast %705 : vector<1x8x32xf32> to vector<8x32xf32>
    %707 = vector.shape_cast %704 : vector<8x32xf32> to vector<1x8x32xf32>
    tpu.vector_store %arg9[%c14_457, %c0_458, %c32_459], %707 {strides = array<i32>} : memref<18x9x64xf32, #tpu.memory_space<vmem>>, vector<1x8x32xf32>,
    %708 = vector.extract_strided_slice %427 {offsets = [224, 0], sizes = [8, 128], strides = [1, 1]} : vector<256x128xf32> to vector<8x128xf32>
    %709 = vector.extract_strided_slice %427 {offsets = [232, 0], sizes = [8, 128], strides = [1, 1]} : vector<256x128xf32> to vector<8x128xf32>
    %710 = arith.maximumf %708, %709 : vector<8x128xf32>
    %711 = vector.extract_strided_slice %710 {offsets = [0, 0], sizes = [8, 32], strides = [1, 1]} : vector<8x128xf32> to vector<8x32xf32>
    %712 = vector.extract_strided_slice %710 {offsets = [0, 32], sizes = [8, 32], strides = [1, 1]} : vector<8x128xf32> to vector<8x32xf32>
    %713 = arith.maximumf %711, %712 : vector<8x32xf32>
    %714 = vector.extract_strided_slice %710 {offsets = [0, 64], sizes = [8, 32], strides = [1, 1]} : vector<8x128xf32> to vector<8x32xf32>
    %715 = vector.extract_strided_slice %710 {offsets = [0, 96], sizes = [8, 32], strides = [1, 1]} : vector<8x128xf32> to vector<8x32xf32>
    %716 = arith.maximumf %714, %715 : vector<8x32xf32>
    %717 = tpu.concatenate %713, %716 in 1 : vector<8x32xf32>, vector<8x32xf32> -> vector<8x64xf32>
    %cst_460 = arith.constant 0.000000e+00 : f32
    %718 = vector.broadcast %cst_460 : f32 to vector<8x64xf32>
    %719 = arith.maximumf %717, %718 : vector<8x64xf32>
    %720 = vector.extract_strided_slice %719 {offsets = [0, 32], sizes = [8, 32], strides = [1, 1]} : vector<8x64xf32> to vector<8x32xf32>
    %c15_461 = arith.constant 15 : index
    %c1_462 = arith.constant 1 : index
    %c0_463 = arith.constant 0 : index
    %721 = vector.load %arg9[%c15_461, %c1_462, %c0_463] : memref<18x9x64xf32, #tpu.memory_space<vmem>>, vector<1x8x32xf32>
    %722 = vector.shape_cast %721 : vector<1x8x32xf32> to vector<8x32xf32>
    %723 = vector.shape_cast %720 : vector<8x32xf32> to vector<1x8x32xf32>
    tpu.vector_store %arg9[%c15_461, %c1_462, %c0_463], %723 {strides = array<i32>} : memref<18x9x64xf32, #tpu.memory_space<vmem>>, vector<1x8x32xf32>,
    %724 = vector.extract_strided_slice %719 {offsets = [0, 0], sizes = [8, 32], strides = [1, 1]} : vector<8x64xf32> to vector<8x32xf32>
    %c15_464 = arith.constant 15 : index
    %c0_465 = arith.constant 0 : index
    %c32_466 = arith.constant 32 : index
    %725 = vector.load %arg9[%c15_464, %c0_465, %c32_466] : memref<18x9x64xf32, #tpu.memory_space<vmem>>, vector<1x8x32xf32>
    %726 = vector.shape_cast %725 : vector<1x8x32xf32> to vector<8x32xf32>
    %727 = vector.shape_cast %724 : vector<8x32xf32> to vector<1x8x32xf32>
    tpu.vector_store %arg9[%c15_464, %c0_465, %c32_466], %727 {strides = array<i32>} : memref<18x9x64xf32, #tpu.memory_space<vmem>>, vector<1x8x32xf32>,
    %728 = vector.extract_strided_slice %427 {offsets = [240, 0], sizes = [8, 128], strides = [1, 1]} : vector<256x128xf32> to vector<8x128xf32>
    %729 = vector.extract_strided_slice %427 {offsets = [248, 0], sizes = [8, 128], strides = [1, 1]} : vector<256x128xf32> to vector<8x128xf32>
    %730 = arith.maximumf %728, %729 : vector<8x128xf32>
    %731 = vector.extract_strided_slice %730 {offsets = [0, 0], sizes = [8, 32], strides = [1, 1]} : vector<8x128xf32> to vector<8x32xf32>
    %732 = vector.extract_strided_slice %730 {offsets = [0, 32], sizes = [8, 32], strides = [1, 1]} : vector<8x128xf32> to vector<8x32xf32>
    %733 = arith.maximumf %731, %732 : vector<8x32xf32>
    %734 = vector.extract_strided_slice %730 {offsets = [0, 64], sizes = [8, 32], strides = [1, 1]} : vector<8x128xf32> to vector<8x32xf32>
    %735 = vector.extract_strided_slice %730 {offsets = [0, 96], sizes = [8, 32], strides = [1, 1]} : vector<8x128xf32> to vector<8x32xf32>
    %736 = arith.maximumf %734, %735 : vector<8x32xf32>
    %737 = tpu.concatenate %733, %736 in 1 : vector<8x32xf32>, vector<8x32xf32> -> vector<8x64xf32>
    %cst_467 = arith.constant 0.000000e+00 : f32
    %738 = vector.broadcast %cst_467 : f32 to vector<8x64xf32>
    %739 = arith.maximumf %737, %738 : vector<8x64xf32>
    %740 = vector.extract_strided_slice %739 {offsets = [0, 32], sizes = [8, 32], strides = [1, 1]} : vector<8x64xf32> to vector<8x32xf32>
    %c16_468 = arith.constant 16 : index
    %c1_469 = arith.constant 1 : index
    %c0_470 = arith.constant 0 : index
    %741 = vector.load %arg9[%c16_468, %c1_469, %c0_470] : memref<18x9x64xf32, #tpu.memory_space<vmem>>, vector<1x8x32xf32>
    %742 = vector.shape_cast %741 : vector<1x8x32xf32> to vector<8x32xf32>
    %743 = vector.shape_cast %740 : vector<8x32xf32> to vector<1x8x32xf32>
    tpu.vector_store %arg9[%c16_468, %c1_469, %c0_470], %743 {strides = array<i32>} : memref<18x9x64xf32, #tpu.memory_space<vmem>>, vector<1x8x32xf32>,
    %744 = vector.extract_strided_slice %739 {offsets = [0, 0], sizes = [8, 32], strides = [1, 1]} : vector<8x64xf32> to vector<8x32xf32>
    %c16_471 = arith.constant 16 : index
    %c0_472 = arith.constant 0 : index
    %c32_473 = arith.constant 32 : index
    %745 = vector.load %arg9[%c16_471, %c0_472, %c32_473] : memref<18x9x64xf32, #tpu.memory_space<vmem>>, vector<1x8x32xf32>
    %746 = vector.shape_cast %745 : vector<1x8x32xf32> to vector<8x32xf32>
    %747 = vector.shape_cast %744 : vector<8x32xf32> to vector<1x8x32xf32>
    tpu.vector_store %arg9[%c16_471, %c0_472, %c32_473], %747 {strides = array<i32>} : memref<18x9x64xf32, #tpu.memory_space<vmem>>, vector<1x8x32xf32>,
    %c0_474 = arith.constant 0 : index
    %c0_475 = arith.constant 0 : index
    %c0_476 = arith.constant 0 : index
    %748 = vector.load %arg9[%c0_474, %c0_475, %c0_476] : memref<18x9x64xf32, #tpu.memory_space<vmem>>, vector<1x9x64xf32>
    %749 = vector.shape_cast %748 : vector<1x9x64xf32> to vector<9x64xf32>
    %750 = vector.extract_strided_slice %749 {offsets = [0, 0], sizes = [8, 64], strides = [1, 1]} : vector<9x64xf32> to vector<8x64xf32>
    %751 = vector.extract_strided_slice %749 {offsets = [1, 0], sizes = [8, 64], strides = [1, 1]} : vector<9x64xf32> to vector<8x64xf32>
    %c1_477 = arith.constant 1 : index
    %c0_478 = arith.constant 0 : index
    %c0_479 = arith.constant 0 : index
    %752 = vector.load %arg9[%c1_477, %c0_478, %c0_479] : memref<18x9x64xf32, #tpu.memory_space<vmem>>, vector<1x9x64xf32>
    %753 = vector.shape_cast %752 : vector<1x9x64xf32> to vector<9x64xf32>
    %754 = vector.extract_strided_slice %753 {offsets = [0, 0], sizes = [8, 64], strides = [1, 1]} : vector<9x64xf32> to vector<8x64xf32>
    %755 = vector.extract_strided_slice %753 {offsets = [1, 0], sizes = [8, 64], strides = [1, 1]} : vector<9x64xf32> to vector<8x64xf32>
    %c2_480 = arith.constant 2 : index
    %c0_481 = arith.constant 0 : index
    %c0_482 = arith.constant 0 : index
    %756 = vector.load %arg9[%c2_480, %c0_481, %c0_482] : memref<18x9x64xf32, #tpu.memory_space<vmem>>, vector<1x9x64xf32>
    %757 = vector.shape_cast %756 : vector<1x9x64xf32> to vector<9x64xf32>
    %758 = vector.extract_strided_slice %757 {offsets = [0, 0], sizes = [8, 64], strides = [1, 1]} : vector<9x64xf32> to vector<8x64xf32>
    %759 = vector.extract_strided_slice %757 {offsets = [1, 0], sizes = [8, 64], strides = [1, 1]} : vector<9x64xf32> to vector<8x64xf32>
    %760 = tpu.concatenate %750, %751, %754, %755, %758, %759 in 1 : vector<8x64xf32>, vector<8x64xf32>, vector<8x64xf32>, vector<8x64xf32>, vector<8x64xf32>, vector<8x64xf32> -> vector<8x384xf32>
    %c1_483 = arith.constant 1 : index
    %c0_484 = arith.constant 0 : index
    %c0_485 = arith.constant 0 : index
    %761 = vector.load %arg9[%c1_483, %c0_484, %c0_485] : memref<18x9x64xf32, #tpu.memory_space<vmem>>, vector<1x9x64xf32>
    %762 = vector.shape_cast %761 : vector<1x9x64xf32> to vector<9x64xf32>
    %763 = vector.extract_strided_slice %762 {offsets = [0, 0], sizes = [8, 64], strides = [1, 1]} : vector<9x64xf32> to vector<8x64xf32>
    %764 = vector.extract_strided_slice %762 {offsets = [1, 0], sizes = [8, 64], strides = [1, 1]} : vector<9x64xf32> to vector<8x64xf32>
    %c2_486 = arith.constant 2 : index
    %c0_487 = arith.constant 0 : index
    %c0_488 = arith.constant 0 : index
    %765 = vector.load %arg9[%c2_486, %c0_487, %c0_488] : memref<18x9x64xf32, #tpu.memory_space<vmem>>, vector<1x9x64xf32>
    %766 = vector.shape_cast %765 : vector<1x9x64xf32> to vector<9x64xf32>
    %767 = vector.extract_strided_slice %766 {offsets = [0, 0], sizes = [8, 64], strides = [1, 1]} : vector<9x64xf32> to vector<8x64xf32>
    %768 = vector.extract_strided_slice %766 {offsets = [1, 0], sizes = [8, 64], strides = [1, 1]} : vector<9x64xf32> to vector<8x64xf32>
    %c3_489 = arith.constant 3 : index
    %c0_490 = arith.constant 0 : index
    %c0_491 = arith.constant 0 : index
    %769 = vector.load %arg9[%c3_489, %c0_490, %c0_491] : memref<18x9x64xf32, #tpu.memory_space<vmem>>, vector<1x9x64xf32>
    %770 = vector.shape_cast %769 : vector<1x9x64xf32> to vector<9x64xf32>
    %771 = vector.extract_strided_slice %770 {offsets = [0, 0], sizes = [8, 64], strides = [1, 1]} : vector<9x64xf32> to vector<8x64xf32>
    %772 = vector.extract_strided_slice %770 {offsets = [1, 0], sizes = [8, 64], strides = [1, 1]} : vector<9x64xf32> to vector<8x64xf32>
    %773 = tpu.concatenate %763, %764, %767, %768, %771, %772 in 1 : vector<8x64xf32>, vector<8x64xf32>, vector<8x64xf32>, vector<8x64xf32>, vector<8x64xf32>, vector<8x64xf32> -> vector<8x384xf32>
    %c2_492 = arith.constant 2 : index
    %c0_493 = arith.constant 0 : index
    %c0_494 = arith.constant 0 : index
    %774 = vector.load %arg9[%c2_492, %c0_493, %c0_494] : memref<18x9x64xf32, #tpu.memory_space<vmem>>, vector<1x9x64xf32>
    %775 = vector.shape_cast %774 : vector<1x9x64xf32> to vector<9x64xf32>
    %776 = vector.extract_strided_slice %775 {offsets = [0, 0], sizes = [8, 64], strides = [1, 1]} : vector<9x64xf32> to vector<8x64xf32>
    %777 = vector.extract_strided_slice %775 {offsets = [1, 0], sizes = [8, 64], strides = [1, 1]} : vector<9x64xf32> to vector<8x64xf32>
    %c3_495 = arith.constant 3 : index
    %c0_496 = arith.constant 0 : index
    %c0_497 = arith.constant 0 : index
    %778 = vector.load %arg9[%c3_495, %c0_496, %c0_497] : memref<18x9x64xf32, #tpu.memory_space<vmem>>, vector<1x9x64xf32>
    %779 = vector.shape_cast %778 : vector<1x9x64xf32> to vector<9x64xf32>
    %780 = vector.extract_strided_slice %779 {offsets = [0, 0], sizes = [8, 64], strides = [1, 1]} : vector<9x64xf32> to vector<8x64xf32>
    %781 = vector.extract_strided_slice %779 {offsets = [1, 0], sizes = [8, 64], strides = [1, 1]} : vector<9x64xf32> to vector<8x64xf32>
    %c4_498 = arith.constant 4 : index
    %c0_499 = arith.constant 0 : index
    %c0_500 = arith.constant 0 : index
    %782 = vector.load %arg9[%c4_498, %c0_499, %c0_500] : memref<18x9x64xf32, #tpu.memory_space<vmem>>, vector<1x9x64xf32>
    %783 = vector.shape_cast %782 : vector<1x9x64xf32> to vector<9x64xf32>
    %784 = vector.extract_strided_slice %783 {offsets = [0, 0], sizes = [8, 64], strides = [1, 1]} : vector<9x64xf32> to vector<8x64xf32>
    %785 = vector.extract_strided_slice %783 {offsets = [1, 0], sizes = [8, 64], strides = [1, 1]} : vector<9x64xf32> to vector<8x64xf32>
    %786 = tpu.concatenate %776, %777, %780, %781, %784, %785 in 1 : vector<8x64xf32>, vector<8x64xf32>, vector<8x64xf32>, vector<8x64xf32>, vector<8x64xf32>, vector<8x64xf32> -> vector<8x384xf32>
    %c3_501 = arith.constant 3 : index
    %c0_502 = arith.constant 0 : index
    %c0_503 = arith.constant 0 : index
    %787 = vector.load %arg9[%c3_501, %c0_502, %c0_503] : memref<18x9x64xf32, #tpu.memory_space<vmem>>, vector<1x9x64xf32>
    %788 = vector.shape_cast %787 : vector<1x9x64xf32> to vector<9x64xf32>
    %789 = vector.extract_strided_slice %788 {offsets = [0, 0], sizes = [8, 64], strides = [1, 1]} : vector<9x64xf32> to vector<8x64xf32>
    %790 = vector.extract_strided_slice %788 {offsets = [1, 0], sizes = [8, 64], strides = [1, 1]} : vector<9x64xf32> to vector<8x64xf32>
    %c4_504 = arith.constant 4 : index
    %c0_505 = arith.constant 0 : index
    %c0_506 = arith.constant 0 : index
    %791 = vector.load %arg9[%c4_504, %c0_505, %c0_506] : memref<18x9x64xf32, #tpu.memory_space<vmem>>, vector<1x9x64xf32>
    %792 = vector.shape_cast %791 : vector<1x9x64xf32> to vector<9x64xf32>
    %793 = vector.extract_strided_slice %792 {offsets = [0, 0], sizes = [8, 64], strides = [1, 1]} : vector<9x64xf32> to vector<8x64xf32>
    %794 = vector.extract_strided_slice %792 {offsets = [1, 0], sizes = [8, 64], strides = [1, 1]} : vector<9x64xf32> to vector<8x64xf32>
    %c5_507 = arith.constant 5 : index
    %c0_508 = arith.constant 0 : index
    %c0_509 = arith.constant 0 : index
    %795 = vector.load %arg9[%c5_507, %c0_508, %c0_509] : memref<18x9x64xf32, #tpu.memory_space<vmem>>, vector<1x9x64xf32>
    %796 = vector.shape_cast %795 : vector<1x9x64xf32> to vector<9x64xf32>
    %797 = vector.extract_strided_slice %796 {offsets = [0, 0], sizes = [8, 64], strides = [1, 1]} : vector<9x64xf32> to vector<8x64xf32>
    %798 = vector.extract_strided_slice %796 {offsets = [1, 0], sizes = [8, 64], strides = [1, 1]} : vector<9x64xf32> to vector<8x64xf32>
    %799 = tpu.concatenate %789, %790, %793, %794, %797, %798 in 1 : vector<8x64xf32>, vector<8x64xf32>, vector<8x64xf32>, vector<8x64xf32>, vector<8x64xf32>, vector<8x64xf32> -> vector<8x384xf32>
    %c4_510 = arith.constant 4 : index
    %c0_511 = arith.constant 0 : index
    %c0_512 = arith.constant 0 : index
    %800 = vector.load %arg9[%c4_510, %c0_511, %c0_512] : memref<18x9x64xf32, #tpu.memory_space<vmem>>, vector<1x9x64xf32>
    %801 = vector.shape_cast %800 : vector<1x9x64xf32> to vector<9x64xf32>
    %802 = vector.extract_strided_slice %801 {offsets = [0, 0], sizes = [8, 64], strides = [1, 1]} : vector<9x64xf32> to vector<8x64xf32>
    %803 = vector.extract_strided_slice %801 {offsets = [1, 0], sizes = [8, 64], strides = [1, 1]} : vector<9x64xf32> to vector<8x64xf32>
    %c5_513 = arith.constant 5 : index
    %c0_514 = arith.constant 0 : index
    %c0_515 = arith.constant 0 : index
    %804 = vector.load %arg9[%c5_513, %c0_514, %c0_515] : memref<18x9x64xf32, #tpu.memory_space<vmem>>, vector<1x9x64xf32>
    %805 = vector.shape_cast %804 : vector<1x9x64xf32> to vector<9x64xf32>
    %806 = vector.extract_strided_slice %805 {offsets = [0, 0], sizes = [8, 64], strides = [1, 1]} : vector<9x64xf32> to vector<8x64xf32>
    %807 = vector.extract_strided_slice %805 {offsets = [1, 0], sizes = [8, 64], strides = [1, 1]} : vector<9x64xf32> to vector<8x64xf32>
    %c6_516 = arith.constant 6 : index
    %c0_517 = arith.constant 0 : index
    %c0_518 = arith.constant 0 : index
    %808 = vector.load %arg9[%c6_516, %c0_517, %c0_518] : memref<18x9x64xf32, #tpu.memory_space<vmem>>, vector<1x9x64xf32>
    %809 = vector.shape_cast %808 : vector<1x9x64xf32> to vector<9x64xf32>
    %810 = vector.extract_strided_slice %809 {offsets = [0, 0], sizes = [8, 64], strides = [1, 1]} : vector<9x64xf32> to vector<8x64xf32>
    %811 = vector.extract_strided_slice %809 {offsets = [1, 0], sizes = [8, 64], strides = [1, 1]} : vector<9x64xf32> to vector<8x64xf32>
    %812 = tpu.concatenate %802, %803, %806, %807, %810, %811 in 1 : vector<8x64xf32>, vector<8x64xf32>, vector<8x64xf32>, vector<8x64xf32>, vector<8x64xf32>, vector<8x64xf32> -> vector<8x384xf32>
    %c5_519 = arith.constant 5 : index
    %c0_520 = arith.constant 0 : index
    %c0_521 = arith.constant 0 : index
    %813 = vector.load %arg9[%c5_519, %c0_520, %c0_521] : memref<18x9x64xf32, #tpu.memory_space<vmem>>, vector<1x9x64xf32>
    %814 = vector.shape_cast %813 : vector<1x9x64xf32> to vector<9x64xf32>
    %815 = vector.extract_strided_slice %814 {offsets = [0, 0], sizes = [8, 64], strides = [1, 1]} : vector<9x64xf32> to vector<8x64xf32>
    %816 = vector.extract_strided_slice %814 {offsets = [1, 0], sizes = [8, 64], strides = [1, 1]} : vector<9x64xf32> to vector<8x64xf32>
    %c6_522 = arith.constant 6 : index
    %c0_523 = arith.constant 0 : index
    %c0_524 = arith.constant 0 : index
    %817 = vector.load %arg9[%c6_522, %c0_523, %c0_524] : memref<18x9x64xf32, #tpu.memory_space<vmem>>, vector<1x9x64xf32>
    %818 = vector.shape_cast %817 : vector<1x9x64xf32> to vector<9x64xf32>
    %819 = vector.extract_strided_slice %818 {offsets = [0, 0], sizes = [8, 64], strides = [1, 1]} : vector<9x64xf32> to vector<8x64xf32>
    %820 = vector.extract_strided_slice %818 {offsets = [1, 0], sizes = [8, 64], strides = [1, 1]} : vector<9x64xf32> to vector<8x64xf32>
    %c7_525 = arith.constant 7 : index
    %c0_526 = arith.constant 0 : index
    %c0_527 = arith.constant 0 : index
    %821 = vector.load %arg9[%c7_525, %c0_526, %c0_527] : memref<18x9x64xf32, #tpu.memory_space<vmem>>, vector<1x9x64xf32>
    %822 = vector.shape_cast %821 : vector<1x9x64xf32> to vector<9x64xf32>
    %823 = vector.extract_strided_slice %822 {offsets = [0, 0], sizes = [8, 64], strides = [1, 1]} : vector<9x64xf32> to vector<8x64xf32>
    %824 = vector.extract_strided_slice %822 {offsets = [1, 0], sizes = [8, 64], strides = [1, 1]} : vector<9x64xf32> to vector<8x64xf32>
    %825 = tpu.concatenate %815, %816, %819, %820, %823, %824 in 1 : vector<8x64xf32>, vector<8x64xf32>, vector<8x64xf32>, vector<8x64xf32>, vector<8x64xf32>, vector<8x64xf32> -> vector<8x384xf32>
    %c6_528 = arith.constant 6 : index
    %c0_529 = arith.constant 0 : index
    %c0_530 = arith.constant 0 : index
    %826 = vector.load %arg9[%c6_528, %c0_529, %c0_530] : memref<18x9x64xf32, #tpu.memory_space<vmem>>, vector<1x9x64xf32>
    %827 = vector.shape_cast %826 : vector<1x9x64xf32> to vector<9x64xf32>
    %828 = vector.extract_strided_slice %827 {offsets = [0, 0], sizes = [8, 64], strides = [1, 1]} : vector<9x64xf32> to vector<8x64xf32>
    %829 = vector.extract_strided_slice %827 {offsets = [1, 0], sizes = [8, 64], strides = [1, 1]} : vector<9x64xf32> to vector<8x64xf32>
    %c7_531 = arith.constant 7 : index
    %c0_532 = arith.constant 0 : index
    %c0_533 = arith.constant 0 : index
    %830 = vector.load %arg9[%c7_531, %c0_532, %c0_533] : memref<18x9x64xf32, #tpu.memory_space<vmem>>, vector<1x9x64xf32>
    %831 = vector.shape_cast %830 : vector<1x9x64xf32> to vector<9x64xf32>
    %832 = vector.extract_strided_slice %831 {offsets = [0, 0], sizes = [8, 64], strides = [1, 1]} : vector<9x64xf32> to vector<8x64xf32>
    %833 = vector.extract_strided_slice %831 {offsets = [1, 0], sizes = [8, 64], strides = [1, 1]} : vector<9x64xf32> to vector<8x64xf32>
    %c8_534 = arith.constant 8 : index
    %c0_535 = arith.constant 0 : index
    %c0_536 = arith.constant 0 : index
    %834 = vector.load %arg9[%c8_534, %c0_535, %c0_536] : memref<18x9x64xf32, #tpu.memory_space<vmem>>, vector<1x9x64xf32>
    %835 = vector.shape_cast %834 : vector<1x9x64xf32> to vector<9x64xf32>
    %836 = vector.extract_strided_slice %835 {offsets = [0, 0], sizes = [8, 64], strides = [1, 1]} : vector<9x64xf32> to vector<8x64xf32>
    %837 = vector.extract_strided_slice %835 {offsets = [1, 0], sizes = [8, 64], strides = [1, 1]} : vector<9x64xf32> to vector<8x64xf32>
    %838 = tpu.concatenate %828, %829, %832, %833, %836, %837 in 1 : vector<8x64xf32>, vector<8x64xf32>, vector<8x64xf32>, vector<8x64xf32>, vector<8x64xf32>, vector<8x64xf32> -> vector<8x384xf32>
    %c7_537 = arith.constant 7 : index
    %c0_538 = arith.constant 0 : index
    %c0_539 = arith.constant 0 : index
    %839 = vector.load %arg9[%c7_537, %c0_538, %c0_539] : memref<18x9x64xf32, #tpu.memory_space<vmem>>, vector<1x9x64xf32>
    %840 = vector.shape_cast %839 : vector<1x9x64xf32> to vector<9x64xf32>
    %841 = vector.extract_strided_slice %840 {offsets = [0, 0], sizes = [8, 64], strides = [1, 1]} : vector<9x64xf32> to vector<8x64xf32>
    %842 = vector.extract_strided_slice %840 {offsets = [1, 0], sizes = [8, 64], strides = [1, 1]} : vector<9x64xf32> to vector<8x64xf32>
    %c8_540 = arith.constant 8 : index
    %c0_541 = arith.constant 0 : index
    %c0_542 = arith.constant 0 : index
    %843 = vector.load %arg9[%c8_540, %c0_541, %c0_542] : memref<18x9x64xf32, #tpu.memory_space<vmem>>, vector<1x9x64xf32>
    %844 = vector.shape_cast %843 : vector<1x9x64xf32> to vector<9x64xf32>
    %845 = vector.extract_strided_slice %844 {offsets = [0, 0], sizes = [8, 64], strides = [1, 1]} : vector<9x64xf32> to vector<8x64xf32>
    %846 = vector.extract_strided_slice %844 {offsets = [1, 0], sizes = [8, 64], strides = [1, 1]} : vector<9x64xf32> to vector<8x64xf32>
    %c9_543 = arith.constant 9 : index
    %c0_544 = arith.constant 0 : index
    %c0_545 = arith.constant 0 : index
    %847 = vector.load %arg9[%c9_543, %c0_544, %c0_545] : memref<18x9x64xf32, #tpu.memory_space<vmem>>, vector<1x9x64xf32>
    %848 = vector.shape_cast %847 : vector<1x9x64xf32> to vector<9x64xf32>
    %849 = vector.extract_strided_slice %848 {offsets = [0, 0], sizes = [8, 64], strides = [1, 1]} : vector<9x64xf32> to vector<8x64xf32>
    %850 = vector.extract_strided_slice %848 {offsets = [1, 0], sizes = [8, 64], strides = [1, 1]} : vector<9x64xf32> to vector<8x64xf32>
    %851 = tpu.concatenate %841, %842, %845, %846, %849, %850 in 1 : vector<8x64xf32>, vector<8x64xf32>, vector<8x64xf32>, vector<8x64xf32>, vector<8x64xf32>, vector<8x64xf32> -> vector<8x384xf32>
    %c8_546 = arith.constant 8 : index
    %c0_547 = arith.constant 0 : index
    %c0_548 = arith.constant 0 : index
    %852 = vector.load %arg9[%c8_546, %c0_547, %c0_548] : memref<18x9x64xf32, #tpu.memory_space<vmem>>, vector<1x9x64xf32>
    %853 = vector.shape_cast %852 : vector<1x9x64xf32> to vector<9x64xf32>
    %854 = vector.extract_strided_slice %853 {offsets = [0, 0], sizes = [8, 64], strides = [1, 1]} : vector<9x64xf32> to vector<8x64xf32>
    %855 = vector.extract_strided_slice %853 {offsets = [1, 0], sizes = [8, 64], strides = [1, 1]} : vector<9x64xf32> to vector<8x64xf32>
    %c9_549 = arith.constant 9 : index
    %c0_550 = arith.constant 0 : index
    %c0_551 = arith.constant 0 : index
    %856 = vector.load %arg9[%c9_549, %c0_550, %c0_551] : memref<18x9x64xf32, #tpu.memory_space<vmem>>, vector<1x9x64xf32>
    %857 = vector.shape_cast %856 : vector<1x9x64xf32> to vector<9x64xf32>
    %858 = vector.extract_strided_slice %857 {offsets = [0, 0], sizes = [8, 64], strides = [1, 1]} : vector<9x64xf32> to vector<8x64xf32>
    %859 = vector.extract_strided_slice %857 {offsets = [1, 0], sizes = [8, 64], strides = [1, 1]} : vector<9x64xf32> to vector<8x64xf32>
    %c10_552 = arith.constant 10 : index
    %c0_553 = arith.constant 0 : index
    %c0_554 = arith.constant 0 : index
    %860 = vector.load %arg9[%c10_552, %c0_553, %c0_554] : memref<18x9x64xf32, #tpu.memory_space<vmem>>, vector<1x9x64xf32>
    %861 = vector.shape_cast %860 : vector<1x9x64xf32> to vector<9x64xf32>
    %862 = vector.extract_strided_slice %861 {offsets = [0, 0], sizes = [8, 64], strides = [1, 1]} : vector<9x64xf32> to vector<8x64xf32>
    %863 = vector.extract_strided_slice %861 {offsets = [1, 0], sizes = [8, 64], strides = [1, 1]} : vector<9x64xf32> to vector<8x64xf32>
    %864 = tpu.concatenate %854, %855, %858, %859, %862, %863 in 1 : vector<8x64xf32>, vector<8x64xf32>, vector<8x64xf32>, vector<8x64xf32>, vector<8x64xf32>, vector<8x64xf32> -> vector<8x384xf32>
    %c9_555 = arith.constant 9 : index
    %c0_556 = arith.constant 0 : index
    %c0_557 = arith.constant 0 : index
    %865 = vector.load %arg9[%c9_555, %c0_556, %c0_557] : memref<18x9x64xf32, #tpu.memory_space<vmem>>, vector<1x9x64xf32>
    %866 = vector.shape_cast %865 : vector<1x9x64xf32> to vector<9x64xf32>
    %867 = vector.extract_strided_slice %866 {offsets = [0, 0], sizes = [8, 64], strides = [1, 1]} : vector<9x64xf32> to vector<8x64xf32>
    %868 = vector.extract_strided_slice %866 {offsets = [1, 0], sizes = [8, 64], strides = [1, 1]} : vector<9x64xf32> to vector<8x64xf32>
    %c10_558 = arith.constant 10 : index
    %c0_559 = arith.constant 0 : index
    %c0_560 = arith.constant 0 : index
    %869 = vector.load %arg9[%c10_558, %c0_559, %c0_560] : memref<18x9x64xf32, #tpu.memory_space<vmem>>, vector<1x9x64xf32>
    %870 = vector.shape_cast %869 : vector<1x9x64xf32> to vector<9x64xf32>
    %871 = vector.extract_strided_slice %870 {offsets = [0, 0], sizes = [8, 64], strides = [1, 1]} : vector<9x64xf32> to vector<8x64xf32>
    %872 = vector.extract_strided_slice %870 {offsets = [1, 0], sizes = [8, 64], strides = [1, 1]} : vector<9x64xf32> to vector<8x64xf32>
    %c11_561 = arith.constant 11 : index
    %c0_562 = arith.constant 0 : index
    %c0_563 = arith.constant 0 : index
    %873 = vector.load %arg9[%c11_561, %c0_562, %c0_563] : memref<18x9x64xf32, #tpu.memory_space<vmem>>, vector<1x9x64xf32>
    %874 = vector.shape_cast %873 : vector<1x9x64xf32> to vector<9x64xf32>
    %875 = vector.extract_strided_slice %874 {offsets = [0, 0], sizes = [8, 64], strides = [1, 1]} : vector<9x64xf32> to vector<8x64xf32>
    %876 = vector.extract_strided_slice %874 {offsets = [1, 0], sizes = [8, 64], strides = [1, 1]} : vector<9x64xf32> to vector<8x64xf32>
    %877 = tpu.concatenate %867, %868, %871, %872, %875, %876 in 1 : vector<8x64xf32>, vector<8x64xf32>, vector<8x64xf32>, vector<8x64xf32>, vector<8x64xf32>, vector<8x64xf32> -> vector<8x384xf32>
    %c10_564 = arith.constant 10 : index
    %c0_565 = arith.constant 0 : index
    %c0_566 = arith.constant 0 : index
    %878 = vector.load %arg9[%c10_564, %c0_565, %c0_566] : memref<18x9x64xf32, #tpu.memory_space<vmem>>, vector<1x9x64xf32>
    %879 = vector.shape_cast %878 : vector<1x9x64xf32> to vector<9x64xf32>
    %880 = vector.extract_strided_slice %879 {offsets = [0, 0], sizes = [8, 64], strides = [1, 1]} : vector<9x64xf32> to vector<8x64xf32>
    %881 = vector.extract_strided_slice %879 {offsets = [1, 0], sizes = [8, 64], strides = [1, 1]} : vector<9x64xf32> to vector<8x64xf32>
    %c11_567 = arith.constant 11 : index
    %c0_568 = arith.constant 0 : index
    %c0_569 = arith.constant 0 : index
    %882 = vector.load %arg9[%c11_567, %c0_568, %c0_569] : memref<18x9x64xf32, #tpu.memory_space<vmem>>, vector<1x9x64xf32>
    %883 = vector.shape_cast %882 : vector<1x9x64xf32> to vector<9x64xf32>
    %884 = vector.extract_strided_slice %883 {offsets = [0, 0], sizes = [8, 64], strides = [1, 1]} : vector<9x64xf32> to vector<8x64xf32>
    %885 = vector.extract_strided_slice %883 {offsets = [1, 0], sizes = [8, 64], strides = [1, 1]} : vector<9x64xf32> to vector<8x64xf32>
    %c12_570 = arith.constant 12 : index
    %c0_571 = arith.constant 0 : index
    %c0_572 = arith.constant 0 : index
    %886 = vector.load %arg9[%c12_570, %c0_571, %c0_572] : memref<18x9x64xf32, #tpu.memory_space<vmem>>, vector<1x9x64xf32>
    %887 = vector.shape_cast %886 : vector<1x9x64xf32> to vector<9x64xf32>
    %888 = vector.extract_strided_slice %887 {offsets = [0, 0], sizes = [8, 64], strides = [1, 1]} : vector<9x64xf32> to vector<8x64xf32>
    %889 = vector.extract_strided_slice %887 {offsets = [1, 0], sizes = [8, 64], strides = [1, 1]} : vector<9x64xf32> to vector<8x64xf32>
    %890 = tpu.concatenate %880, %881, %884, %885, %888, %889 in 1 : vector<8x64xf32>, vector<8x64xf32>, vector<8x64xf32>, vector<8x64xf32>, vector<8x64xf32>, vector<8x64xf32> -> vector<8x384xf32>
    %c11_573 = arith.constant 11 : index
    %c0_574 = arith.constant 0 : index
    %c0_575 = arith.constant 0 : index
    %891 = vector.load %arg9[%c11_573, %c0_574, %c0_575] : memref<18x9x64xf32, #tpu.memory_space<vmem>>, vector<1x9x64xf32>
    %892 = vector.shape_cast %891 : vector<1x9x64xf32> to vector<9x64xf32>
    %893 = vector.extract_strided_slice %892 {offsets = [0, 0], sizes = [8, 64], strides = [1, 1]} : vector<9x64xf32> to vector<8x64xf32>
    %894 = vector.extract_strided_slice %892 {offsets = [1, 0], sizes = [8, 64], strides = [1, 1]} : vector<9x64xf32> to vector<8x64xf32>
    %c12_576 = arith.constant 12 : index
    %c0_577 = arith.constant 0 : index
    %c0_578 = arith.constant 0 : index
    %895 = vector.load %arg9[%c12_576, %c0_577, %c0_578] : memref<18x9x64xf32, #tpu.memory_space<vmem>>, vector<1x9x64xf32>
    %896 = vector.shape_cast %895 : vector<1x9x64xf32> to vector<9x64xf32>
    %897 = vector.extract_strided_slice %896 {offsets = [0, 0], sizes = [8, 64], strides = [1, 1]} : vector<9x64xf32> to vector<8x64xf32>
    %898 = vector.extract_strided_slice %896 {offsets = [1, 0], sizes = [8, 64], strides = [1, 1]} : vector<9x64xf32> to vector<8x64xf32>
    %c13_579 = arith.constant 13 : index
    %c0_580 = arith.constant 0 : index
    %c0_581 = arith.constant 0 : index
    %899 = vector.load %arg9[%c13_579, %c0_580, %c0_581] : memref<18x9x64xf32, #tpu.memory_space<vmem>>, vector<1x9x64xf32>
    %900 = vector.shape_cast %899 : vector<1x9x64xf32> to vector<9x64xf32>
    %901 = vector.extract_strided_slice %900 {offsets = [0, 0], sizes = [8, 64], strides = [1, 1]} : vector<9x64xf32> to vector<8x64xf32>
    %902 = vector.extract_strided_slice %900 {offsets = [1, 0], sizes = [8, 64], strides = [1, 1]} : vector<9x64xf32> to vector<8x64xf32>
    %903 = tpu.concatenate %893, %894, %897, %898, %901, %902 in 1 : vector<8x64xf32>, vector<8x64xf32>, vector<8x64xf32>, vector<8x64xf32>, vector<8x64xf32>, vector<8x64xf32> -> vector<8x384xf32>
    %c12_582 = arith.constant 12 : index
    %c0_583 = arith.constant 0 : index
    %c0_584 = arith.constant 0 : index
    %904 = vector.load %arg9[%c12_582, %c0_583, %c0_584] : memref<18x9x64xf32, #tpu.memory_space<vmem>>, vector<1x9x64xf32>
    %905 = vector.shape_cast %904 : vector<1x9x64xf32> to vector<9x64xf32>
    %906 = vector.extract_strided_slice %905 {offsets = [0, 0], sizes = [8, 64], strides = [1, 1]} : vector<9x64xf32> to vector<8x64xf32>
    %907 = vector.extract_strided_slice %905 {offsets = [1, 0], sizes = [8, 64], strides = [1, 1]} : vector<9x64xf32> to vector<8x64xf32>
    %c13_585 = arith.constant 13 : index
    %c0_586 = arith.constant 0 : index
    %c0_587 = arith.constant 0 : index
    %908 = vector.load %arg9[%c13_585, %c0_586, %c0_587] : memref<18x9x64xf32, #tpu.memory_space<vmem>>, vector<1x9x64xf32>
    %909 = vector.shape_cast %908 : vector<1x9x64xf32> to vector<9x64xf32>
    %910 = vector.extract_strided_slice %909 {offsets = [0, 0], sizes = [8, 64], strides = [1, 1]} : vector<9x64xf32> to vector<8x64xf32>
    %911 = vector.extract_strided_slice %909 {offsets = [1, 0], sizes = [8, 64], strides = [1, 1]} : vector<9x64xf32> to vector<8x64xf32>
    %c14_588 = arith.constant 14 : index
    %c0_589 = arith.constant 0 : index
    %c0_590 = arith.constant 0 : index
    %912 = vector.load %arg9[%c14_588, %c0_589, %c0_590] : memref<18x9x64xf32, #tpu.memory_space<vmem>>, vector<1x9x64xf32>
    %913 = vector.shape_cast %912 : vector<1x9x64xf32> to vector<9x64xf32>
    %914 = vector.extract_strided_slice %913 {offsets = [0, 0], sizes = [8, 64], strides = [1, 1]} : vector<9x64xf32> to vector<8x64xf32>
    %915 = vector.extract_strided_slice %913 {offsets = [1, 0], sizes = [8, 64], strides = [1, 1]} : vector<9x64xf32> to vector<8x64xf32>
    %916 = tpu.concatenate %906, %907, %910, %911, %914, %915 in 1 : vector<8x64xf32>, vector<8x64xf32>, vector<8x64xf32>, vector<8x64xf32>, vector<8x64xf32>, vector<8x64xf32> -> vector<8x384xf32>
    %c13_591 = arith.constant 13 : index
    %c0_592 = arith.constant 0 : index
    %c0_593 = arith.constant 0 : index
    %917 = vector.load %arg9[%c13_591, %c0_592, %c0_593] : memref<18x9x64xf32, #tpu.memory_space<vmem>>, vector<1x9x64xf32>
    %918 = vector.shape_cast %917 : vector<1x9x64xf32> to vector<9x64xf32>
    %919 = vector.extract_strided_slice %918 {offsets = [0, 0], sizes = [8, 64], strides = [1, 1]} : vector<9x64xf32> to vector<8x64xf32>
    %920 = vector.extract_strided_slice %918 {offsets = [1, 0], sizes = [8, 64], strides = [1, 1]} : vector<9x64xf32> to vector<8x64xf32>
    %c14_594 = arith.constant 14 : index
    %c0_595 = arith.constant 0 : index
    %c0_596 = arith.constant 0 : index
    %921 = vector.load %arg9[%c14_594, %c0_595, %c0_596] : memref<18x9x64xf32, #tpu.memory_space<vmem>>, vector<1x9x64xf32>
    %922 = vector.shape_cast %921 : vector<1x9x64xf32> to vector<9x64xf32>
    %923 = vector.extract_strided_slice %922 {offsets = [0, 0], sizes = [8, 64], strides = [1, 1]} : vector<9x64xf32> to vector<8x64xf32>
    %924 = vector.extract_strided_slice %922 {offsets = [1, 0], sizes = [8, 64], strides = [1, 1]} : vector<9x64xf32> to vector<8x64xf32>
    %c15_597 = arith.constant 15 : index
    %c0_598 = arith.constant 0 : index
    %c0_599 = arith.constant 0 : index
    %925 = vector.load %arg9[%c15_597, %c0_598, %c0_599] : memref<18x9x64xf32, #tpu.memory_space<vmem>>, vector<1x9x64xf32>
    %926 = vector.shape_cast %925 : vector<1x9x64xf32> to vector<9x64xf32>
    %927 = vector.extract_strided_slice %926 {offsets = [0, 0], sizes = [8, 64], strides = [1, 1]} : vector<9x64xf32> to vector<8x64xf32>
    %928 = vector.extract_strided_slice %926 {offsets = [1, 0], sizes = [8, 64], strides = [1, 1]} : vector<9x64xf32> to vector<8x64xf32>
    %929 = tpu.concatenate %919, %920, %923, %924, %927, %928 in 1 : vector<8x64xf32>, vector<8x64xf32>, vector<8x64xf32>, vector<8x64xf32>, vector<8x64xf32>, vector<8x64xf32> -> vector<8x384xf32>
    %c14_600 = arith.constant 14 : index
    %c0_601 = arith.constant 0 : index
    %c0_602 = arith.constant 0 : index
    %930 = vector.load %arg9[%c14_600, %c0_601, %c0_602] : memref<18x9x64xf32, #tpu.memory_space<vmem>>, vector<1x9x64xf32>
    %931 = vector.shape_cast %930 : vector<1x9x64xf32> to vector<9x64xf32>
    %932 = vector.extract_strided_slice %931 {offsets = [0, 0], sizes = [8, 64], strides = [1, 1]} : vector<9x64xf32> to vector<8x64xf32>
    %933 = vector.extract_strided_slice %931 {offsets = [1, 0], sizes = [8, 64], strides = [1, 1]} : vector<9x64xf32> to vector<8x64xf32>
    %c15_603 = arith.constant 15 : index
    %c0_604 = arith.constant 0 : index
    %c0_605 = arith.constant 0 : index
    %934 = vector.load %arg9[%c15_603, %c0_604, %c0_605] : memref<18x9x64xf32, #tpu.memory_space<vmem>>, vector<1x9x64xf32>
    %935 = vector.shape_cast %934 : vector<1x9x64xf32> to vector<9x64xf32>
    %936 = vector.extract_strided_slice %935 {offsets = [0, 0], sizes = [8, 64], strides = [1, 1]} : vector<9x64xf32> to vector<8x64xf32>
    %937 = vector.extract_strided_slice %935 {offsets = [1, 0], sizes = [8, 64], strides = [1, 1]} : vector<9x64xf32> to vector<8x64xf32>
    %c16_606 = arith.constant 16 : index
    %c0_607 = arith.constant 0 : index
    %c0_608 = arith.constant 0 : index
    %938 = vector.load %arg9[%c16_606, %c0_607, %c0_608] : memref<18x9x64xf32, #tpu.memory_space<vmem>>, vector<1x9x64xf32>
    %939 = vector.shape_cast %938 : vector<1x9x64xf32> to vector<9x64xf32>
    %940 = vector.extract_strided_slice %939 {offsets = [0, 0], sizes = [8, 64], strides = [1, 1]} : vector<9x64xf32> to vector<8x64xf32>
    %941 = vector.extract_strided_slice %939 {offsets = [1, 0], sizes = [8, 64], strides = [1, 1]} : vector<9x64xf32> to vector<8x64xf32>
    %942 = tpu.concatenate %932, %933, %936, %937, %940, %941 in 1 : vector<8x64xf32>, vector<8x64xf32>, vector<8x64xf32>, vector<8x64xf32>, vector<8x64xf32>, vector<8x64xf32> -> vector<8x384xf32>
    %c15_609 = arith.constant 15 : index
    %c0_610 = arith.constant 0 : index
    %c0_611 = arith.constant 0 : index
    %943 = vector.load %arg9[%c15_609, %c0_610, %c0_611] : memref<18x9x64xf32, #tpu.memory_space<vmem>>, vector<1x9x64xf32>
    %944 = vector.shape_cast %943 : vector<1x9x64xf32> to vector<9x64xf32>
    %945 = vector.extract_strided_slice %944 {offsets = [0, 0], sizes = [8, 64], strides = [1, 1]} : vector<9x64xf32> to vector<8x64xf32>
    %946 = vector.extract_strided_slice %944 {offsets = [1, 0], sizes = [8, 64], strides = [1, 1]} : vector<9x64xf32> to vector<8x64xf32>
    %c16_612 = arith.constant 16 : index
    %c0_613 = arith.constant 0 : index
    %c0_614 = arith.constant 0 : index
    %947 = vector.load %arg9[%c16_612, %c0_613, %c0_614] : memref<18x9x64xf32, #tpu.memory_space<vmem>>, vector<1x9x64xf32>
    %948 = vector.shape_cast %947 : vector<1x9x64xf32> to vector<9x64xf32>
    %949 = vector.extract_strided_slice %948 {offsets = [0, 0], sizes = [8, 64], strides = [1, 1]} : vector<9x64xf32> to vector<8x64xf32>
    %950 = vector.extract_strided_slice %948 {offsets = [1, 0], sizes = [8, 64], strides = [1, 1]} : vector<9x64xf32> to vector<8x64xf32>
    %c17_615 = arith.constant 17 : index
    %c0_616 = arith.constant 0 : index
    %c0_617 = arith.constant 0 : index
    %951 = vector.load %arg9[%c17_615, %c0_616, %c0_617] : memref<18x9x64xf32, #tpu.memory_space<vmem>>, vector<1x9x64xf32>
    %952 = vector.shape_cast %951 : vector<1x9x64xf32> to vector<9x64xf32>
    %953 = vector.extract_strided_slice %952 {offsets = [0, 0], sizes = [8, 64], strides = [1, 1]} : vector<9x64xf32> to vector<8x64xf32>
    %954 = vector.extract_strided_slice %952 {offsets = [1, 0], sizes = [8, 64], strides = [1, 1]} : vector<9x64xf32> to vector<8x64xf32>
    %955 = tpu.concatenate %945, %946, %949, %950, %953, %954 in 1 : vector<8x64xf32>, vector<8x64xf32>, vector<8x64xf32>, vector<8x64xf32>, vector<8x64xf32>, vector<8x64xf32> -> vector<8x384xf32>
    %956 = tpu.concatenate %760, %773, %786, %799, %812, %825, %838, %851, %864, %877, %890, %903, %916, %929, %942, %955 in 0 : vector<8x384xf32>, vector<8x384xf32>, vector<8x384xf32>, vector<8x384xf32>, vector<8x384xf32>, vector<8x384xf32>, vector<8x384xf32>, vector<8x384xf32>, vector<8x384xf32>, vector<8x384xf32>, vector<8x384xf32>, vector<8x384xf32>, vector<8x384xf32>, vector<8x384xf32>, vector<8x384xf32>, vector<8x384xf32> -> vector<128x384xf32>
    %c0_618 = arith.constant 0 : index
    %c0_619 = arith.constant 0 : index
    %957 = vector.load %arg4[%c0_618, %c0_619] : memref<384x128xf32, #tpu.memory_space<vmem>>, vector<384x128xf32>
    %cst_620 = arith.constant dense<0.000000e+00> : vector<128x128xf32>
    %958 = tpu.matmul %956, %957, %cst_620 {dimension_numbers = #tpu.dot_dimension_numbers<[1], [0], [0], [1], [0, 0, 1, 1], [], []>} : vector<128x384xf32>, vector<384x128xf32>, vector<128x128xf32> -> vector<128x128xf32>
    %c0_621 = arith.constant 0 : index
    %c0_622 = arith.constant 0 : index
    %959 = vector.load %arg5[%c0_621, %c0_622] : memref<1x128xf32, #tpu.memory_space<vmem>>, vector<1x128xf32>
    %960 = vector.broadcast %959 : vector<1x128xf32> to vector<128x128xf32>
    %961 = arith.addf %958, %960 : vector<128x128xf32>
    %962 = vector.extract_strided_slice %961 {offsets = [0, 0], sizes = [8, 128], strides = [1, 1]} : vector<128x128xf32> to vector<8x128xf32>
    %963 = vector.extract_strided_slice %961 {offsets = [8, 0], sizes = [8, 128], strides = [1, 1]} : vector<128x128xf32> to vector<8x128xf32>
    %964 = arith.maximumf %962, %963 : vector<8x128xf32>
    %965 = vector.extract_strided_slice %964 {offsets = [0, 0], sizes = [8, 64], strides = [1, 1]} : vector<8x128xf32> to vector<8x64xf32>
    %966 = vector.extract_strided_slice %964 {offsets = [0, 64], sizes = [8, 64], strides = [1, 1]} : vector<8x128xf32> to vector<8x64xf32>
    %967 = arith.maximumf %965, %966 : vector<8x64xf32>
    %cst_623 = arith.constant 0.000000e+00 : f32
    %968 = vector.broadcast %cst_623 : f32 to vector<8x64xf32>
    %969 = arith.maximumf %967, %968 : vector<8x64xf32>
    %c1_624 = arith.constant 1 : index
    %c1_625 = arith.constant 1 : index
    %c0_626 = arith.constant 0 : index
    %970 = vector.load %arg10[%c1_624, %c1_625, %c0_626] : memref<10x10x64xf32, #tpu.memory_space<vmem>>, vector<1x8x64xf32>
    %971 = vector.shape_cast %970 : vector<1x8x64xf32> to vector<8x64xf32>
    %972 = vector.shape_cast %969 : vector<8x64xf32> to vector<1x8x64xf32>
    tpu.vector_store %arg10[%c1_624, %c1_625, %c0_626], %972 {strides = array<i32>} : memref<10x10x64xf32, #tpu.memory_space<vmem>>, vector<1x8x64xf32>,
    %973 = vector.extract_strided_slice %961 {offsets = [16, 0], sizes = [8, 128], strides = [1, 1]} : vector<128x128xf32> to vector<8x128xf32>
    %974 = vector.extract_strided_slice %961 {offsets = [24, 0], sizes = [8, 128], strides = [1, 1]} : vector<128x128xf32> to vector<8x128xf32>
    %975 = arith.maximumf %973, %974 : vector<8x128xf32>
    %976 = vector.extract_strided_slice %975 {offsets = [0, 0], sizes = [8, 64], strides = [1, 1]} : vector<8x128xf32> to vector<8x64xf32>
    %977 = vector.extract_strided_slice %975 {offsets = [0, 64], sizes = [8, 64], strides = [1, 1]} : vector<8x128xf32> to vector<8x64xf32>
    %978 = arith.maximumf %976, %977 : vector<8x64xf32>
    %cst_627 = arith.constant 0.000000e+00 : f32
    %979 = vector.broadcast %cst_627 : f32 to vector<8x64xf32>
    %980 = arith.maximumf %978, %979 : vector<8x64xf32>
    %c2_628 = arith.constant 2 : index
    %c1_629 = arith.constant 1 : index
    %c0_630 = arith.constant 0 : index
    %981 = vector.load %arg10[%c2_628, %c1_629, %c0_630] : memref<10x10x64xf32, #tpu.memory_space<vmem>>, vector<1x8x64xf32>
    %982 = vector.shape_cast %981 : vector<1x8x64xf32> to vector<8x64xf32>
    %983 = vector.shape_cast %980 : vector<8x64xf32> to vector<1x8x64xf32>
    tpu.vector_store %arg10[%c2_628, %c1_629, %c0_630], %983 {strides = array<i32>} : memref<10x10x64xf32, #tpu.memory_space<vmem>>, vector<1x8x64xf32>,
    %984 = vector.extract_strided_slice %961 {offsets = [32, 0], sizes = [8, 128], strides = [1, 1]} : vector<128x128xf32> to vector<8x128xf32>
    %985 = vector.extract_strided_slice %961 {offsets = [40, 0], sizes = [8, 128], strides = [1, 1]} : vector<128x128xf32> to vector<8x128xf32>
    %986 = arith.maximumf %984, %985 : vector<8x128xf32>
    %987 = vector.extract_strided_slice %986 {offsets = [0, 0], sizes = [8, 64], strides = [1, 1]} : vector<8x128xf32> to vector<8x64xf32>
    %988 = vector.extract_strided_slice %986 {offsets = [0, 64], sizes = [8, 64], strides = [1, 1]} : vector<8x128xf32> to vector<8x64xf32>
    %989 = arith.maximumf %987, %988 : vector<8x64xf32>
    %cst_631 = arith.constant 0.000000e+00 : f32
    %990 = vector.broadcast %cst_631 : f32 to vector<8x64xf32>
    %991 = arith.maximumf %989, %990 : vector<8x64xf32>
    %c3_632 = arith.constant 3 : index
    %c1_633 = arith.constant 1 : index
    %c0_634 = arith.constant 0 : index
    %992 = vector.load %arg10[%c3_632, %c1_633, %c0_634] : memref<10x10x64xf32, #tpu.memory_space<vmem>>, vector<1x8x64xf32>
    %993 = vector.shape_cast %992 : vector<1x8x64xf32> to vector<8x64xf32>
    %994 = vector.shape_cast %991 : vector<8x64xf32> to vector<1x8x64xf32>
    tpu.vector_store %arg10[%c3_632, %c1_633, %c0_634], %994 {strides = array<i32>} : memref<10x10x64xf32, #tpu.memory_space<vmem>>, vector<1x8x64xf32>,
    %995 = vector.extract_strided_slice %961 {offsets = [48, 0], sizes = [8, 128], strides = [1, 1]} : vector<128x128xf32> to vector<8x128xf32>
    %996 = vector.extract_strided_slice %961 {offsets = [56, 0], sizes = [8, 128], strides = [1, 1]} : vector<128x128xf32> to vector<8x128xf32>
    %997 = arith.maximumf %995, %996 : vector<8x128xf32>
    %998 = vector.extract_strided_slice %997 {offsets = [0, 0], sizes = [8, 64], strides = [1, 1]} : vector<8x128xf32> to vector<8x64xf32>
    %999 = vector.extract_strided_slice %997 {offsets = [0, 64], sizes = [8, 64], strides = [1, 1]} : vector<8x128xf32> to vector<8x64xf32>
    %1000 = arith.maximumf %998, %999 : vector<8x64xf32>
    %cst_635 = arith.constant 0.000000e+00 : f32
    %1001 = vector.broadcast %cst_635 : f32 to vector<8x64xf32>
    %1002 = arith.maximumf %1000, %1001 : vector<8x64xf32>
    %c4_636 = arith.constant 4 : index
    %c1_637 = arith.constant 1 : index
    %c0_638 = arith.constant 0 : index
    %1003 = vector.load %arg10[%c4_636, %c1_637, %c0_638] : memref<10x10x64xf32, #tpu.memory_space<vmem>>, vector<1x8x64xf32>
    %1004 = vector.shape_cast %1003 : vector<1x8x64xf32> to vector<8x64xf32>
    %1005 = vector.shape_cast %1002 : vector<8x64xf32> to vector<1x8x64xf32>
    tpu.vector_store %arg10[%c4_636, %c1_637, %c0_638], %1005 {strides = array<i32>} : memref<10x10x64xf32, #tpu.memory_space<vmem>>, vector<1x8x64xf32>,
    %1006 = vector.extract_strided_slice %961 {offsets = [64, 0], sizes = [8, 128], strides = [1, 1]} : vector<128x128xf32> to vector<8x128xf32>
    %1007 = vector.extract_strided_slice %961 {offsets = [72, 0], sizes = [8, 128], strides = [1, 1]} : vector<128x128xf32> to vector<8x128xf32>
    %1008 = arith.maximumf %1006, %1007 : vector<8x128xf32>
    %1009 = vector.extract_strided_slice %1008 {offsets = [0, 0], sizes = [8, 64], strides = [1, 1]} : vector<8x128xf32> to vector<8x64xf32>
    %1010 = vector.extract_strided_slice %1008 {offsets = [0, 64], sizes = [8, 64], strides = [1, 1]} : vector<8x128xf32> to vector<8x64xf32>
    %1011 = arith.maximumf %1009, %1010 : vector<8x64xf32>
    %cst_639 = arith.constant 0.000000e+00 : f32
    %1012 = vector.broadcast %cst_639 : f32 to vector<8x64xf32>
    %1013 = arith.maximumf %1011, %1012 : vector<8x64xf32>
    %c5_640 = arith.constant 5 : index
    %c1_641 = arith.constant 1 : index
    %c0_642 = arith.constant 0 : index
    %1014 = vector.load %arg10[%c5_640, %c1_641, %c0_642] : memref<10x10x64xf32, #tpu.memory_space<vmem>>, vector<1x8x64xf32>
    %1015 = vector.shape_cast %1014 : vector<1x8x64xf32> to vector<8x64xf32>
    %1016 = vector.shape_cast %1013 : vector<8x64xf32> to vector<1x8x64xf32>
    tpu.vector_store %arg10[%c5_640, %c1_641, %c0_642], %1016 {strides = array<i32>} : memref<10x10x64xf32, #tpu.memory_space<vmem>>, vector<1x8x64xf32>,
    %1017 = vector.extract_strided_slice %961 {offsets = [80, 0], sizes = [8, 128], strides = [1, 1]} : vector<128x128xf32> to vector<8x128xf32>
    %1018 = vector.extract_strided_slice %961 {offsets = [88, 0], sizes = [8, 128], strides = [1, 1]} : vector<128x128xf32> to vector<8x128xf32>
    %1019 = arith.maximumf %1017, %1018 : vector<8x128xf32>
    %1020 = vector.extract_strided_slice %1019 {offsets = [0, 0], sizes = [8, 64], strides = [1, 1]} : vector<8x128xf32> to vector<8x64xf32>
    %1021 = vector.extract_strided_slice %1019 {offsets = [0, 64], sizes = [8, 64], strides = [1, 1]} : vector<8x128xf32> to vector<8x64xf32>
    %1022 = arith.maximumf %1020, %1021 : vector<8x64xf32>
    %cst_643 = arith.constant 0.000000e+00 : f32
    %1023 = vector.broadcast %cst_643 : f32 to vector<8x64xf32>
    %1024 = arith.maximumf %1022, %1023 : vector<8x64xf32>
    %c6_644 = arith.constant 6 : index
    %c1_645 = arith.constant 1 : index
    %c0_646 = arith.constant 0 : index
    %1025 = vector.load %arg10[%c6_644, %c1_645, %c0_646] : memref<10x10x64xf32, #tpu.memory_space<vmem>>, vector<1x8x64xf32>
    %1026 = vector.shape_cast %1025 : vector<1x8x64xf32> to vector<8x64xf32>
    %1027 = vector.shape_cast %1024 : vector<8x64xf32> to vector<1x8x64xf32>
    tpu.vector_store %arg10[%c6_644, %c1_645, %c0_646], %1027 {strides = array<i32>} : memref<10x10x64xf32, #tpu.memory_space<vmem>>, vector<1x8x64xf32>,
    %1028 = vector.extract_strided_slice %961 {offsets = [96, 0], sizes = [8, 128], strides = [1, 1]} : vector<128x128xf32> to vector<8x128xf32>
    %1029 = vector.extract_strided_slice %961 {offsets = [104, 0], sizes = [8, 128], strides = [1, 1]} : vector<128x128xf32> to vector<8x128xf32>
    %1030 = arith.maximumf %1028, %1029 : vector<8x128xf32>
    %1031 = vector.extract_strided_slice %1030 {offsets = [0, 0], sizes = [8, 64], strides = [1, 1]} : vector<8x128xf32> to vector<8x64xf32>
    %1032 = vector.extract_strided_slice %1030 {offsets = [0, 64], sizes = [8, 64], strides = [1, 1]} : vector<8x128xf32> to vector<8x64xf32>
    %1033 = arith.maximumf %1031, %1032 : vector<8x64xf32>
    %cst_647 = arith.constant 0.000000e+00 : f32
    %1034 = vector.broadcast %cst_647 : f32 to vector<8x64xf32>
    %1035 = arith.maximumf %1033, %1034 : vector<8x64xf32>
    %c7_648 = arith.constant 7 : index
    %c1_649 = arith.constant 1 : index
    %c0_650 = arith.constant 0 : index
    %1036 = vector.load %arg10[%c7_648, %c1_649, %c0_650] : memref<10x10x64xf32, #tpu.memory_space<vmem>>, vector<1x8x64xf32>
    %1037 = vector.shape_cast %1036 : vector<1x8x64xf32> to vector<8x64xf32>
    %1038 = vector.shape_cast %1035 : vector<8x64xf32> to vector<1x8x64xf32>
    tpu.vector_store %arg10[%c7_648, %c1_649, %c0_650], %1038 {strides = array<i32>} : memref<10x10x64xf32, #tpu.memory_space<vmem>>, vector<1x8x64xf32>,
    %1039 = vector.extract_strided_slice %961 {offsets = [112, 0], sizes = [8, 128], strides = [1, 1]} : vector<128x128xf32> to vector<8x128xf32>
    %1040 = vector.extract_strided_slice %961 {offsets = [120, 0], sizes = [8, 128], strides = [1, 1]} : vector<128x128xf32> to vector<8x128xf32>
    %1041 = arith.maximumf %1039, %1040 : vector<8x128xf32>
    %1042 = vector.extract_strided_slice %1041 {offsets = [0, 0], sizes = [8, 64], strides = [1, 1]} : vector<8x128xf32> to vector<8x64xf32>
    %1043 = vector.extract_strided_slice %1041 {offsets = [0, 64], sizes = [8, 64], strides = [1, 1]} : vector<8x128xf32> to vector<8x64xf32>
    %1044 = arith.maximumf %1042, %1043 : vector<8x64xf32>
    %cst_651 = arith.constant 0.000000e+00 : f32
    %1045 = vector.broadcast %cst_651 : f32 to vector<8x64xf32>
    %1046 = arith.maximumf %1044, %1045 : vector<8x64xf32>
    %c8_652 = arith.constant 8 : index
    %c1_653 = arith.constant 1 : index
    %c0_654 = arith.constant 0 : index
    %1047 = vector.load %arg10[%c8_652, %c1_653, %c0_654] : memref<10x10x64xf32, #tpu.memory_space<vmem>>, vector<1x8x64xf32>
    %1048 = vector.shape_cast %1047 : vector<1x8x64xf32> to vector<8x64xf32>
    %1049 = vector.shape_cast %1046 : vector<8x64xf32> to vector<1x8x64xf32>
    tpu.vector_store %arg10[%c8_652, %c1_653, %c0_654], %1049 {strides = array<i32>} : memref<10x10x64xf32, #tpu.memory_space<vmem>>, vector<1x8x64xf32>,
    %c0_655 = arith.constant 0 : index
    %c0_656 = arith.constant 0 : index
    %c0_657 = arith.constant 0 : index
    %1050 = vector.load %arg10[%c0_655, %c0_656, %c0_657] : memref<10x10x64xf32, #tpu.memory_space<vmem>>, vector<1x10x64xf32>
    %1051 = vector.shape_cast %1050 : vector<1x10x64xf32> to vector<10x64xf32>
    %1052 = vector.extract_strided_slice %1051 {offsets = [0, 0], sizes = [8, 64], strides = [1, 1]} : vector<10x64xf32> to vector<8x64xf32>
    %1053 = vector.extract_strided_slice %1051 {offsets = [1, 0], sizes = [8, 64], strides = [1, 1]} : vector<10x64xf32> to vector<8x64xf32>
    %1054 = vector.extract_strided_slice %1051 {offsets = [2, 0], sizes = [8, 64], strides = [1, 1]} : vector<10x64xf32> to vector<8x64xf32>
    %c1_658 = arith.constant 1 : index
    %c0_659 = arith.constant 0 : index
    %c0_660 = arith.constant 0 : index
    %1055 = vector.load %arg10[%c1_658, %c0_659, %c0_660] : memref<10x10x64xf32, #tpu.memory_space<vmem>>, vector<1x10x64xf32>
    %1056 = vector.shape_cast %1055 : vector<1x10x64xf32> to vector<10x64xf32>
    %1057 = vector.extract_strided_slice %1056 {offsets = [0, 0], sizes = [8, 64], strides = [1, 1]} : vector<10x64xf32> to vector<8x64xf32>
    %1058 = vector.extract_strided_slice %1056 {offsets = [1, 0], sizes = [8, 64], strides = [1, 1]} : vector<10x64xf32> to vector<8x64xf32>
    %1059 = vector.extract_strided_slice %1056 {offsets = [2, 0], sizes = [8, 64], strides = [1, 1]} : vector<10x64xf32> to vector<8x64xf32>
    %c2_661 = arith.constant 2 : index
    %c0_662 = arith.constant 0 : index
    %c0_663 = arith.constant 0 : index
    %1060 = vector.load %arg10[%c2_661, %c0_662, %c0_663] : memref<10x10x64xf32, #tpu.memory_space<vmem>>, vector<1x10x64xf32>
    %1061 = vector.shape_cast %1060 : vector<1x10x64xf32> to vector<10x64xf32>
    %1062 = vector.extract_strided_slice %1061 {offsets = [0, 0], sizes = [8, 64], strides = [1, 1]} : vector<10x64xf32> to vector<8x64xf32>
    %1063 = vector.extract_strided_slice %1061 {offsets = [1, 0], sizes = [8, 64], strides = [1, 1]} : vector<10x64xf32> to vector<8x64xf32>
    %1064 = vector.extract_strided_slice %1061 {offsets = [2, 0], sizes = [8, 64], strides = [1, 1]} : vector<10x64xf32> to vector<8x64xf32>
    %1065 = tpu.concatenate %1052, %1053, %1054, %1057, %1058, %1059, %1062, %1063, %1064 in 1 : vector<8x64xf32>, vector<8x64xf32>, vector<8x64xf32>, vector<8x64xf32>, vector<8x64xf32>, vector<8x64xf32>, vector<8x64xf32>, vector<8x64xf32>, vector<8x64xf32> -> vector<8x576xf32>
    %c1_664 = arith.constant 1 : index
    %c0_665 = arith.constant 0 : index
    %c0_666 = arith.constant 0 : index
    %1066 = vector.load %arg10[%c1_664, %c0_665, %c0_666] : memref<10x10x64xf32, #tpu.memory_space<vmem>>, vector<1x10x64xf32>
    %1067 = vector.shape_cast %1066 : vector<1x10x64xf32> to vector<10x64xf32>
    %1068 = vector.extract_strided_slice %1067 {offsets = [0, 0], sizes = [8, 64], strides = [1, 1]} : vector<10x64xf32> to vector<8x64xf32>
    %1069 = vector.extract_strided_slice %1067 {offsets = [1, 0], sizes = [8, 64], strides = [1, 1]} : vector<10x64xf32> to vector<8x64xf32>
    %1070 = vector.extract_strided_slice %1067 {offsets = [2, 0], sizes = [8, 64], strides = [1, 1]} : vector<10x64xf32> to vector<8x64xf32>
    %c2_667 = arith.constant 2 : index
    %c0_668 = arith.constant 0 : index
    %c0_669 = arith.constant 0 : index
    %1071 = vector.load %arg10[%c2_667, %c0_668, %c0_669] : memref<10x10x64xf32, #tpu.memory_space<vmem>>, vector<1x10x64xf32>
    %1072 = vector.shape_cast %1071 : vector<1x10x64xf32> to vector<10x64xf32>
    %1073 = vector.extract_strided_slice %1072 {offsets = [0, 0], sizes = [8, 64], strides = [1, 1]} : vector<10x64xf32> to vector<8x64xf32>
    %1074 = vector.extract_strided_slice %1072 {offsets = [1, 0], sizes = [8, 64], strides = [1, 1]} : vector<10x64xf32> to vector<8x64xf32>
    %1075 = vector.extract_strided_slice %1072 {offsets = [2, 0], sizes = [8, 64], strides = [1, 1]} : vector<10x64xf32> to vector<8x64xf32>
    %c3_670 = arith.constant 3 : index
    %c0_671 = arith.constant 0 : index
    %c0_672 = arith.constant 0 : index
    %1076 = vector.load %arg10[%c3_670, %c0_671, %c0_672] : memref<10x10x64xf32, #tpu.memory_space<vmem>>, vector<1x10x64xf32>
    %1077 = vector.shape_cast %1076 : vector<1x10x64xf32> to vector<10x64xf32>
    %1078 = vector.extract_strided_slice %1077 {offsets = [0, 0], sizes = [8, 64], strides = [1, 1]} : vector<10x64xf32> to vector<8x64xf32>
    %1079 = vector.extract_strided_slice %1077 {offsets = [1, 0], sizes = [8, 64], strides = [1, 1]} : vector<10x64xf32> to vector<8x64xf32>
    %1080 = vector.extract_strided_slice %1077 {offsets = [2, 0], sizes = [8, 64], strides = [1, 1]} : vector<10x64xf32> to vector<8x64xf32>
    %1081 = tpu.concatenate %1068, %1069, %1070, %1073, %1074, %1075, %1078, %1079, %1080 in 1 : vector<8x64xf32>, vector<8x64xf32>, vector<8x64xf32>, vector<8x64xf32>, vector<8x64xf32>, vector<8x64xf32>, vector<8x64xf32>, vector<8x64xf32>, vector<8x64xf32> -> vector<8x576xf32>
    %c2_673 = arith.constant 2 : index
    %c0_674 = arith.constant 0 : index
    %c0_675 = arith.constant 0 : index
    %1082 = vector.load %arg10[%c2_673, %c0_674, %c0_675] : memref<10x10x64xf32, #tpu.memory_space<vmem>>, vector<1x10x64xf32>
    %1083 = vector.shape_cast %1082 : vector<1x10x64xf32> to vector<10x64xf32>
    %1084 = vector.extract_strided_slice %1083 {offsets = [0, 0], sizes = [8, 64], strides = [1, 1]} : vector<10x64xf32> to vector<8x64xf32>
    %1085 = vector.extract_strided_slice %1083 {offsets = [1, 0], sizes = [8, 64], strides = [1, 1]} : vector<10x64xf32> to vector<8x64xf32>
    %1086 = vector.extract_strided_slice %1083 {offsets = [2, 0], sizes = [8, 64], strides = [1, 1]} : vector<10x64xf32> to vector<8x64xf32>
    %c3_676 = arith.constant 3 : index
    %c0_677 = arith.constant 0 : index
    %c0_678 = arith.constant 0 : index
    %1087 = vector.load %arg10[%c3_676, %c0_677, %c0_678] : memref<10x10x64xf32, #tpu.memory_space<vmem>>, vector<1x10x64xf32>
    %1088 = vector.shape_cast %1087 : vector<1x10x64xf32> to vector<10x64xf32>
    %1089 = vector.extract_strided_slice %1088 {offsets = [0, 0], sizes = [8, 64], strides = [1, 1]} : vector<10x64xf32> to vector<8x64xf32>
    %1090 = vector.extract_strided_slice %1088 {offsets = [1, 0], sizes = [8, 64], strides = [1, 1]} : vector<10x64xf32> to vector<8x64xf32>
    %1091 = vector.extract_strided_slice %1088 {offsets = [2, 0], sizes = [8, 64], strides = [1, 1]} : vector<10x64xf32> to vector<8x64xf32>
    %c4_679 = arith.constant 4 : index
    %c0_680 = arith.constant 0 : index
    %c0_681 = arith.constant 0 : index
    %1092 = vector.load %arg10[%c4_679, %c0_680, %c0_681] : memref<10x10x64xf32, #tpu.memory_space<vmem>>, vector<1x10x64xf32>
    %1093 = vector.shape_cast %1092 : vector<1x10x64xf32> to vector<10x64xf32>
    %1094 = vector.extract_strided_slice %1093 {offsets = [0, 0], sizes = [8, 64], strides = [1, 1]} : vector<10x64xf32> to vector<8x64xf32>
    %1095 = vector.extract_strided_slice %1093 {offsets = [1, 0], sizes = [8, 64], strides = [1, 1]} : vector<10x64xf32> to vector<8x64xf32>
    %1096 = vector.extract_strided_slice %1093 {offsets = [2, 0], sizes = [8, 64], strides = [1, 1]} : vector<10x64xf32> to vector<8x64xf32>
    %1097 = tpu.concatenate %1084, %1085, %1086, %1089, %1090, %1091, %1094, %1095, %1096 in 1 : vector<8x64xf32>, vector<8x64xf32>, vector<8x64xf32>, vector<8x64xf32>, vector<8x64xf32>, vector<8x64xf32>, vector<8x64xf32>, vector<8x64xf32>, vector<8x64xf32> -> vector<8x576xf32>
    %c3_682 = arith.constant 3 : index
    %c0_683 = arith.constant 0 : index
    %c0_684 = arith.constant 0 : index
    %1098 = vector.load %arg10[%c3_682, %c0_683, %c0_684] : memref<10x10x64xf32, #tpu.memory_space<vmem>>, vector<1x10x64xf32>
    %1099 = vector.shape_cast %1098 : vector<1x10x64xf32> to vector<10x64xf32>
    %1100 = vector.extract_strided_slice %1099 {offsets = [0, 0], sizes = [8, 64], strides = [1, 1]} : vector<10x64xf32> to vector<8x64xf32>
    %1101 = vector.extract_strided_slice %1099 {offsets = [1, 0], sizes = [8, 64], strides = [1, 1]} : vector<10x64xf32> to vector<8x64xf32>
    %1102 = vector.extract_strided_slice %1099 {offsets = [2, 0], sizes = [8, 64], strides = [1, 1]} : vector<10x64xf32> to vector<8x64xf32>
    %c4_685 = arith.constant 4 : index
    %c0_686 = arith.constant 0 : index
    %c0_687 = arith.constant 0 : index
    %1103 = vector.load %arg10[%c4_685, %c0_686, %c0_687] : memref<10x10x64xf32, #tpu.memory_space<vmem>>, vector<1x10x64xf32>
    %1104 = vector.shape_cast %1103 : vector<1x10x64xf32> to vector<10x64xf32>
    %1105 = vector.extract_strided_slice %1104 {offsets = [0, 0], sizes = [8, 64], strides = [1, 1]} : vector<10x64xf32> to vector<8x64xf32>
    %1106 = vector.extract_strided_slice %1104 {offsets = [1, 0], sizes = [8, 64], strides = [1, 1]} : vector<10x64xf32> to vector<8x64xf32>
    %1107 = vector.extract_strided_slice %1104 {offsets = [2, 0], sizes = [8, 64], strides = [1, 1]} : vector<10x64xf32> to vector<8x64xf32>
    %c5_688 = arith.constant 5 : index
    %c0_689 = arith.constant 0 : index
    %c0_690 = arith.constant 0 : index
    %1108 = vector.load %arg10[%c5_688, %c0_689, %c0_690] : memref<10x10x64xf32, #tpu.memory_space<vmem>>, vector<1x10x64xf32>
    %1109 = vector.shape_cast %1108 : vector<1x10x64xf32> to vector<10x64xf32>
    %1110 = vector.extract_strided_slice %1109 {offsets = [0, 0], sizes = [8, 64], strides = [1, 1]} : vector<10x64xf32> to vector<8x64xf32>
    %1111 = vector.extract_strided_slice %1109 {offsets = [1, 0], sizes = [8, 64], strides = [1, 1]} : vector<10x64xf32> to vector<8x64xf32>
    %1112 = vector.extract_strided_slice %1109 {offsets = [2, 0], sizes = [8, 64], strides = [1, 1]} : vector<10x64xf32> to vector<8x64xf32>
    %1113 = tpu.concatenate %1100, %1101, %1102, %1105, %1106, %1107, %1110, %1111, %1112 in 1 : vector<8x64xf32>, vector<8x64xf32>, vector<8x64xf32>, vector<8x64xf32>, vector<8x64xf32>, vector<8x64xf32>, vector<8x64xf32>, vector<8x64xf32>, vector<8x64xf32> -> vector<8x576xf32>
    %c4_691 = arith.constant 4 : index
    %c0_692 = arith.constant 0 : index
    %c0_693 = arith.constant 0 : index
    %1114 = vector.load %arg10[%c4_691, %c0_692, %c0_693] : memref<10x10x64xf32, #tpu.memory_space<vmem>>, vector<1x10x64xf32>
    %1115 = vector.shape_cast %1114 : vector<1x10x64xf32> to vector<10x64xf32>
    %1116 = vector.extract_strided_slice %1115 {offsets = [0, 0], sizes = [8, 64], strides = [1, 1]} : vector<10x64xf32> to vector<8x64xf32>
    %1117 = vector.extract_strided_slice %1115 {offsets = [1, 0], sizes = [8, 64], strides = [1, 1]} : vector<10x64xf32> to vector<8x64xf32>
    %1118 = vector.extract_strided_slice %1115 {offsets = [2, 0], sizes = [8, 64], strides = [1, 1]} : vector<10x64xf32> to vector<8x64xf32>
    %c5_694 = arith.constant 5 : index
    %c0_695 = arith.constant 0 : index
    %c0_696 = arith.constant 0 : index
    %1119 = vector.load %arg10[%c5_694, %c0_695, %c0_696] : memref<10x10x64xf32, #tpu.memory_space<vmem>>, vector<1x10x64xf32>
    %1120 = vector.shape_cast %1119 : vector<1x10x64xf32> to vector<10x64xf32>
    %1121 = vector.extract_strided_slice %1120 {offsets = [0, 0], sizes = [8, 64], strides = [1, 1]} : vector<10x64xf32> to vector<8x64xf32>
    %1122 = vector.extract_strided_slice %1120 {offsets = [1, 0], sizes = [8, 64], strides = [1, 1]} : vector<10x64xf32> to vector<8x64xf32>
    %1123 = vector.extract_strided_slice %1120 {offsets = [2, 0], sizes = [8, 64], strides = [1, 1]} : vector<10x64xf32> to vector<8x64xf32>
    %c6_697 = arith.constant 6 : index
    %c0_698 = arith.constant 0 : index
    %c0_699 = arith.constant 0 : index
    %1124 = vector.load %arg10[%c6_697, %c0_698, %c0_699] : memref<10x10x64xf32, #tpu.memory_space<vmem>>, vector<1x10x64xf32>
    %1125 = vector.shape_cast %1124 : vector<1x10x64xf32> to vector<10x64xf32>
    %1126 = vector.extract_strided_slice %1125 {offsets = [0, 0], sizes = [8, 64], strides = [1, 1]} : vector<10x64xf32> to vector<8x64xf32>
    %1127 = vector.extract_strided_slice %1125 {offsets = [1, 0], sizes = [8, 64], strides = [1, 1]} : vector<10x64xf32> to vector<8x64xf32>
    %1128 = vector.extract_strided_slice %1125 {offsets = [2, 0], sizes = [8, 64], strides = [1, 1]} : vector<10x64xf32> to vector<8x64xf32>
    %1129 = tpu.concatenate %1116, %1117, %1118, %1121, %1122, %1123, %1126, %1127, %1128 in 1 : vector<8x64xf32>, vector<8x64xf32>, vector<8x64xf32>, vector<8x64xf32>, vector<8x64xf32>, vector<8x64xf32>, vector<8x64xf32>, vector<8x64xf32>, vector<8x64xf32> -> vector<8x576xf32>
    %c5_700 = arith.constant 5 : index
    %c0_701 = arith.constant 0 : index
    %c0_702 = arith.constant 0 : index
    %1130 = vector.load %arg10[%c5_700, %c0_701, %c0_702] : memref<10x10x64xf32, #tpu.memory_space<vmem>>, vector<1x10x64xf32>
    %1131 = vector.shape_cast %1130 : vector<1x10x64xf32> to vector<10x64xf32>
    %1132 = vector.extract_strided_slice %1131 {offsets = [0, 0], sizes = [8, 64], strides = [1, 1]} : vector<10x64xf32> to vector<8x64xf32>
    %1133 = vector.extract_strided_slice %1131 {offsets = [1, 0], sizes = [8, 64], strides = [1, 1]} : vector<10x64xf32> to vector<8x64xf32>
    %1134 = vector.extract_strided_slice %1131 {offsets = [2, 0], sizes = [8, 64], strides = [1, 1]} : vector<10x64xf32> to vector<8x64xf32>
    %c6_703 = arith.constant 6 : index
    %c0_704 = arith.constant 0 : index
    %c0_705 = arith.constant 0 : index
    %1135 = vector.load %arg10[%c6_703, %c0_704, %c0_705] : memref<10x10x64xf32, #tpu.memory_space<vmem>>, vector<1x10x64xf32>
    %1136 = vector.shape_cast %1135 : vector<1x10x64xf32> to vector<10x64xf32>
    %1137 = vector.extract_strided_slice %1136 {offsets = [0, 0], sizes = [8, 64], strides = [1, 1]} : vector<10x64xf32> to vector<8x64xf32>
    %1138 = vector.extract_strided_slice %1136 {offsets = [1, 0], sizes = [8, 64], strides = [1, 1]} : vector<10x64xf32> to vector<8x64xf32>
    %1139 = vector.extract_strided_slice %1136 {offsets = [2, 0], sizes = [8, 64], strides = [1, 1]} : vector<10x64xf32> to vector<8x64xf32>
    %c7_706 = arith.constant 7 : index
    %c0_707 = arith.constant 0 : index
    %c0_708 = arith.constant 0 : index
    %1140 = vector.load %arg10[%c7_706, %c0_707, %c0_708] : memref<10x10x64xf32, #tpu.memory_space<vmem>>, vector<1x10x64xf32>
    %1141 = vector.shape_cast %1140 : vector<1x10x64xf32> to vector<10x64xf32>
    %1142 = vector.extract_strided_slice %1141 {offsets = [0, 0], sizes = [8, 64], strides = [1, 1]} : vector<10x64xf32> to vector<8x64xf32>
    %1143 = vector.extract_strided_slice %1141 {offsets = [1, 0], sizes = [8, 64], strides = [1, 1]} : vector<10x64xf32> to vector<8x64xf32>
    %1144 = vector.extract_strided_slice %1141 {offsets = [2, 0], sizes = [8, 64], strides = [1, 1]} : vector<10x64xf32> to vector<8x64xf32>
    %1145 = tpu.concatenate %1132, %1133, %1134, %1137, %1138, %1139, %1142, %1143, %1144 in 1 : vector<8x64xf32>, vector<8x64xf32>, vector<8x64xf32>, vector<8x64xf32>, vector<8x64xf32>, vector<8x64xf32>, vector<8x64xf32>, vector<8x64xf32>, vector<8x64xf32> -> vector<8x576xf32>
    %c6_709 = arith.constant 6 : index
    %c0_710 = arith.constant 0 : index
    %c0_711 = arith.constant 0 : index
    %1146 = vector.load %arg10[%c6_709, %c0_710, %c0_711] : memref<10x10x64xf32, #tpu.memory_space<vmem>>, vector<1x10x64xf32>
    %1147 = vector.shape_cast %1146 : vector<1x10x64xf32> to vector<10x64xf32>
    %1148 = vector.extract_strided_slice %1147 {offsets = [0, 0], sizes = [8, 64], strides = [1, 1]} : vector<10x64xf32> to vector<8x64xf32>
    %1149 = vector.extract_strided_slice %1147 {offsets = [1, 0], sizes = [8, 64], strides = [1, 1]} : vector<10x64xf32> to vector<8x64xf32>
    %1150 = vector.extract_strided_slice %1147 {offsets = [2, 0], sizes = [8, 64], strides = [1, 1]} : vector<10x64xf32> to vector<8x64xf32>
    %c7_712 = arith.constant 7 : index
    %c0_713 = arith.constant 0 : index
    %c0_714 = arith.constant 0 : index
    %1151 = vector.load %arg10[%c7_712, %c0_713, %c0_714] : memref<10x10x64xf32, #tpu.memory_space<vmem>>, vector<1x10x64xf32>
    %1152 = vector.shape_cast %1151 : vector<1x10x64xf32> to vector<10x64xf32>
    %1153 = vector.extract_strided_slice %1152 {offsets = [0, 0], sizes = [8, 64], strides = [1, 1]} : vector<10x64xf32> to vector<8x64xf32>
    %1154 = vector.extract_strided_slice %1152 {offsets = [1, 0], sizes = [8, 64], strides = [1, 1]} : vector<10x64xf32> to vector<8x64xf32>
    %1155 = vector.extract_strided_slice %1152 {offsets = [2, 0], sizes = [8, 64], strides = [1, 1]} : vector<10x64xf32> to vector<8x64xf32>
    %c8_715 = arith.constant 8 : index
    %c0_716 = arith.constant 0 : index
    %c0_717 = arith.constant 0 : index
    %1156 = vector.load %arg10[%c8_715, %c0_716, %c0_717] : memref<10x10x64xf32, #tpu.memory_space<vmem>>, vector<1x10x64xf32>
    %1157 = vector.shape_cast %1156 : vector<1x10x64xf32> to vector<10x64xf32>
    %1158 = vector.extract_strided_slice %1157 {offsets = [0, 0], sizes = [8, 64], strides = [1, 1]} : vector<10x64xf32> to vector<8x64xf32>
    %1159 = vector.extract_strided_slice %1157 {offsets = [1, 0], sizes = [8, 64], strides = [1, 1]} : vector<10x64xf32> to vector<8x64xf32>
    %1160 = vector.extract_strided_slice %1157 {offsets = [2, 0], sizes = [8, 64], strides = [1, 1]} : vector<10x64xf32> to vector<8x64xf32>
    %1161 = tpu.concatenate %1148, %1149, %1150, %1153, %1154, %1155, %1158, %1159, %1160 in 1 : vector<8x64xf32>, vector<8x64xf32>, vector<8x64xf32>, vector<8x64xf32>, vector<8x64xf32>, vector<8x64xf32>, vector<8x64xf32>, vector<8x64xf32>, vector<8x64xf32> -> vector<8x576xf32>
    %c7_718 = arith.constant 7 : index
    %c0_719 = arith.constant 0 : index
    %c0_720 = arith.constant 0 : index
    %1162 = vector.load %arg10[%c7_718, %c0_719, %c0_720] : memref<10x10x64xf32, #tpu.memory_space<vmem>>, vector<1x10x64xf32>
    %1163 = vector.shape_cast %1162 : vector<1x10x64xf32> to vector<10x64xf32>
    %1164 = vector.extract_strided_slice %1163 {offsets = [0, 0], sizes = [8, 64], strides = [1, 1]} : vector<10x64xf32> to vector<8x64xf32>
    %1165 = vector.extract_strided_slice %1163 {offsets = [1, 0], sizes = [8, 64], strides = [1, 1]} : vector<10x64xf32> to vector<8x64xf32>
    %1166 = vector.extract_strided_slice %1163 {offsets = [2, 0], sizes = [8, 64], strides = [1, 1]} : vector<10x64xf32> to vector<8x64xf32>
    %c8_721 = arith.constant 8 : index
    %c0_722 = arith.constant 0 : index
    %c0_723 = arith.constant 0 : index
    %1167 = vector.load %arg10[%c8_721, %c0_722, %c0_723] : memref<10x10x64xf32, #tpu.memory_space<vmem>>, vector<1x10x64xf32>
    %1168 = vector.shape_cast %1167 : vector<1x10x64xf32> to vector<10x64xf32>
    %1169 = vector.extract_strided_slice %1168 {offsets = [0, 0], sizes = [8, 64], strides = [1, 1]} : vector<10x64xf32> to vector<8x64xf32>
    %1170 = vector.extract_strided_slice %1168 {offsets = [1, 0], sizes = [8, 64], strides = [1, 1]} : vector<10x64xf32> to vector<8x64xf32>
    %1171 = vector.extract_strided_slice %1168 {offsets = [2, 0], sizes = [8, 64], strides = [1, 1]} : vector<10x64xf32> to vector<8x64xf32>
    %c9_724 = arith.constant 9 : index
    %c0_725 = arith.constant 0 : index
    %c0_726 = arith.constant 0 : index
    %1172 = vector.load %arg10[%c9_724, %c0_725, %c0_726] : memref<10x10x64xf32, #tpu.memory_space<vmem>>, vector<1x10x64xf32>
    %1173 = vector.shape_cast %1172 : vector<1x10x64xf32> to vector<10x64xf32>
    %1174 = vector.extract_strided_slice %1173 {offsets = [0, 0], sizes = [8, 64], strides = [1, 1]} : vector<10x64xf32> to vector<8x64xf32>
    %1175 = vector.extract_strided_slice %1173 {offsets = [1, 0], sizes = [8, 64], strides = [1, 1]} : vector<10x64xf32> to vector<8x64xf32>
    %1176 = vector.extract_strided_slice %1173 {offsets = [2, 0], sizes = [8, 64], strides = [1, 1]} : vector<10x64xf32> to vector<8x64xf32>
    %1177 = tpu.concatenate %1164, %1165, %1166, %1169, %1170, %1171, %1174, %1175, %1176 in 1 : vector<8x64xf32>, vector<8x64xf32>, vector<8x64xf32>, vector<8x64xf32>, vector<8x64xf32>, vector<8x64xf32>, vector<8x64xf32>, vector<8x64xf32>, vector<8x64xf32> -> vector<8x576xf32>
    %1178 = tpu.concatenate %1065, %1081, %1097, %1113, %1129, %1145, %1161, %1177 in 0 : vector<8x576xf32>, vector<8x576xf32>, vector<8x576xf32>, vector<8x576xf32>, vector<8x576xf32>, vector<8x576xf32>, vector<8x576xf32>, vector<8x576xf32> -> vector<64x576xf32>
    %c0_727 = arith.constant 0 : index
    %c0_728 = arith.constant 0 : index
    %1179 = vector.load %arg6[%c0_727, %c0_728] : memref<576x64xf32, #tpu.memory_space<vmem>>, vector<576x64xf32>
    %cst_729 = arith.constant dense<0.000000e+00> : vector<64x64xf32>
    %1180 = tpu.matmul %1178, %1179, %cst_729 {dimension_numbers = #tpu.dot_dimension_numbers<[1], [0], [0], [1], [0, 0, 1, 1], [], []>} : vector<64x576xf32>, vector<576x64xf32>, vector<64x64xf32> -> vector<64x64xf32>
    %c0_730 = arith.constant 0 : index
    %c0_731 = arith.constant 0 : index
    %1181 = vector.load %arg7[%c0_730, %c0_731] : memref<1x64xf32, #tpu.memory_space<vmem>>, vector<1x64xf32>
    %1182 = vector.broadcast %1181 : vector<1x64xf32> to vector<64x64xf32>
    %1183 = arith.addf %1180, %1182 : vector<64x64xf32>
    %cst_732 = arith.constant 0.000000e+00 : f32
    %1184 = vector.broadcast %cst_732 : f32 to vector<64x64xf32>
    %1185 = arith.maximumf %1183, %1184 : vector<64x64xf32>
    %c0_733 = arith.constant 0 : index
    %c0_734 = arith.constant 0 : index
    %c0_735 = arith.constant 0 : index
    %1186 = vector.load %arg8[%c0_733, %c0_734, %c0_735] : memref<1x64x64xf32, #tpu.memory_space<vmem>>, vector<1x64x64xf32>
    %1187 = vector.shape_cast %1186 : vector<1x64x64xf32> to vector<64x64xf32>
    %1188 = vector.shape_cast %1185 : vector<64x64xf32> to vector<1x64x64xf32>
    tpu.vector_store %arg8[%c0_733, %c0_734, %c0_735], %1188 {strides = array<i32>} : memref<1x64x64xf32, #tpu.memory_space<vmem>>, vector<1x64x64xf32>,
    return
  }
  func.func @transform_0(%arg0: i32) -> (i32, i32, i32, i32) {
    %c0_i32 = arith.constant 0 : i32
    %c0_i32_0 = arith.constant 0 : i32
    %c0_i32_1 = arith.constant 0 : i32
    %c0_i32_2 = arith.constant 0 : i32
    return %arg0, %c0_i32, %c0_i32_0, %c0_i32_1 : i32, i32, i32, i32
  }
  func.func @transform_1(%arg0: i32) -> (i32, i32) {
    %c0_i32 = arith.constant 0 : i32
    %c0_i32_0 = arith.constant 0 : i32
    %c0_i32_1 = arith.constant 0 : i32
    return %c0_i32, %c0_i32_0 : i32, i32
  }
  func.func @transform_2(%arg0: i32) -> (i32, i32) {
    %c0_i32 = arith.constant 0 : i32
    %c0_i32_0 = arith.constant 0 : i32
    %c0_i32_1 = arith.constant 0 : i32
    return %c0_i32, %c0_i32_0 : i32, i32
  }
  func.func @transform_3(%arg0: i32) -> (i32, i32) {
    %c0_i32 = arith.constant 0 : i32
    %c0_i32_0 = arith.constant 0 : i32
    %c0_i32_1 = arith.constant 0 : i32
    return %c0_i32, %c0_i32_0 : i32, i32
  }
  func.func @transform_4(%arg0: i32) -> (i32, i32) {
    %c0_i32 = arith.constant 0 : i32
    %c0_i32_0 = arith.constant 0 : i32
    %c0_i32_1 = arith.constant 0 : i32
    return %c0_i32, %c0_i32_0 : i32, i32
  }
  func.func @transform_5(%arg0: i32) -> (i32, i32) {
    %c0_i32 = arith.constant 0 : i32
    %c0_i32_0 = arith.constant 0 : i32
    %c0_i32_1 = arith.constant 0 : i32
    return %c0_i32, %c0_i32_0 : i32, i32
  }
  func.func @transform_6(%arg0: i32) -> (i32, i32) {
    %c0_i32 = arith.constant 0 : i32
    %c0_i32_0 = arith.constant 0 : i32
    %c0_i32_1 = arith.constant 0 : i32
    return %c0_i32, %c0_i32_0 : i32, i32
  }
  func.func @transform_7(%arg0: i32) -> (i32, i32, i32) {
    %c0_i32 = arith.constant 0 : i32
    %c0_i32_0 = arith.constant 0 : i32
    %c0_i32_1 = arith.constant 0 : i32
    return %arg0, %c0_i32, %c0_i32_0 : i32, i32, i32
  }
}

module attributes {stable_mosaic.version = 11 : i64} {
  func.func @_fc_kernel(%arg0: memref<2x4096xf32, #tpu.memory_space<vmem>>, %arg1: memref<4096x128xf32, #tpu.memory_space<vmem>>, %arg2: memref<1x128xf32, #tpu.memory_space<vmem>>, %arg3: memref<2x128xf32, #tpu.memory_space<vmem>>) attributes {dimension_semantics = [], scalar_prefetch = 0 : i64, scratch_operands = 0 : i64, tpu.core_type = #tpu.core_type<tc>} {
    %c0 = arith.constant 0 : index
    %c0_0 = arith.constant 0 : index
    %0 = vector.load %arg0[%c0, %c0_0] : memref<2x4096xf32, #tpu.memory_space<vmem>>, vector<2x4096xf32>
    %c0_1 = arith.constant 0 : index
    %c0_2 = arith.constant 0 : index
    %1 = vector.load %arg1[%c0_1, %c0_2] : memref<4096x128xf32, #tpu.memory_space<vmem>>, vector<4096x128xf32>
    %cst = arith.constant dense<0.000000e+00> : vector<2x128xf32>
    %2 = tpu.matmul %0, %1, %cst {dimension_numbers = #tpu.dot_dimension_numbers<[1], [0], [0], [1], [0, 0, 1, 1], [], []>} : vector<2x4096xf32>, vector<4096x128xf32>, vector<2x128xf32> -> vector<2x128xf32>
    %c0_3 = arith.constant 0 : index
    %c0_4 = arith.constant 0 : index
    %3 = vector.load %arg2[%c0_3, %c0_4] : memref<1x128xf32, #tpu.memory_space<vmem>>, vector<1x128xf32>
    %4 = vector.broadcast %3 : vector<1x128xf32> to vector<2x128xf32>
    %5 = arith.addf %2, %4 : vector<2x128xf32>
    %c0_5 = arith.constant 0 : index
    %c0_6 = arith.constant 0 : index
    %6 = vector.load %arg3[%c0_5, %c0_6] : memref<2x128xf32, #tpu.memory_space<vmem>>, vector<2x128xf32>
    tpu.vector_store %arg3[%c0_5, %c0_6], %5 {strides = array<i32>} : memref<2x128xf32, #tpu.memory_space<vmem>>, vector<2x128xf32>,
    return
  }
}

</mosaic_0001>

<llo_original>
// kernel: tile.14
$region0: #{tile.14}
  #allocation0 [shape = 's32[1]{0}', space=sflag, size = 0x4, scoped, tag = 'scoped memory for tile.14']
  %s0 = inlined_call_operand.vmem [shape: f32[32], index: 0, kind: input, shape index: {}]
  %s1 = inlined_call_operand.vmem [shape: f32[4,32], index: 1, kind: output, shape index: {}]
  // Predicated region
  $region2: #{tile.14} parent=0 // pred_check
    _
  $region3: #{tile.14} parent=0 // pred_check_branch
    %3 = sbr.rel (0) target = $region5
  $region4: #{tile.14} parent=0 // pred_region
    _
  $region5: #{tile.14} parent=0 // pred_fallthru
    _
  %v4 = vld [vmem:[%s0] ss:$0 sm:$0xff]
  %5 = vst [vmem:[%s1] sm:$0xf] %v4

// kernel: tile.15
$region0: #{tile.15}
  %s0 = inlined_call_operand.vmem [shape: f32[4,32], index: 0, kind: input, shape index: {}]
  %s1 = inlined_call_operand.vmem [shape: f32[1,128], index: 1, kind: output, shape index: {}]
  $region1: #{tile.15} parent=0
    #allocation0 [shape = 'u8[4096]{0}', space=vmem, size = 0x1000, scoped, tag = 'scoped mem for output reshape']
    #allocation1 [shape = 'u8[4096]{0}', space=vmem, size = 0x1000, scoped, tag = 'scoped mem for input reshape']
    %s3 = sshllo.u32 0, 4
    %v4 = vld [vmem:[%s0] sm:%s3]
    %5 = vst [vmem:[#allocation1] sm:%s3] %v4
    %v6 = vld [vmem:[#allocation1] sm:$0x1]
    %vm7 = vcmask 261120
    %8 = vst.msk [vmem:[#allocation0] sm:$0x1] %vm7, %v6
    %s9 = scalar_lea.vmem [#allocation1], 3
    %v10 = vld [vmem:[%s9] sm:$0x1]
    %11 = vrot.lane.b32.xlu0 %v10, 96
    %v12 = vpop.permute.xlu0 %11
    %vm13 = vcmask 1048320
    %14 = vst.msk [vmem:[#allocation0] sm:$0x1] %vm13, %v12
    %s15 = scalar_lea.vmem [#allocation1], 2
    %v16 = vld [vmem:[%s15] sm:$0x1]
    %17 = vrot.lane.b32.xlu0 %v16, 64
    %v18 = vpop.permute.xlu0 %17
    %vm19 = vcmask 785920
    %20 = vst.msk [vmem:[#allocation0] sm:$0x1] %vm19, %v18
    %s21 = scalar_lea.vmem [#allocation1], 1
    %v22 = vld [vmem:[%s21] sm:$0x1]
    %23 = vrot.lane.b32.xlu0 %v22, 32
    %v24 = vpop.permute.xlu0 %23
    %vm25 = vcmask 523520
    %26 = vst.msk [vmem:[#allocation0] sm:$0x1] %vm25, %v24
    %s28 = sshllo.u32 0, 1
    %v30 = vld [vmem:[#allocation0] sm:%s28]
    %s31 = sshllo.u32 0, 1
    %32 = vst [vmem:[%s1] sm:%s31] %v30

// kernel: tile.19
$region0: #{tile.19}
  #allocation0 [shape = 's32[1]{0}', space=sflag, size = 0x4, scoped, tag = 'scoped memory for tile.19']
  %s0 = inlined_call_operand.vmem [shape: f32[64], index: 0, kind: input, shape index: {}]
  %s1 = inlined_call_operand.vmem [shape: f32[2,64], index: 1, kind: output, shape index: {}]
  // Predicated region
  $region2: #{tile.19} parent=0 // pred_check
    _
  $region3: #{tile.19} parent=0 // pred_check_branch
    %3 = sbr.rel (0) target = $region5
  $region4: #{tile.19} parent=0 // pred_region
    _
  $region5: #{tile.19} parent=0 // pred_fallthru
    _
  %v4 = vld [vmem:[%s0] ss:$0 sm:$0xff]
  %5 = vst [vmem:[%s1] sm:$0x3] %v4

// kernel: tile.20
$region0: #{tile.20}
  %s0 = inlined_call_operand.vmem [shape: f32[2,64], index: 0, kind: input, shape index: {}]
  %s1 = inlined_call_operand.vmem [shape: f32[1,128], index: 1, kind: output, shape index: {}]
  $region1: #{tile.20} parent=0
    #allocation0 [shape = 'u8[4096]{0}', space=vmem, size = 0x1000, scoped, tag = 'scoped mem for output reshape']
    #allocation1 [shape = 'u8[4096]{0}', space=vmem, size = 0x1000, scoped, tag = 'scoped mem for input reshape']
    %s3 = sshllo.u32 0, 2
    %v4 = vld [vmem:[%s0] sm:%s3]
    %5 = vst [vmem:[#allocation1] sm:%s3] %v4
    %v6 = vld [vmem:[#allocation1] sm:$0x1]
    %vm7 = vcmask 523264
    %8 = vst.msk [vmem:[#allocation0] sm:$0x1] %vm7, %v6
    %s9 = scalar_lea.vmem [#allocation1], 1
    %v10 = vld [vmem:[%s9] sm:$0x1]
    %11 = vrot.lane.b32.xlu0 %v10, 64
    %v12 = vpop.permute.xlu0 %11
    %vm13 = vcmask 1048064
    %14 = vst.msk [vmem:[#allocation0] sm:$0x1] %vm13, %v12
    %s16 = sshllo.u32 0, 1
    %v18 = vld [vmem:[#allocation0] sm:%s16]
    %s19 = sshllo.u32 0, 1
    %20 = vst [vmem:[%s1] sm:%s19] %v18

// kernel: forward.3
$region0: #{forward.3}
  #allocation0 [shape = 'u32[]', space=smem, size = 0x4, offset = 0x4, fixed_abs, tag = 'smem constant byte address 0x4 - core index']
  #allocation1 [shape = 'u32[144,128]{1,0:T(1,128)}', space=vmem, size = 0x12000, scoped, tag = 'internal scratch']
  %s0 = inlined_call_operand.vmem [shape: f32[2,4096], index: 0, kind: input, shape index: {}]
  %s1 = inlined_call_operand.vmem [shape: f32[4096,128], index: 1, kind: input, shape index: {}]
  %s2 = inlined_call_operand.vmem [shape: f32[1,128], index: 2, kind: input, shape index: {}]
  %s3 = inlined_call_operand.hbm [shape: f32[2,128], index: 3, kind: output, shape index: {}]
  %s4 = sld [smem:[#allocation0]]
  $region22: #{forward.3} parent=0
    _
  %s6 = ssub.s32 1, %s4
  %s7 = scalar_select 0, %s6, %s4
  $region1: #{forward.3} parent=0
    #allocation2 [shape = 'u8[1024]{0}', space=vmem, size = 0x400, scoped, tag = 'output window, operand 0, single buffered']
    #allocation3 [shape = 's32[1]{0}', space=sflag, size = 0x4, scoped, tag = 'scoped memory for forward.3']
    %8 = vsyncpa [#allocation3], 0
    // Predicated region
    $region2: #{forward.3} parent=1 // pred_check
      _
    $region3: #{forward.3} parent=1 // pred_check_branch
      %10 = sbr.rel (0) target = $region5
    $region4: #{forward.3} parent=1 // pred_region
      _
    $region5: #{forward.3} parent=1 // pred_fallthru
      _
    // Predicated region
    $region6: #{forward.3} parent=1 // pred_check
      _
    $region7: #{forward.3} parent=1 // pred_check_branch
      %12 = sbr.rel (0) target = $region9
    $region8: #{forward.3} parent=1 // pred_region
      _
    $region9: #{forward.3} parent=1 // pred_fallthru
      _
    // Predicated region
    $region10: #{forward.3} parent=1 // pred_check
      _
    $region11: #{forward.3} parent=1 // pred_check_branch
      %14 = sbr.rel (0) target = $region13
    $region12: #{forward.3} parent=1 // pred_region
      _
    $region13: #{forward.3} parent=1 // pred_fallthru
      _
    %v15 = vld [vmem:[%s0] sm:$0xff]
    %v16 = vld [vmem:[%s0 + $0x8] sm:$0xff]
    %v17 = vld [vmem:[%s0 + $0x10] sm:$0xff]
    %v18 = vld [vmem:[%s0 + $0x18] sm:$0xff]
    %v19 = vld [vmem:[%s0 + $0x20] sm:$0xff]
    %v20 = vld [vmem:[%s0 + $0x28] sm:$0xff]
    %v21 = vld [vmem:[%s0 + $0x30] sm:$0xff]
    %v22 = vld [vmem:[%s0 + $0x38] sm:$0xff]
    %v23 = vld [vmem:[%s1] sm:$0xff]
    %v24 = vld [vmem:[%s1 + $0x8] sm:$0xff]
    %v25 = vld [vmem:[%s1 + $0x10] sm:$0xff]
    %v26 = vld [vmem:[%s1 + $0x18] sm:$0xff]
    %v27 = vld [vmem:[%s1 + $0x20] sm:$0xff]
    %v28 = vld [vmem:[%s1 + $0x28] sm:$0xff]
    %v29 = vld [vmem:[%s1 + $0x30] sm:$0xff]
    %v30 = vld [vmem:[%s1 + $0x38] sm:$0xff]
    %v31 = vld [vmem:[%s1 + $0x40] sm:$0xff]
    %v32 = vld [vmem:[%s1 + $0x48] sm:$0xff]
    %v33 = vld [vmem:[%s1 + $0x50] sm:$0xff]
    %v34 = vld [vmem:[%s1 + $0x58] sm:$0xff]
    %v35 = vld [vmem:[%s1 + $0x60] sm:$0xff]
    %v36 = vld [vmem:[%s1 + $0x68] sm:$0xff]
    %v37 = vld [vmem:[%s1 + $0x70] sm:$0xff]
    %v38 = vld [vmem:[%s1 + $0x78] sm:$0xff]
    %v39 = vld [vmem:[%s1 + $0x80] sm:$0xff]
    %v40 = vld [vmem:[%s1 + $0x88] sm:$0xff]
    %v41 = vld [vmem:[%s1 + $0x90] sm:$0xff]
    %v42 = vld [vmem:[%s1 + $0x98] sm:$0xff]
    %v43 = vld [vmem:[%s1 + $0xa0] sm:$0xff]
    %v44 = vld [vmem:[%s1 + $0xa8] sm:$0xff]
    %v45 = vld [vmem:[%s1 + $0xb0] sm:$0xff]
    %v46 = vld [vmem:[%s1 + $0xb8] sm:$0xff]
    %v47 = vld [vmem:[%s1 + $0xc0] sm:$0xff]
    %v48 = vld [vmem:[%s1 + $0xc8] sm:$0xff]
    %v49 = vld [vmem:[%s1 + $0xd0] sm:$0xff]
    %v50 = vld [vmem:[%s1 + $0xd8] sm:$0xff]
    %v51 = vld [vmem:[%s1 + $0xe0] sm:$0xff]
    %v52 = vld [vmem:[%s1 + $0xe8] sm:$0xff]
    %v53 = vld [vmem:[%s1 + $0xf0] sm:$0xff]
    %v54 = vld [vmem:[%s1 + $0xf8] sm:$0xff]
    %v55 = vld [vmem:[%s1 + $0x100] sm:$0xff]
    %v56 = vld [vmem:[%s1 + $0x108] sm:$0xff]
    %v57 = vld [vmem:[%s1 + $0x110] sm:$0xff]
    %v58 = vld [vmem:[%s1 + $0x118] sm:$0xff]
    %v59 = vld [vmem:[%s1 + $0x120] sm:$0xff]
    %v60 = vld [vmem:[%s1 + $0x128] sm:$0xff]
    %v61 = vld [vmem:[%s1 + $0x130] sm:$0xff]
    %v62 = vld [vmem:[%s1 + $0x138] sm:$0xff]
    %v63 = vld [vmem:[%s1 + $0x140] sm:$0xff]
    %v64 = vld [vmem:[%s1 + $0x148] sm:$0xff]
    %v65 = vld [vmem:[%s1 + $0x150] sm:$0xff]
    %v66 = vld [vmem:[%s1 + $0x158] sm:$0xff]
    %v67 = vld [vmem:[%s1 + $0x160] sm:$0xff]
    %v68 = vld [vmem:[%s1 + $0x168] sm:$0xff]
    %v69 = vld [vmem:[%s1 + $0x170] sm:$0xff]
    %v70 = vld [vmem:[%s1 + $0x178] sm:$0xff]
    %v71 = vld [vmem:[%s1 + $0x180] sm:$0xff]
    %v72 = vld [vmem:[%s1 + $0x188] sm:$0xff]
    %v73 = vld [vmem:[%s1 + $0x190] sm:$0xff]
    %v74 = vld [vmem:[%s1 + $0x198] sm:$0xff]
    %v75 = vld [vmem:[%s1 + $0x1a0] sm:$0xff]
    %v76 = vld [vmem:[%s1 + $0x1a8] sm:$0xff]
    %v77 = vld [vmem:[%s1 + $0x1b0] sm:$0xff]
    %v78 = vld [vmem:[%s1 + $0x1b8] sm:$0xff]
    %v79 = vld [vmem:[%s1 + $0x1c0] sm:$0xff]
    %v80 = vld [vmem:[%s1 + $0x1c8] sm:$0xff]
    %v81 = vld [vmem:[%s1 + $0x1d0] sm:$0xff]
    %v82 = vld [vmem:[%s1 + $0x1d8] sm:$0xff]
    %v83 = vld [vmem:[%s1 + $0x1e0] sm:$0xff]
    %v84 = vld [vmem:[%s1 + $0x1e8] sm:$0xff]
    %v85 = vld [vmem:[%s1 + $0x1f0] sm:$0xff]
    %v86 = vld [vmem:[%s1 + $0x1f8] sm:$0xff]
    %v87 = vld [vmem:[%s1 + $0x200] sm:$0xff]
    %v88 = vld [vmem:[%s1 + $0x208] sm:$0xff]
    %v89 = vld [vmem:[%s1 + $0x210] sm:$0xff]
    %v90 = vld [vmem:[%s1 + $0x218] sm:$0xff]
    %v91 = vld [vmem:[%s1 + $0x220] sm:$0xff]
    %v92 = vld [vmem:[%s1 + $0x228] sm:$0xff]
    %v93 = vld [vmem:[%s1 + $0x230] sm:$0xff]
    %v94 = vld [vmem:[%s1 + $0x238] sm:$0xff]
    %v95 = vld [vmem:[%s1 + $0x240] sm:$0xff]
    %v96 = vld [vmem:[%s1 + $0x248] sm:$0xff]
    %v97 = vld [vmem:[%s1 + $0x250] sm:$0xff]
    %v98 = vld [vmem:[%s1 + $0x258] sm:$0xff]
    %v99 = vld [vmem:[%s1 + $0x260] sm:$0xff]
    %v100 = vld [vmem:[%s1 + $0x268] sm:$0xff]
    %v101 = vld [vmem:[%s1 + $0x270] sm:$0xff]
    %v102 = vld [vmem:[%s1 + $0x278] sm:$0xff]
    %v103 = vld [vmem:[%s1 + $0x280] sm:$0xff]
    %v104 = vld [vmem:[%s1 + $0x288] sm:$0xff]
    %v105 = vld [vmem:[%s1 + $0x290] sm:$0xff]
    %v106 = vld [vmem:[%s1 + $0x298] sm:$0xff]
    %v107 = vld [vmem:[%s1 + $0x2a0] sm:$0xff]
    %v108 = vld [vmem:[%s1 + $0x2a8] sm:$0xff]
    %v109 = vld [vmem:[%s1 + $0x2b0] sm:$0xff]
    %v110 = vld [vmem:[%s1 + $0x2b8] sm:$0xff]
    %v111 = vld [vmem:[%s1 + $0x2c0] sm:$0xff]
    %v112 = vld [vmem:[%s1 + $0x2c8] sm:$0xff]
    %v113 = vld [vmem:[%s1 + $0x2d0] sm:$0xff]
    %v114 = vld [vmem:[%s1 + $0x2d8] sm:$0xff]
    %v115 = vld [vmem:[%s1 + $0x2e0] sm:$0xff]
    %v116 = vld [vmem:[%s1 + $0x2e8] sm:$0xff]
    %v117 = vld [vmem:[%s1 + $0x2f0] sm:$0xff]
    %v118 = vld [vmem:[%s1 + $0x2f8] sm:$0xff]
    %v119 = vld [vmem:[%s1 + $0x300] sm:$0xff]
    %v120 = vld [vmem:[%s1 + $0x308] sm:$0xff]
    %v121 = vld [vmem:[%s1 + $0x310] sm:$0xff]
    %v122 = vld [vmem:[%s1 + $0x318] sm:$0xff]
    %v123 = vld [vmem:[%s1 + $0x320] sm:$0xff]
    %v124 = vld [vmem:[%s1 + $0x328] sm:$0xff]
    %v125 = vld [vmem:[%s1 + $0x330] sm:$0xff]
    %v126 = vld [vmem:[%s1 + $0x338] sm:$0xff]
    %v127 = vld [vmem:[%s1 + $0x340] sm:$0xff]
    %v128 = vld [vmem:[%s1 + $0x348] sm:$0xff]
    %v129 = vld [vmem:[%s1 + $0x350] sm:$0xff]
    %v130 = vld [vmem:[%s1 + $0x358] sm:$0xff]
    %v131 = vld [vmem:[%s1 + $0x360] sm:$0xff]
    %v132 = vld [vmem:[%s1 + $0x368] sm:$0xff]
    %v133 = vld [vmem:[%s1 + $0x370] sm:$0xff]
    %v134 = vld [vmem:[%s1 + $0x378] sm:$0xff]
    %v135 = vld [vmem:[%s1 + $0x380] sm:$0xff]
    %v136 = vld [vmem:[%s1 + $0x388] sm:$0xff]
    %v137 = vld [vmem:[%s1 + $0x390] sm:$0xff]
    %v138 = vld [vmem:[%s1 + $0x398] sm:$0xff]
    %v139 = vld [vmem:[%s1 + $0x3a0] sm:$0xff]
    %v140 = vld [vmem:[%s1 + $0x3a8] sm:$0xff]
    %v141 = vld [vmem:[%s1 + $0x3b0] sm:$0xff]
    %v142 = vld [vmem:[%s1 + $0x3b8] sm:$0xff]
    %v143 = vld [vmem:[%s1 + $0x3c0] sm:$0xff]
    %v144 = vld [vmem:[%s1 + $0x3c8] sm:$0xff]
    %v145 = vld [vmem:[%s1 + $0x3d0] sm:$0xff]
    %v146 = vld [vmem:[%s1 + $0x3d8] sm:$0xff]
    %v147 = vld [vmem:[%s1 + $0x3e0] sm:$0xff]
    %v148 = vld [vmem:[%s1 + $0x3e8] sm:$0xff]
    %v149 = vld [vmem:[%s1 + $0x3f0] sm:$0xff]
    %v150 = vld [vmem:[%s1 + $0x3f8] sm:$0xff]
    %v151 = vld [vmem:[%s1 + $0x400] sm:$0xff]
    %v152 = vld [vmem:[%s1 + $0x408] sm:$0xff]
    %v153 = vld [vmem:[%s1 + $0x410] sm:$0xff]
    %v154 = vld [vmem:[%s1 + $0x418] sm:$0xff]
    %v155 = vld [vmem:[%s1 + $0x420] sm:$0xff]
    %v156 = vld [vmem:[%s1 + $0x428] sm:$0xff]
    %v157 = vld [vmem:[%s1 + $0x430] sm:$0xff]
    %v158 = vld [vmem:[%s1 + $0x438] sm:$0xff]
    %v159 = vld [vmem:[%s1 + $0x440] sm:$0xff]
    %v160 = vld [vmem:[%s1 + $0x448] sm:$0xff]
    %v161 = vld [vmem:[%s1 + $0x450] sm:$0xff]
    %v162 = vld [vmem:[%s1 + $0x458] sm:$0xff]
    %v163 = vld [vmem:[%s1 + $0x460] sm:$0xff]
    %v164 = vld [vmem:[%s1 + $0x468] sm:$0xff]
    %v165 = vld [vmem:[%s1 + $0x470] sm:$0xff]
    %v166 = vld [vmem:[%s1 + $0x478] sm:$0xff]
    %v167 = vld [vmem:[%s1 + $0x480] sm:$0xff]
    %v168 = vld [vmem:[%s1 + $0x488] sm:$0xff]
    %v169 = vld [vmem:[%s1 + $0x490] sm:$0xff]
    %v170 = vld [vmem:[%s1 + $0x498] sm:$0xff]
    %v171 = vld [vmem:[%s1 + $0x4a0] sm:$0xff]
    %v172 = vld [vmem:[%s1 + $0x4a8] sm:$0xff]
    %v173 = vld [vmem:[%s1 + $0x4b0] sm:$0xff]
    %v174 = vld [vmem:[%s1 + $0x4b8] sm:$0xff]
    %v175 = vld [vmem:[%s1 + $0x4c0] sm:$0xff]
    %v176 = vld [vmem:[%s1 + $0x4c8] sm:$0xff]
    %v177 = vld [vmem:[%s1 + $0x4d0] sm:$0xff]
    %v178 = vld [vmem:[%s1 + $0x4d8] sm:$0xff]
    %v179 = vld [vmem:[%s1 + $0x4e0] sm:$0xff]
    %v180 = vld [vmem:[%s1 + $0x4e8] sm:$0xff]
    %v181 = vld [vmem:[%s1 + $0x4f0] sm:$0xff]
    %v182 = vld [vmem:[%s1 + $0x4f8] sm:$0xff]
    %v183 = vld [vmem:[%s1 + $0x500] sm:$0xff]
    %v184 = vld [vmem:[%s1 + $0x508] sm:$0xff]
    %v185 = vld [vmem:[%s1 + $0x510] sm:$0xff]
    %v186 = vld [vmem:[%s1 + $0x518] sm:$0xff]
    %v187 = vld [vmem:[%s1 + $0x520] sm:$0xff]
    %v188 = vld [vmem:[%s1 + $0x528] sm:$0xff]
    %v189 = vld [vmem:[%s1 + $0x530] sm:$0xff]
    %v190 = vld [vmem:[%s1 + $0x538] sm:$0xff]
    %v191 = vld [vmem:[%s1 + $0x540] sm:$0xff]
    %v192 = vld [vmem:[%s1 + $0x548] sm:$0xff]
    %v193 = vld [vmem:[%s1 + $0x550] sm:$0xff]
    %v194 = vld [vmem:[%s1 + $0x558] sm:$0xff]
    %v195 = vld [vmem:[%s1 + $0x560] sm:$0xff]
    %v196 = vld [vmem:[%s1 + $0x568] sm:$0xff]
    %v197 = vld [vmem:[%s1 + $0x570] sm:$0xff]
    %v198 = vld [vmem:[%s1 + $0x578] sm:$0xff]
    %v199 = vld [vmem:[%s1 + $0x580] sm:$0xff]
    %v200 = vld [vmem:[%s1 + $0x588] sm:$0xff]
    %v201 = vld [vmem:[%s1 + $0x590] sm:$0xff]
    %v202 = vld [vmem:[%s1 + $0x598] sm:$0xff]
    %v203 = vld [vmem:[%s1 + $0x5a0] sm:$0xff]
    %v204 = vld [vmem:[%s1 + $0x5a8] sm:$0xff]
    %v205 = vld [vmem:[%s1 + $0x5b0] sm:$0xff]
    %v206 = vld [vmem:[%s1 + $0x5b8] sm:$0xff]
    %v207 = vld [vmem:[%s1 + $0x5c0] sm:$0xff]
    %v208 = vld [vmem:[%s1 + $0x5c8] sm:$0xff]
    %v209 = vld [vmem:[%s1 + $0x5d0] sm:$0xff]
    %v210 = vld [vmem:[%s1 + $0x5d8] sm:$0xff]
    %v211 = vld [vmem:[%s1 + $0x5e0] sm:$0xff]
    %v212 = vld [vmem:[%s1 + $0x5e8] sm:$0xff]
    %v213 = vld [vmem:[%s1 + $0x5f0] sm:$0xff]
    %v214 = vld [vmem:[%s1 + $0x5f8] sm:$0xff]
    %v215 = vld [vmem:[%s1 + $0x600] sm:$0xff]
    %v216 = vld [vmem:[%s1 + $0x608] sm:$0xff]
    %v217 = vld [vmem:[%s1 + $0x610] sm:$0xff]
    %v218 = vld [vmem:[%s1 + $0x618] sm:$0xff]
    %v219 = vld [vmem:[%s1 + $0x620] sm:$0xff]
    %v220 = vld [vmem:[%s1 + $0x628] sm:$0xff]
    %v221 = vld [vmem:[%s1 + $0x630] sm:$0xff]
    %v222 = vld [vmem:[%s1 + $0x638] sm:$0xff]
    %v223 = vld [vmem:[%s1 + $0x640] sm:$0xff]
    %v224 = vld [vmem:[%s1 + $0x648] sm:$0xff]
    %v225 = vld [vmem:[%s1 + $0x650] sm:$0xff]
    %v226 = vld [vmem:[%s1 + $0x658] sm:$0xff]
    %v227 = vld [vmem:[%s1 + $0x660] sm:$0xff]
    %v228 = vld [vmem:[%s1 + $0x668] sm:$0xff]
    %v229 = vld [vmem:[%s1 + $0x670] sm:$0xff]
    %v230 = vld [vmem:[%s1 + $0x678] sm:$0xff]
    %v231 = vld [vmem:[%s1 + $0x680] sm:$0xff]
    %v232 = vld [vmem:[%s1 + $0x688] sm:$0xff]
    %v233 = vld [vmem:[%s1 + $0x690] sm:$0xff]
    %v234 = vld [vmem:[%s1 + $0x698] sm:$0xff]
    %v235 = vld [vmem:[%s1 + $0x6a0] sm:$0xff]
    %v236 = vld [vmem:[%s1 + $0x6a8] sm:$0xff]
    %v237 = vld [vmem:[%s1 + $0x6b0] sm:$0xff]
    %v238 = vld [vmem:[%s1 + $0x6b8] sm:$0xff]
    %v239 = vld [vmem:[%s1 + $0x6c0] sm:$0xff]
    %v240 = vld [vmem:[%s1 + $0x6c8] sm:$0xff]
    %v241 = vld [vmem:[%s1 + $0x6d0] sm:$0xff]
    %v242 = vld [vmem:[%s1 + $0x6d8] sm:$0xff]
    %v243 = vld [vmem:[%s1 + $0x6e0] sm:$0xff]
    %v244 = vld [vmem:[%s1 + $0x6e8] sm:$0xff]
    %v245 = vld [vmem:[%s1 + $0x6f0] sm:$0xff]
    %v246 = vld [vmem:[%s1 + $0x6f8] sm:$0xff]
    %v247 = vld [vmem:[%s1 + $0x700] sm:$0xff]
    %v248 = vld [vmem:[%s1 + $0x708] sm:$0xff]
    %v249 = vld [vmem:[%s1 + $0x710] sm:$0xff]
    %v250 = vld [vmem:[%s1 + $0x718] sm:$0xff]
    %v251 = vld [vmem:[%s1 + $0x720] sm:$0xff]
    %v252 = vld [vmem:[%s1 + $0x728] sm:$0xff]
    %v253 = vld [vmem:[%s1 + $0x730] sm:$0xff]
    %v254 = vld [vmem:[%s1 + $0x738] sm:$0xff]
    %v255 = vld [vmem:[%s1 + $0x740] sm:$0xff]
    %v256 = vld [vmem:[%s1 + $0x748] sm:$0xff]
    %v257 = vld [vmem:[%s1 + $0x750] sm:$0xff]
    %v258 = vld [vmem:[%s1 + $0x758] sm:$0xff]
    %v259 = vld [vmem:[%s1 + $0x760] sm:$0xff]
    %v260 = vld [vmem:[%s1 + $0x768] sm:$0xff]
    %v261 = vld [vmem:[%s1 + $0x770] sm:$0xff]
    %v262 = vld [vmem:[%s1 + $0x778] sm:$0xff]
    %v263 = vld [vmem:[%s1 + $0x780] sm:$0xff]
    %v264 = vld [vmem:[%s1 + $0x788] sm:$0xff]
    %v265 = vld [vmem:[%s1 + $0x790] sm:$0xff]
    %v266 = vld [vmem:[%s1 + $0x798] sm:$0xff]
    %v267 = vld [vmem:[%s1 + $0x7a0] sm:$0xff]
    %v268 = vld [vmem:[%s1 + $0x7a8] sm:$0xff]
    %v269 = vld [vmem:[%s1 + $0x7b0] sm:$0xff]
    %v270 = vld [vmem:[%s1 + $0x7b8] sm:$0xff]
    %v271 = vld [vmem:[%s1 + $0x7c0] sm:$0xff]
    %v272 = vld [vmem:[%s1 + $0x7c8] sm:$0xff]
    %v273 = vld [vmem:[%s1 + $0x7d0] sm:$0xff]
    %v274 = vld [vmem:[%s1 + $0x7d8] sm:$0xff]
    %v275 = vld [vmem:[%s1 + $0x7e0] sm:$0xff]
    %v276 = vld [vmem:[%s1 + $0x7e8] sm:$0xff]
    %v277 = vld [vmem:[%s1 + $0x7f0] sm:$0xff]
    %v278 = vld [vmem:[%s1 + $0x7f8] sm:$0xff]
    %v279 = vld [vmem:[%s1 + $0x800] sm:$0xff]
    %v280 = vld [vmem:[%s1 + $0x808] sm:$0xff]
    %v281 = vld [vmem:[%s1 + $0x810] sm:$0xff]
    %v282 = vld [vmem:[%s1 + $0x818] sm:$0xff]
    %v283 = vld [vmem:[%s1 + $0x820] sm:$0xff]
    %v284 = vld [vmem:[%s1 + $0x828] sm:$0xff]
    %v285 = vld [vmem:[%s1 + $0x830] sm:$0xff]
    %v286 = vld [vmem:[%s1 + $0x838] sm:$0xff]
    %v287 = vld [vmem:[%s1 + $0x840] sm:$0xff]
    %v288 = vld [vmem:[%s1 + $0x848] sm:$0xff]
    %v289 = vld [vmem:[%s1 + $0x850] sm:$0xff]
    %v290 = vld [vmem:[%s1 + $0x858] sm:$0xff]
    %v291 = vld [vmem:[%s1 + $0x860] sm:$0xff]
    %v292 = vld [vmem:[%s1 + $0x868] sm:$0xff]
    %v293 = vld [vmem:[%s1 + $0x870] sm:$0xff]
    %v294 = vld [vmem:[%s1 + $0x878] sm:$0xff]
    %v295 = vld [vmem:[%s1 + $0x880] sm:$0xff]
    %v296 = vld [vmem:[%s1 + $0x888] sm:$0xff]
    %v297 = vld [vmem:[%s1 + $0x890] sm:$0xff]
    %v298 = vld [vmem:[%s1 + $0x898] sm:$0xff]
    %v299 = vld [vmem:[%s1 + $0x8a0] sm:$0xff]
    %v300 = vld [vmem:[%s1 + $0x8a8] sm:$0xff]
    %v301 = vld [vmem:[%s1 + $0x8b0] sm:$0xff]
    %v302 = vld [vmem:[%s1 + $0x8b8] sm:$0xff]
    %v303 = vld [vmem:[%s1 + $0x8c0] sm:$0xff]
    %v304 = vld [vmem:[%s1 + $0x8c8] sm:$0xff]
    %v305 = vld [vmem:[%s1 + $0x8d0] sm:$0xff]
    %v306 = vld [vmem:[%s1 + $0x8d8] sm:$0xff]
    %v307 = vld [vmem:[%s1 + $0x8e0] sm:$0xff]
    %v308 = vld [vmem:[%s1 + $0x8e8] sm:$0xff]
    %v309 = vld [vmem:[%s1 + $0x8f0] sm:$0xff]
    %v310 = vld [vmem:[%s1 + $0x8f8] sm:$0xff]
    %v311 = vld [vmem:[%s1 + $0x900] sm:$0xff]
    %v312 = vld [vmem:[%s1 + $0x908] sm:$0xff]
    %v313 = vld [vmem:[%s1 + $0x910] sm:$0xff]
    %v314 = vld [vmem:[%s1 + $0x918] sm:$0xff]
    %v315 = vld [vmem:[%s1 + $0x920] sm:$0xff]
    %v316 = vld [vmem:[%s1 + $0x928] sm:$0xff]
    %v317 = vld [vmem:[%s1 + $0x930] sm:$0xff]
    %v318 = vld [vmem:[%s1 + $0x938] sm:$0xff]
    %v319 = vld [vmem:[%s1 + $0x940] sm:$0xff]
    %v320 = vld [vmem:[%s1 + $0x948] sm:$0xff]
    %v321 = vld [vmem:[%s1 + $0x950] sm:$0xff]
    %v322 = vld [vmem:[%s1 + $0x958] sm:$0xff]
    %v323 = vld [vmem:[%s1 + $0x960] sm:$0xff]
    %v324 = vld [vmem:[%s1 + $0x968] sm:$0xff]
    %v325 = vld [vmem:[%s1 + $0x970] sm:$0xff]
    %v326 = vld [vmem:[%s1 + $0x978] sm:$0xff]
    %v327 = vld [vmem:[%s1 + $0x980] sm:$0xff]
    %v328 = vld [vmem:[%s1 + $0x988] sm:$0xff]
    %v329 = vld [vmem:[%s1 + $0x990] sm:$0xff]
    %v330 = vld [vmem:[%s1 + $0x998] sm:$0xff]
    %v331 = vld [vmem:[%s1 + $0x9a0] sm:$0xff]
    %v332 = vld [vmem:[%s1 + $0x9a8] sm:$0xff]
    %v333 = vld [vmem:[%s1 + $0x9b0] sm:$0xff]
    %v334 = vld [vmem:[%s1 + $0x9b8] sm:$0xff]
    %v335 = vld [vmem:[%s1 + $0x9c0] sm:$0xff]
    %v336 = vld [vmem:[%s1 + $0x9c8] sm:$0xff]
    %v337 = vld [vmem:[%s1 + $0x9d0] sm:$0xff]
    %v338 = vld [vmem:[%s1 + $0x9d8] sm:$0xff]
    %v339 = vld [vmem:[%s1 + $0x9e0] sm:$0xff]
    %v340 = vld [vmem:[%s1 + $0x9e8] sm:$0xff]
    %v341 = vld [vmem:[%s1 + $0x9f0] sm:$0xff]
    %v342 = vld [vmem:[%s1 + $0x9f8] sm:$0xff]
    %v343 = vld [vmem:[%s1 + $0xa00] sm:$0xff]
    %v344 = vld [vmem:[%s1 + $0xa08] sm:$0xff]
    %v345 = vld [vmem:[%s1 + $0xa10] sm:$0xff]
    %v346 = vld [vmem:[%s1 + $0xa18] sm:$0xff]
    %v347 = vld [vmem:[%s1 + $0xa20] sm:$0xff]
    %v348 = vld [vmem:[%s1 + $0xa28] sm:$0xff]
    %v349 = vld [vmem:[%s1 + $0xa30] sm:$0xff]
    %v350 = vld [vmem:[%s1 + $0xa38] sm:$0xff]
    %v351 = vld [vmem:[%s1 + $0xa40] sm:$0xff]
    %v352 = vld [vmem:[%s1 + $0xa48] sm:$0xff]
    %v353 = vld [vmem:[%s1 + $0xa50] sm:$0xff]
    %v354 = vld [vmem:[%s1 + $0xa58] sm:$0xff]
    %v355 = vld [vmem:[%s1 + $0xa60] sm:$0xff]
    %v356 = vld [vmem:[%s1 + $0xa68] sm:$0xff]
    %v357 = vld [vmem:[%s1 + $0xa70] sm:$0xff]
    %v358 = vld [vmem:[%s1 + $0xa78] sm:$0xff]
    %v359 = vld [vmem:[%s1 + $0xa80] sm:$0xff]
    %v360 = vld [vmem:[%s1 + $0xa88] sm:$0xff]
    %v361 = vld [vmem:[%s1 + $0xa90] sm:$0xff]
    %v362 = vld [vmem:[%s1 + $0xa98] sm:$0xff]
    %v363 = vld [vmem:[%s1 + $0xaa0] sm:$0xff]
    %v364 = vld [vmem:[%s1 + $0xaa8] sm:$0xff]
    %v365 = vld [vmem:[%s1 + $0xab0] sm:$0xff]
    %v366 = vld [vmem:[%s1 + $0xab8] sm:$0xff]
    %v367 = vld [vmem:[%s1 + $0xac0] sm:$0xff]
    %v368 = vld [vmem:[%s1 + $0xac8] sm:$0xff]
    %v369 = vld [vmem:[%s1 + $0xad0] sm:$0xff]
    %v370 = vld [vmem:[%s1 + $0xad8] sm:$0xff]
    %v371 = vld [vmem:[%s1 + $0xae0] sm:$0xff]
    %v372 = vld [vmem:[%s1 + $0xae8] sm:$0xff]
    %v373 = vld [vmem:[%s1 + $0xaf0] sm:$0xff]
    %v374 = vld [vmem:[%s1 + $0xaf8] sm:$0xff]
    %v375 = vld [vmem:[%s1 + $0xb00] sm:$0xff]
    %v376 = vld [vmem:[%s1 + $0xb08] sm:$0xff]
    %v377 = vld [vmem:[%s1 + $0xb10] sm:$0xff]
    %v378 = vld [vmem:[%s1 + $0xb18] sm:$0xff]
    %v379 = vld [vmem:[%s1 + $0xb20] sm:$0xff]
    %v380 = vld [vmem:[%s1 + $0xb28] sm:$0xff]
    %v381 = vld [vmem:[%s1 + $0xb30] sm:$0xff]
    %v382 = vld [vmem:[%s1 + $0xb38] sm:$0xff]
    %v383 = vld [vmem:[%s1 + $0xb40] sm:$0xff]
    %v384 = vld [vmem:[%s1 + $0xb48] sm:$0xff]
    %v385 = vld [vmem:[%s1 + $0xb50] sm:$0xff]
    %v386 = vld [vmem:[%s1 + $0xb58] sm:$0xff]
    %v387 = vld [vmem:[%s1 + $0xb60] sm:$0xff]
    %v388 = vld [vmem:[%s1 + $0xb68] sm:$0xff]
    %v389 = vld [vmem:[%s1 + $0xb70] sm:$0xff]
    %v390 = vld [vmem:[%s1 + $0xb78] sm:$0xff]
    %v391 = vld [vmem:[%s1 + $0xb80] sm:$0xff]
    %v392 = vld [vmem:[%s1 + $0xb88] sm:$0xff]
    %v393 = vld [vmem:[%s1 + $0xb90] sm:$0xff]
    %v394 = vld [vmem:[%s1 + $0xb98] sm:$0xff]
    %v395 = vld [vmem:[%s1 + $0xba0] sm:$0xff]
    %v396 = vld [vmem:[%s1 + $0xba8] sm:$0xff]
    %v397 = vld [vmem:[%s1 + $0xbb0] sm:$0xff]
    %v398 = vld [vmem:[%s1 + $0xbb8] sm:$0xff]
    %v399 = vld [vmem:[%s1 + $0xbc0] sm:$0xff]
    %v400 = vld [vmem:[%s1 + $0xbc8] sm:$0xff]
    %v401 = vld [vmem:[%s1 + $0xbd0] sm:$0xff]
    %v402 = vld [vmem:[%s1 + $0xbd8] sm:$0xff]
    %v403 = vld [vmem:[%s1 + $0xbe0] sm:$0xff]
    %v404 = vld [vmem:[%s1 + $0xbe8] sm:$0xff]
    %v405 = vld [vmem:[%s1 + $0xbf0] sm:$0xff]
    %v406 = vld [vmem:[%s1 + $0xbf8] sm:$0xff]
    %v407 = vld [vmem:[%s1 + $0xc00] sm:$0xff]
    %v408 = vld [vmem:[%s1 + $0xc08] sm:$0xff]
    %v409 = vld [vmem:[%s1 + $0xc10] sm:$0xff]
    %v410 = vld [vmem:[%s1 + $0xc18] sm:$0xff]
    %v411 = vld [vmem:[%s1 + $0xc20] sm:$0xff]
    %v412 = vld [vmem:[%s1 + $0xc28] sm:$0xff]
    %v413 = vld [vmem:[%s1 + $0xc30] sm:$0xff]
    %v414 = vld [vmem:[%s1 + $0xc38] sm:$0xff]
    %v415 = vld [vmem:[%s1 + $0xc40] sm:$0xff]
    %v416 = vld [vmem:[%s1 + $0xc48] sm:$0xff]
    %v417 = vld [vmem:[%s1 + $0xc50] sm:$0xff]
    %v418 = vld [vmem:[%s1 + $0xc58] sm:$0xff]
    %v419 = vld [vmem:[%s1 + $0xc60] sm:$0xff]
    %v420 = vld [vmem:[%s1 + $0xc68] sm:$0xff]
    %v421 = vld [vmem:[%s1 + $0xc70] sm:$0xff]
    %v422 = vld [vmem:[%s1 + $0xc78] sm:$0xff]
    %v423 = vld [vmem:[%s1 + $0xc80] sm:$0xff]
    %v424 = vld [vmem:[%s1 + $0xc88] sm:$0xff]
    %v425 = vld [vmem:[%s1 + $0xc90] sm:$0xff]
    %v426 = vld [vmem:[%s1 + $0xc98] sm:$0xff]
    %v427 = vld [vmem:[%s1 + $0xca0] sm:$0xff]
    %v428 = vld [vmem:[%s1 + $0xca8] sm:$0xff]
    %v429 = vld [vmem:[%s1 + $0xcb0] sm:$0xff]
    %v430 = vld [vmem:[%s1 + $0xcb8] sm:$0xff]
    %v431 = vld [vmem:[%s1 + $0xcc0] sm:$0xff]
    %v432 = vld [vmem:[%s1 + $0xcc8] sm:$0xff]
    %v433 = vld [vmem:[%s1 + $0xcd0] sm:$0xff]
    %v434 = vld [vmem:[%s1 + $0xcd8] sm:$0xff]
    %v435 = vld [vmem:[%s1 + $0xce0] sm:$0xff]
    %v436 = vld [vmem:[%s1 + $0xce8] sm:$0xff]
    %v437 = vld [vmem:[%s1 + $0xcf0] sm:$0xff]
    %v438 = vld [vmem:[%s1 + $0xcf8] sm:$0xff]
    %v439 = vld [vmem:[%s1 + $0xd00] sm:$0xff]
    %v440 = vld [vmem:[%s1 + $0xd08] sm:$0xff]
    %v441 = vld [vmem:[%s1 + $0xd10] sm:$0xff]
    %v442 = vld [vmem:[%s1 + $0xd18] sm:$0xff]
    %v443 = vld [vmem:[%s1 + $0xd20] sm:$0xff]
    %v444 = vld [vmem:[%s1 + $0xd28] sm:$0xff]
    %v445 = vld [vmem:[%s1 + $0xd30] sm:$0xff]
    %v446 = vld [vmem:[%s1 + $0xd38] sm:$0xff]
    %v447 = vld [vmem:[%s1 + $0xd40] sm:$0xff]
    %v448 = vld [vmem:[%s1 + $0xd48] sm:$0xff]
    %v449 = vld [vmem:[%s1 + $0xd50] sm:$0xff]
    %v450 = vld [vmem:[%s1 + $0xd58] sm:$0xff]
    %v451 = vld [vmem:[%s1 + $0xd60] sm:$0xff]
    %v452 = vld [vmem:[%s1 + $0xd68] sm:$0xff]
    %v453 = vld [vmem:[%s1 + $0xd70] sm:$0xff]
    %v454 = vld [vmem:[%s1 + $0xd78] sm:$0xff]
    %v455 = vld [vmem:[%s1 + $0xd80] sm:$0xff]
    %v456 = vld [vmem:[%s1 + $0xd88] sm:$0xff]
    %v457 = vld [vmem:[%s1 + $0xd90] sm:$0xff]
    %v458 = vld [vmem:[%s1 + $0xd98] sm:$0xff]
    %v459 = vld [vmem:[%s1 + $0xda0] sm:$0xff]
    %v460 = vld [vmem:[%s1 + $0xda8] sm:$0xff]
    %v461 = vld [vmem:[%s1 + $0xdb0] sm:$0xff]
    %v462 = vld [vmem:[%s1 + $0xdb8] sm:$0xff]
    %v463 = vld [vmem:[%s1 + $0xdc0] sm:$0xff]
    %v464 = vld [vmem:[%s1 + $0xdc8] sm:$0xff]
    %v465 = vld [vmem:[%s1 + $0xdd0] sm:$0xff]
    %v466 = vld [vmem:[%s1 + $0xdd8] sm:$0xff]
    %v467 = vld [vmem:[%s1 + $0xde0] sm:$0xff]
    %v468 = vld [vmem:[%s1 + $0xde8] sm:$0xff]
    %v469 = vld [vmem:[%s1 + $0xdf0] sm:$0xff]
    %v470 = vld [vmem:[%s1 + $0xdf8] sm:$0xff]
    %v471 = vld [vmem:[%s1 + $0xe00] sm:$0xff]
    %v472 = vld [vmem:[%s1 + $0xe08] sm:$0xff]
    %v473 = vld [vmem:[%s1 + $0xe10] sm:$0xff]
    %v474 = vld [vmem:[%s1 + $0xe18] sm:$0xff]
    %v475 = vld [vmem:[%s1 + $0xe20] sm:$0xff]
    %v476 = vld [vmem:[%s1 + $0xe28] sm:$0xff]
    %v477 = vld [vmem:[%s1 + $0xe30] sm:$0xff]
    %v478 = vld [vmem:[%s1 + $0xe38] sm:$0xff]
    %v479 = vld [vmem:[%s1 + $0xe40] sm:$0xff]
    %v480 = vld [vmem:[%s1 + $0xe48] sm:$0xff]
    %v481 = vld [vmem:[%s1 + $0xe50] sm:$0xff]
    %v482 = vld [vmem:[%s1 + $0xe58] sm:$0xff]
    %v483 = vld [vmem:[%s1 + $0xe60] sm:$0xff]
    %v484 = vld [vmem:[%s1 + $0xe68] sm:$0xff]
    %v485 = vld [vmem:[%s1 + $0xe70] sm:$0xff]
    %v486 = vld [vmem:[%s1 + $0xe78] sm:$0xff]
    %v487 = vld [vmem:[%s1 + $0xe80] sm:$0xff]
    %v488 = vld [vmem:[%s1 + $0xe88] sm:$0xff]
    %v489 = vld [vmem:[%s1 + $0xe90] sm:$0xff]
    %v490 = vld [vmem:[%s1 + $0xe98] sm:$0xff]
    %v491 = vld [vmem:[%s1 + $0xea0] sm:$0xff]
    %v492 = vld [vmem:[%s1 + $0xea8] sm:$0xff]
    %v493 = vld [vmem:[%s1 + $0xeb0] sm:$0xff]
    %v494 = vld [vmem:[%s1 + $0xeb8] sm:$0xff]
    %v495 = vld [vmem:[%s1 + $0xec0] sm:$0xff]
    %v496 = vld [vmem:[%s1 + $0xec8] sm:$0xff]
    %v497 = vld [vmem:[%s1 + $0xed0] sm:$0xff]
    %v498 = vld [vmem:[%s1 + $0xed8] sm:$0xff]
    %v499 = vld [vmem:[%s1 + $0xee0] sm:$0xff]
    %v500 = vld [vmem:[%s1 + $0xee8] sm:$0xff]
    %v501 = vld [vmem:[%s1 + $0xef0] sm:$0xff]
    %v502 = vld [vmem:[%s1 + $0xef8] sm:$0xff]
    %v503 = vld [vmem:[%s1 + $0xf00] sm:$0xff]
    %v504 = vld [vmem:[%s1 + $0xf08] sm:$0xff]
    %v505 = vld [vmem:[%s1 + $0xf10] sm:$0xff]
    %v506 = vld [vmem:[%s1 + $0xf18] sm:$0xff]
    %v507 = vld [vmem:[%s1 + $0xf20] sm:$0xff]
    %v508 = vld [vmem:[%s1 + $0xf28] sm:$0xff]
    %v509 = vld [vmem:[%s1 + $0xf30] sm:$0xff]
    %v510 = vld [vmem:[%s1 + $0xf38] sm:$0xff]
    %v511 = vld [vmem:[%s1 + $0xf40] sm:$0xff]
    %v512 = vld [vmem:[%s1 + $0xf48] sm:$0xff]
    %v513 = vld [vmem:[%s1 + $0xf50] sm:$0xff]
    %v514 = vld [vmem:[%s1 + $0xf58] sm:$0xff]
    %v515 = vld [vmem:[%s1 + $0xf60] sm:$0xff]
    %v516 = vld [vmem:[%s1 + $0xf68] sm:$0xff]
    %v517 = vld [vmem:[%s1 + $0xf70] sm:$0xff]
    %v518 = vld [vmem:[%s1 + $0xf78] sm:$0xff]
    %v519 = vld [vmem:[%s1 + $0xf80] sm:$0xff]
    %v520 = vld [vmem:[%s1 + $0xf88] sm:$0xff]
    %v521 = vld [vmem:[%s1 + $0xf90] sm:$0xff]
    %v522 = vld [vmem:[%s1 + $0xf98] sm:$0xff]
    %v523 = vld [vmem:[%s1 + $0xfa0] sm:$0xff]
    %v524 = vld [vmem:[%s1 + $0xfa8] sm:$0xff]
    %v525 = vld [vmem:[%s1 + $0xfb0] sm:$0xff]
    %v526 = vld [vmem:[%s1 + $0xfb8] sm:$0xff]
    %v527 = vld [vmem:[%s1 + $0xfc0] sm:$0xff]
    %v528 = vld [vmem:[%s1 + $0xfc8] sm:$0xff]
    %v529 = vld [vmem:[%s1 + $0xfd0] sm:$0xff]
    %v530 = vld [vmem:[%s1 + $0xfd8] sm:$0xff]
    %v531 = vld [vmem:[%s1 + $0xfe0] sm:$0xff]
    %v532 = vld [vmem:[%s1 + $0xfe8] sm:$0xff]
    %v533 = vld [vmem:[%s1 + $0xff0] sm:$0xff]
    %v534 = vld [vmem:[%s1 + $0xff8] sm:$0xff]
    %v535 = vld [vmem:[%s2] sm:$0x1]
    %v537 = vlaneseq
    %v538 = vshrl.u32 %v537, 7
    %v539 = vsub.s32 0, %v538
    %v540 = vrot.slane %v535, %v539
    %v550 = vcombine.high %v15, %v15
    %v552 = vunpack.c.l.s4 1983009808
    %v553 = vunpack.c.0.s8 %v552
    %v554 = vlaneseq
    %v555 = vshrl.u32 %v554, 7
    %v556 = vsub.s32 %v553, %v555
    %v557 = vrot.slane %v15, %v556
    %v559 = vunpack.c.l.s4 1983009808
    %v560 = vunpack.c.0.s8 %v559
    %v561 = vlaneseq
    %v562 = vshrl.u32 %v561, 7
    %v563 = vsub.s32 %v560, %v562
    %v564 = vrot.slane %v550, %v563
    %v565 = vcombine.high %v557, %v557
    %v566 = vcombine.high %v564, %v564
    %v567 = vcombine.high %v16, %v16
    %v569 = vunpack.c.l.s4 1983009808
    %v570 = vunpack.c.0.s8 %v569
    %v571 = vlaneseq
    %v572 = vshrl.u32 %v571, 7
    %v573 = vsub.s32 %v570, %v572
    %v574 = vrot.slane %v16, %v573
    %v576 = vunpack.c.l.s4 1983009808
    %v577 = vunpack.c.0.s8 %v576
    %v578 = vlaneseq
    %v579 = vshrl.u32 %v578, 7
    %v580 = vsub.s32 %v577, %v579
    %v581 = vrot.slane %v567, %v580
    %v582 = vcombine.high %v574, %v574
    %v583 = vcombine.high %v581, %v581
    %v584 = vcombine.high %v17, %v17
    %v586 = vunpack.c.l.s4 1983009808
    %v587 = vunpack.c.0.s8 %v586
    %v588 = vlaneseq
    %v589 = vshrl.u32 %v588, 7
    %v590 = vsub.s32 %v587, %v589
    %v591 = vrot.slane %v17, %v590
    %v593 = vunpack.c.l.s4 1983009808
    %v594 = vunpack.c.0.s8 %v593
    %v595 = vlaneseq
    %v596 = vshrl.u32 %v595, 7
    %v597 = vsub.s32 %v594, %v596
    %v598 = vrot.slane %v584, %v597
    %v599 = vcombine.high %v591, %v591
    %v600 = vcombine.high %v598, %v598
    %v601 = vcombine.high %v18, %v18
    %v603 = vunpack.c.l.s4 1983009808
    %v604 = vunpack.c.0.s8 %v603
    %v605 = vlaneseq
    %v606 = vshrl.u32 %v605, 7
    %v607 = vsub.s32 %v604, %v606
    %v608 = vrot.slane %v18, %v607
    %v610 = vunpack.c.l.s4 1983009808
    %v611 = vunpack.c.0.s8 %v610
    %v612 = vlaneseq
    %v613 = vshrl.u32 %v612, 7
    %v614 = vsub.s32 %v611, %v613
    %v615 = vrot.slane %v601, %v614
    %v616 = vcombine.high %v608, %v608
    %v617 = vcombine.high %v615, %v615
    %v618 = vcombine.high %v19, %v19
    %v620 = vunpack.c.l.s4 1983009808
    %v621 = vunpack.c.0.s8 %v620
    %v622 = vlaneseq
    %v623 = vshrl.u32 %v622, 7
    %v624 = vsub.s32 %v621, %v623
    %v625 = vrot.slane %v19, %v624
    %v627 = vunpack.c.l.s4 1983009808
    %v628 = vunpack.c.0.s8 %v627
    %v629 = vlaneseq
    %v630 = vshrl.u32 %v629, 7
    %v631 = vsub.s32 %v628, %v630
    %v632 = vrot.slane %v618, %v631
    %v633 = vcombine.high %v625, %v625
    %v634 = vcombine.high %v632, %v632
    %v635 = vcombine.high %v20, %v20
    %v637 = vunpack.c.l.s4 1983009808
    %v638 = vunpack.c.0.s8 %v637
    %v639 = vlaneseq
    %v640 = vshrl.u32 %v639, 7
    %v641 = vsub.s32 %v638, %v640
    %v642 = vrot.slane %v20, %v641
    %v644 = vunpack.c.l.s4 1983009808
    %v645 = vunpack.c.0.s8 %v644
    %v646 = vlaneseq
    %v647 = vshrl.u32 %v646, 7
    %v648 = vsub.s32 %v645, %v647
    %v649 = vrot.slane %v635, %v648
    %v650 = vcombine.high %v642, %v642
    %v651 = vcombine.high %v649, %v649
    %v652 = vcombine.high %v21, %v21
    %v654 = vunpack.c.l.s4 1983009808
    %v655 = vunpack.c.0.s8 %v654
    %v656 = vlaneseq
    %v657 = vshrl.u32 %v656, 7
    %v658 = vsub.s32 %v655, %v657
    %v659 = vrot.slane %v21, %v658
    %v661 = vunpack.c.l.s4 1983009808
    %v662 = vunpack.c.0.s8 %v661
    %v663 = vlaneseq
    %v664 = vshrl.u32 %v663, 7
    %v665 = vsub.s32 %v662, %v664
    %v666 = vrot.slane %v652, %v665
    %v667 = vcombine.high %v659, %v659
    %v668 = vcombine.high %v666, %v666
    %v669 = vcombine.high %v22, %v22
    %v671 = vunpack.c.l.s4 1983009808
    %v672 = vunpack.c.0.s8 %v671
    %v673 = vlaneseq
    %v674 = vshrl.u32 %v673, 7
    %v675 = vsub.s32 %v672, %v674
    %v676 = vrot.slane %v22, %v675
    %v678 = vunpack.c.l.s4 1983009808
    %v679 = vunpack.c.0.s8 %v678
    %v680 = vlaneseq
    %v681 = vshrl.u32 %v680, 7
    %v682 = vsub.s32 %v679, %v681
    %v683 = vrot.slane %v669, %v682
    %v684 = vcombine.high %v676, %v676
    %v685 = vcombine.high %v683, %v683
    %718 = vmatprep.subr.mxu0 0.0
    %719 = vmatpush1.msra.mxu0 %v23
    %720 = vmatprep.subr.mxu0 0.0
    %721 = vmatpush1.msra.mxu0 %v24
    %722 = vmatprep.subr.mxu0 0.0
    %723 = vmatpush1.msra.mxu0 %v25
    %724 = vmatprep.subr.mxu0 0.0
    %725 = vmatpush1.msra.mxu0 %v26
    %726 = vmatprep.subr.mxu0 0.0
    %727 = vmatpush1.msra.mxu0 %v27
    %728 = vmatprep.subr.mxu0 0.0
    %729 = vmatpush1.msra.mxu0 %v28
    %730 = vmatprep.subr.mxu0 0.0
    %731 = vmatpush1.msra.mxu0 %v29
    %732 = vmatprep.subr.mxu0 0.0
    %733 = vmatpush1.msra.mxu0 %v30
    %734 = vmatprep.subr.mxu0 0.0
    %735 = vmatpush1.msra.mxu0 %v31
    %736 = vmatprep.subr.mxu0 0.0
    %737 = vmatpush1.msra.mxu0 %v32
    %738 = vmatprep.subr.mxu0 0.0
    %739 = vmatpush1.msra.mxu0 %v33
    %740 = vmatprep.subr.mxu0 0.0
    %741 = vmatpush1.msra.mxu0 %v34
    %742 = vmatprep.subr.mxu0 0.0
    %743 = vmatpush1.msra.mxu0 %v35
    %744 = vmatprep.subr.mxu0 0.0
    %745 = vmatpush1.msra.mxu0 %v36
    %746 = vmatprep.subr.mxu0 0.0
    %747 = vmatpush1.msra.mxu0 %v37
    %748 = vmatprep.subr.mxu0 0.0
    %749 = vmatpush1.msra.mxu0 %v38
    %750 = vmatprep.subr.mxu0 0.0
    %751 = vmatpush1.msra.mxu0 %v39
    %752 = vmatprep.subr.mxu0 0.0
    %753 = vmatpush1.msra.mxu0 %v40
    %754 = vmatprep.subr.mxu0 0.0
    %755 = vmatpush1.msra.mxu0 %v41
    %756 = vmatprep.subr.mxu0 0.0
    %757 = vmatpush1.msra.mxu0 %v42
    %758 = vmatprep.subr.mxu0 0.0
    %759 = vmatpush1.msra.mxu0 %v43
    %760 = vmatprep.subr.mxu0 0.0
    %761 = vmatpush1.msra.mxu0 %v44
    %762 = vmatprep.subr.mxu0 0.0
    %763 = vmatpush1.msra.mxu0 %v45
    %764 = vmatprep.subr.mxu0 0.0
    %765 = vmatpush1.msra.mxu0 %v46
    %766 = vmatprep.subr.mxu0 0.0
    %767 = vmatpush1.msra.mxu0 %v47
    %768 = vmatprep.subr.mxu0 0.0
    %769 = vmatpush1.msra.mxu0 %v48
    %770 = vmatprep.subr.mxu0 0.0
    %771 = vmatpush1.msra.mxu0 %v49
    %772 = vmatprep.subr.mxu0 0.0
    %773 = vmatpush1.msra.mxu0 %v50
    %774 = vmatprep.subr.mxu0 0.0
    %775 = vmatpush1.msra.mxu0 %v51
    %776 = vmatprep.subr.mxu0 0.0
    %777 = vmatpush1.msra.mxu0 %v52
    %778 = vmatprep.subr.mxu0 0.0
    %779 = vmatpush1.msra.mxu0 %v53
    %780 = vmatprep.subr.mxu0 0.0
    %781 = vmatpush1.msra.mxu0 %v54
    %782 = vmatprep.mubr.f32.mxu0 %v565
    %783 = vmatmul.mubr.f32.gmra.mrb[0].mxu0 %v557
    %v784 = vpop.f32.mrb[0].mxu0
    %v785 = vadd.f32 %v540, %v784
    %v786 = vpop.f32.mrb[0].mxu0
    %787 = vdwg.mxu0
    %788 = vmatprep.subr.mxu0 0.0
    %789 = vmatpush1.msra.mxu0 %v55
    %790 = vmatprep.subr.mxu0 0.0
    %791 = vmatpush1.msra.mxu0 %v56
    %792 = vmatprep.subr.mxu0 0.0
    %793 = vmatpush1.msra.mxu0 %v57
    %794 = vmatprep.subr.mxu0 0.0
    %795 = vmatpush1.msra.mxu0 %v58
    %796 = vmatprep.subr.mxu0 0.0
    %797 = vmatpush1.msra.mxu0 %v59
    %798 = vmatprep.subr.mxu0 0.0
    %799 = vmatpush1.msra.mxu0 %v60
    %800 = vmatprep.subr.mxu0 0.0
    %801 = vmatpush1.msra.mxu0 %v61
    %802 = vmatprep.subr.mxu0 0.0
    %803 = vmatpush1.msra.mxu0 %v62
    %804 = vmatprep.subr.mxu0 0.0
    %805 = vmatpush1.msra.mxu0 %v63
    %806 = vmatprep.subr.mxu0 0.0
    %807 = vmatpush1.msra.mxu0 %v64
    %808 = vmatprep.subr.mxu0 0.0
    %809 = vmatpush1.msra.mxu0 %v65
    %810 = vmatprep.subr.mxu0 0.0
    %811 = vmatpush1.msra.mxu0 %v66
    %812 = vmatprep.subr.mxu0 0.0
    %813 = vmatpush1.msra.mxu0 %v67
    %814 = vmatprep.subr.mxu0 0.0
    %815 = vmatpush1.msra.mxu0 %v68
    %816 = vmatprep.subr.mxu0 0.0
    %817 = vmatpush1.msra.mxu0 %v69
    %818 = vmatprep.subr.mxu0 0.0
    %819 = vmatpush1.msra.mxu0 %v70
    %820 = vmatprep.subr.mxu0 0.0
    %821 = vmatpush1.msra.mxu0 %v71
    %822 = vmatprep.subr.mxu0 0.0
    %823 = vmatpush1.msra.mxu0 %v72
    %824 = vmatprep.subr.mxu0 0.0
    %825 = vmatpush1.msra.mxu0 %v73
    %826 = vmatprep.subr.mxu0 0.0
    %827 = vmatpush1.msra.mxu0 %v74
    %828 = vmatprep.subr.mxu0 0.0
    %829 = vmatpush1.msra.mxu0 %v75
    %830 = vmatprep.subr.mxu0 0.0
    %831 = vmatpush1.msra.mxu0 %v76
    %832 = vmatprep.subr.mxu0 0.0
    %833 = vmatpush1.msra.mxu0 %v77
    %834 = vmatprep.subr.mxu0 0.0
    %835 = vmatpush1.msra.mxu0 %v78
    %836 = vmatprep.subr.mxu0 0.0
    %837 = vmatpush1.msra.mxu0 %v79
    %838 = vmatprep.subr.mxu0 0.0
    %839 = vmatpush1.msra.mxu0 %v80
    %840 = vmatprep.subr.mxu0 0.0
    %841 = vmatpush1.msra.mxu0 %v81
    %842 = vmatprep.subr.mxu0 0.0
    %843 = vmatpush1.msra.mxu0 %v82
    %844 = vmatprep.subr.mxu0 0.0
    %845 = vmatpush1.msra.mxu0 %v83
    %846 = vmatprep.subr.mxu0 0.0
    %847 = vmatpush1.msra.mxu0 %v84
    %848 = vmatprep.subr.mxu0 0.0
    %849 = vmatpush1.msra.mxu0 %v85
    %850 = vmatprep.subr.mxu0 0.0
    %851 = vmatpush1.msra.mxu0 %v86
    %852 = vmatprep.mubr.f32.mxu0 %v566
    %853 = vmatmul.mubr.f32.gmra.mrb[0].mxu0 %v564
    %v854 = vpop.f32.mrb[0].mxu0
    %v855 = vadd.f32 %v785, %v854
    %v856 = vpop.f32.mrb[0].mxu0
    %857 = vdwg.mxu0
    %858 = vmatprep.subr.mxu0 0.0
    %859 = vmatpush1.msra.mxu0 %v87
    %860 = vmatprep.subr.mxu0 0.0
    %861 = vmatpush1.msra.mxu0 %v88
    %862 = vmatprep.subr.mxu0 0.0
    %863 = vmatpush1.msra.mxu0 %v89
    %864 = vmatprep.subr.mxu0 0.0
    %865 = vmatpush1.msra.mxu0 %v90
    %866 = vmatprep.subr.mxu0 0.0
    %867 = vmatpush1.msra.mxu0 %v91
    %868 = vmatprep.subr.mxu0 0.0
    %869 = vmatpush1.msra.mxu0 %v92
    %870 = vmatprep.subr.mxu0 0.0
    %871 = vmatpush1.msra.mxu0 %v93
    %872 = vmatprep.subr.mxu0 0.0
    %873 = vmatpush1.msra.mxu0 %v94
    %874 = vmatprep.subr.mxu0 0.0
    %875 = vmatpush1.msra.mxu0 %v95
    %876 = vmatprep.subr.mxu0 0.0
    %877 = vmatpush1.msra.mxu0 %v96
    %878 = vmatprep.subr.mxu0 0.0
    %879 = vmatpush1.msra.mxu0 %v97
    %880 = vmatprep.subr.mxu0 0.0
    %881 = vmatpush1.msra.mxu0 %v98
    %882 = vmatprep.subr.mxu0 0.0
    %883 = vmatpush1.msra.mxu0 %v99
    %884 = vmatprep.subr.mxu0 0.0
    %885 = vmatpush1.msra.mxu0 %v100
    %886 = vmatprep.subr.mxu0 0.0
    %887 = vmatpush1.msra.mxu0 %v101
    %888 = vmatprep.subr.mxu0 0.0
    %889 = vmatpush1.msra.mxu0 %v102
    %890 = vmatprep.subr.mxu0 0.0
    %891 = vmatpush1.msra.mxu0 %v103
    %892 = vmatprep.subr.mxu0 0.0
    %893 = vmatpush1.msra.mxu0 %v104
    %894 = vmatprep.subr.mxu0 0.0
    %895 = vmatpush1.msra.mxu0 %v105
    %896 = vmatprep.subr.mxu0 0.0
    %897 = vmatpush1.msra.mxu0 %v106
    %898 = vmatprep.subr.mxu0 0.0
    %899 = vmatpush1.msra.mxu0 %v107
    %900 = vmatprep.subr.mxu0 0.0
    %901 = vmatpush1.msra.mxu0 %v108
    %902 = vmatprep.subr.mxu0 0.0
    %903 = vmatpush1.msra.mxu0 %v109
    %904 = vmatprep.subr.mxu0 0.0
    %905 = vmatpush1.msra.mxu0 %v110
    %906 = vmatprep.subr.mxu0 0.0
    %907 = vmatpush1.msra.mxu0 %v111
    %908 = vmatprep.subr.mxu0 0.0
    %909 = vmatpush1.msra.mxu0 %v112
    %910 = vmatprep.subr.mxu0 0.0
    %911 = vmatpush1.msra.mxu0 %v113
    %912 = vmatprep.subr.mxu0 0.0
    %913 = vmatpush1.msra.mxu0 %v114
    %914 = vmatprep.subr.mxu0 0.0
    %915 = vmatpush1.msra.mxu0 %v115
    %916 = vmatprep.subr.mxu0 0.0
    %917 = vmatpush1.msra.mxu0 %v116
    %918 = vmatprep.subr.mxu0 0.0
    %919 = vmatpush1.msra.mxu0 %v117
    %920 = vmatprep.subr.mxu0 0.0
    %921 = vmatpush1.msra.mxu0 %v118
    %922 = vmatprep.mubr.f32.mxu0 %v582
    %923 = vmatmul.mubr.f32.gmra.mrb[0].mxu0 %v574
    %v924 = vpop.f32.mrb[0].mxu0
    %v925 = vadd.f32 %v855, %v924
    %v926 = vpop.f32.mrb[0].mxu0
    %927 = vdwg.mxu0
    %928 = vmatprep.subr.mxu0 0.0
    %929 = vmatpush1.msra.mxu0 %v119
    %930 = vmatprep.subr.mxu0 0.0
    %931 = vmatpush1.msra.mxu0 %v120
    %932 = vmatprep.subr.mxu0 0.0
    %933 = vmatpush1.msra.mxu0 %v121
    %934 = vmatprep.subr.mxu0 0.0
    %935 = vmatpush1.msra.mxu0 %v122
    %936 = vmatprep.subr.mxu0 0.0
    %937 = vmatpush1.msra.mxu0 %v123
    %938 = vmatprep.subr.mxu0 0.0
    %939 = vmatpush1.msra.mxu0 %v124
    %940 = vmatprep.subr.mxu0 0.0
    %941 = vmatpush1.msra.mxu0 %v125
    %942 = vmatprep.subr.mxu0 0.0
    %943 = vmatpush1.msra.mxu0 %v126
    %944 = vmatprep.subr.mxu0 0.0
    %945 = vmatpush1.msra.mxu0 %v127
    %946 = vmatprep.subr.mxu0 0.0
    %947 = vmatpush1.msra.mxu0 %v128
    %948 = vmatprep.subr.mxu0 0.0
    %949 = vmatpush1.msra.mxu0 %v129
    %950 = vmatprep.subr.mxu0 0.0
    %951 = vmatpush1.msra.mxu0 %v130
    %952 = vmatprep.subr.mxu0 0.0
    %953 = vmatpush1.msra.mxu0 %v131
    %954 = vmatprep.subr.mxu0 0.0
    %955 = vmatpush1.msra.mxu0 %v132
    %956 = vmatprep.subr.mxu0 0.0
    %957 = vmatpush1.msra.mxu0 %v133
    %958 = vmatprep.subr.mxu0 0.0
    %959 = vmatpush1.msra.mxu0 %v134
    %960 = vmatprep.subr.mxu0 0.0
    %961 = vmatpush1.msra.mxu0 %v135
    %962 = vmatprep.subr.mxu0 0.0
    %963 = vmatpush1.msra.mxu0 %v136
    %964 = vmatprep.subr.mxu0 0.0
    %965 = vmatpush1.msra.mxu0 %v137
    %966 = vmatprep.subr.mxu0 0.0
    %967 = vmatpush1.msra.mxu0 %v138
    %968 = vmatprep.subr.mxu0 0.0
    %969 = vmatpush1.msra.mxu0 %v139
    %970 = vmatprep.subr.mxu0 0.0
    %971 = vmatpush1.msra.mxu0 %v140
    %972 = vmatprep.subr.mxu0 0.0
    %973 = vmatpush1.msra.mxu0 %v141
    %974 = vmatprep.subr.mxu0 0.0
    %975 = vmatpush1.msra.mxu0 %v142
    %976 = vmatprep.subr.mxu0 0.0
    %977 = vmatpush1.msra.mxu0 %v143
    %978 = vmatprep.subr.mxu0 0.0
    %979 = vmatpush1.msra.mxu0 %v144
    %980 = vmatprep.subr.mxu0 0.0
    %981 = vmatpush1.msra.mxu0 %v145
    %982 = vmatprep.subr.mxu0 0.0
    %983 = vmatpush1.msra.mxu0 %v146
    %984 = vmatprep.subr.mxu0 0.0
    %985 = vmatpush1.msra.mxu0 %v147
    %986 = vmatprep.subr.mxu0 0.0
    %987 = vmatpush1.msra.mxu0 %v148
    %988 = vmatprep.subr.mxu0 0.0
    %989 = vmatpush1.msra.mxu0 %v149
    %990 = vmatprep.subr.mxu0 0.0
    %991 = vmatpush1.msra.mxu0 %v150
    %992 = vmatprep.mubr.f32.mxu0 %v583
    %993 = vmatmul.mubr.f32.gmra.mrb[0].mxu0 %v581
    %v994 = vpop.f32.mrb[0].mxu0
    %v995 = vadd.f32 %v925, %v994
    %v996 = vpop.f32.mrb[0].mxu0
    %997 = vdwg.mxu0
    %998 = vmatprep.subr.mxu0 0.0
    %999 = vmatpush1.msra.mxu0 %v151
    %1000 = vmatprep.subr.mxu0 0.0
    %1001 = vmatpush1.msra.mxu0 %v152
    %1002 = vmatprep.subr.mxu0 0.0
    %1003 = vmatpush1.msra.mxu0 %v153
    %1004 = vmatprep.subr.mxu0 0.0
    %1005 = vmatpush1.msra.mxu0 %v154
    %1006 = vmatprep.subr.mxu0 0.0
    %1007 = vmatpush1.msra.mxu0 %v155
    %1008 = vmatprep.subr.mxu0 0.0
    %1009 = vmatpush1.msra.mxu0 %v156
    %1010 = vmatprep.subr.mxu0 0.0
    %1011 = vmatpush1.msra.mxu0 %v157
    %1012 = vmatprep.subr.mxu0 0.0
    %1013 = vmatpush1.msra.mxu0 %v158
    %1014 = vmatprep.subr.mxu0 0.0
    %1015 = vmatpush1.msra.mxu0 %v159
    %1016 = vmatprep.subr.mxu0 0.0
    %1017 = vmatpush1.msra.mxu0 %v160
    %1018 = vmatprep.subr.mxu0 0.0
    %1019 = vmatpush1.msra.mxu0 %v161
    %1020 = vmatprep.subr.mxu0 0.0
    %1021 = vmatpush1.msra.mxu0 %v162
    %1022 = vmatprep.subr.mxu0 0.0
    %1023 = vmatpush1.msra.mxu0 %v163
    %1024 = vmatprep.subr.mxu0 0.0
    %1025 = vmatpush1.msra.mxu0 %v164
    %1026 = vmatprep.subr.mxu0 0.0
    %1027 = vmatpush1.msra.mxu0 %v165
    %1028 = vmatprep.subr.mxu0 0.0
    %1029 = vmatpush1.msra.mxu0 %v166
    %1030 = vmatprep.subr.mxu0 0.0
    %1031 = vmatpush1.msra.mxu0 %v167
    %1032 = vmatprep.subr.mxu0 0.0
    %1033 = vmatpush1.msra.mxu0 %v168
    %1034 = vmatprep.subr.mxu0 0.0
    %1035 = vmatpush1.msra.mxu0 %v169
    %1036 = vmatprep.subr.mxu0 0.0
    %1037 = vmatpush1.msra.mxu0 %v170
    %1038 = vmatprep.subr.mxu0 0.0
    %1039 = vmatpush1.msra.mxu0 %v171
    %1040 = vmatprep.subr.mxu0 0.0
    %1041 = vmatpush1.msra.mxu0 %v172
    %1042 = vmatprep.subr.mxu0 0.0
    %1043 = vmatpush1.msra.mxu0 %v173
    %1044 = vmatprep.subr.mxu0 0.0
    %1045 = vmatpush1.msra.mxu0 %v174
    %1046 = vmatprep.subr.mxu0 0.0
    %1047 = vmatpush1.msra.mxu0 %v175
    %1048 = vmatprep.subr.mxu0 0.0
    %1049 = vmatpush1.msra.mxu0 %v176
    %1050 = vmatprep.subr.mxu0 0.0
    %1051 = vmatpush1.msra.mxu0 %v177
    %1052 = vmatprep.subr.mxu0 0.0
    %1053 = vmatpush1.msra.mxu0 %v178
    %1054 = vmatprep.subr.mxu0 0.0
    %1055 = vmatpush1.msra.mxu0 %v179
    %1056 = vmatprep.subr.mxu0 0.0
    %1057 = vmatpush1.msra.mxu0 %v180
    %1058 = vmatprep.subr.mxu0 0.0
    %1059 = vmatpush1.msra.mxu0 %v181
    %1060 = vmatprep.subr.mxu0 0.0
    %1061 = vmatpush1.msra.mxu0 %v182
    %1062 = vmatprep.mubr.f32.mxu0 %v599
    %1063 = vmatmul.mubr.f32.gmra.mrb[0].mxu0 %v591
    %v1064 = vpop.f32.mrb[0].mxu0
    %v1065 = vadd.f32 %v995, %v1064
    %v1066 = vpop.f32.mrb[0].mxu0
    %1067 = vdwg.mxu0
    %1068 = vmatprep.subr.mxu0 0.0
    %1069 = vmatpush1.msra.mxu0 %v183
    %1070 = vmatprep.subr.mxu0 0.0
    %1071 = vmatpush1.msra.mxu0 %v184
    %1072 = vmatprep.subr.mxu0 0.0
    %1073 = vmatpush1.msra.mxu0 %v185
    %1074 = vmatprep.subr.mxu0 0.0
    %1075 = vmatpush1.msra.mxu0 %v186
    %1076 = vmatprep.subr.mxu0 0.0
    %1077 = vmatpush1.msra.mxu0 %v187
    %1078 = vmatprep.subr.mxu0 0.0
    %1079 = vmatpush1.msra.mxu0 %v188
    %1080 = vmatprep.subr.mxu0 0.0
    %1081 = vmatpush1.msra.mxu0 %v189
    %1082 = vmatprep.subr.mxu0 0.0
    %1083 = vmatpush1.msra.mxu0 %v190
    %1084 = vmatprep.subr.mxu0 0.0
    %1085 = vmatpush1.msra.mxu0 %v191
    %1086 = vmatprep.subr.mxu0 0.0
    %1087 = vmatpush1.msra.mxu0 %v192
    %1088 = vmatprep.subr.mxu0 0.0
    %1089 = vmatpush1.msra.mxu0 %v193
    %1090 = vmatprep.subr.mxu0 0.0
    %1091 = vmatpush1.msra.mxu0 %v194
    %1092 = vmatprep.subr.mxu0 0.0
    %1093 = vmatpush1.msra.mxu0 %v195
    %1094 = vmatprep.subr.mxu0 0.0
    %1095 = vmatpush1.msra.mxu0 %v196
    %1096 = vmatprep.subr.mxu0 0.0
    %1097 = vmatpush1.msra.mxu0 %v197
    %1098 = vmatprep.subr.mxu0 0.0
    %1099 = vmatpush1.msra.mxu0 %v198
    %1100 = vmatprep.subr.mxu0 0.0
    %1101 = vmatpush1.msra.mxu0 %v199
    %1102 = vmatprep.subr.mxu0 0.0
    %1103 = vmatpush1.msra.mxu0 %v200
    %1104 = vmatprep.subr.mxu0 0.0
    %1105 = vmatpush1.msra.mxu0 %v201
    %1106 = vmatprep.subr.mxu0 0.0
    %1107 = vmatpush1.msra.mxu0 %v202
    %1108 = vmatprep.subr.mxu0 0.0
    %1109 = vmatpush1.msra.mxu0 %v203
    %1110 = vmatprep.subr.mxu0 0.0
    %1111 = vmatpush1.msra.mxu0 %v204
    %1112 = vmatprep.subr.mxu0 0.0
    %1113 = vmatpush1.msra.mxu0 %v205
    %1114 = vmatprep.subr.mxu0 0.0
    %1115 = vmatpush1.msra.mxu0 %v206
    %1116 = vmatprep.subr.mxu0 0.0
    %1117 = vmatpush1.msra.mxu0 %v207
    %1118 = vmatprep.subr.mxu0 0.0
    %1119 = vmatpush1.msra.mxu0 %v208
    %1120 = vmatprep.subr.mxu0 0.0
    %1121 = vmatpush1.msra.mxu0 %v209
    %1122 = vmatprep.subr.mxu0 0.0
    %1123 = vmatpush1.msra.mxu0 %v210
    %1124 = vmatprep.subr.mxu0 0.0
    %1125 = vmatpush1.msra.mxu0 %v211
    %1126 = vmatprep.subr.mxu0 0.0
    %1127 = vmatpush1.msra.mxu0 %v212
    %1128 = vmatprep.subr.mxu0 0.0
    %1129 = vmatpush1.msra.mxu0 %v213
    %1130 = vmatprep.subr.mxu0 0.0
    %1131 = vmatpush1.msra.mxu0 %v214
    %1132 = vmatprep.mubr.f32.mxu0 %v600
    %1133 = vmatmul.mubr.f32.gmra.mrb[0].mxu0 %v598
    %v1134 = vpop.f32.mrb[0].mxu0
    %v1135 = vadd.f32 %v1065, %v1134
    %v1136 = vpop.f32.mrb[0].mxu0
    %1137 = vdwg.mxu0
    %1138 = vmatprep.subr.mxu0 0.0
    %1139 = vmatpush1.msra.mxu0 %v215
    %1140 = vmatprep.subr.mxu0 0.0
    %1141 = vmatpush1.msra.mxu0 %v216
    %1142 = vmatprep.subr.mxu0 0.0
    %1143 = vmatpush1.msra.mxu0 %v217
    %1144 = vmatprep.subr.mxu0 0.0
    %1145 = vmatpush1.msra.mxu0 %v218
    %1146 = vmatprep.subr.mxu0 0.0
    %1147 = vmatpush1.msra.mxu0 %v219
    %1148 = vmatprep.subr.mxu0 0.0
    %1149 = vmatpush1.msra.mxu0 %v220
    %1150 = vmatprep.subr.mxu0 0.0
    %1151 = vmatpush1.msra.mxu0 %v221
    %1152 = vmatprep.subr.mxu0 0.0
    %1153 = vmatpush1.msra.mxu0 %v222
    %1154 = vmatprep.subr.mxu0 0.0
    %1155 = vmatpush1.msra.mxu0 %v223
    %1156 = vmatprep.subr.mxu0 0.0
    %1157 = vmatpush1.msra.mxu0 %v224
    %1158 = vmatprep.subr.mxu0 0.0
    %1159 = vmatpush1.msra.mxu0 %v225
    %1160 = vmatprep.subr.mxu0 0.0
    %1161 = vmatpush1.msra.mxu0 %v226
    %1162 = vmatprep.subr.mxu0 0.0
    %1163 = vmatpush1.msra.mxu0 %v227
    %1164 = vmatprep.subr.mxu0 0.0
    %1165 = vmatpush1.msra.mxu0 %v228
    %1166 = vmatprep.subr.mxu0 0.0
    %1167 = vmatpush1.msra.mxu0 %v229
    %1168 = vmatprep.subr.mxu0 0.0
    %1169 = vmatpush1.msra.mxu0 %v230
    %1170 = vmatprep.subr.mxu0 0.0
    %1171 = vmatpush1.msra.mxu0 %v231
    %1172 = vmatprep.subr.mxu0 0.0
    %1173 = vmatpush1.msra.mxu0 %v232
    %1174 = vmatprep.subr.mxu0 0.0
    %1175 = vmatpush1.msra.mxu0 %v233
    %1176 = vmatprep.subr.mxu0 0.0
    %1177 = vmatpush1.msra.mxu0 %v234
    %1178 = vmatprep.subr.mxu0 0.0
    %1179 = vmatpush1.msra.mxu0 %v235
    %1180 = vmatprep.subr.mxu0 0.0
    %1181 = vmatpush1.msra.mxu0 %v236
    %1182 = vmatprep.subr.mxu0 0.0
    %1183 = vmatpush1.msra.mxu0 %v237
    %1184 = vmatprep.subr.mxu0 0.0
    %1185 = vmatpush1.msra.mxu0 %v238
    %1186 = vmatprep.subr.mxu0 0.0
    %1187 = vmatpush1.msra.mxu0 %v239
    %1188 = vmatprep.subr.mxu0 0.0
    %1189 = vmatpush1.msra.mxu0 %v240
    %1190 = vmatprep.subr.mxu0 0.0
    %1191 = vmatpush1.msra.mxu0 %v241
    %1192 = vmatprep.subr.mxu0 0.0
    %1193 = vmatpush1.msra.mxu0 %v242
    %1194 = vmatprep.subr.mxu0 0.0
    %1195 = vmatpush1.msra.mxu0 %v243
    %1196 = vmatprep.subr.mxu0 0.0
    %1197 = vmatpush1.msra.mxu0 %v244
    %1198 = vmatprep.subr.mxu0 0.0
    %1199 = vmatpush1.msra.mxu0 %v245
    %1200 = vmatprep.subr.mxu0 0.0
    %1201 = vmatpush1.msra.mxu0 %v246
    %1202 = vmatprep.mubr.f32.mxu0 %v616
    %1203 = vmatmul.mubr.f32.gmra.mrb[0].mxu0 %v608
    %v1204 = vpop.f32.mrb[0].mxu0
    %v1205 = vadd.f32 %v1135, %v1204
    %v1206 = vpop.f32.mrb[0].mxu0
    %1207 = vdwg.mxu0
    %1208 = vmatprep.subr.mxu0 0.0
    %1209 = vmatpush1.msra.mxu0 %v247
    %1210 = vmatprep.subr.mxu0 0.0
    %1211 = vmatpush1.msra.mxu0 %v248
    %1212 = vmatprep.subr.mxu0 0.0
    %1213 = vmatpush1.msra.mxu0 %v249
    %1214 = vmatprep.subr.mxu0 0.0
    %1215 = vmatpush1.msra.mxu0 %v250
    %1216 = vmatprep.subr.mxu0 0.0
    %1217 = vmatpush1.msra.mxu0 %v251
    %1218 = vmatprep.subr.mxu0 0.0
    %1219 = vmatpush1.msra.mxu0 %v252
    %1220 = vmatprep.subr.mxu0 0.0
    %1221 = vmatpush1.msra.mxu0 %v253
    %1222 = vmatprep.subr.mxu0 0.0
    %1223 = vmatpush1.msra.mxu0 %v254
    %1224 = vmatprep.subr.mxu0 0.0
    %1225 = vmatpush1.msra.mxu0 %v255
    %1226 = vmatprep.subr.mxu0 0.0
    %1227 = vmatpush1.msra.mxu0 %v256
    %1228 = vmatprep.subr.mxu0 0.0
    %1229 = vmatpush1.msra.mxu0 %v257
    %1230 = vmatprep.subr.mxu0 0.0
    %1231 = vmatpush1.msra.mxu0 %v258
    %1232 = vmatprep.subr.mxu0 0.0
    %1233 = vmatpush1.msra.mxu0 %v259
    %1234 = vmatprep.subr.mxu0 0.0
    %1235 = vmatpush1.msra.mxu0 %v260
    %1236 = vmatprep.subr.mxu0 0.0
    %1237 = vmatpush1.msra.mxu0 %v261
    %1238 = vmatprep.subr.mxu0 0.0
    %1239 = vmatpush1.msra.mxu0 %v262
    %1240 = vmatprep.subr.mxu0 0.0
    %1241 = vmatpush1.msra.mxu0 %v263
    %1242 = vmatprep.subr.mxu0 0.0
    %1243 = vmatpush1.msra.mxu0 %v264
    %1244 = vmatprep.subr.mxu0 0.0
    %1245 = vmatpush1.msra.mxu0 %v265
    %1246 = vmatprep.subr.mxu0 0.0
    %1247 = vmatpush1.msra.mxu0 %v266
    %1248 = vmatprep.subr.mxu0 0.0
    %1249 = vmatpush1.msra.mxu0 %v267
    %1250 = vmatprep.subr.mxu0 0.0
    %1251 = vmatpush1.msra.mxu0 %v268
    %1252 = vmatprep.subr.mxu0 0.0
    %1253 = vmatpush1.msra.mxu0 %v269
    %1254 = vmatprep.subr.mxu0 0.0
    %1255 = vmatpush1.msra.mxu0 %v270
    %1256 = vmatprep.subr.mxu0 0.0
    %1257 = vmatpush1.msra.mxu0 %v271
    %1258 = vmatprep.subr.mxu0 0.0
    %1259 = vmatpush1.msra.mxu0 %v272
    %1260 = vmatprep.subr.mxu0 0.0
    %1261 = vmatpush1.msra.mxu0 %v273
    %1262 = vmatprep.subr.mxu0 0.0
    %1263 = vmatpush1.msra.mxu0 %v274
    %1264 = vmatprep.subr.mxu0 0.0
    %1265 = vmatpush1.msra.mxu0 %v275
    %1266 = vmatprep.subr.mxu0 0.0
    %1267 = vmatpush1.msra.mxu0 %v276
    %1268 = vmatprep.subr.mxu0 0.0
    %1269 = vmatpush1.msra.mxu0 %v277
    %1270 = vmatprep.subr.mxu0 0.0
    %1271 = vmatpush1.msra.mxu0 %v278
    %1272 = vmatprep.mubr.f32.mxu0 %v617
    %1273 = vmatmul.mubr.f32.gmra.mrb[0].mxu0 %v615
    %v1274 = vpop.f32.mrb[0].mxu0
    %v1275 = vadd.f32 %v1205, %v1274
    %v1276 = vpop.f32.mrb[0].mxu0
    %1277 = vdwg.mxu0
    %1278 = vmatprep.subr.mxu0 0.0
    %1279 = vmatpush1.msra.mxu0 %v279
    %1280 = vmatprep.subr.mxu0 0.0
    %1281 = vmatpush1.msra.mxu0 %v280
    %1282 = vmatprep.subr.mxu0 0.0
    %1283 = vmatpush1.msra.mxu0 %v281
    %1284 = vmatprep.subr.mxu0 0.0
    %1285 = vmatpush1.msra.mxu0 %v282
    %1286 = vmatprep.subr.mxu0 0.0
    %1287 = vmatpush1.msra.mxu0 %v283
    %1288 = vmatprep.subr.mxu0 0.0
    %1289 = vmatpush1.msra.mxu0 %v284
    %1290 = vmatprep.subr.mxu0 0.0
    %1291 = vmatpush1.msra.mxu0 %v285
    %1292 = vmatprep.subr.mxu0 0.0
    %1293 = vmatpush1.msra.mxu0 %v286
    %1294 = vmatprep.subr.mxu0 0.0
    %1295 = vmatpush1.msra.mxu0 %v287
    %1296 = vmatprep.subr.mxu0 0.0
    %1297 = vmatpush1.msra.mxu0 %v288
    %1298 = vmatprep.subr.mxu0 0.0
    %1299 = vmatpush1.msra.mxu0 %v289
    %1300 = vmatprep.subr.mxu0 0.0
    %1301 = vmatpush1.msra.mxu0 %v290
    %1302 = vmatprep.subr.mxu0 0.0
    %1303 = vmatpush1.msra.mxu0 %v291
    %1304 = vmatprep.subr.mxu0 0.0
    %1305 = vmatpush1.msra.mxu0 %v292
    %1306 = vmatprep.subr.mxu0 0.0
    %1307 = vmatpush1.msra.mxu0 %v293
    %1308 = vmatprep.subr.mxu0 0.0
    %1309 = vmatpush1.msra.mxu0 %v294
    %1310 = vmatprep.subr.mxu0 0.0
    %1311 = vmatpush1.msra.mxu0 %v295
    %1312 = vmatprep.subr.mxu0 0.0
    %1313 = vmatpush1.msra.mxu0 %v296
    %1314 = vmatprep.subr.mxu0 0.0
    %1315 = vmatpush1.msra.mxu0 %v297
    %1316 = vmatprep.subr.mxu0 0.0
    %1317 = vmatpush1.msra.mxu0 %v298
    %1318 = vmatprep.subr.mxu0 0.0
    %1319 = vmatpush1.msra.mxu0 %v299
    %1320 = vmatprep.subr.mxu0 0.0
    %1321 = vmatpush1.msra.mxu0 %v300
    %1322 = vmatprep.subr.mxu0 0.0
    %1323 = vmatpush1.msra.mxu0 %v301
    %1324 = vmatprep.subr.mxu0 0.0
    %1325 = vmatpush1.msra.mxu0 %v302
    %1326 = vmatprep.subr.mxu0 0.0
    %1327 = vmatpush1.msra.mxu0 %v303
    %1328 = vmatprep.subr.mxu0 0.0
    %1329 = vmatpush1.msra.mxu0 %v304
    %1330 = vmatprep.subr.mxu0 0.0
    %1331 = vmatpush1.msra.mxu0 %v305
    %1332 = vmatprep.subr.mxu0 0.0
    %1333 = vmatpush1.msra.mxu0 %v306
    %1334 = vmatprep.subr.mxu0 0.0
    %1335 = vmatpush1.msra.mxu0 %v307
    %1336 = vmatprep.subr.mxu0 0.0
    %1337 = vmatpush1.msra.mxu0 %v308
    %1338 = vmatprep.subr.mxu0 0.0
    %1339 = vmatpush1.msra.mxu0 %v309
    %1340 = vmatprep.subr.mxu0 0.0
    %1341 = vmatpush1.msra.mxu0 %v310
    %1342 = vmatprep.mubr.f32.mxu0 %v633
    %1343 = vmatmul.mubr.f32.gmra.mrb[0].mxu0 %v625
    %v1344 = vpop.f32.mrb[0].mxu0
    %v1345 = vadd.f32 %v1275, %v1344
    %v1346 = vpop.f32.mrb[0].mxu0
    %1347 = vdwg.mxu0
    %1348 = vmatprep.subr.mxu0 0.0
    %1349 = vmatpush1.msra.mxu0 %v311
    %1350 = vmatprep.subr.mxu0 0.0
    %1351 = vmatpush1.msra.mxu0 %v312
    %1352 = vmatprep.subr.mxu0 0.0
    %1353 = vmatpush1.msra.mxu0 %v313
    %1354 = vmatprep.subr.mxu0 0.0
    %1355 = vmatpush1.msra.mxu0 %v314
    %1356 = vmatprep.subr.mxu0 0.0
    %1357 = vmatpush1.msra.mxu0 %v315
    %1358 = vmatprep.subr.mxu0 0.0
    %1359 = vmatpush1.msra.mxu0 %v316
    %1360 = vmatprep.subr.mxu0 0.0
    %1361 = vmatpush1.msra.mxu0 %v317
    %1362 = vmatprep.subr.mxu0 0.0
    %1363 = vmatpush1.msra.mxu0 %v318
    %1364 = vmatprep.subr.mxu0 0.0
    %1365 = vmatpush1.msra.mxu0 %v319
    %1366 = vmatprep.subr.mxu0 0.0
    %1367 = vmatpush1.msra.mxu0 %v320
    %1368 = vmatprep.subr.mxu0 0.0
    %1369 = vmatpush1.msra.mxu0 %v321
    %1370 = vmatprep.subr.mxu0 0.0
    %1371 = vmatpush1.msra.mxu0 %v322
    %1372 = vmatprep.subr.mxu0 0.0
    %1373 = vmatpush1.msra.mxu0 %v323
    %1374 = vmatprep.subr.mxu0 0.0
    %1375 = vmatpush1.msra.mxu0 %v324
    %1376 = vmatprep.subr.mxu0 0.0
    %1377 = vmatpush1.msra.mxu0 %v325
    %1378 = vmatprep.subr.mxu0 0.0
    %1379 = vmatpush1.msra.mxu0 %v326
    %1380 = vmatprep.subr.mxu0 0.0
    %1381 = vmatpush1.msra.mxu0 %v327
    %1382 = vmatprep.subr.mxu0 0.0
    %1383 = vmatpush1.msra.mxu0 %v328
    %1384 = vmatprep.subr.mxu0 0.0
    %1385 = vmatpush1.msra.mxu0 %v329
    %1386 = vmatprep.subr.mxu0 0.0
    %1387 = vmatpush1.msra.mxu0 %v330
    %1388 = vmatprep.subr.mxu0 0.0
    %1389 = vmatpush1.msra.mxu0 %v331
    %1390 = vmatprep.subr.mxu0 0.0
    %1391 = vmatpush1.msra.mxu0 %v332
    %1392 = vmatprep.subr.mxu0 0.0
    %1393 = vmatpush1.msra.mxu0 %v333
    %1394 = vmatprep.subr.mxu0 0.0
    %1395 = vmatpush1.msra.mxu0 %v334
    %1396 = vmatprep.subr.mxu0 0.0
    %1397 = vmatpush1.msra.mxu0 %v335
    %1398 = vmatprep.subr.mxu0 0.0
    %1399 = vmatpush1.msra.mxu0 %v336
    %1400 = vmatprep.subr.mxu0 0.0
    %1401 = vmatpush1.msra.mxu0 %v337
    %1402 = vmatprep.subr.mxu0 0.0
    %1403 = vmatpush1.msra.mxu0 %v338
    %1404 = vmatprep.subr.mxu0 0.0
    %1405 = vmatpush1.msra.mxu0 %v339
    %1406 = vmatprep.subr.mxu0 0.0
    %1407 = vmatpush1.msra.mxu0 %v340
    %1408 = vmatprep.subr.mxu0 0.0
    %1409 = vmatpush1.msra.mxu0 %v341
    %1410 = vmatprep.subr.mxu0 0.0
    %1411 = vmatpush1.msra.mxu0 %v342
    %1412 = vmatprep.mubr.f32.mxu0 %v634
    %1413 = vmatmul.mubr.f32.gmra.mrb[0].mxu0 %v632
    %v1414 = vpop.f32.mrb[0].mxu0
    %v1415 = vadd.f32 %v1345, %v1414
    %v1416 = vpop.f32.mrb[0].mxu0
    %1417 = vdwg.mxu0
    %1418 = vmatprep.subr.mxu0 0.0
    %1419 = vmatpush1.msra.mxu0 %v343
    %1420 = vmatprep.subr.mxu0 0.0
    %1421 = vmatpush1.msra.mxu0 %v344
    %1422 = vmatprep.subr.mxu0 0.0
    %1423 = vmatpush1.msra.mxu0 %v345
    %1424 = vmatprep.subr.mxu0 0.0
    %1425 = vmatpush1.msra.mxu0 %v346
    %1426 = vmatprep.subr.mxu0 0.0
    %1427 = vmatpush1.msra.mxu0 %v347
    %1428 = vmatprep.subr.mxu0 0.0
    %1429 = vmatpush1.msra.mxu0 %v348
    %1430 = vmatprep.subr.mxu0 0.0
    %1431 = vmatpush1.msra.mxu0 %v349
    %1432 = vmatprep.subr.mxu0 0.0
    %1433 = vmatpush1.msra.mxu0 %v350
    %1434 = vmatprep.subr.mxu0 0.0
    %1435 = vmatpush1.msra.mxu0 %v351
    %1436 = vmatprep.subr.mxu0 0.0
    %1437 = vmatpush1.msra.mxu0 %v352
    %1438 = vmatprep.subr.mxu0 0.0
    %1439 = vmatpush1.msra.mxu0 %v353
    %1440 = vmatprep.subr.mxu0 0.0
    %1441 = vmatpush1.msra.mxu0 %v354
    %1442 = vmatprep.subr.mxu0 0.0
    %1443 = vmatpush1.msra.mxu0 %v355
    %1444 = vmatprep.subr.mxu0 0.0
    %1445 = vmatpush1.msra.mxu0 %v356
    %1446 = vmatprep.subr.mxu0 0.0
    %1447 = vmatpush1.msra.mxu0 %v357
    %1448 = vmatprep.subr.mxu0 0.0
    %1449 = vmatpush1.msra.mxu0 %v358
    %1450 = vmatprep.subr.mxu0 0.0
    %1451 = vmatpush1.msra.mxu0 %v359
    %1452 = vmatprep.subr.mxu0 0.0
    %1453 = vmatpush1.msra.mxu0 %v360
    %1454 = vmatprep.subr.mxu0 0.0
    %1455 = vmatpush1.msra.mxu0 %v361
    %1456 = vmatprep.subr.mxu0 0.0
    %1457 = vmatpush1.msra.mxu0 %v362
    %1458 = vmatprep.subr.mxu0 0.0
    %1459 = vmatpush1.msra.mxu0 %v363
    %1460 = vmatprep.subr.mxu0 0.0
    %1461 = vmatpush1.msra.mxu0 %v364
    %1462 = vmatprep.subr.mxu0 0.0
    %1463 = vmatpush1.msra.mxu0 %v365
    %1464 = vmatprep.subr.mxu0 0.0
    %1465 = vmatpush1.msra.mxu0 %v366
    %1466 = vmatprep.subr.mxu0 0.0
    %1467 = vmatpush1.msra.mxu0 %v367
    %1468 = vmatprep.subr.mxu0 0.0
    %1469 = vmatpush1.msra.mxu0 %v368
    %1470 = vmatprep.subr.mxu0 0.0
    %1471 = vmatpush1.msra.mxu0 %v369
    %1472 = vmatprep.subr.mxu0 0.0
    %1473 = vmatpush1.msra.mxu0 %v370
    %1474 = vmatprep.subr.mxu0 0.0
    %1475 = vmatpush1.msra.mxu0 %v371
    %1476 = vmatprep.subr.mxu0 0.0
    %1477 = vmatpush1.msra.mxu0 %v372
    %1478 = vmatprep.subr.mxu0 0.0
    %1479 = vmatpush1.msra.mxu0 %v373
    %1480 = vmatprep.subr.mxu0 0.0
    %1481 = vmatpush1.msra.mxu0 %v374
    %1482 = vmatprep.mubr.f32.mxu0 %v650
    %1483 = vmatmul.mubr.f32.gmra.mrb[0].mxu0 %v642
    %v1484 = vpop.f32.mrb[0].mxu0
    %v1485 = vadd.f32 %v1415, %v1484
    %v1486 = vpop.f32.mrb[0].mxu0
    %1487 = vdwg.mxu0
    %1488 = vmatprep.subr.mxu0 0.0
    %1489 = vmatpush1.msra.mxu0 %v375
    %1490 = vmatprep.subr.mxu0 0.0
    %1491 = vmatpush1.msra.mxu0 %v376
    %1492 = vmatprep.subr.mxu0 0.0
    %1493 = vmatpush1.msra.mxu0 %v377
    %1494 = vmatprep.subr.mxu0 0.0
    %1495 = vmatpush1.msra.mxu0 %v378
    %1496 = vmatprep.subr.mxu0 0.0
    %1497 = vmatpush1.msra.mxu0 %v379
    %1498 = vmatprep.subr.mxu0 0.0
    %1499 = vmatpush1.msra.mxu0 %v380
    %1500 = vmatprep.subr.mxu0 0.0
    %1501 = vmatpush1.msra.mxu0 %v381
    %1502 = vmatprep.subr.mxu0 0.0
    %1503 = vmatpush1.msra.mxu0 %v382
    %1504 = vmatprep.subr.mxu0 0.0
    %1505 = vmatpush1.msra.mxu0 %v383
    %1506 = vmatprep.subr.mxu0 0.0
    %1507 = vmatpush1.msra.mxu0 %v384
    %1508 = vmatprep.subr.mxu0 0.0
    %1509 = vmatpush1.msra.mxu0 %v385
    %1510 = vmatprep.subr.mxu0 0.0
    %1511 = vmatpush1.msra.mxu0 %v386
    %1512 = vmatprep.subr.mxu0 0.0
    %1513 = vmatpush1.msra.mxu0 %v387
    %1514 = vmatprep.subr.mxu0 0.0
    %1515 = vmatpush1.msra.mxu0 %v388
    %1516 = vmatprep.subr.mxu0 0.0
    %1517 = vmatpush1.msra.mxu0 %v389
    %1518 = vmatprep.subr.mxu0 0.0
    %1519 = vmatpush1.msra.mxu0 %v390
    %1520 = vmatprep.subr.mxu0 0.0
    %1521 = vmatpush1.msra.mxu0 %v391
    %1522 = vmatprep.subr.mxu0 0.0
    %1523 = vmatpush1.msra.mxu0 %v392
    %1524 = vmatprep.subr.mxu0 0.0
    %1525 = vmatpush1.msra.mxu0 %v393
    %1526 = vmatprep.subr.mxu0 0.0
    %1527 = vmatpush1.msra.mxu0 %v394
    %1528 = vmatprep.subr.mxu0 0.0
    %1529 = vmatpush1.msra.mxu0 %v395
    %1530 = vmatprep.subr.mxu0 0.0
    %1531 = vmatpush1.msra.mxu0 %v396
    %1532 = vmatprep.subr.mxu0 0.0
    %1533 = vmatpush1.msra.mxu0 %v397
    %1534 = vmatprep.subr.mxu0 0.0
    %1535 = vmatpush1.msra.mxu0 %v398
    %1536 = vmatprep.subr.mxu0 0.0
    %1537 = vmatpush1.msra.mxu0 %v399
    %1538 = vmatprep.subr.mxu0 0.0
    %1539 = vmatpush1.msra.mxu0 %v400
    %1540 = vmatprep.subr.mxu0 0.0
    %1541 = vmatpush1.msra.mxu0 %v401
    %1542 = vmatprep.subr.mxu0 0.0
    %1543 = vmatpush1.msra.mxu0 %v402
    %1544 = vmatprep.subr.mxu0 0.0
    %1545 = vmatpush1.msra.mxu0 %v403
    %1546 = vmatprep.subr.mxu0 0.0
    %1547 = vmatpush1.msra.mxu0 %v404
    %1548 = vmatprep.subr.mxu0 0.0
    %1549 = vmatpush1.msra.mxu0 %v405
    %1550 = vmatprep.subr.mxu0 0.0
    %1551 = vmatpush1.msra.mxu0 %v406
    %1552 = vmatprep.mubr.f32.mxu0 %v651
    %1553 = vmatmul.mubr.f32.gmra.mrb[0].mxu0 %v649
    %v1554 = vpop.f32.mrb[0].mxu0
    %v1555 = vadd.f32 %v1485, %v1554
    %v1556 = vpop.f32.mrb[0].mxu0
    %1557 = vdwg.mxu0
    %1558 = vmatprep.subr.mxu0 0.0
    %1559 = vmatpush1.msra.mxu0 %v407
    %1560 = vmatprep.subr.mxu0 0.0
    %1561 = vmatpush1.msra.mxu0 %v408
    %1562 = vmatprep.subr.mxu0 0.0
    %1563 = vmatpush1.msra.mxu0 %v409
    %1564 = vmatprep.subr.mxu0 0.0
    %1565 = vmatpush1.msra.mxu0 %v410
    %1566 = vmatprep.subr.mxu0 0.0
    %1567 = vmatpush1.msra.mxu0 %v411
    %1568 = vmatprep.subr.mxu0 0.0
    %1569 = vmatpush1.msra.mxu0 %v412
    %1570 = vmatprep.subr.mxu0 0.0
    %1571 = vmatpush1.msra.mxu0 %v413
    %1572 = vmatprep.subr.mxu0 0.0
    %1573 = vmatpush1.msra.mxu0 %v414
    %1574 = vmatprep.subr.mxu0 0.0
    %1575 = vmatpush1.msra.mxu0 %v415
    %1576 = vmatprep.subr.mxu0 0.0
    %1577 = vmatpush1.msra.mxu0 %v416
    %1578 = vmatprep.subr.mxu0 0.0
    %1579 = vmatpush1.msra.mxu0 %v417
    %1580 = vmatprep.subr.mxu0 0.0
    %1581 = vmatpush1.msra.mxu0 %v418
    %1582 = vmatprep.subr.mxu0 0.0
    %1583 = vmatpush1.msra.mxu0 %v419
    %1584 = vmatprep.subr.mxu0 0.0
    %1585 = vmatpush1.msra.mxu0 %v420
    %1586 = vmatprep.subr.mxu0 0.0
    %1587 = vmatpush1.msra.mxu0 %v421
    %1588 = vmatprep.subr.mxu0 0.0
    %1589 = vmatpush1.msra.mxu0 %v422
    %1590 = vmatprep.subr.mxu0 0.0
    %1591 = vmatpush1.msra.mxu0 %v423
    %1592 = vmatprep.subr.mxu0 0.0
    %1593 = vmatpush1.msra.mxu0 %v424
    %1594 = vmatprep.subr.mxu0 0.0
    %1595 = vmatpush1.msra.mxu0 %v425
    %1596 = vmatprep.subr.mxu0 0.0
    %1597 = vmatpush1.msra.mxu0 %v426
    %1598 = vmatprep.subr.mxu0 0.0
    %1599 = vmatpush1.msra.mxu0 %v427
    %1600 = vmatprep.subr.mxu0 0.0
    %1601 = vmatpush1.msra.mxu0 %v428
    %1602 = vmatprep.subr.mxu0 0.0
    %1603 = vmatpush1.msra.mxu0 %v429
    %1604 = vmatprep.subr.mxu0 0.0
    %1605 = vmatpush1.msra.mxu0 %v430
    %1606 = vmatprep.subr.mxu0 0.0
    %1607 = vmatpush1.msra.mxu0 %v431
    %1608 = vmatprep.subr.mxu0 0.0
    %1609 = vmatpush1.msra.mxu0 %v432
    %1610 = vmatprep.subr.mxu0 0.0
    %1611 = vmatpush1.msra.mxu0 %v433
    %1612 = vmatprep.subr.mxu0 0.0
    %1613 = vmatpush1.msra.mxu0 %v434
    %1614 = vmatprep.subr.mxu0 0.0
    %1615 = vmatpush1.msra.mxu0 %v435
    %1616 = vmatprep.subr.mxu0 0.0
    %1617 = vmatpush1.msra.mxu0 %v436
    %1618 = vmatprep.subr.mxu0 0.0
    %1619 = vmatpush1.msra.mxu0 %v437
    %1620 = vmatprep.subr.mxu0 0.0
    %1621 = vmatpush1.msra.mxu0 %v438
    %1622 = vmatprep.mubr.f32.mxu0 %v667
    %1623 = vmatmul.mubr.f32.gmra.mrb[0].mxu0 %v659
    %v1624 = vpop.f32.mrb[0].mxu0
    %v1625 = vadd.f32 %v1555, %v1624
    %v1626 = vpop.f32.mrb[0].mxu0
    %1627 = vdwg.mxu0
    %1628 = vmatprep.subr.mxu0 0.0
    %1629 = vmatpush1.msra.mxu0 %v439
    %1630 = vmatprep.subr.mxu0 0.0
    %1631 = vmatpush1.msra.mxu0 %v440
    %1632 = vmatprep.subr.mxu0 0.0
    %1633 = vmatpush1.msra.mxu0 %v441
    %1634 = vmatprep.subr.mxu0 0.0
    %1635 = vmatpush1.msra.mxu0 %v442
    %1636 = vmatprep.subr.mxu0 0.0
    %1637 = vmatpush1.msra.mxu0 %v443
    %1638 = vmatprep.subr.mxu0 0.0
    %1639 = vmatpush1.msra.mxu0 %v444
    %1640 = vmatprep.subr.mxu0 0.0
    %1641 = vmatpush1.msra.mxu0 %v445
    %1642 = vmatprep.subr.mxu0 0.0
    %1643 = vmatpush1.msra.mxu0 %v446
    %1644 = vmatprep.subr.mxu0 0.0
    %1645 = vmatpush1.msra.mxu0 %v447
    %1646 = vmatprep.subr.mxu0 0.0
    %1647 = vmatpush1.msra.mxu0 %v448
    %1648 = vmatprep.subr.mxu0 0.0
    %1649 = vmatpush1.msra.mxu0 %v449
    %1650 = vmatprep.subr.mxu0 0.0
    %1651 = vmatpush1.msra.mxu0 %v450
    %1652 = vmatprep.subr.mxu0 0.0
    %1653 = vmatpush1.msra.mxu0 %v451
    %1654 = vmatprep.subr.mxu0 0.0
    %1655 = vmatpush1.msra.mxu0 %v452
    %1656 = vmatprep.subr.mxu0 0.0
    %1657 = vmatpush1.msra.mxu0 %v453
    %1658 = vmatprep.subr.mxu0 0.0
    %1659 = vmatpush1.msra.mxu0 %v454
    %1660 = vmatprep.subr.mxu0 0.0
    %1661 = vmatpush1.msra.mxu0 %v455
    %1662 = vmatprep.subr.mxu0 0.0
    %1663 = vmatpush1.msra.mxu0 %v456
    %1664 = vmatprep.subr.mxu0 0.0
    %1665 = vmatpush1.msra.mxu0 %v457
    %1666 = vmatprep.subr.mxu0 0.0
    %1667 = vmatpush1.msra.mxu0 %v458
    %1668 = vmatprep.subr.mxu0 0.0
    %1669 = vmatpush1.msra.mxu0 %v459
    %1670 = vmatprep.subr.mxu0 0.0
    %1671 = vmatpush1.msra.mxu0 %v460
    %1672 = vmatprep.subr.mxu0 0.0
    %1673 = vmatpush1.msra.mxu0 %v461
    %1674 = vmatprep.subr.mxu0 0.0
    %1675 = vmatpush1.msra.mxu0 %v462
    %1676 = vmatprep.subr.mxu0 0.0
    %1677 = vmatpush1.msra.mxu0 %v463
    %1678 = vmatprep.subr.mxu0 0.0
    %1679 = vmatpush1.msra.mxu0 %v464
    %1680 = vmatprep.subr.mxu0 0.0
    %1681 = vmatpush1.msra.mxu0 %v465
    %1682 = vmatprep.subr.mxu0 0.0
    %1683 = vmatpush1.msra.mxu0 %v466
    %1684 = vmatprep.subr.mxu0 0.0
    %1685 = vmatpush1.msra.mxu0 %v467
    %1686 = vmatprep.subr.mxu0 0.0
    %1687 = vmatpush1.msra.mxu0 %v468
    %1688 = vmatprep.subr.mxu0 0.0
    %1689 = vmatpush1.msra.mxu0 %v469
    %1690 = vmatprep.subr.mxu0 0.0
    %1691 = vmatpush1.msra.mxu0 %v470
    %1692 = vmatprep.mubr.f32.mxu0 %v668
    %1693 = vmatmul.mubr.f32.gmra.mrb[0].mxu0 %v666
    %v1694 = vpop.f32.mrb[0].mxu0
    %v1695 = vadd.f32 %v1625, %v1694
    %v1696 = vpop.f32.mrb[0].mxu0
    %1697 = vdwg.mxu0
    %1698 = vmatprep.subr.mxu0 0.0
    %1699 = vmatpush1.msra.mxu0 %v471
    %1700 = vmatprep.subr.mxu0 0.0
    %1701 = vmatpush1.msra.mxu0 %v472
    %1702 = vmatprep.subr.mxu0 0.0
    %1703 = vmatpush1.msra.mxu0 %v473
    %1704 = vmatprep.subr.mxu0 0.0
    %1705 = vmatpush1.msra.mxu0 %v474
    %1706 = vmatprep.subr.mxu0 0.0
    %1707 = vmatpush1.msra.mxu0 %v475
    %1708 = vmatprep.subr.mxu0 0.0
    %1709 = vmatpush1.msra.mxu0 %v476
    %1710 = vmatprep.subr.mxu0 0.0
    %1711 = vmatpush1.msra.mxu0 %v477
    %1712 = vmatprep.subr.mxu0 0.0
    %1713 = vmatpush1.msra.mxu0 %v478
    %1714 = vmatprep.subr.mxu0 0.0
    %1715 = vmatpush1.msra.mxu0 %v479
    %1716 = vmatprep.subr.mxu0 0.0
    %1717 = vmatpush1.msra.mxu0 %v480
    %1718 = vmatprep.subr.mxu0 0.0
    %1719 = vmatpush1.msra.mxu0 %v481
    %1720 = vmatprep.subr.mxu0 0.0
    %1721 = vmatpush1.msra.mxu0 %v482
    %1722 = vmatprep.subr.mxu0 0.0
    %1723 = vmatpush1.msra.mxu0 %v483
    %1724 = vmatprep.subr.mxu0 0.0
    %1725 = vmatpush1.msra.mxu0 %v484
    %1726 = vmatprep.subr.mxu0 0.0
    %1727 = vmatpush1.msra.mxu0 %v485
    %1728 = vmatprep.subr.mxu0 0.0
    %1729 = vmatpush1.msra.mxu0 %v486
    %1730 = vmatprep.subr.mxu0 0.0
    %1731 = vmatpush1.msra.mxu0 %v487
    %1732 = vmatprep.subr.mxu0 0.0
    %1733 = vmatpush1.msra.mxu0 %v488
    %1734 = vmatprep.subr.mxu0 0.0
    %1735 = vmatpush1.msra.mxu0 %v489
    %1736 = vmatprep.subr.mxu0 0.0
    %1737 = vmatpush1.msra.mxu0 %v490
    %1738 = vmatprep.subr.mxu0 0.0
    %1739 = vmatpush1.msra.mxu0 %v491
    %1740 = vmatprep.subr.mxu0 0.0
    %1741 = vmatpush1.msra.mxu0 %v492
    %1742 = vmatprep.subr.mxu0 0.0
    %1743 = vmatpush1.msra.mxu0 %v493
    %1744 = vmatprep.subr.mxu0 0.0
    %1745 = vmatpush1.msra.mxu0 %v494
    %1746 = vmatprep.subr.mxu0 0.0
    %1747 = vmatpush1.msra.mxu0 %v495
    %1748 = vmatprep.subr.mxu0 0.0
    %1749 = vmatpush1.msra.mxu0 %v496
    %1750 = vmatprep.subr.mxu0 0.0
    %1751 = vmatpush1.msra.mxu0 %v497
    %1752 = vmatprep.subr.mxu0 0.0
    %1753 = vmatpush1.msra.mxu0 %v498
    %1754 = vmatprep.subr.mxu0 0.0
    %1755 = vmatpush1.msra.mxu0 %v499
    %1756 = vmatprep.subr.mxu0 0.0
    %1757 = vmatpush1.msra.mxu0 %v500
    %1758 = vmatprep.subr.mxu0 0.0
    %1759 = vmatpush1.msra.mxu0 %v501
    %1760 = vmatprep.subr.mxu0 0.0
    %1761 = vmatpush1.msra.mxu0 %v502
    %1762 = vmatprep.mubr.f32.mxu0 %v684
    %1763 = vmatmul.mubr.f32.gmra.mrb[0].mxu0 %v676
    %v1764 = vpop.f32.mrb[0].mxu0
    %v1765 = vadd.f32 %v1695, %v1764
    %v1766 = vpop.f32.mrb[0].mxu0
    %1767 = vdwg.mxu0
    %1768 = vmatprep.subr.mxu0 0.0
    %1769 = vmatpush1.msra.mxu0 %v503
    %1770 = vmatprep.subr.mxu0 0.0
    %1771 = vmatpush1.msra.mxu0 %v504
    %1772 = vmatprep.subr.mxu0 0.0
    %1773 = vmatpush1.msra.mxu0 %v505
    %1774 = vmatprep.subr.mxu0 0.0
    %1775 = vmatpush1.msra.mxu0 %v506
    %1776 = vmatprep.subr.mxu0 0.0
    %1777 = vmatpush1.msra.mxu0 %v507
    %1778 = vmatprep.subr.mxu0 0.0
    %1779 = vmatpush1.msra.mxu0 %v508
    %1780 = vmatprep.subr.mxu0 0.0
    %1781 = vmatpush1.msra.mxu0 %v509
    %1782 = vmatprep.subr.mxu0 0.0
    %1783 = vmatpush1.msra.mxu0 %v510
    %1784 = vmatprep.subr.mxu0 0.0
    %1785 = vmatpush1.msra.mxu0 %v511
    %1786 = vmatprep.subr.mxu0 0.0
    %1787 = vmatpush1.msra.mxu0 %v512
    %1788 = vmatprep.subr.mxu0 0.0
    %1789 = vmatpush1.msra.mxu0 %v513
    %1790 = vmatprep.subr.mxu0 0.0
    %1791 = vmatpush1.msra.mxu0 %v514
    %1792 = vmatprep.subr.mxu0 0.0
    %1793 = vmatpush1.msra.mxu0 %v515
    %1794 = vmatprep.subr.mxu0 0.0
    %1795 = vmatpush1.msra.mxu0 %v516
    %1796 = vmatprep.subr.mxu0 0.0
    %1797 = vmatpush1.msra.mxu0 %v517
    %1798 = vmatprep.subr.mxu0 0.0
    %1799 = vmatpush1.msra.mxu0 %v518
    %1800 = vmatprep.subr.mxu0 0.0
    %1801 = vmatpush1.msra.mxu0 %v519
    %1802 = vmatprep.subr.mxu0 0.0
    %1803 = vmatpush1.msra.mxu0 %v520
    %1804 = vmatprep.subr.mxu0 0.0
    %1805 = vmatpush1.msra.mxu0 %v521
    %1806 = vmatprep.subr.mxu0 0.0
    %1807 = vmatpush1.msra.mxu0 %v522
    %1808 = vmatprep.subr.mxu0 0.0
    %1809 = vmatpush1.msra.mxu0 %v523
    %1810 = vmatprep.subr.mxu0 0.0
    %1811 = vmatpush1.msra.mxu0 %v524
    %1812 = vmatprep.subr.mxu0 0.0
    %1813 = vmatpush1.msra.mxu0 %v525
    %1814 = vmatprep.subr.mxu0 0.0
    %1815 = vmatpush1.msra.mxu0 %v526
    %1816 = vmatprep.subr.mxu0 0.0
    %1817 = vmatpush1.msra.mxu0 %v527
    %1818 = vmatprep.subr.mxu0 0.0
    %1819 = vmatpush1.msra.mxu0 %v528
    %1820 = vmatprep.subr.mxu0 0.0
    %1821 = vmatpush1.msra.mxu0 %v529
    %1822 = vmatprep.subr.mxu0 0.0
    %1823 = vmatpush1.msra.mxu0 %v530
    %1824 = vmatprep.subr.mxu0 0.0
    %1825 = vmatpush1.msra.mxu0 %v531
    %1826 = vmatprep.subr.mxu0 0.0
    %1827 = vmatpush1.msra.mxu0 %v532
    %1828 = vmatprep.subr.mxu0 0.0
    %1829 = vmatpush1.msra.mxu0 %v533
    %1830 = vmatprep.subr.mxu0 0.0
    %1831 = vmatpush1.msra.mxu0 %v534
    %1832 = vmatprep.mubr.f32.mxu0 %v685
    %1833 = vmatmul.mubr.f32.gmra.mrb[0].mxu0 %v683
    %v1834 = vpop.f32.mrb[0].mxu0
    %v1835 = vadd.f32 %v1765, %v1834
    %v1836 = vpop.f32.mrb[0].mxu0
    %1837 = vdwg.mxu0
    %1838 = vst [vmem:[#allocation2] sm:$0x3] %v1835
    // Predicated region
    $region14: #{forward.3} parent=1 // pred_check
      _
    $region15: #{forward.3} parent=1 // pred_check_branch
      %1840 = sbr.rel (0) target = $region17
    $region16: #{forward.3} parent=1 // pred_region
      %s1842 = ssub.s32 32, 32
      %1843 = vsyncadd [#allocation3], %s1842
      %s1845 = sshll.u32 [#allocation2], 4
      %s1846 = int_to_ptr.vmem [resolvable:$true] %s1845
      %1848 = dma.vmem_to_hbm [thread:$0]  %s1846, 32, %s3, [#allocation3]
    $region17: #{forward.3} parent=1 // pred_fallthru
      _
    // Predicated region
    $region18: #{forward.3} parent=1 // pred_check
      _
    $region19: #{forward.3} parent=1 // pred_check_branch
      %1850 = sbr.rel (0) target = $region21
    $region20: #{forward.3} parent=1 // pred_region
      %1851 = dma.done [#allocation3], 32
    $region21: #{forward.3} parent=1 // pred_fallthru
      _
    %1852 = vsyncpa [#allocation3], 1

// kernel: forward.2
$region0: #{forward.2}
  #allocation0 [shape = 'u32[]', space=smem, size = 0x4, offset = 0x4, fixed_abs, tag = 'smem constant byte address 0x4 - core index']
  #allocation1 [shape = 'u32[144,128]{1,0:T(1,128)}', space=vmem, size = 0x12000, scoped, tag = 'internal scratch']
  #allocation2 [shape = 'f32[18,9,64]{2,1,0:T(8,128)}', space=vmem, size = 0x24000, scoped, tag = 'scratch operand']
  #allocation3 [shape = 'f32[10,10,64]{2,1,0:T(8,128)}', space=vmem, size = 0x14000, scoped, tag = 'scratch operand']
  %s0 = inlined_call_operand.vmem [shape: f32[2,34,9,12], index: 0, kind: input, shape index: {}]
  %s1 = inlined_call_operand.vmem [shape: f32[72,128], index: 1, kind: input, shape index: {}]
  %s2 = inlined_call_operand.vmem [shape: f32[1,128], index: 2, kind: input, shape index: {}]
  %s3 = inlined_call_operand.vmem [shape: f32[384,128], index: 3, kind: input, shape index: {}]
  %s4 = inlined_call_operand.vmem [shape: f32[1,128], index: 4, kind: input, shape index: {}]
  %s5 = inlined_call_operand.vmem [shape: f32[576,64], index: 5, kind: input, shape index: {}]
  %s6 = inlined_call_operand.vmem [shape: f32[1,64], index: 6, kind: input, shape index: {}]
  %s7 = inlined_call_operand.vmem [shape: f32[2,64,64], index: 7, kind: output, shape index: {}]
  %s8 = sld [smem:[#allocation0]]
  $region61: #{forward.2} parent=0
    _
  %s10 = ssub.s32 1, %s8
  %s11 = scalar_select 0, %s10, %s8
  loop: start=0, step=1, limit=4
  $region2: #{forward.2} parent=0 // loop_pre_header
    _
  $region3: #{forward.2} parent=0 // loop_header
    %s13 = sphi 0, %s17
    %p14 = scmp.ge.s32.totalorder %s13, 4
    %s23 = sphi 0, %s25
    %s26 = sphi 0, %s23
    %s27 = sphi 0, %s26
    %s43 = sphi 0, %s27
    %s47 = sphi 0, %s47
    %s49 = sphi 0, %s47
    %s50 = sphi 0, %s49
    %s64 = sphi 0, %s50
    %s68 = sphi 0, %s68
    %s70 = sphi 0, %s68
    %s71 = sphi 0, %s70
    %s85 = sphi 0, %s71
    %s89 = sphi 0, %s89
    %s91 = sphi 0, %s89
    %s92 = sphi 0, %s91
    %s106 = sphi 0, %s92
    %s110 = sphi 0, %s110
    %s112 = sphi 0, %s110
    %s113 = sphi 0, %s112
    %s127 = sphi 0, %s113
    %s131 = sphi 0, %s131
    %s133 = sphi 0, %s131
    %s134 = sphi 0, %s133
    %s148 = sphi 0, %s134
    %s152 = sphi 0, %s152
    %s154 = sphi 0, %s152
    %s155 = sphi 0, %s154
    %s169 = sphi 0, %s155
    %s175 = sphi 0, %s177
    %s178 = sphi 0, %s175
    %s179 = sphi 0, %s178
    %s195 = sphi 0, %s179
  $region4: #{forward.2} parent=0 // loop_header_branch
    %16 = sbr.rel (%p14) target = $region8
  $region5: #{forward.2} parent=0 // loop_body
    %s18 = ssub.s32 %s13, 1
    %s19 = ssub.s32 %s13, 2
    %s20 = sadd.s32 %s13, 1
    %s21 = ssub.s32 %s13, %s20
    %p22 = scmp.eq.s32.totalorder %s21, 0
    %s24 = sadd.s32 %s23, 1
    %s25 = scalar_select %p22, %s23, %s24
    %p28 = pneg %p22
    %p29 = scmp.eq.s32.totalorder %s13, 1
    %p30 = por %p28, %p29
    %p31 = scmp.ne.s32.totalorder %s23, %s26
    %p32 = scmp.eq.s32.totalorder %s13, 0
    %p33 = por %p31, %p32
    %p34 = scmp.ne.s32.totalorder %s23, %s26
    %p35 = scmp.eq.s32.totalorder %s18, 1
    %p36 = por %p34, %p35
    %p37 = scmp.ne.s32.totalorder %s26, %s27
    %p38 = scmp.eq.s32.totalorder %s18, 0
    %p39 = por %p37, %p38
    %p40 = scmp.ne.s32.totalorder %s26, %s27
    %p41 = scmp.eq.s32.totalorder %s19, 1
    %p42 = por %p40, %p41
    %p44 = scmp.ne.s32.totalorder %s27, %s43
    %p45 = scmp.eq.s32.totalorder %s19, 0
    %p46 = por %p44, %p45
    %s48 = sadd.s32 %s47, 1
    %p51 = scmp.eq.s32.totalorder %s13, 1
    %p52 = scmp.ne.s32.totalorder %s47, %s49
    %p53 = scmp.eq.s32.totalorder %s13, 0
    %p54 = por %p52, %p53
    %p55 = scmp.ne.s32.totalorder %s47, %s49
    %p56 = scmp.eq.s32.totalorder %s18, 1
    %p57 = por %p55, %p56
    %p58 = scmp.ne.s32.totalorder %s49, %s50
    %p59 = scmp.eq.s32.totalorder %s18, 0
    %p60 = por %p58, %p59
    %p61 = scmp.ne.s32.totalorder %s49, %s50
    %p62 = scmp.eq.s32.totalorder %s19, 1
    %p63 = por %p61, %p62
    %p65 = scmp.ne.s32.totalorder %s50, %s64
    %p66 = scmp.eq.s32.totalorder %s19, 0
    %p67 = por %p65, %p66
    %s69 = sadd.s32 %s68, 1
    %p72 = scmp.eq.s32.totalorder %s13, 1
    %p73 = scmp.ne.s32.totalorder %s68, %s70
    %p74 = scmp.eq.s32.totalorder %s13, 0
    %p75 = por %p73, %p74
    %p76 = scmp.ne.s32.totalorder %s68, %s70
    %p77 = scmp.eq.s32.totalorder %s18, 1
    %p78 = por %p76, %p77
    %p79 = scmp.ne.s32.totalorder %s70, %s71
    %p80 = scmp.eq.s32.totalorder %s18, 0
    %p81 = por %p79, %p80
    %p82 = scmp.ne.s32.totalorder %s70, %s71
    %p83 = scmp.eq.s32.totalorder %s19, 1
    %p84 = por %p82, %p83
    %p86 = scmp.ne.s32.totalorder %s71, %s85
    %p87 = scmp.eq.s32.totalorder %s19, 0
    %p88 = por %p86, %p87
    %s90 = sadd.s32 %s89, 1
    %p93 = scmp.eq.s32.totalorder %s13, 1
    %p94 = scmp.ne.s32.totalorder %s89, %s91
    %p95 = scmp.eq.s32.totalorder %s13, 0
    %p96 = por %p94, %p95
    %p97 = scmp.ne.s32.totalorder %s89, %s91
    %p98 = scmp.eq.s32.totalorder %s18, 1
    %p99 = por %p97, %p98
    %p100 = scmp.ne.s32.totalorder %s91, %s92
    %p101 = scmp.eq.s32.totalorder %s18, 0
    %p102 = por %p100, %p101
    %p103 = scmp.ne.s32.totalorder %s91, %s92
    %p104 = scmp.eq.s32.totalorder %s19, 1
    %p105 = por %p103, %p104
    %p107 = scmp.ne.s32.totalorder %s92, %s106
    %p108 = scmp.eq.s32.totalorder %s19, 0
    %p109 = por %p107, %p108
    %s111 = sadd.s32 %s110, 1
    %p114 = scmp.eq.s32.totalorder %s13, 1
    %p115 = scmp.ne.s32.totalorder %s110, %s112
    %p116 = scmp.eq.s32.totalorder %s13, 0
    %p117 = por %p115, %p116
    %p118 = scmp.ne.s32.totalorder %s110, %s112
    %p119 = scmp.eq.s32.totalorder %s18, 1
    %p120 = por %p118, %p119
    %p121 = scmp.ne.s32.totalorder %s112, %s113
    %p122 = scmp.eq.s32.totalorder %s18, 0
    %p123 = por %p121, %p122
    %p124 = scmp.ne.s32.totalorder %s112, %s113
    %p125 = scmp.eq.s32.totalorder %s19, 1
    %p126 = por %p124, %p125
    %p128 = scmp.ne.s32.totalorder %s113, %s127
    %p129 = scmp.eq.s32.totalorder %s19, 0
    %p130 = por %p128, %p129
    %s132 = sadd.s32 %s131, 1
    %p135 = scmp.eq.s32.totalorder %s13, 1
    %p136 = scmp.ne.s32.totalorder %s131, %s133
    %p137 = scmp.eq.s32.totalorder %s13, 0
    %p138 = por %p136, %p137
    %p139 = scmp.ne.s32.totalorder %s131, %s133
    %p140 = scmp.eq.s32.totalorder %s18, 1
    %p141 = por %p139, %p140
    %p142 = scmp.ne.s32.totalorder %s133, %s134
    %p143 = scmp.eq.s32.totalorder %s18, 0
    %p144 = por %p142, %p143
    %p145 = scmp.ne.s32.totalorder %s133, %s134
    %p146 = scmp.eq.s32.totalorder %s19, 1
    %p147 = por %p145, %p146
    %p149 = scmp.ne.s32.totalorder %s134, %s148
    %p150 = scmp.eq.s32.totalorder %s19, 0
    %p151 = por %p149, %p150
    %s153 = sadd.s32 %s152, 1
    %p156 = scmp.eq.s32.totalorder %s13, 1
    %p157 = scmp.ne.s32.totalorder %s152, %s154
    %p158 = scmp.eq.s32.totalorder %s13, 0
    %p159 = por %p157, %p158
    %p160 = scmp.ne.s32.totalorder %s152, %s154
    %p161 = scmp.eq.s32.totalorder %s18, 1
    %p162 = por %p160, %p161
    %p163 = scmp.ne.s32.totalorder %s154, %s155
    %p164 = scmp.eq.s32.totalorder %s18, 0
    %p165 = por %p163, %p164
    %p166 = scmp.ne.s32.totalorder %s154, %s155
    %p167 = scmp.eq.s32.totalorder %s19, 1
    %p168 = por %p166, %p167
    %p170 = scmp.ne.s32.totalorder %s155, %s169
    %p171 = scmp.eq.s32.totalorder %s19, 0
    %p172 = por %p170, %p171
    %s173 = ssub.s32 %s13, %s20
    %p174 = scmp.eq.s32.totalorder %s173, 0
    %s176 = sadd.s32 %s175, 1
    %s177 = scalar_select %p174, %s175, %s176
    %p180 = pneg %p174
    %p181 = scmp.eq.s32.totalorder %s13, 1
    %p182 = por %p180, %p181
    %p183 = scmp.ne.s32.totalorder %s175, %s178
    %p184 = scmp.eq.s32.totalorder %s13, 0
    %p185 = por %p183, %p184
    %p186 = scmp.ne.s32.totalorder %s175, %s178
    %p187 = scmp.eq.s32.totalorder %s18, 1
    %p188 = por %p186, %p187
    %p189 = scmp.ne.s32.totalorder %s178, %s179
    %p190 = scmp.eq.s32.totalorder %s18, 0
    %p191 = por %p189, %p190
    %p192 = scmp.ne.s32.totalorder %s178, %s179
    %p193 = scmp.eq.s32.totalorder %s19, 1
    %p194 = por %p192, %p193
    %p196 = scmp.ne.s32.totalorder %s179, %s195
    %p197 = scmp.eq.s32.totalorder %s19, 0
    %p198 = por %p196, %p197
    %p199 = scmp.le.s32.totalorder 1, %s13
    %p200 = scmp.lt.s32.totalorder %s13, 3
    %p201 = pnand %p199, %p200
    %p202 = pneg %p201
    // Predicated region
    $region9: #{forward.2} parent=5 // pred_check
      _
    $region10: #{forward.2} parent=5 // pred_check_branch
      %204 = sbr.rel (%p201) target = $region12
    $region11: #{forward.2} parent=5 // pred_region
      %s205 = ssub.s32 %s13, 1
      // Predicated region
      $region13: #{forward.2} parent=11 // pred_check
        %p206 = pneg %p60
      $region14: #{forward.2} parent=11 // pred_check_branch
        %208 = sbr.rel (%p206) target = $region16
      $region15: #{forward.2} parent=11 // pred_region
        _
      $region16: #{forward.2} parent=11 // pred_fallthru
        _
      // Predicated region
      $region17: #{forward.2} parent=11 // pred_check
        %p209 = pneg %p81
      $region18: #{forward.2} parent=11 // pred_check_branch
        %211 = sbr.rel (%p209) target = $region20
      $region19: #{forward.2} parent=11 // pred_region
        _
      $region20: #{forward.2} parent=11 // pred_fallthru
        _
      // Predicated region
      $region21: #{forward.2} parent=11 // pred_check
        %p212 = pneg %p102
      $region22: #{forward.2} parent=11 // pred_check_branch
        %214 = sbr.rel (%p212) target = $region24
      $region23: #{forward.2} parent=11 // pred_region
        _
      $region24: #{forward.2} parent=11 // pred_fallthru
        _
      // Predicated region
      $region25: #{forward.2} parent=11 // pred_check
        %p215 = pneg %p123
      $region26: #{forward.2} parent=11 // pred_check_branch
        %217 = sbr.rel (%p215) target = $region28
      $region27: #{forward.2} parent=11 // pred_region
        _
      $region28: #{forward.2} parent=11 // pred_fallthru
        _
      // Predicated region
      $region29: #{forward.2} parent=11 // pred_check
        %p218 = pneg %p144
      $region30: #{forward.2} parent=11 // pred_check_branch
        %220 = sbr.rel (%p218) target = $region32
      $region31: #{forward.2} parent=11 // pred_region
        _
      $region32: #{forward.2} parent=11 // pred_fallthru
        _
      // Predicated region
      $region33: #{forward.2} parent=11 // pred_check
        %p221 = pneg %p165
      $region34: #{forward.2} parent=11 // pred_check_branch
        %223 = sbr.rel (%p221) target = $region36
      $region35: #{forward.2} parent=11 // pred_region
        _
      $region36: #{forward.2} parent=11 // pred_fallthru
        _
    $region12: #{forward.2} parent=5 // pred_fallthru
      _
    %p224 = scmp.lt.s32.totalorder %s13, 2
    // Predicated region
    $region37: #{forward.2} parent=5 // pred_check
      %p225 = pneg %p224
    $region38: #{forward.2} parent=5 // pred_check_branch
      %227 = sbr.rel (%p225) target = $region40
    $region39: #{forward.2} parent=5 // pred_region
      // Predicated region
      $region41: #{forward.2} parent=39 // pred_check
        %p228 = pneg %p33
      $region42: #{forward.2} parent=39 // pred_check_branch
        %230 = sbr.rel (%p228) target = $region44
      $region43: #{forward.2} parent=39 // pred_region
        %p231 = scmp.lt.s32.totalorder %s13, 1
        %s232 = scalar_select %p231, %s13, 1
        %s233 = smul.addr %s232, 68
        %s234 = smul.addr %s233, 8
        %s235 = scalar_lea.vmem %s0, %s234
      $region44: #{forward.2} parent=39 // pred_fallthru
        _
    $region40: #{forward.2} parent=5 // pred_fallthru
      _
    %p236 = scmp.le.s32.totalorder 1, %s13
    %p237 = scmp.lt.s32.totalorder %s13, 3
    %p238 = pnand %p236, %p237
    %p239 = pneg %p238
    // Predicated region
    $region45: #{forward.2} parent=5 // pred_check
      _
    $region46: #{forward.2} parent=5 // pred_check_branch
      %241 = sbr.rel (%p238) target = $region48
    $region47: #{forward.2} parent=5 // pred_region
      %s242 = ssub.s32 %s13, 1
      %p243 = scmp.lt.s32.totalorder %s18, 1
      %s244 = scalar_select %p243, %s18, 1
      %s245 = smul.addr %s244, 68
      %s246 = smul.addr %s245, 8
      %s247 = scalar_lea.vmem %s0, %s246
      %p248 = pneg %p39
      %p249 = pneg %p36
      %p250 = pneg %p60
      %p251 = pneg %p57
      %p252 = pneg %p81
      %p253 = pneg %p78
      %p254 = pneg %p102
      %p255 = pneg %p99
      %p256 = pneg %p123
      %p257 = pneg %p120
      %p258 = pneg %p144
      %p259 = pneg %p141
      %p260 = pneg %p165
      %p261 = pneg %p162
      %p262 = pneg %p191
      %p263 = pneg %p188
      %p264 = scmp.lt.s32.totalorder %s18, 1
      %s265 = scalar_select %p264, %s18, 1
      %s266 = smul.addr %s265, 8
      %s267 = smul.addr %s266, 8
      %s268 = scalar_lea.vmem %s7, %s267
      %p269 = scmp.lt.s32.totalorder %s18, 1
      %s270 = scalar_select %p269, %s18, 1
      %s271 = smul.addr %s270, 68
      %s272 = smul.addr %s271, 8
      %s273 = scalar_lea.vmem %s0, %s272
      %p274 = scmp.lt.s32.totalorder %s18, 1
      %s275 = scalar_select %p274, %s18, 1
      %s276 = smul.addr %s275, 8
      %s277 = smul.addr %s276, 8
      %s278 = scalar_lea.vmem %s7, %s277
      %vm279 = vcmask 523264
      %280 = vst.msk [vmem:[#allocation2] sm:$0xff] %vm279, 0.0
      %vm281 = vcmask 516096
      %282 = vst.msk [vmem:[#allocation2 + $0x8] sm:$0x1] %vm281, 0.0
      %283 = vst.msk [vmem:[#allocation2 + $0x10] sm:$0xff] %vm279, 0.0
      %284 = vst.msk [vmem:[#allocation2 + $0x18] sm:$0x1] %vm281, 0.0
      %285 = vst.msk [vmem:[#allocation2 + $0x20] sm:$0xff] %vm279, 0.0
      %286 = vst.msk [vmem:[#allocation2 + $0x28] sm:$0x1] %vm281, 0.0
      %287 = vst.msk [vmem:[#allocation2 + $0x30] sm:$0xff] %vm279, 0.0
      %288 = vst.msk [vmem:[#allocation2 + $0x38] sm:$0x1] %vm281, 0.0
      %289 = vst.msk [vmem:[#allocation2 + $0x40] sm:$0xff] %vm279, 0.0
      %290 = vst.msk [vmem:[#allocation2 + $0x48] sm:$0x1] %vm281, 0.0
      %291 = vst.msk [vmem:[#allocation2 + $0x50] sm:$0xff] %vm279, 0.0
      %292 = vst.msk [vmem:[#allocation2 + $0x58] sm:$0x1] %vm281, 0.0
      %293 = vst.msk [vmem:[#allocation2 + $0x60] sm:$0xff] %vm279, 0.0
      %294 = vst.msk [vmem:[#allocation2 + $0x68] sm:$0x1] %vm281, 0.0
      %295 = vst.msk [vmem:[#allocation2 + $0x70] sm:$0xff] %vm279, 0.0
      %296 = vst.msk [vmem:[#allocation2 + $0x78] sm:$0x1] %vm281, 0.0
      %297 = vst.msk [vmem:[#allocation2 + $0x80] sm:$0xff] %vm279, 0.0
      %298 = vst.msk [vmem:[#allocation2 + $0x88] sm:$0x1] %vm281, 0.0
      %299 = vst.msk [vmem:[#allocation2 + $0x90] sm:$0xff] %vm279, 0.0
      %300 = vst.msk [vmem:[#allocation2 + $0x98] sm:$0x1] %vm281, 0.0
      %301 = vst.msk [vmem:[#allocation2 + $0xa0] sm:$0xff] %vm279, 0.0
      %302 = vst.msk [vmem:[#allocation2 + $0xa8] sm:$0x1] %vm281, 0.0
      %303 = vst.msk [vmem:[#allocation2 + $0xb0] sm:$0xff] %vm279, 0.0
      %304 = vst.msk [vmem:[#allocation2 + $0xb8] sm:$0x1] %vm281, 0.0
      %305 = vst.msk [vmem:[#allocation2 + $0xc0] sm:$0xff] %vm279, 0.0
      %306 = vst.msk [vmem:[#allocation2 + $0xc8] sm:$0x1] %vm281, 0.0
      %307 = vst.msk [vmem:[#allocation2 + $0xd0] sm:$0xff] %vm279, 0.0
      %308 = vst.msk [vmem:[#allocation2 + $0xd8] sm:$0x1] %vm281, 0.0
      %309 = vst.msk [vmem:[#allocation2 + $0xe0] sm:$0xff] %vm279, 0.0
      %310 = vst.msk [vmem:[#allocation2 + $0xe8] sm:$0x1] %vm281, 0.0
      %311 = vst.msk [vmem:[#allocation2 + $0xf0] sm:$0xff] %vm279, 0.0
      %312 = vst.msk [vmem:[#allocation2 + $0xf8] sm:$0x1] %vm281, 0.0
      %313 = vst.msk [vmem:[#allocation2 + $0x100] sm:$0xff] %vm279, 0.0
      %314 = vst.msk [vmem:[#allocation2 + $0x108] sm:$0x1] %vm281, 0.0
      %315 = vst.msk [vmem:[#allocation2 + $0x110] sm:$0xff] %vm279, 0.0
      %316 = vst.msk [vmem:[#allocation2 + $0x118] sm:$0x1] %vm281, 0.0
      %317 = vst.msk [vmem:[#allocation3] sm:$0xff] %vm279, 0.0
      %vm318 = vcmask 517120
      %319 = vst.msk [vmem:[#allocation3 + $0x8] sm:$0x3] %vm318, 0.0
      %320 = vst.msk [vmem:[#allocation3 + $0x10] sm:$0xff] %vm279, 0.0
      %321 = vst.msk [vmem:[#allocation3 + $0x18] sm:$0x3] %vm318, 0.0
      %322 = vst.msk [vmem:[#allocation3 + $0x20] sm:$0xff] %vm279, 0.0
      %323 = vst.msk [vmem:[#allocation3 + $0x28] sm:$0x3] %vm318, 0.0
      %324 = vst.msk [vmem:[#allocation3 + $0x30] sm:$0xff] %vm279, 0.0
      %325 = vst.msk [vmem:[#allocation3 + $0x38] sm:$0x3] %vm318, 0.0
      %326 = vst.msk [vmem:[#allocation3 + $0x40] sm:$0xff] %vm279, 0.0
      %327 = vst.msk [vmem:[#allocation3 + $0x48] sm:$0x3] %vm318, 0.0
      %328 = vst.msk [vmem:[#allocation3 + $0x50] sm:$0xff] %vm279, 0.0
      %329 = vst.msk [vmem:[#allocation3 + $0x58] sm:$0x3] %vm318, 0.0
      %330 = vst.msk [vmem:[#allocation3 + $0x60] sm:$0xff] %vm279, 0.0
      %331 = vst.msk [vmem:[#allocation3 + $0x68] sm:$0x3] %vm318, 0.0
      %332 = vst.msk [vmem:[#allocation3 + $0x70] sm:$0xff] %vm279, 0.0
      %333 = vst.msk [vmem:[#allocation3 + $0x78] sm:$0x3] %vm318, 0.0
      %334 = vst.msk [vmem:[#allocation3 + $0x80] sm:$0xff] %vm279, 0.0
      %335 = vst.msk [vmem:[#allocation3 + $0x88] sm:$0x3] %vm318, 0.0
      %336 = vst.msk [vmem:[#allocation3 + $0x90] sm:$0xff] %vm279, 0.0
      %337 = vst.msk [vmem:[#allocation3 + $0x98] sm:$0x3] %vm318, 0.0
      %v338 = vld [vmem:[%s273] sm:$0xff]
      %v339 = vld [vmem:[%s273 + $0x8] sm:$0x1]
      %s340 = scalar_lea.vmem %s273, 16
      %v341 = vld [vmem:[%s340] sm:$0xff]
      %v342 = vld [vmem:[%s340 + $0x8] sm:$0x1]
      %s343 = scalar_lea.vmem %s273, 32
      %v344 = vld [vmem:[%s343] sm:$0xff]
      %v345 = vld [vmem:[%s343 + $0x8] sm:$0x1]
      %vm348 = vcmask 1046528
      %v349 = vrot.slane %v338, 1
      %v350 = vrot.slane %v339, 1
      %v351 = vsel %vm348, %v349, %v350
      %352 = vrot.lane.b32.xlu0 %v351, 12
      %v353 = vpop.permute.xlu0 %352
      %356 = vrot.lane.b32.xlu0 %v341, 24
      %v357 = vpop.permute.xlu0 %356
      %v360 = vrot.slane %v341, 1
      %v361 = vrot.slane %v342, 1
      %v362 = vsel %vm348, %v360, %v361
      %363 = vrot.lane.b32.xlu0 %v362, 36
      %v364 = vpop.permute.xlu0 %363
      %367 = vrot.lane.b32.xlu0 %v344, 48
      %v368 = vpop.permute.xlu0 %367
      %v371 = vrot.slane %v344, 1
      %v372 = vrot.slane %v345, 1
      %v373 = vsel %vm348, %v371, %v372
      %374 = vrot.lane.b32.xlu0 %v373, 60
      %v375 = vpop.permute.xlu0 %374
      %vm377 = vcmask 97280
      %v378 = vsel %vm377, %v338, %v353
      %vm379 = vcmask 195584
      %v380 = vsel %vm379, %v378, %v357
      %vm381 = vcmask 293888
      %v382 = vsel %vm381, %v380, %v364
      %vm383 = vcmask 392192
      %v384 = vsel %vm383, %v382, %v368
      %vm385 = vcmask 490496
      %v386 = vsel %vm385, %v384, %v375
      %s387 = scalar_lea.vmem %s273, 48
      %v388 = vld [vmem:[%s387] sm:$0xff]
      %v389 = vld [vmem:[%s387 + $0x8] sm:$0x1]
      %390 = vrot.lane.b32.xlu0 %v362, 12
      %v391 = vpop.permute.xlu0 %390
      %393 = vrot.lane.b32.xlu0 %v344, 24
      %v394 = vpop.permute.xlu0 %393
      %396 = vrot.lane.b32.xlu0 %v373, 36
      %v397 = vpop.permute.xlu0 %396
      %400 = vrot.lane.b32.xlu0 %v388, 48
      %v401 = vpop.permute.xlu0 %400
      %v404 = vrot.slane %v388, 1
      %v405 = vrot.slane %v389, 1
      %v406 = vsel %vm348, %v404, %v405
      %407 = vrot.lane.b32.xlu0 %v406, 60
      %v408 = vpop.permute.xlu0 %407
      %v410 = vsel %vm377, %v341, %v391
      %v411 = vsel %vm379, %v410, %v394
      %v412 = vsel %vm381, %v411, %v397
      %v413 = vsel %vm383, %v412, %v401
      %v414 = vsel %vm385, %v413, %v408
      %s415 = scalar_lea.vmem %s273, 64
      %v416 = vld [vmem:[%s415] sm:$0xff]
      %v417 = vld [vmem:[%s415 + $0x8] sm:$0x1]
      %418 = vrot.lane.b32.xlu0 %v373, 12
      %v419 = vpop.permute.xlu0 %418
      %421 = vrot.lane.b32.xlu0 %v388, 24
      %v422 = vpop.permute.xlu0 %421
      %424 = vrot.lane.b32.xlu0 %v406, 36
      %v425 = vpop.permute.xlu0 %424
      %428 = vrot.lane.b32.xlu0 %v416, 48
      %v429 = vpop.permute.xlu0 %428
      %v432 = vrot.slane %v416, 1
      %v433 = vrot.slane %v417, 1
      %v434 = vsel %vm348, %v432, %v433
      %435 = vrot.lane.b32.xlu0 %v434, 60
      %v436 = vpop.permute.xlu0 %435
      %v438 = vsel %vm377, %v344, %v419
      %v439 = vsel %vm379, %v438, %v422
      %v440 = vsel %vm381, %v439, %v425
      %v441 = vsel %vm383, %v440, %v429
      %v442 = vsel %vm385, %v441, %v436
      %s443 = scalar_lea.vmem %s273, 80
      %v444 = vld [vmem:[%s443] sm:$0xff]
      %v445 = vld [vmem:[%s443 + $0x8] sm:$0x1]
      %446 = vrot.lane.b32.xlu0 %v406, 12
      %v447 = vpop.permute.xlu0 %446
      %449 = vrot.lane.b32.xlu0 %v416, 24
      %v450 = vpop.permute.xlu0 %449
      %452 = vrot.lane.b32.xlu0 %v434, 36
      %v453 = vpop.permute.xlu0 %452
      %456 = vrot.lane.b32.xlu0 %v444, 48
      %v457 = vpop.permute.xlu0 %456
      %v460 = vrot.slane %v444, 1
      %v461 = vrot.slane %v445, 1
      %v462 = vsel %vm348, %v460, %v461
      %463 = vrot.lane.b32.xlu0 %v462, 60
      %v464 = vpop.permute.xlu0 %463
      %v466 = vsel %vm377, %v388, %v447
      %v467 = vsel %vm379, %v466, %v450
      %v468 = vsel %vm381, %v467, %v453
      %v469 = vsel %vm383, %v468, %v457
      %v470 = vsel %vm385, %v469, %v464
      %s471 = scalar_lea.vmem %s273, 96
      %v472 = vld [vmem:[%s471] sm:$0xff]
      %v473 = vld [vmem:[%s471 + $0x8] sm:$0x1]
      %474 = vrot.lane.b32.xlu0 %v434, 12
      %v475 = vpop.permute.xlu0 %474
      %477 = vrot.lane.b32.xlu0 %v444, 24
      %v478 = vpop.permute.xlu0 %477
      %480 = vrot.lane.b32.xlu0 %v462, 36
      %v481 = vpop.permute.xlu0 %480
      %484 = vrot.lane.b32.xlu0 %v472, 48
      %v485 = vpop.permute.xlu0 %484
      %v488 = vrot.slane %v472, 1
      %v489 = vrot.slane %v473, 1
      %v490 = vsel %vm348, %v488, %v489
      %491 = vrot.lane.b32.xlu0 %v490, 60
      %v492 = vpop.permute.xlu0 %491
      %v494 = vsel %vm377, %v416, %v475
      %v495 = vsel %vm379, %v494, %v478
      %v496 = vsel %vm381, %v495, %v481
      %v497 = vsel %vm383, %v496, %v485
      %v498 = vsel %vm385, %v497, %v492
      %s499 = scalar_lea.vmem %s273, 112
      %v500 = vld [vmem:[%s499] sm:$0xff]
      %v501 = vld [vmem:[%s499 + $0x8] sm:$0x1]
      %502 = vrot.lane.b32.xlu0 %v462, 12
      %v503 = vpop.permute.xlu0 %502
      %505 = vrot.lane.b32.xlu0 %v472, 24
      %v506 = vpop.permute.xlu0 %505
      %508 = vrot.lane.b32.xlu0 %v490, 36
      %v509 = vpop.permute.xlu0 %508
      %512 = vrot.lane.b32.xlu0 %v500, 48
      %v513 = vpop.permute.xlu0 %512
      %v516 = vrot.slane %v500, 1
      %v517 = vrot.slane %v501, 1
      %v518 = vsel %vm348, %v516, %v517
      %519 = vrot.lane.b32.xlu0 %v518, 60
      %v520 = vpop.permute.xlu0 %519
      %v522 = vsel %vm377, %v444, %v503
      %v523 = vsel %vm379, %v522, %v506
      %v524 = vsel %vm381, %v523, %v509
      %v525 = vsel %vm383, %v524, %v513
      %v526 = vsel %vm385, %v525, %v520
      %s527 = scalar_lea.vmem %s273, 128
      %v528 = vld [vmem:[%s527] sm:$0xff]
      %v529 = vld [vmem:[%s527 + $0x8] sm:$0x1]
      %530 = vrot.lane.b32.xlu0 %v490, 12
      %v531 = vpop.permute.xlu0 %530
      %533 = vrot.lane.b32.xlu0 %v500, 24
      %v534 = vpop.permute.xlu0 %533
      %536 = vrot.lane.b32.xlu0 %v518, 36
      %v537 = vpop.permute.xlu0 %536
      %540 = vrot.lane.b32.xlu0 %v528, 48
      %v541 = vpop.permute.xlu0 %540
      %v544 = vrot.slane %v528, 1
      %v545 = vrot.slane %v529, 1
      %v546 = vsel %vm348, %v544, %v545
      %547 = vrot.lane.b32.xlu0 %v546, 60
      %v548 = vpop.permute.xlu0 %547
      %v550 = vsel %vm377, %v472, %v531
      %v551 = vsel %vm379, %v550, %v534
      %v552 = vsel %vm381, %v551, %v537
      %v553 = vsel %vm383, %v552, %v541
      %v554 = vsel %vm385, %v553, %v548
      %s555 = scalar_lea.vmem %s273, 144
      %v556 = vld [vmem:[%s555] sm:$0xff]
      %v557 = vld [vmem:[%s555 + $0x8] sm:$0x1]
      %558 = vrot.lane.b32.xlu0 %v518, 12
      %v559 = vpop.permute.xlu0 %558
      %561 = vrot.lane.b32.xlu0 %v528, 24
      %v562 = vpop.permute.xlu0 %561
      %564 = vrot.lane.b32.xlu0 %v546, 36
      %v565 = vpop.permute.xlu0 %564
      %568 = vrot.lane.b32.xlu0 %v556, 48
      %v569 = vpop.permute.xlu0 %568
      %v572 = vrot.slane %v556, 1
      %v573 = vrot.slane %v557, 1
      %v574 = vsel %vm348, %v572, %v573
      %575 = vrot.lane.b32.xlu0 %v574, 60
      %v576 = vpop.permute.xlu0 %575
      %v578 = vsel %vm377, %v500, %v559
      %v579 = vsel %vm379, %v578, %v562
      %v580 = vsel %vm381, %v579, %v565
      %v581 = vsel %vm383, %v580, %v569
      %v582 = vsel %vm385, %v581, %v576
      %s583 = scalar_lea.vmem %s273, 160
      %v584 = vld [vmem:[%s583] sm:$0xff]
      %v585 = vld [vmem:[%s583 + $0x8] sm:$0x1]
      %586 = vrot.lane.b32.xlu0 %v546, 12
      %v587 = vpop.permute.xlu0 %586
      %589 = vrot.lane.b32.xlu0 %v556, 24
      %v590 = vpop.permute.xlu0 %589
      %592 = vrot.lane.b32.xlu0 %v574, 36
      %v593 = vpop.permute.xlu0 %592
      %596 = vrot.lane.b32.xlu0 %v584, 48
      %v597 = vpop.permute.xlu0 %596
      %v600 = vrot.slane %v584, 1
      %v601 = vrot.slane %v585, 1
      %v602 = vsel %vm348, %v600, %v601
      %603 = vrot.lane.b32.xlu0 %v602, 60
      %v604 = vpop.permute.xlu0 %603
      %v606 = vsel %vm377, %v528, %v587
      %v607 = vsel %vm379, %v606, %v590
      %v608 = vsel %vm381, %v607, %v593
      %v609 = vsel %vm383, %v608, %v597
      %v610 = vsel %vm385, %v609, %v604
      %s611 = scalar_lea.vmem %s273, 176
      %v612 = vld [vmem:[%s611] sm:$0xff]
      %v613 = vld [vmem:[%s611 + $0x8] sm:$0x1]
      %614 = vrot.lane.b32.xlu0 %v574, 12
      %v615 = vpop.permute.xlu0 %614
      %617 = vrot.lane.b32.xlu0 %v584, 24
      %v618 = vpop.permute.xlu0 %617
      %620 = vrot.lane.b32.xlu0 %v602, 36
      %v621 = vpop.permute.xlu0 %620
      %624 = vrot.lane.b32.xlu0 %v612, 48
      %v625 = vpop.permute.xlu0 %624
      %v628 = vrot.slane %v612, 1
      %v629 = vrot.slane %v613, 1
      %v630 = vsel %vm348, %v628, %v629
      %631 = vrot.lane.b32.xlu0 %v630, 60
      %v632 = vpop.permute.xlu0 %631
      %v634 = vsel %vm377, %v556, %v615
      %v635 = vsel %vm379, %v634, %v618
      %v636 = vsel %vm381, %v635, %v621
      %v637 = vsel %vm383, %v636, %v625
      %v638 = vsel %vm385, %v637, %v632
      %s639 = scalar_lea.vmem %s273, 192
      %v640 = vld [vmem:[%s639] sm:$0xff]
      %v641 = vld [vmem:[%s639 + $0x8] sm:$0x1]
      %642 = vrot.lane.b32.xlu0 %v602, 12
      %v643 = vpop.permute.xlu0 %642
      %645 = vrot.lane.b32.xlu0 %v612, 24
      %v646 = vpop.permute.xlu0 %645
      %648 = vrot.lane.b32.xlu0 %v630, 36
      %v649 = vpop.permute.xlu0 %648
      %652 = vrot.lane.b32.xlu0 %v640, 48
      %v653 = vpop.permute.xlu0 %652
      %v656 = vrot.slane %v640, 1
      %v657 = vrot.slane %v641, 1
      %v658 = vsel %vm348, %v656, %v657
      %659 = vrot.lane.b32.xlu0 %v658, 60
      %v660 = vpop.permute.xlu0 %659
      %v662 = vsel %vm377, %v584, %v643
      %v663 = vsel %vm379, %v662, %v646
      %v664 = vsel %vm381, %v663, %v649
      %v665 = vsel %vm383, %v664, %v653
      %v666 = vsel %vm385, %v665, %v660
      %s667 = scalar_lea.vmem %s273, 208
      %v668 = vld [vmem:[%s667] sm:$0xff]
      %v669 = vld [vmem:[%s667 + $0x8] sm:$0x1]
      %670 = vrot.lane.b32.xlu0 %v630, 12
      %v671 = vpop.permute.xlu0 %670
      %673 = vrot.lane.b32.xlu0 %v640, 24
      %v674 = vpop.permute.xlu0 %673
      %676 = vrot.lane.b32.xlu0 %v658, 36
      %v677 = vpop.permute.xlu0 %676
      %680 = vrot.lane.b32.xlu0 %v668, 48
      %v681 = vpop.permute.xlu0 %680
      %v684 = vrot.slane %v668, 1
      %v685 = vrot.slane %v669, 1
      %v686 = vsel %vm348, %v684, %v685
      %687 = vrot.lane.b32.xlu0 %v686, 60
      %v688 = vpop.permute.xlu0 %687
      %v690 = vsel %vm377, %v612, %v671
      %v691 = vsel %vm379, %v690, %v674
      %v692 = vsel %vm381, %v691, %v677
      %v693 = vsel %vm383, %v692, %v681
      %v694 = vsel %vm385, %v693, %v688
      %s695 = scalar_lea.vmem %s273, 224
      %v696 = vld [vmem:[%s695] sm:$0xff]
      %v697 = vld [vmem:[%s695 + $0x8] sm:$0x1]
      %698 = vrot.lane.b32.xlu0 %v658, 12
      %v699 = vpop.permute.xlu0 %698
      %701 = vrot.lane.b32.xlu0 %v668, 24
      %v702 = vpop.permute.xlu0 %701
      %704 = vrot.lane.b32.xlu0 %v686, 36
      %v705 = vpop.permute.xlu0 %704
      %708 = vrot.lane.b32.xlu0 %v696, 48
      %v709 = vpop.permute.xlu0 %708
      %v712 = vrot.slane %v696, 1
      %v713 = vrot.slane %v697, 1
      %v714 = vsel %vm348, %v712, %v713
      %715 = vrot.lane.b32.xlu0 %v714, 60
      %v716 = vpop.permute.xlu0 %715
      %v718 = vsel %vm377, %v640, %v699
      %v719 = vsel %vm379, %v718, %v702
      %v720 = vsel %vm381, %v719, %v705
      %v721 = vsel %vm383, %v720, %v709
      %v722 = vsel %vm385, %v721, %v716
      %s723 = scalar_lea.vmem %s273, 240
      %v724 = vld [vmem:[%s723] sm:$0xff]
      %v725 = vld [vmem:[%s723 + $0x8] sm:$0x1]
      %726 = vrot.lane.b32.xlu0 %v686, 12
      %v727 = vpop.permute.xlu0 %726
      %729 = vrot.lane.b32.xlu0 %v696, 24
      %v730 = vpop.permute.xlu0 %729
      %732 = vrot.lane.b32.xlu0 %v714, 36
      %v733 = vpop.permute.xlu0 %732
      %736 = vrot.lane.b32.xlu0 %v724, 48
      %v737 = vpop.permute.xlu0 %736
      %v740 = vrot.slane %v724, 1
      %v741 = vrot.slane %v725, 1
      %v742 = vsel %vm348, %v740, %v741
      %743 = vrot.lane.b32.xlu0 %v742, 60
      %v744 = vpop.permute.xlu0 %743
      %v746 = vsel %vm377, %v668, %v727
      %v747 = vsel %vm379, %v746, %v730
      %v748 = vsel %vm381, %v747, %v733
      %v749 = vsel %vm383, %v748, %v737
      %v750 = vsel %vm385, %v749, %v744
      %s751 = scalar_lea.vmem %s273, 256
      %v752 = vld [vmem:[%s751] sm:$0xff]
      %v753 = vld [vmem:[%s751 + $0x8] sm:$0x1]
      %754 = vrot.lane.b32.xlu0 %v714, 12
      %v755 = vpop.permute.xlu0 %754
      %757 = vrot.lane.b32.xlu0 %v724, 24
      %v758 = vpop.permute.xlu0 %757
      %760 = vrot.lane.b32.xlu0 %v742, 36
      %v761 = vpop.permute.xlu0 %760
      %764 = vrot.lane.b32.xlu0 %v752, 48
      %v765 = vpop.permute.xlu0 %764
      %v768 = vrot.slane %v752, 1
      %v769 = vrot.slane %v753, 1
      %v770 = vsel %vm348, %v768, %v769
      %771 = vrot.lane.b32.xlu0 %v770, 60
      %v772 = vpop.permute.xlu0 %771
      %v774 = vsel %vm377, %v696, %v755
      %v775 = vsel %vm379, %v774, %v758
      %v776 = vsel %vm381, %v775, %v761
      %v777 = vsel %vm383, %v776, %v765
      %v778 = vsel %vm385, %v777, %v772
      %s779 = scalar_lea.vmem %s273, 272
      %v780 = vld [vmem:[%s779] sm:$0xff]
      %v781 = vld [vmem:[%s779 + $0x8] sm:$0x1]
      %782 = vrot.lane.b32.xlu0 %v742, 12
      %v783 = vpop.permute.xlu0 %782
      %785 = vrot.lane.b32.xlu0 %v752, 24
      %v786 = vpop.permute.xlu0 %785
      %788 = vrot.lane.b32.xlu0 %v770, 36
      %v789 = vpop.permute.xlu0 %788
      %792 = vrot.lane.b32.xlu0 %v780, 48
      %v793 = vpop.permute.xlu0 %792
      %v796 = vrot.slane %v780, 1
      %v797 = vrot.slane %v781, 1
      %v798 = vsel %vm348, %v796, %v797
      %799 = vrot.lane.b32.xlu0 %v798, 60
      %v800 = vpop.permute.xlu0 %799
      %v802 = vsel %vm377, %v724, %v783
      %v803 = vsel %vm379, %v802, %v786
      %v804 = vsel %vm381, %v803, %v789
      %v805 = vsel %vm383, %v804, %v793
      %v806 = vsel %vm385, %v805, %v800
      %s807 = scalar_lea.vmem %s273, 288
      %v808 = vld [vmem:[%s807] sm:$0xff]
      %v809 = vld [vmem:[%s807 + $0x8] sm:$0x1]
      %810 = vrot.lane.b32.xlu0 %v770, 12
      %v811 = vpop.permute.xlu0 %810
      %813 = vrot.lane.b32.xlu0 %v780, 24
      %v814 = vpop.permute.xlu0 %813
      %816 = vrot.lane.b32.xlu0 %v798, 36
      %v817 = vpop.permute.xlu0 %816
      %820 = vrot.lane.b32.xlu0 %v808, 48
      %v821 = vpop.permute.xlu0 %820
      %v824 = vrot.slane %v808, 1
      %v825 = vrot.slane %v809, 1
      %v826 = vsel %vm348, %v824, %v825
      %827 = vrot.lane.b32.xlu0 %v826, 60
      %v828 = vpop.permute.xlu0 %827
      %v830 = vsel %vm377, %v752, %v811
      %v831 = vsel %vm379, %v830, %v814
      %v832 = vsel %vm381, %v831, %v817
      %v833 = vsel %vm383, %v832, %v821
      %v834 = vsel %vm385, %v833, %v828
      %s835 = scalar_lea.vmem %s273, 304
      %v836 = vld [vmem:[%s835] sm:$0xff]
      %v837 = vld [vmem:[%s835 + $0x8] sm:$0x1]
      %838 = vrot.lane.b32.xlu0 %v798, 12
      %v839 = vpop.permute.xlu0 %838
      %841 = vrot.lane.b32.xlu0 %v808, 24
      %v842 = vpop.permute.xlu0 %841
      %844 = vrot.lane.b32.xlu0 %v826, 36
      %v845 = vpop.permute.xlu0 %844
      %848 = vrot.lane.b32.xlu0 %v836, 48
      %v849 = vpop.permute.xlu0 %848
      %v852 = vrot.slane %v836, 1
      %v853 = vrot.slane %v837, 1
      %v854 = vsel %vm348, %v852, %v853
      %855 = vrot.lane.b32.xlu0 %v854, 60
      %v856 = vpop.permute.xlu0 %855
      %v858 = vsel %vm377, %v780, %v839
      %v859 = vsel %vm379, %v858, %v842
      %v860 = vsel %vm381, %v859, %v845
      %v861 = vsel %vm383, %v860, %v849
      %v862 = vsel %vm385, %v861, %v856
      %s863 = scalar_lea.vmem %s273, 320
      %v864 = vld [vmem:[%s863] sm:$0xff]
      %v865 = vld [vmem:[%s863 + $0x8] sm:$0x1]
      %866 = vrot.lane.b32.xlu0 %v826, 12
      %v867 = vpop.permute.xlu0 %866
      %869 = vrot.lane.b32.xlu0 %v836, 24
      %v870 = vpop.permute.xlu0 %869
      %872 = vrot.lane.b32.xlu0 %v854, 36
      %v873 = vpop.permute.xlu0 %872
      %876 = vrot.lane.b32.xlu0 %v864, 48
      %v877 = vpop.permute.xlu0 %876
      %v880 = vrot.slane %v864, 1
      %v881 = vrot.slane %v865, 1
      %v882 = vsel %vm348, %v880, %v881
      %883 = vrot.lane.b32.xlu0 %v882, 60
      %v884 = vpop.permute.xlu0 %883
      %v886 = vsel %vm377, %v808, %v867
      %v887 = vsel %vm379, %v886, %v870
      %v888 = vsel %vm381, %v887, %v873
      %v889 = vsel %vm383, %v888, %v877
      %v890 = vsel %vm385, %v889, %v884
      %s891 = scalar_lea.vmem %s273, 336
      %v892 = vld [vmem:[%s891] sm:$0xff]
      %v893 = vld [vmem:[%s891 + $0x8] sm:$0x1]
      %894 = vrot.lane.b32.xlu0 %v854, 12
      %v895 = vpop.permute.xlu0 %894
      %897 = vrot.lane.b32.xlu0 %v864, 24
      %v898 = vpop.permute.xlu0 %897
      %900 = vrot.lane.b32.xlu0 %v882, 36
      %v901 = vpop.permute.xlu0 %900
      %904 = vrot.lane.b32.xlu0 %v892, 48
      %v905 = vpop.permute.xlu0 %904
      %v908 = vrot.slane %v892, 1
      %v909 = vrot.slane %v893, 1
      %v910 = vsel %vm348, %v908, %v909
      %911 = vrot.lane.b32.xlu0 %v910, 60
      %v912 = vpop.permute.xlu0 %911
      %v914 = vsel %vm377, %v836, %v895
      %v915 = vsel %vm379, %v914, %v898
      %v916 = vsel %vm381, %v915, %v901
      %v917 = vsel %vm383, %v916, %v905
      %v918 = vsel %vm385, %v917, %v912
      %s919 = scalar_lea.vmem %s273, 352
      %v920 = vld [vmem:[%s919] sm:$0xff]
      %v921 = vld [vmem:[%s919 + $0x8] sm:$0x1]
      %922 = vrot.lane.b32.xlu0 %v882, 12
      %v923 = vpop.permute.xlu0 %922
      %925 = vrot.lane.b32.xlu0 %v892, 24
      %v926 = vpop.permute.xlu0 %925
      %928 = vrot.lane.b32.xlu0 %v910, 36
      %v929 = vpop.permute.xlu0 %928
      %932 = vrot.lane.b32.xlu0 %v920, 48
      %v933 = vpop.permute.xlu0 %932
      %v936 = vrot.slane %v920, 1
      %v937 = vrot.slane %v921, 1
      %v938 = vsel %vm348, %v936, %v937
      %939 = vrot.lane.b32.xlu0 %v938, 60
      %v940 = vpop.permute.xlu0 %939
      %v942 = vsel %vm377, %v864, %v923
      %v943 = vsel %vm379, %v942, %v926
      %v944 = vsel %vm381, %v943, %v929
      %v945 = vsel %vm383, %v944, %v933
      %v946 = vsel %vm385, %v945, %v940
      %s947 = scalar_lea.vmem %s273, 368
      %v948 = vld [vmem:[%s947] sm:$0xff]
      %v949 = vld [vmem:[%s947 + $0x8] sm:$0x1]
      %950 = vrot.lane.b32.xlu0 %v910, 12
      %v951 = vpop.permute.xlu0 %950
      %953 = vrot.lane.b32.xlu0 %v920, 24
      %v954 = vpop.permute.xlu0 %953
      %956 = vrot.lane.b32.xlu0 %v938, 36
      %v957 = vpop.permute.xlu0 %956
      %960 = vrot.lane.b32.xlu0 %v948, 48
      %v961 = vpop.permute.xlu0 %960
      %v964 = vrot.slane %v948, 1
      %v965 = vrot.slane %v949, 1
      %v966 = vsel %vm348, %v964, %v965
      %967 = vrot.lane.b32.xlu0 %v966, 60
      %v968 = vpop.permute.xlu0 %967
      %v970 = vsel %vm377, %v892, %v951
      %v971 = vsel %vm379, %v970, %v954
      %v972 = vsel %vm381, %v971, %v957
      %v973 = vsel %vm383, %v972, %v961
      %v974 = vsel %vm385, %v973, %v968
      %s975 = scalar_lea.vmem %s273, 384
      %v976 = vld [vmem:[%s975] sm:$0xff]
      %v977 = vld [vmem:[%s975 + $0x8] sm:$0x1]
      %978 = vrot.lane.b32.xlu0 %v938, 12
      %v979 = vpop.permute.xlu0 %978
      %981 = vrot.lane.b32.xlu0 %v948, 24
      %v982 = vpop.permute.xlu0 %981
      %984 = vrot.lane.b32.xlu0 %v966, 36
      %v985 = vpop.permute.xlu0 %984
      %988 = vrot.lane.b32.xlu0 %v976, 48
      %v989 = vpop.permute.xlu0 %988
      %v992 = vrot.slane %v976, 1
      %v993 = vrot.slane %v977, 1
      %v994 = vsel %vm348, %v992, %v993
      %995 = vrot.lane.b32.xlu0 %v994, 60
      %v996 = vpop.permute.xlu0 %995
      %v998 = vsel %vm377, %v920, %v979
      %v999 = vsel %vm379, %v998, %v982
      %v1000 = vsel %vm381, %v999, %v985
      %v1001 = vsel %vm383, %v1000, %v989
      %v1002 = vsel %vm385, %v1001, %v996
      %s1003 = scalar_lea.vmem %s273, 400
      %v1004 = vld [vmem:[%s1003] sm:$0xff]
      %v1005 = vld [vmem:[%s1003 + $0x8] sm:$0x1]
      %1006 = vrot.lane.b32.xlu0 %v966, 12
      %v1007 = vpop.permute.xlu0 %1006
      %1009 = vrot.lane.b32.xlu0 %v976, 24
      %v1010 = vpop.permute.xlu0 %1009
      %1012 = vrot.lane.b32.xlu0 %v994, 36
      %v1013 = vpop.permute.xlu0 %1012
      %1016 = vrot.lane.b32.xlu0 %v1004, 48
      %v1017 = vpop.permute.xlu0 %1016
      %v1020 = vrot.slane %v1004, 1
      %v1021 = vrot.slane %v1005, 1
      %v1022 = vsel %vm348, %v1020, %v1021
      %1023 = vrot.lane.b32.xlu0 %v1022, 60
      %v1024 = vpop.permute.xlu0 %1023
      %v1026 = vsel %vm377, %v948, %v1007
      %v1027 = vsel %vm379, %v1026, %v1010
      %v1028 = vsel %vm381, %v1027, %v1013
      %v1029 = vsel %vm383, %v1028, %v1017
      %v1030 = vsel %vm385, %v1029, %v1024
      %s1031 = scalar_lea.vmem %s273, 416
      %v1032 = vld [vmem:[%s1031] sm:$0xff]
      %v1033 = vld [vmem:[%s1031 + $0x8] sm:$0x1]
      %1034 = vrot.lane.b32.xlu0 %v994, 12
      %v1035 = vpop.permute.xlu0 %1034
      %1037 = vrot.lane.b32.xlu0 %v1004, 24
      %v1038 = vpop.permute.xlu0 %1037
      %1040 = vrot.lane.b32.xlu0 %v1022, 36
      %v1041 = vpop.permute.xlu0 %1040
      %1044 = vrot.lane.b32.xlu0 %v1032, 48
      %v1045 = vpop.permute.xlu0 %1044
      %v1048 = vrot.slane %v1032, 1
      %v1049 = vrot.slane %v1033, 1
      %v1050 = vsel %vm348, %v1048, %v1049
      %1051 = vrot.lane.b32.xlu0 %v1050, 60
      %v1052 = vpop.permute.xlu0 %1051
      %v1054 = vsel %vm377, %v976, %v1035
      %v1055 = vsel %vm379, %v1054, %v1038
      %v1056 = vsel %vm381, %v1055, %v1041
      %v1057 = vsel %vm383, %v1056, %v1045
      %v1058 = vsel %vm385, %v1057, %v1052
      %s1059 = scalar_lea.vmem %s273, 432
      %v1060 = vld [vmem:[%s1059] sm:$0xff]
      %v1061 = vld [vmem:[%s1059 + $0x8] sm:$0x1]
      %1062 = vrot.lane.b32.xlu0 %v1022, 12
      %v1063 = vpop.permute.xlu0 %1062
      %1065 = vrot.lane.b32.xlu0 %v1032, 24
      %v1066 = vpop.permute.xlu0 %1065
      %1068 = vrot.lane.b32.xlu0 %v1050, 36
      %v1069 = vpop.permute.xlu0 %1068
      %1072 = vrot.lane.b32.xlu0 %v1060, 48
      %v1073 = vpop.permute.xlu0 %1072
      %v1076 = vrot.slane %v1060, 1
      %v1077 = vrot.slane %v1061, 1
      %v1078 = vsel %vm348, %v1076, %v1077
      %1079 = vrot.lane.b32.xlu0 %v1078, 60
      %v1080 = vpop.permute.xlu0 %1079
      %v1082 = vsel %vm377, %v1004, %v1063
      %v1083 = vsel %vm379, %v1082, %v1066
      %v1084 = vsel %vm381, %v1083, %v1069
      %v1085 = vsel %vm383, %v1084, %v1073
      %v1086 = vsel %vm385, %v1085, %v1080
      %s1087 = scalar_lea.vmem %s273, 448
      %v1088 = vld [vmem:[%s1087] sm:$0xff]
      %v1089 = vld [vmem:[%s1087 + $0x8] sm:$0x1]
      %1090 = vrot.lane.b32.xlu0 %v1050, 12
      %v1091 = vpop.permute.xlu0 %1090
      %1093 = vrot.lane.b32.xlu0 %v1060, 24
      %v1094 = vpop.permute.xlu0 %1093
      %1096 = vrot.lane.b32.xlu0 %v1078, 36
      %v1097 = vpop.permute.xlu0 %1096
      %1100 = vrot.lane.b32.xlu0 %v1088, 48
      %v1101 = vpop.permute.xlu0 %1100
      %v1104 = vrot.slane %v1088, 1
      %v1105 = vrot.slane %v1089, 1
      %v1106 = vsel %vm348, %v1104, %v1105
      %1107 = vrot.lane.b32.xlu0 %v1106, 60
      %v1108 = vpop.permute.xlu0 %1107
      %v1110 = vsel %vm377, %v1032, %v1091
      %v1111 = vsel %vm379, %v1110, %v1094
      %v1112 = vsel %vm381, %v1111, %v1097
      %v1113 = vsel %vm383, %v1112, %v1101
      %v1114 = vsel %vm385, %v1113, %v1108
      %s1115 = scalar_lea.vmem %s273, 464
      %v1116 = vld [vmem:[%s1115] sm:$0xff]
      %v1117 = vld [vmem:[%s1115 + $0x8] sm:$0x1]
      %1118 = vrot.lane.b32.xlu0 %v1078, 12
      %v1119 = vpop.permute.xlu0 %1118
      %1121 = vrot.lane.b32.xlu0 %v1088, 24
      %v1122 = vpop.permute.xlu0 %1121
      %1124 = vrot.lane.b32.xlu0 %v1106, 36
      %v1125 = vpop.permute.xlu0 %1124
      %1128 = vrot.lane.b32.xlu0 %v1116, 48
      %v1129 = vpop.permute.xlu0 %1128
      %v1132 = vrot.slane %v1116, 1
      %v1133 = vrot.slane %v1117, 1
      %v1134 = vsel %vm348, %v1132, %v1133
      %1135 = vrot.lane.b32.xlu0 %v1134, 60
      %v1136 = vpop.permute.xlu0 %1135
      %v1138 = vsel %vm377, %v1060, %v1119
      %v1139 = vsel %vm379, %v1138, %v1122
      %v1140 = vsel %vm381, %v1139, %v1125
      %v1141 = vsel %vm383, %v1140, %v1129
      %v1142 = vsel %vm385, %v1141, %v1136
      %s1143 = scalar_lea.vmem %s273, 480
      %v1144 = vld [vmem:[%s1143] sm:$0xff]
      %v1145 = vld [vmem:[%s1143 + $0x8] sm:$0x1]
      %1146 = vrot.lane.b32.xlu0 %v1106, 12
      %v1147 = vpop.permute.xlu0 %1146
      %1149 = vrot.lane.b32.xlu0 %v1116, 24
      %v1150 = vpop.permute.xlu0 %1149
      %1152 = vrot.lane.b32.xlu0 %v1134, 36
      %v1153 = vpop.permute.xlu0 %1152
      %1156 = vrot.lane.b32.xlu0 %v1144, 48
      %v1157 = vpop.permute.xlu0 %1156
      %v1160 = vrot.slane %v1144, 1
      %v1161 = vrot.slane %v1145, 1
      %v1162 = vsel %vm348, %v1160, %v1161
      %1163 = vrot.lane.b32.xlu0 %v1162, 60
      %v1164 = vpop.permute.xlu0 %1163
      %v1166 = vsel %vm377, %v1088, %v1147
      %v1167 = vsel %vm379, %v1166, %v1150
      %v1168 = vsel %vm381, %v1167, %v1153
      %v1169 = vsel %vm383, %v1168, %v1157
      %v1170 = vsel %vm385, %v1169, %v1164
      %s1171 = scalar_lea.vmem %s273, 496
      %v1172 = vld [vmem:[%s1171] sm:$0xff]
      %v1173 = vld [vmem:[%s1171 + $0x8] sm:$0x1]
      %1174 = vrot.lane.b32.xlu0 %v1134, 12
      %v1175 = vpop.permute.xlu0 %1174
      %1177 = vrot.lane.b32.xlu0 %v1144, 24
      %v1178 = vpop.permute.xlu0 %1177
      %1180 = vrot.lane.b32.xlu0 %v1162, 36
      %v1181 = vpop.permute.xlu0 %1180
      %1184 = vrot.lane.b32.xlu0 %v1172, 48
      %v1185 = vpop.permute.xlu0 %1184
      %v1188 = vrot.slane %v1172, 1
      %v1189 = vrot.slane %v1173, 1
      %v1190 = vsel %vm348, %v1188, %v1189
      %1191 = vrot.lane.b32.xlu0 %v1190, 60
      %v1192 = vpop.permute.xlu0 %1191
      %v1194 = vsel %vm377, %v1116, %v1175
      %v1195 = vsel %vm379, %v1194, %v1178
      %v1196 = vsel %vm381, %v1195, %v1181
      %v1197 = vsel %vm383, %v1196, %v1185
      %v1198 = vsel %vm385, %v1197, %v1192
      %s1199 = scalar_lea.vmem %s273, 512
      %v1200 = vld [vmem:[%s1199] sm:$0xff]
      %v1201 = vld [vmem:[%s1199 + $0x8] sm:$0x1]
      %1202 = vrot.lane.b32.xlu0 %v1162, 12
      %v1203 = vpop.permute.xlu0 %1202
      %1205 = vrot.lane.b32.xlu0 %v1172, 24
      %v1206 = vpop.permute.xlu0 %1205
      %1208 = vrot.lane.b32.xlu0 %v1190, 36
      %v1209 = vpop.permute.xlu0 %1208
      %1212 = vrot.lane.b32.xlu0 %v1200, 48
      %v1213 = vpop.permute.xlu0 %1212
      %v1216 = vrot.slane %v1200, 1
      %v1217 = vrot.slane %v1201, 1
      %v1218 = vsel %vm348, %v1216, %v1217
      %1219 = vrot.lane.b32.xlu0 %v1218, 60
      %v1220 = vpop.permute.xlu0 %1219
      %v1222 = vsel %vm377, %v1144, %v1203
      %v1223 = vsel %vm379, %v1222, %v1206
      %v1224 = vsel %vm381, %v1223, %v1209
      %v1225 = vsel %vm383, %v1224, %v1213
      %v1226 = vsel %vm385, %v1225, %v1220
      %s1227 = scalar_lea.vmem %s273, 528
      %v1228 = vld [vmem:[%s1227] sm:$0xff]
      %v1229 = vld [vmem:[%s1227 + $0x8] sm:$0x1]
      %1230 = vrot.lane.b32.xlu0 %v1190, 12
      %v1231 = vpop.permute.xlu0 %1230
      %1233 = vrot.lane.b32.xlu0 %v1200, 24
      %v1234 = vpop.permute.xlu0 %1233
      %1236 = vrot.lane.b32.xlu0 %v1218, 36
      %v1237 = vpop.permute.xlu0 %1236
      %1240 = vrot.lane.b32.xlu0 %v1228, 48
      %v1241 = vpop.permute.xlu0 %1240
      %v1244 = vrot.slane %v1228, 1
      %v1245 = vrot.slane %v1229, 1
      %v1246 = vsel %vm348, %v1244, %v1245
      %1247 = vrot.lane.b32.xlu0 %v1246, 60
      %v1248 = vpop.permute.xlu0 %1247
      %v1250 = vsel %vm377, %v1172, %v1231
      %v1251 = vsel %vm379, %v1250, %v1234
      %v1252 = vsel %vm381, %v1251, %v1237
      %v1253 = vsel %vm383, %v1252, %v1241
      %v1254 = vsel %vm385, %v1253, %v1248
      %v1255 = vld [vmem:[%s1] sm:$0xff]
      %v1256 = vld [vmem:[%s1 + $0x8] sm:$0xff]
      %v1257 = vld [vmem:[%s1 + $0x10] sm:$0xff]
      %v1258 = vld [vmem:[%s1 + $0x18] sm:$0xff]
      %v1259 = vld [vmem:[%s1 + $0x20] sm:$0xff]
      %v1260 = vld [vmem:[%s1 + $0x28] sm:$0xff]
      %v1261 = vld [vmem:[%s1 + $0x30] sm:$0xff]
      %v1262 = vld [vmem:[%s1 + $0x38] sm:$0xff]
      %v1263 = vld [vmem:[%s1 + $0x40] sm:$0xff]
      %v1264 = vld [vmem:[%s2] sm:$0x1]
      %v1266 = vlaneseq
      %v1267 = vshrl.u32 %v1266, 7
      %v1268 = vsub.s32 0, %v1267
      %v1269 = vrot.slane %v1264, %v1268
      %vm1271 = vcmask 588800
      %v1273 = vsel %vm1271, %v386, 0
      %v1276 = vsel %vm1271, %v414, 0
      %v1279 = vsel %vm1271, %v442, 0
      %v1282 = vsel %vm1271, %v470, 0
      %v1285 = vsel %vm1271, %v498, 0
      %v1288 = vsel %vm1271, %v526, 0
      %v1291 = vsel %vm1271, %v554, 0
      %v1294 = vsel %vm1271, %v582, 0
      %v1297 = vsel %vm1271, %v610, 0
      %v1300 = vsel %vm1271, %v638, 0
      %v1303 = vsel %vm1271, %v666, 0
      %v1306 = vsel %vm1271, %v694, 0
      %v1309 = vsel %vm1271, %v722, 0
      %v1312 = vsel %vm1271, %v750, 0
      %v1315 = vsel %vm1271, %v778, 0
      %v1318 = vsel %vm1271, %v806, 0
      %v1321 = vsel %vm1271, %v834, 0
      %v1324 = vsel %vm1271, %v862, 0
      %v1327 = vsel %vm1271, %v890, 0
      %v1330 = vsel %vm1271, %v918, 0
      %v1333 = vsel %vm1271, %v946, 0
      %v1336 = vsel %vm1271, %v974, 0
      %v1339 = vsel %vm1271, %v1002, 0
      %v1342 = vsel %vm1271, %v1030, 0
      %v1345 = vsel %vm1271, %v1058, 0
      %v1348 = vsel %vm1271, %v1086, 0
      %v1351 = vsel %vm1271, %v1114, 0
      %v1354 = vsel %vm1271, %v1142, 0
      %v1357 = vsel %vm1271, %v1170, 0
      %v1360 = vsel %vm1271, %v1198, 0
      %v1363 = vsel %vm1271, %v1226, 0
      %v1366 = vsel %vm1271, %v1254, 0
      %1368 = vmatprep.subr.mxu0 0.0
      %1369 = vmatpush1.msra.mxu0 %v1255
      %1370 = vmatprep.subr.mxu0 0.0
      %1371 = vmatpush1.msra.mxu0 %v1256
      %1372 = vmatprep.subr.mxu0 0.0
      %1373 = vmatpush1.msra.mxu0 %v1257
      %1374 = vmatprep.subr.mxu0 0.0
      %1375 = vmatpush1.msra.mxu0 %v1258
      %1376 = vmatprep.subr.mxu0 0.0
      %1377 = vmatpush1.msra.mxu0 %v1259
      %1378 = vmatprep.subr.mxu0 0.0
      %1379 = vmatpush1.msra.mxu0 %v1260
      %1380 = vmatprep.subr.mxu0 0.0
      %1381 = vmatpush1.msra.mxu0 %v1261
      %1382 = vmatprep.subr.mxu0 0.0
      %1383 = vmatpush1.msra.mxu0 %v1262
      %1384 = vmatprep.subr.mxu0 0.0
      %1385 = vmatpush1.msra.mxu0 %v1263
      %1386 = vmatprep.subr.mxu0 0.0
      %1387 = vmatpush1.msra.mxu0 0.0
      %1388 = vmatprep.subr.mxu0 0.0
      %1389 = vmatpush1.msra.mxu0 0.0
      %1390 = vmatprep.subr.mxu0 0.0
      %1391 = vmatpush1.msra.mxu0 0.0
      %1392 = vmatprep.subr.mxu0 0.0
      %1393 = vmatpush1.msra.mxu0 0.0
      %1394 = vmatprep.subr.mxu0 0.0
      %1395 = vmatpush1.msra.mxu0 0.0
      %1396 = vmatprep.subr.mxu0 0.0
      %1397 = vmatpush1.msra.mxu0 0.0
      %1398 = vmatprep.subr.mxu0 0.0
      %1399 = vmatpush1.msra.mxu0 0.0
      %1400 = vmatprep.subr.mxu0 0.0
      %1401 = vmatpush1.msra.mxu0 0.0
      %1402 = vmatprep.subr.mxu0 0.0
      %1403 = vmatpush1.msra.mxu0 0.0
      %1404 = vmatprep.subr.mxu0 0.0
      %1405 = vmatpush1.msra.mxu0 0.0
      %1406 = vmatprep.subr.mxu0 0.0
      %1407 = vmatpush1.msra.mxu0 0.0
      %1408 = vmatprep.subr.mxu0 0.0
      %1409 = vmatpush1.msra.mxu0 0.0
      %1410 = vmatprep.subr.mxu0 0.0
      %1411 = vmatpush1.msra.mxu0 0.0
      %1412 = vmatprep.subr.mxu0 0.0
      %1413 = vmatpush1.msra.mxu0 0.0
      %1414 = vmatprep.subr.mxu0 0.0
      %1415 = vmatpush1.msra.mxu0 0.0
      %1416 = vmatprep.subr.mxu0 0.0
      %1417 = vmatpush1.msra.mxu0 0.0
      %1418 = vmatprep.subr.mxu0 0.0
      %1419 = vmatpush1.msra.mxu0 0.0
      %1420 = vmatprep.subr.mxu0 0.0
      %1421 = vmatpush1.msra.mxu0 0.0
      %1422 = vmatprep.subr.mxu0 0.0
      %1423 = vmatpush1.msra.mxu0 0.0
      %1424 = vmatprep.subr.mxu0 0.0
      %1425 = vmatpush1.msra.mxu0 0.0
      %1426 = vmatprep.subr.mxu0 0.0
      %1427 = vmatpush1.msra.mxu0 0.0
      %1428 = vmatprep.subr.mxu0 0.0
      %1429 = vmatpush1.msra.mxu0 0.0
      %1430 = vmatprep.subr.mxu0 0.0
      %1431 = vmatpush1.msra.mxu0 0.0
      %1432 = vmatprep.mubr.f32.mxu0 0.0
      %1433 = vmatmul.mubr.f32.gmra.mrb[0].mxu0 %v1273
      %v1434 = vpop.f32.mrb[0].mxu0
      %v1435 = vadd.f32 %v1269, %v1434
      %v1436 = vpop.f32.mrb[0].mxu0
      %1437 = vmatprep.mubr.f32.mxu0 0.0
      %1438 = vmatmul.mubr.f32.gmra.mrb[0].mxu0 %v1276
      %v1439 = vpop.f32.mrb[0].mxu0
      %v1440 = vadd.f32 %v1269, %v1439
      %v1441 = vpop.f32.mrb[0].mxu0
      %1442 = vmatprep.mubr.f32.mxu0 0.0
      %1443 = vmatmul.mubr.f32.gmra.mrb[0].mxu0 %v1279
      %v1444 = vpop.f32.mrb[0].mxu0
      %v1445 = vadd.f32 %v1269, %v1444
      %v1446 = vpop.f32.mrb[0].mxu0
      %1447 = vmatprep.mubr.f32.mxu0 0.0
      %1448 = vmatmul.mubr.f32.gmra.mrb[0].mxu0 %v1282
      %v1449 = vpop.f32.mrb[0].mxu0
      %v1450 = vadd.f32 %v1269, %v1449
      %v1451 = vpop.f32.mrb[0].mxu0
      %1452 = vmatprep.mubr.f32.mxu0 0.0
      %1453 = vmatmul.mubr.f32.gmra.mrb[0].mxu0 %v1285
      %v1454 = vpop.f32.mrb[0].mxu0
      %v1455 = vadd.f32 %v1269, %v1454
      %v1456 = vpop.f32.mrb[0].mxu0
      %1457 = vmatprep.mubr.f32.mxu0 0.0
      %1458 = vmatmul.mubr.f32.gmra.mrb[0].mxu0 %v1288
      %v1459 = vpop.f32.mrb[0].mxu0
      %v1460 = vadd.f32 %v1269, %v1459
      %v1461 = vpop.f32.mrb[0].mxu0
      %1462 = vmatprep.mubr.f32.mxu0 0.0
      %1463 = vmatmul.mubr.f32.gmra.mrb[0].mxu0 %v1291
      %v1464 = vpop.f32.mrb[0].mxu0
      %v1465 = vadd.f32 %v1269, %v1464
      %v1466 = vpop.f32.mrb[0].mxu0
      %1467 = vmatprep.mubr.f32.mxu0 0.0
      %1468 = vmatmul.mubr.f32.gmra.mrb[0].mxu0 %v1294
      %v1469 = vpop.f32.mrb[0].mxu0
      %v1470 = vadd.f32 %v1269, %v1469
      %v1471 = vpop.f32.mrb[0].mxu0
      %1472 = vmatprep.mubr.f32.mxu0 0.0
      %1473 = vmatmul.mubr.f32.gmra.mrb[0].mxu0 %v1297
      %v1474 = vpop.f32.mrb[0].mxu0
      %v1475 = vadd.f32 %v1269, %v1474
      %v1476 = vpop.f32.mrb[0].mxu0
      %1477 = vmatprep.mubr.f32.mxu0 0.0
      %1478 = vmatmul.mubr.f32.gmra.mrb[0].mxu0 %v1300
      %v1479 = vpop.f32.mrb[0].mxu0
      %v1480 = vadd.f32 %v1269, %v1479
      %v1481 = vpop.f32.mrb[0].mxu0
      %1482 = vmatprep.mubr.f32.mxu0 0.0
      %1483 = vmatmul.mubr.f32.gmra.mrb[0].mxu0 %v1303
      %v1484 = vpop.f32.mrb[0].mxu0
      %v1485 = vadd.f32 %v1269, %v1484
      %v1486 = vpop.f32.mrb[0].mxu0
      %1487 = vmatprep.mubr.f32.mxu0 0.0
      %1488 = vmatmul.mubr.f32.gmra.mrb[0].mxu0 %v1306
      %v1489 = vpop.f32.mrb[0].mxu0
      %v1490 = vadd.f32 %v1269, %v1489
      %v1491 = vpop.f32.mrb[0].mxu0
      %1492 = vmatprep.mubr.f32.mxu0 0.0
      %1493 = vmatmul.mubr.f32.gmra.mrb[0].mxu0 %v1309
      %v1494 = vpop.f32.mrb[0].mxu0
      %v1495 = vadd.f32 %v1269, %v1494
      %v1496 = vpop.f32.mrb[0].mxu0
      %1497 = vmatprep.mubr.f32.mxu0 0.0
      %1498 = vmatmul.mubr.f32.gmra.mrb[0].mxu0 %v1312
      %v1499 = vpop.f32.mrb[0].mxu0
      %v1500 = vadd.f32 %v1269, %v1499
      %v1501 = vpop.f32.mrb[0].mxu0
      %1502 = vmatprep.mubr.f32.mxu0 0.0
      %1503 = vmatmul.mubr.f32.gmra.mrb[0].mxu0 %v1315
      %v1504 = vpop.f32.mrb[0].mxu0
      %v1505 = vadd.f32 %v1269, %v1504
      %v1506 = vpop.f32.mrb[0].mxu0
      %1507 = vmatprep.mubr.f32.mxu0 0.0
      %1508 = vmatmul.mubr.f32.gmra.mrb[0].mxu0 %v1318
      %v1509 = vpop.f32.mrb[0].mxu0
      %v1510 = vadd.f32 %v1269, %v1509
      %v1511 = vpop.f32.mrb[0].mxu0
      %1512 = vmatprep.mubr.f32.mxu0 0.0
      %1513 = vmatmul.mubr.f32.gmra.mrb[0].mxu0 %v1321
      %v1514 = vpop.f32.mrb[0].mxu0
      %v1515 = vadd.f32 %v1269, %v1514
      %v1516 = vpop.f32.mrb[0].mxu0
      %1517 = vmatprep.mubr.f32.mxu0 0.0
      %1518 = vmatmul.mubr.f32.gmra.mrb[0].mxu0 %v1324
      %v1519 = vpop.f32.mrb[0].mxu0
      %v1520 = vadd.f32 %v1269, %v1519
      %v1521 = vpop.f32.mrb[0].mxu0
      %1522 = vmatprep.mubr.f32.mxu0 0.0
      %1523 = vmatmul.mubr.f32.gmra.mrb[0].mxu0 %v1327
      %v1524 = vpop.f32.mrb[0].mxu0
      %v1525 = vadd.f32 %v1269, %v1524
      %v1526 = vpop.f32.mrb[0].mxu0
      %1527 = vmatprep.mubr.f32.mxu0 0.0
      %1528 = vmatmul.mubr.f32.gmra.mrb[0].mxu0 %v1330
      %v1529 = vpop.f32.mrb[0].mxu0
      %v1530 = vadd.f32 %v1269, %v1529
      %v1531 = vpop.f32.mrb[0].mxu0
      %1532 = vmatprep.mubr.f32.mxu0 0.0
      %1533 = vmatmul.mubr.f32.gmra.mrb[0].mxu0 %v1333
      %v1534 = vpop.f32.mrb[0].mxu0
      %v1535 = vadd.f32 %v1269, %v1534
      %v1536 = vpop.f32.mrb[0].mxu0
      %1537 = vmatprep.mubr.f32.mxu0 0.0
      %1538 = vmatmul.mubr.f32.gmra.mrb[0].mxu0 %v1336
      %v1539 = vpop.f32.mrb[0].mxu0
      %v1540 = vadd.f32 %v1269, %v1539
      %v1541 = vpop.f32.mrb[0].mxu0
      %1542 = vmatprep.mubr.f32.mxu0 0.0
      %1543 = vmatmul.mubr.f32.gmra.mrb[0].mxu0 %v1339
      %v1544 = vpop.f32.mrb[0].mxu0
      %v1545 = vadd.f32 %v1269, %v1544
      %v1546 = vpop.f32.mrb[0].mxu0
      %1547 = vmatprep.mubr.f32.mxu0 0.0
      %1548 = vmatmul.mubr.f32.gmra.mrb[0].mxu0 %v1342
      %v1549 = vpop.f32.mrb[0].mxu0
      %v1550 = vadd.f32 %v1269, %v1549
      %v1551 = vpop.f32.mrb[0].mxu0
      %1552 = vmatprep.mubr.f32.mxu0 0.0
      %1553 = vmatmul.mubr.f32.gmra.mrb[0].mxu0 %v1345
      %v1554 = vpop.f32.mrb[0].mxu0
      %v1555 = vadd.f32 %v1269, %v1554
      %v1556 = vpop.f32.mrb[0].mxu0
      %1557 = vmatprep.mubr.f32.mxu0 0.0
      %1558 = vmatmul.mubr.f32.gmra.mrb[0].mxu0 %v1348
      %v1559 = vpop.f32.mrb[0].mxu0
      %v1560 = vadd.f32 %v1269, %v1559
      %v1561 = vpop.f32.mrb[0].mxu0
      %1562 = vmatprep.mubr.f32.mxu0 0.0
      %1563 = vmatmul.mubr.f32.gmra.mrb[0].mxu0 %v1351
      %v1564 = vpop.f32.mrb[0].mxu0
      %v1565 = vadd.f32 %v1269, %v1564
      %v1566 = vpop.f32.mrb[0].mxu0
      %1567 = vmatprep.mubr.f32.mxu0 0.0
      %1568 = vmatmul.mubr.f32.gmra.mrb[0].mxu0 %v1354
      %v1569 = vpop.f32.mrb[0].mxu0
      %v1570 = vadd.f32 %v1269, %v1569
      %v1571 = vpop.f32.mrb[0].mxu0
      %1572 = vmatprep.mubr.f32.mxu0 0.0
      %1573 = vmatmul.mubr.f32.gmra.mrb[0].mxu0 %v1357
      %v1574 = vpop.f32.mrb[0].mxu0
      %v1575 = vadd.f32 %v1269, %v1574
      %v1576 = vpop.f32.mrb[0].mxu0
      %1577 = vmatprep.mubr.f32.mxu0 0.0
      %1578 = vmatmul.mubr.f32.gmra.mrb[0].mxu0 %v1360
      %v1579 = vpop.f32.mrb[0].mxu0
      %v1580 = vadd.f32 %v1269, %v1579
      %v1581 = vpop.f32.mrb[0].mxu0
      %1582 = vmatprep.mubr.f32.mxu0 0.0
      %1583 = vmatmul.mubr.f32.gmra.mrb[0].mxu0 %v1363
      %v1584 = vpop.f32.mrb[0].mxu0
      %v1585 = vadd.f32 %v1269, %v1584
      %v1586 = vpop.f32.mrb[0].mxu0
      %1587 = vmatprep.mubr.f32.mxu0 0.0
      %1588 = vmatmul.mubr.f32.gmra.mrb[0].mxu0 %v1366
      %v1589 = vpop.f32.mrb[0].mxu0
      %v1590 = vadd.f32 %v1269, %v1589
      %v1591 = vpop.f32.mrb[0].mxu0
      %1592 = vdwg.mxu0
      %v1593 = vmax.f32 %v1435, %v1440
      %1595 = vrot.lane.b32.xlu0 %v1593, 96
      %v1596 = vpop.permute.xlu0 %1595
      %v1598 = vmax.f32 %v1593, %v1596
      %1600 = vrot.lane.b32.xlu0 %v1598, 96
      %v1601 = vpop.permute.xlu0 %1600
      %vm1603 = vcmask 261120
      %v1604 = vsel %vm1603, %v1598, %v1601
      %v1605 = vmax.f32 %v1604, 0.0
      %1607 = vrot.lane.b32.xlu0 %v1605, 96
      %v1608 = vpop.permute.xlu0 %1607
      %s1610 = scalar_lea.vmem [#allocation2], 16
      %1611 = vst.msk [vmem:[%s1610 + $0x1] sm:$0xff] %vm1603, %v1608
      %1612 = vrot.lane.b32.xlu0 %v1605, 32
      %v1613 = vpop.permute.xlu0 %1612
      %vm1615 = vcmask 523520
      %1616 = vst.msk [vmem:[%s1610] sm:$0xff] %vm1615, %v1613
      %v1617 = vmax.f32 %v1445, %v1450
      %1619 = vrot.lane.b32.xlu0 %v1617, 96
      %v1620 = vpop.permute.xlu0 %1619
      %v1622 = vmax.f32 %v1617, %v1620
      %1624 = vrot.lane.b32.xlu0 %v1622, 96
      %v1625 = vpop.permute.xlu0 %1624
      %v1627 = vsel %vm1603, %v1622, %v1625
      %v1628 = vmax.f32 %v1627, 0.0
      %1630 = vrot.lane.b32.xlu0 %v1628, 96
      %v1631 = vpop.permute.xlu0 %1630
      %s1633 = scalar_lea.vmem [#allocation2], 32
      %1634 = vst.msk [vmem:[%s1633 + $0x1] sm:$0xff] %vm1603, %v1631
      %1635 = vrot.lane.b32.xlu0 %v1628, 32
      %v1636 = vpop.permute.xlu0 %1635
      %1638 = vst.msk [vmem:[%s1633] sm:$0xff] %vm1615, %v1636
      %v1639 = vmax.f32 %v1455, %v1460
      %1641 = vrot.lane.b32.xlu0 %v1639, 96
      %v1642 = vpop.permute.xlu0 %1641
      %v1644 = vmax.f32 %v1639, %v1642
      %1646 = vrot.lane.b32.xlu0 %v1644, 96
      %v1647 = vpop.permute.xlu0 %1646
      %v1649 = vsel %vm1603, %v1644, %v1647
      %v1650 = vmax.f32 %v1649, 0.0
      %1652 = vrot.lane.b32.xlu0 %v1650, 96
      %v1653 = vpop.permute.xlu0 %1652
      %s1655 = scalar_lea.vmem [#allocation2], 48
      %1656 = vst.msk [vmem:[%s1655 + $0x1] sm:$0xff] %vm1603, %v1653
      %1657 = vrot.lane.b32.xlu0 %v1650, 32
      %v1658 = vpop.permute.xlu0 %1657
      %1660 = vst.msk [vmem:[%s1655] sm:$0xff] %vm1615, %v1658
      %v1661 = vmax.f32 %v1465, %v1470
      %1663 = vrot.lane.b32.xlu0 %v1661, 96
      %v1664 = vpop.permute.xlu0 %1663
      %v1666 = vmax.f32 %v1661, %v1664
      %1668 = vrot.lane.b32.xlu0 %v1666, 96
      %v1669 = vpop.permute.xlu0 %1668
      %v1671 = vsel %vm1603, %v1666, %v1669
      %v1672 = vmax.f32 %v1671, 0.0
      %1674 = vrot.lane.b32.xlu0 %v1672, 96
      %v1675 = vpop.permute.xlu0 %1674
      %s1677 = scalar_lea.vmem [#allocation2], 64
      %1678 = vst.msk [vmem:[%s1677 + $0x1] sm:$0xff] %vm1603, %v1675
      %1679 = vrot.lane.b32.xlu0 %v1672, 32
      %v1680 = vpop.permute.xlu0 %1679
      %1682 = vst.msk [vmem:[%s1677] sm:$0xff] %vm1615, %v1680
      %v1683 = vmax.f32 %v1475, %v1480
      %1685 = vrot.lane.b32.xlu0 %v1683, 96
      %v1686 = vpop.permute.xlu0 %1685
      %v1688 = vmax.f32 %v1683, %v1686
      %1690 = vrot.lane.b32.xlu0 %v1688, 96
      %v1691 = vpop.permute.xlu0 %1690
      %v1693 = vsel %vm1603, %v1688, %v1691
      %v1694 = vmax.f32 %v1693, 0.0
      %1696 = vrot.lane.b32.xlu0 %v1694, 96
      %v1697 = vpop.permute.xlu0 %1696
      %s1699 = scalar_lea.vmem [#allocation2], 80
      %1700 = vst.msk [vmem:[%s1699 + $0x1] sm:$0xff] %vm1603, %v1697
      %1701 = vrot.lane.b32.xlu0 %v1694, 32
      %v1702 = vpop.permute.xlu0 %1701
      %1704 = vst.msk [vmem:[%s1699] sm:$0xff] %vm1615, %v1702
      %v1705 = vmax.f32 %v1485, %v1490
      %1707 = vrot.lane.b32.xlu0 %v1705, 96
      %v1708 = vpop.permute.xlu0 %1707
      %v1710 = vmax.f32 %v1705, %v1708
      %1712 = vrot.lane.b32.xlu0 %v1710, 96
      %v1713 = vpop.permute.xlu0 %1712
      %v1715 = vsel %vm1603, %v1710, %v1713
      %v1716 = vmax.f32 %v1715, 0.0
      %1718 = vrot.lane.b32.xlu0 %v1716, 96
      %v1719 = vpop.permute.xlu0 %1718
      %s1721 = scalar_lea.vmem [#allocation2], 96
      %1722 = vst.msk [vmem:[%s1721 + $0x1] sm:$0xff] %vm1603, %v1719
      %1723 = vrot.lane.b32.xlu0 %v1716, 32
      %v1724 = vpop.permute.xlu0 %1723
      %1726 = vst.msk [vmem:[%s1721] sm:$0xff] %vm1615, %v1724
      %v1727 = vmax.f32 %v1495, %v1500
      %1729 = vrot.lane.b32.xlu0 %v1727, 96
      %v1730 = vpop.permute.xlu0 %1729
      %v1732 = vmax.f32 %v1727, %v1730
      %1734 = vrot.lane.b32.xlu0 %v1732, 96
      %v1735 = vpop.permute.xlu0 %1734
      %v1737 = vsel %vm1603, %v1732, %v1735
      %v1738 = vmax.f32 %v1737, 0.0
      %1740 = vrot.lane.b32.xlu0 %v1738, 96
      %v1741 = vpop.permute.xlu0 %1740
      %s1743 = scalar_lea.vmem [#allocation2], 112
      %1744 = vst.msk [vmem:[%s1743 + $0x1] sm:$0xff] %vm1603, %v1741
      %1745 = vrot.lane.b32.xlu0 %v1738, 32
      %v1746 = vpop.permute.xlu0 %1745
      %1748 = vst.msk [vmem:[%s1743] sm:$0xff] %vm1615, %v1746
      %v1749 = vmax.f32 %v1505, %v1510
      %1751 = vrot.lane.b32.xlu0 %v1749, 96
      %v1752 = vpop.permute.xlu0 %1751
      %v1754 = vmax.f32 %v1749, %v1752
      %1756 = vrot.lane.b32.xlu0 %v1754, 96
      %v1757 = vpop.permute.xlu0 %1756
      %v1759 = vsel %vm1603, %v1754, %v1757
      %v1760 = vmax.f32 %v1759, 0.0
      %1762 = vrot.lane.b32.xlu0 %v1760, 96
      %v1763 = vpop.permute.xlu0 %1762
      %s1765 = scalar_lea.vmem [#allocation2], 128
      %1766 = vst.msk [vmem:[%s1765 + $0x1] sm:$0xff] %vm1603, %v1763
      %1767 = vrot.lane.b32.xlu0 %v1760, 32
      %v1768 = vpop.permute.xlu0 %1767
      %1770 = vst.msk [vmem:[%s1765] sm:$0xff] %vm1615, %v1768
      %v1771 = vmax.f32 %v1515, %v1520
      %1773 = vrot.lane.b32.xlu0 %v1771, 96
      %v1774 = vpop.permute.xlu0 %1773
      %v1776 = vmax.f32 %v1771, %v1774
      %1778 = vrot.lane.b32.xlu0 %v1776, 96
      %v1779 = vpop.permute.xlu0 %1778
      %v1781 = vsel %vm1603, %v1776, %v1779
      %v1782 = vmax.f32 %v1781, 0.0
      %1784 = vrot.lane.b32.xlu0 %v1782, 96
      %v1785 = vpop.permute.xlu0 %1784
      %s1787 = scalar_lea.vmem [#allocation2], 144
      %1788 = vst.msk [vmem:[%s1787 + $0x1] sm:$0xff] %vm1603, %v1785
      %1789 = vrot.lane.b32.xlu0 %v1782, 32
      %v1790 = vpop.permute.xlu0 %1789
      %1792 = vst.msk [vmem:[%s1787] sm:$0xff] %vm1615, %v1790
      %v1793 = vmax.f32 %v1525, %v1530
      %1795 = vrot.lane.b32.xlu0 %v1793, 96
      %v1796 = vpop.permute.xlu0 %1795
      %v1798 = vmax.f32 %v1793, %v1796
      %1800 = vrot.lane.b32.xlu0 %v1798, 96
      %v1801 = vpop.permute.xlu0 %1800
      %v1803 = vsel %vm1603, %v1798, %v1801
      %v1804 = vmax.f32 %v1803, 0.0
      %1806 = vrot.lane.b32.xlu0 %v1804, 96
      %v1807 = vpop.permute.xlu0 %1806
      %s1809 = scalar_lea.vmem [#allocation2], 160
      %1810 = vst.msk [vmem:[%s1809 + $0x1] sm:$0xff] %vm1603, %v1807
      %1811 = vrot.lane.b32.xlu0 %v1804, 32
      %v1812 = vpop.permute.xlu0 %1811
      %1814 = vst.msk [vmem:[%s1809] sm:$0xff] %vm1615, %v1812
      %v1815 = vmax.f32 %v1535, %v1540
      %1817 = vrot.lane.b32.xlu0 %v1815, 96
      %v1818 = vpop.permute.xlu0 %1817
      %v1820 = vmax.f32 %v1815, %v1818
      %1822 = vrot.lane.b32.xlu0 %v1820, 96
      %v1823 = vpop.permute.xlu0 %1822
      %v1825 = vsel %vm1603, %v1820, %v1823
      %v1826 = vmax.f32 %v1825, 0.0
      %1828 = vrot.lane.b32.xlu0 %v1826, 96
      %v1829 = vpop.permute.xlu0 %1828
      %s1831 = scalar_lea.vmem [#allocation2], 176
      %1832 = vst.msk [vmem:[%s1831 + $0x1] sm:$0xff] %vm1603, %v1829
      %1833 = vrot.lane.b32.xlu0 %v1826, 32
      %v1834 = vpop.permute.xlu0 %1833
      %1836 = vst.msk [vmem:[%s1831] sm:$0xff] %vm1615, %v1834
      %v1837 = vmax.f32 %v1545, %v1550
      %1839 = vrot.lane.b32.xlu0 %v1837, 96
      %v1840 = vpop.permute.xlu0 %1839
      %v1842 = vmax.f32 %v1837, %v1840
      %1844 = vrot.lane.b32.xlu0 %v1842, 96
      %v1845 = vpop.permute.xlu0 %1844
      %v1847 = vsel %vm1603, %v1842, %v1845
      %v1848 = vmax.f32 %v1847, 0.0
      %1850 = vrot.lane.b32.xlu0 %v1848, 96
      %v1851 = vpop.permute.xlu0 %1850
      %s1853 = scalar_lea.vmem [#allocation2], 192
      %1854 = vst.msk [vmem:[%s1853 + $0x1] sm:$0xff] %vm1603, %v1851
      %1855 = vrot.lane.b32.xlu0 %v1848, 32
      %v1856 = vpop.permute.xlu0 %1855
      %1858 = vst.msk [vmem:[%s1853] sm:$0xff] %vm1615, %v1856
      %v1859 = vmax.f32 %v1555, %v1560
      %1861 = vrot.lane.b32.xlu0 %v1859, 96
      %v1862 = vpop.permute.xlu0 %1861
      %v1864 = vmax.f32 %v1859, %v1862
      %1866 = vrot.lane.b32.xlu0 %v1864, 96
      %v1867 = vpop.permute.xlu0 %1866
      %v1869 = vsel %vm1603, %v1864, %v1867
      %v1870 = vmax.f32 %v1869, 0.0
      %1872 = vrot.lane.b32.xlu0 %v1870, 96
      %v1873 = vpop.permute.xlu0 %1872
      %s1875 = scalar_lea.vmem [#allocation2], 208
      %1876 = vst.msk [vmem:[%s1875 + $0x1] sm:$0xff] %vm1603, %v1873
      %1877 = vrot.lane.b32.xlu0 %v1870, 32
      %v1878 = vpop.permute.xlu0 %1877
      %1880 = vst.msk [vmem:[%s1875] sm:$0xff] %vm1615, %v1878
      %v1881 = vmax.f32 %v1565, %v1570
      %1883 = vrot.lane.b32.xlu0 %v1881, 96
      %v1884 = vpop.permute.xlu0 %1883
      %v1886 = vmax.f32 %v1881, %v1884
      %1888 = vrot.lane.b32.xlu0 %v1886, 96
      %v1889 = vpop.permute.xlu0 %1888
      %v1891 = vsel %vm1603, %v1886, %v1889
      %v1892 = vmax.f32 %v1891, 0.0
      %1894 = vrot.lane.b32.xlu0 %v1892, 96
      %v1895 = vpop.permute.xlu0 %1894
      %s1897 = scalar_lea.vmem [#allocation2], 224
      %1898 = vst.msk [vmem:[%s1897 + $0x1] sm:$0xff] %vm1603, %v1895
      %1899 = vrot.lane.b32.xlu0 %v1892, 32
      %v1900 = vpop.permute.xlu0 %1899
      %1902 = vst.msk [vmem:[%s1897] sm:$0xff] %vm1615, %v1900
      %v1903 = vmax.f32 %v1575, %v1580
      %1905 = vrot.lane.b32.xlu0 %v1903, 96
      %v1906 = vpop.permute.xlu0 %1905
      %v1908 = vmax.f32 %v1903, %v1906
      %1910 = vrot.lane.b32.xlu0 %v1908, 96
      %v1911 = vpop.permute.xlu0 %1910
      %v1913 = vsel %vm1603, %v1908, %v1911
      %v1914 = vmax.f32 %v1913, 0.0
      %1916 = vrot.lane.b32.xlu0 %v1914, 96
      %v1917 = vpop.permute.xlu0 %1916
      %s1919 = scalar_lea.vmem [#allocation2], 240
      %1920 = vst.msk [vmem:[%s1919 + $0x1] sm:$0xff] %vm1603, %v1917
      %1921 = vrot.lane.b32.xlu0 %v1914, 32
      %v1922 = vpop.permute.xlu0 %1921
      %1924 = vst.msk [vmem:[%s1919] sm:$0xff] %vm1615, %v1922
      %v1925 = vmax.f32 %v1585, %v1590
      %1927 = vrot.lane.b32.xlu0 %v1925, 96
      %v1928 = vpop.permute.xlu0 %1927
      %v1930 = vmax.f32 %v1925, %v1928
      %1932 = vrot.lane.b32.xlu0 %v1930, 96
      %v1933 = vpop.permute.xlu0 %1932
      %v1935 = vsel %vm1603, %v1930, %v1933
      %v1936 = vmax.f32 %v1935, 0.0
      %1938 = vrot.lane.b32.xlu0 %v1936, 96
      %v1939 = vpop.permute.xlu0 %1938
      %s1941 = scalar_lea.vmem [#allocation2], 256
      %1942 = vst.msk [vmem:[%s1941 + $0x1] sm:$0xff] %vm1603, %v1939
      %1943 = vrot.lane.b32.xlu0 %v1936, 32
      %v1944 = vpop.permute.xlu0 %1943
      %1946 = vst.msk [vmem:[%s1941] sm:$0xff] %vm1615, %v1944
      %v1947 = vld [vmem:[#allocation2] sm:$0xff]
      %v1948 = vld [vmem:[#allocation2 + $0x8] sm:$0x1]
      %v1949 = vld [vmem:[%s1610] sm:$0xff]
      %v1950 = vld [vmem:[%s1610 + $0x8] sm:$0x1]
      %v1951 = vld [vmem:[%s1633] sm:$0xff]
      %v1952 = vld [vmem:[%s1633 + $0x8] sm:$0x1]
      %v1955 = vrot.slane %v1947, 1
      %v1956 = vrot.slane %v1948, 1
      %v1957 = vsel %vm348, %v1955, %v1956
      %1958 = vrot.lane.b32.xlu0 %v1957, 64
      %v1959 = vpop.permute.xlu0 %1958
      %v1963 = vrot.slane %v1949, 1
      %v1964 = vrot.slane %v1950, 1
      %v1965 = vsel %vm348, %v1963, %v1964
      %1966 = vrot.lane.b32.xlu0 %v1965, 64
      %v1967 = vpop.permute.xlu0 %1966
      %v1971 = vrot.slane %v1951, 1
      %v1972 = vrot.slane %v1952, 1
      %v1973 = vsel %vm348, %v1971, %v1972
      %1974 = vrot.lane.b32.xlu0 %v1973, 64
      %v1975 = vpop.permute.xlu0 %1974
      %v1977 = vsel %vm279, %v1947, %v1959
      %v1978 = vsel %vm279, %v1949, %v1967
      %v1979 = vsel %vm279, %v1951, %v1975
      %v1980 = vld [vmem:[%s1655] sm:$0xff]
      %v1981 = vld [vmem:[%s1655 + $0x8] sm:$0x1]
      %v1984 = vrot.slane %v1980, 1
      %v1985 = vrot.slane %v1981, 1
      %v1986 = vsel %vm348, %v1984, %v1985
      %1987 = vrot.lane.b32.xlu0 %v1986, 64
      %v1988 = vpop.permute.xlu0 %1987
      %v1990 = vsel %vm279, %v1980, %v1988
      %v1991 = vld [vmem:[%s1677] sm:$0xff]
      %v1992 = vld [vmem:[%s1677 + $0x8] sm:$0x1]
      %v1995 = vrot.slane %v1991, 1
      %v1996 = vrot.slane %v1992, 1
      %v1997 = vsel %vm348, %v1995, %v1996
      %1998 = vrot.lane.b32.xlu0 %v1997, 64
      %v1999 = vpop.permute.xlu0 %1998
      %v2001 = vsel %vm279, %v1991, %v1999
      %v2002 = vld [vmem:[%s1699] sm:$0xff]
      %v2003 = vld [vmem:[%s1699 + $0x8] sm:$0x1]
      %v2006 = vrot.slane %v2002, 1
      %v2007 = vrot.slane %v2003, 1
      %v2008 = vsel %vm348, %v2006, %v2007
      %2009 = vrot.lane.b32.xlu0 %v2008, 64
      %v2010 = vpop.permute.xlu0 %2009
      %v2012 = vsel %vm279, %v2002, %v2010
      %v2013 = vld [vmem:[%s1721] sm:$0xff]
      %v2014 = vld [vmem:[%s1721 + $0x8] sm:$0x1]
      %v2017 = vrot.slane %v2013, 1
      %v2018 = vrot.slane %v2014, 1
      %v2019 = vsel %vm348, %v2017, %v2018
      %2020 = vrot.lane.b32.xlu0 %v2019, 64
      %v2021 = vpop.permute.xlu0 %2020
      %v2023 = vsel %vm279, %v2013, %v2021
      %v2024 = vld [vmem:[%s1743] sm:$0xff]
      %v2025 = vld [vmem:[%s1743 + $0x8] sm:$0x1]
      %v2028 = vrot.slane %v2024, 1
      %v2029 = vrot.slane %v2025, 1
      %v2030 = vsel %vm348, %v2028, %v2029
      %2031 = vrot.lane.b32.xlu0 %v2030, 64
      %v2032 = vpop.permute.xlu0 %2031
      %v2034 = vsel %vm279, %v2024, %v2032
      %v2035 = vld [vmem:[%s1765] sm:$0xff]
      %v2036 = vld [vmem:[%s1765 + $0x8] sm:$0x1]
      %v2039 = vrot.slane %v2035, 1
      %v2040 = vrot.slane %v2036, 1
      %v2041 = vsel %vm348, %v2039, %v2040
      %2042 = vrot.lane.b32.xlu0 %v2041, 64
      %v2043 = vpop.permute.xlu0 %2042
      %v2045 = vsel %vm279, %v2035, %v2043
      %v2046 = vld [vmem:[%s1787] sm:$0xff]
      %v2047 = vld [vmem:[%s1787 + $0x8] sm:$0x1]
      %v2050 = vrot.slane %v2046, 1
      %v2051 = vrot.slane %v2047, 1
      %v2052 = vsel %vm348, %v2050, %v2051
      %2053 = vrot.lane.b32.xlu0 %v2052, 64
      %v2054 = vpop.permute.xlu0 %2053
      %v2056 = vsel %vm279, %v2046, %v2054
      %v2057 = vld [vmem:[%s1809] sm:$0xff]
      %v2058 = vld [vmem:[%s1809 + $0x8] sm:$0x1]
      %v2061 = vrot.slane %v2057, 1
      %v2062 = vrot.slane %v2058, 1
      %v2063 = vsel %vm348, %v2061, %v2062
      %2064 = vrot.lane.b32.xlu0 %v2063, 64
      %v2065 = vpop.permute.xlu0 %2064
      %v2067 = vsel %vm279, %v2057, %v2065
      %v2068 = vld [vmem:[%s1831] sm:$0xff]
      %v2069 = vld [vmem:[%s1831 + $0x8] sm:$0x1]
      %v2072 = vrot.slane %v2068, 1
      %v2073 = vrot.slane %v2069, 1
      %v2074 = vsel %vm348, %v2072, %v2073
      %2075 = vrot.lane.b32.xlu0 %v2074, 64
      %v2076 = vpop.permute.xlu0 %2075
      %v2078 = vsel %vm279, %v2068, %v2076
      %v2079 = vld [vmem:[%s1853] sm:$0xff]
      %v2080 = vld [vmem:[%s1853 + $0x8] sm:$0x1]
      %v2083 = vrot.slane %v2079, 1
      %v2084 = vrot.slane %v2080, 1
      %v2085 = vsel %vm348, %v2083, %v2084
      %2086 = vrot.lane.b32.xlu0 %v2085, 64
      %v2087 = vpop.permute.xlu0 %2086
      %v2089 = vsel %vm279, %v2079, %v2087
      %v2090 = vld [vmem:[%s1875] sm:$0xff]
      %v2091 = vld [vmem:[%s1875 + $0x8] sm:$0x1]
      %v2094 = vrot.slane %v2090, 1
      %v2095 = vrot.slane %v2091, 1
      %v2096 = vsel %vm348, %v2094, %v2095
      %2097 = vrot.lane.b32.xlu0 %v2096, 64
      %v2098 = vpop.permute.xlu0 %2097
      %v2100 = vsel %vm279, %v2090, %v2098
      %v2101 = vld [vmem:[%s1897] sm:$0xff]
      %v2102 = vld [vmem:[%s1897 + $0x8] sm:$0x1]
      %v2105 = vrot.slane %v2101, 1
      %v2106 = vrot.slane %v2102, 1
      %v2107 = vsel %vm348, %v2105, %v2106
      %2108 = vrot.lane.b32.xlu0 %v2107, 64
      %v2109 = vpop.permute.xlu0 %2108
      %v2111 = vsel %vm279, %v2101, %v2109
      %v2112 = vld [vmem:[%s1919] sm:$0xff]
      %v2113 = vld [vmem:[%s1919 + $0x8] sm:$0x1]
      %v2116 = vrot.slane %v2112, 1
      %v2117 = vrot.slane %v2113, 1
      %v2118 = vsel %vm348, %v2116, %v2117
      %2119 = vrot.lane.b32.xlu0 %v2118, 64
      %v2120 = vpop.permute.xlu0 %2119
      %v2122 = vsel %vm279, %v2112, %v2120
      %v2123 = vld [vmem:[%s1941] sm:$0xff]
      %v2124 = vld [vmem:[%s1941 + $0x8] sm:$0x1]
      %v2127 = vrot.slane %v2123, 1
      %v2128 = vrot.slane %v2124, 1
      %v2129 = vsel %vm348, %v2127, %v2128
      %2130 = vrot.lane.b32.xlu0 %v2129, 64
      %v2131 = vpop.permute.xlu0 %2130
      %v2133 = vsel %vm279, %v2123, %v2131
      %s2134 = scalar_lea.vmem [#allocation2], 272
      %v2135 = vld [vmem:[%s2134] sm:$0xff]
      %v2136 = vld [vmem:[%s2134 + $0x8] sm:$0x1]
      %v2139 = vrot.slane %v2135, 1
      %v2140 = vrot.slane %v2136, 1
      %v2141 = vsel %vm348, %v2139, %v2140
      %2142 = vrot.lane.b32.xlu0 %v2141, 64
      %v2143 = vpop.permute.xlu0 %2142
      %v2145 = vsel %vm279, %v2135, %v2143
      %v2146 = vld [vmem:[%s3] sm:$0xff]
      %v2147 = vld [vmem:[%s3 + $0x8] sm:$0xff]
      %v2148 = vld [vmem:[%s3 + $0x10] sm:$0xff]
      %v2149 = vld [vmem:[%s3 + $0x18] sm:$0xff]
      %v2150 = vld [vmem:[%s3 + $0x20] sm:$0xff]
      %v2151 = vld [vmem:[%s3 + $0x28] sm:$0xff]
      %v2152 = vld [vmem:[%s3 + $0x30] sm:$0xff]
      %v2153 = vld [vmem:[%s3 + $0x38] sm:$0xff]
      %v2154 = vld [vmem:[%s3 + $0x40] sm:$0xff]
      %v2155 = vld [vmem:[%s3 + $0x48] sm:$0xff]
      %v2156 = vld [vmem:[%s3 + $0x50] sm:$0xff]
      %v2157 = vld [vmem:[%s3 + $0x58] sm:$0xff]
      %v2158 = vld [vmem:[%s3 + $0x60] sm:$0xff]
      %v2159 = vld [vmem:[%s3 + $0x68] sm:$0xff]
      %v2160 = vld [vmem:[%s3 + $0x70] sm:$0xff]
      %v2161 = vld [vmem:[%s3 + $0x78] sm:$0xff]
      %v2162 = vld [vmem:[%s3 + $0x80] sm:$0xff]
      %v2163 = vld [vmem:[%s3 + $0x88] sm:$0xff]
      %v2164 = vld [vmem:[%s3 + $0x90] sm:$0xff]
      %v2165 = vld [vmem:[%s3 + $0x98] sm:$0xff]
      %v2166 = vld [vmem:[%s3 + $0xa0] sm:$0xff]
      %v2167 = vld [vmem:[%s3 + $0xa8] sm:$0xff]
      %v2168 = vld [vmem:[%s3 + $0xb0] sm:$0xff]
      %v2169 = vld [vmem:[%s3 + $0xb8] sm:$0xff]
      %v2170 = vld [vmem:[%s3 + $0xc0] sm:$0xff]
      %v2171 = vld [vmem:[%s3 + $0xc8] sm:$0xff]
      %v2172 = vld [vmem:[%s3 + $0xd0] sm:$0xff]
      %v2173 = vld [vmem:[%s3 + $0xd8] sm:$0xff]
      %v2174 = vld [vmem:[%s3 + $0xe0] sm:$0xff]
      %v2175 = vld [vmem:[%s3 + $0xe8] sm:$0xff]
      %v2176 = vld [vmem:[%s3 + $0xf0] sm:$0xff]
      %v2177 = vld [vmem:[%s3 + $0xf8] sm:$0xff]
      %v2178 = vld [vmem:[%s3 + $0x100] sm:$0xff]
      %v2179 = vld [vmem:[%s3 + $0x108] sm:$0xff]
      %v2180 = vld [vmem:[%s3 + $0x110] sm:$0xff]
      %v2181 = vld [vmem:[%s3 + $0x118] sm:$0xff]
      %v2182 = vld [vmem:[%s3 + $0x120] sm:$0xff]
      %v2183 = vld [vmem:[%s3 + $0x128] sm:$0xff]
      %v2184 = vld [vmem:[%s3 + $0x130] sm:$0xff]
      %v2185 = vld [vmem:[%s3 + $0x138] sm:$0xff]
      %v2186 = vld [vmem:[%s3 + $0x140] sm:$0xff]
      %v2187 = vld [vmem:[%s3 + $0x148] sm:$0xff]
      %v2188 = vld [vmem:[%s3 + $0x150] sm:$0xff]
      %v2189 = vld [vmem:[%s3 + $0x158] sm:$0xff]
      %v2190 = vld [vmem:[%s3 + $0x160] sm:$0xff]
      %v2191 = vld [vmem:[%s3 + $0x168] sm:$0xff]
      %v2192 = vld [vmem:[%s3 + $0x170] sm:$0xff]
      %v2193 = vld [vmem:[%s3 + $0x178] sm:$0xff]
      %v2194 = vld [vmem:[%s4] sm:$0x1]
      %v2196 = vlaneseq
      %v2197 = vshrl.u32 %v2196, 7
      %v2198 = vsub.s32 0, %v2197
      %v2199 = vrot.slane %v2194, %v2198
      %2201 = vmatprep.subr.mxu0 0.0
      %2202 = vmatpush1.msra.mxu0 %v2146
      %2203 = vmatprep.subr.mxu0 0.0
      %2204 = vmatpush1.msra.mxu0 %v2147
      %2205 = vmatprep.subr.mxu0 0.0
      %2206 = vmatpush1.msra.mxu0 %v2148
      %2207 = vmatprep.subr.mxu0 0.0
      %2208 = vmatpush1.msra.mxu0 %v2149
      %2209 = vmatprep.subr.mxu0 0.0
      %2210 = vmatpush1.msra.mxu0 %v2150
      %2211 = vmatprep.subr.mxu0 0.0
      %2212 = vmatpush1.msra.mxu0 %v2151
      %2213 = vmatprep.subr.mxu0 0.0
      %2214 = vmatpush1.msra.mxu0 %v2152
      %2215 = vmatprep.subr.mxu0 0.0
      %2216 = vmatpush1.msra.mxu0 %v2153
      %2217 = vmatprep.subr.mxu0 0.0
      %2218 = vmatpush1.msra.mxu0 %v2154
      %2219 = vmatprep.subr.mxu0 0.0
      %2220 = vmatpush1.msra.mxu0 %v2155
      %2221 = vmatprep.subr.mxu0 0.0
      %2222 = vmatpush1.msra.mxu0 %v2156
      %2223 = vmatprep.subr.mxu0 0.0
      %2224 = vmatpush1.msra.mxu0 %v2157
      %2225 = vmatprep.subr.mxu0 0.0
      %2226 = vmatpush1.msra.mxu0 %v2158
      %2227 = vmatprep.subr.mxu0 0.0
      %2228 = vmatpush1.msra.mxu0 %v2159
      %2229 = vmatprep.subr.mxu0 0.0
      %2230 = vmatpush1.msra.mxu0 %v2160
      %2231 = vmatprep.subr.mxu0 0.0
      %2232 = vmatpush1.msra.mxu0 %v2161
      %2233 = vmatprep.subr.mxu0 0.0
      %2234 = vmatpush1.msra.mxu0 %v2162
      %2235 = vmatprep.subr.mxu0 0.0
      %2236 = vmatpush1.msra.mxu0 %v2163
      %2237 = vmatprep.subr.mxu0 0.0
      %2238 = vmatpush1.msra.mxu0 %v2164
      %2239 = vmatprep.subr.mxu0 0.0
      %2240 = vmatpush1.msra.mxu0 %v2165
      %2241 = vmatprep.subr.mxu0 0.0
      %2242 = vmatpush1.msra.mxu0 %v2166
      %2243 = vmatprep.subr.mxu0 0.0
      %2244 = vmatpush1.msra.mxu0 %v2167
      %2245 = vmatprep.subr.mxu0 0.0
      %2246 = vmatpush1.msra.mxu0 %v2168
      %2247 = vmatprep.subr.mxu0 0.0
      %2248 = vmatpush1.msra.mxu0 %v2169
      %2249 = vmatprep.subr.mxu0 0.0
      %2250 = vmatpush1.msra.mxu0 %v2170
      %2251 = vmatprep.subr.mxu0 0.0
      %2252 = vmatpush1.msra.mxu0 %v2171
      %2253 = vmatprep.subr.mxu0 0.0
      %2254 = vmatpush1.msra.mxu0 %v2172
      %2255 = vmatprep.subr.mxu0 0.0
      %2256 = vmatpush1.msra.mxu0 %v2173
      %2257 = vmatprep.subr.mxu0 0.0
      %2258 = vmatpush1.msra.mxu0 %v2174
      %2259 = vmatprep.subr.mxu0 0.0
      %2260 = vmatpush1.msra.mxu0 %v2175
      %2261 = vmatprep.subr.mxu0 0.0
      %2262 = vmatpush1.msra.mxu0 %v2176
      %2263 = vmatprep.subr.mxu0 0.0
      %2264 = vmatpush1.msra.mxu0 %v2177
      %2265 = vmatprep.mubr.f32.mxu0 %v1978
      %2266 = vmatmul.mubr.f32.gmra.mrb[0].mxu0 %v1977
      %v2267 = vpop.f32.mrb[0].mxu0
      %v2268 = vadd.f32 %v2199, %v2267
      %v2269 = vpop.f32.mrb[0].mxu0
      %2270 = vmatprep.mubr.f32.mxu0 %v1979
      %2271 = vmatmul.mubr.f32.gmra.mrb[0].mxu0 %v1978
      %v2272 = vpop.f32.mrb[0].mxu0
      %v2273 = vadd.f32 %v2199, %v2272
      %v2274 = vpop.f32.mrb[0].mxu0
      %2275 = vmatprep.mubr.f32.mxu0 %v1990
      %2276 = vmatmul.mubr.f32.gmra.mrb[0].mxu0 %v1979
      %v2277 = vpop.f32.mrb[0].mxu0
      %v2278 = vadd.f32 %v2199, %v2277
      %v2279 = vpop.f32.mrb[0].mxu0
      %2280 = vmatprep.mubr.f32.mxu0 %v2001
      %2281 = vmatmul.mubr.f32.gmra.mrb[0].mxu0 %v1990
      %v2282 = vpop.f32.mrb[0].mxu0
      %v2283 = vadd.f32 %v2199, %v2282
      %v2284 = vpop.f32.mrb[0].mxu0
      %2285 = vmatprep.mubr.f32.mxu0 %v2012
      %2286 = vmatmul.mubr.f32.gmra.mrb[0].mxu0 %v2001
      %v2287 = vpop.f32.mrb[0].mxu0
      %v2288 = vadd.f32 %v2199, %v2287
      %v2289 = vpop.f32.mrb[0].mxu0
      %2290 = vmatprep.mubr.f32.mxu0 %v2023
      %2291 = vmatmul.mubr.f32.gmra.mrb[0].mxu0 %v2012
      %v2292 = vpop.f32.mrb[0].mxu0
      %v2293 = vadd.f32 %v2199, %v2292
      %v2294 = vpop.f32.mrb[0].mxu0
      %2295 = vmatprep.mubr.f32.mxu0 %v2034
      %2296 = vmatmul.mubr.f32.gmra.mrb[0].mxu0 %v2023
      %v2297 = vpop.f32.mrb[0].mxu0
      %v2298 = vadd.f32 %v2199, %v2297
      %v2299 = vpop.f32.mrb[0].mxu0
      %2300 = vmatprep.mubr.f32.mxu0 %v2045
      %2301 = vmatmul.mubr.f32.gmra.mrb[0].mxu0 %v2034
      %v2302 = vpop.f32.mrb[0].mxu0
      %v2303 = vadd.f32 %v2199, %v2302
      %v2304 = vpop.f32.mrb[0].mxu0
      %2305 = vmatprep.mubr.f32.mxu0 %v2056
      %2306 = vmatmul.mubr.f32.gmra.mrb[0].mxu0 %v2045
      %v2307 = vpop.f32.mrb[0].mxu0
      %v2308 = vadd.f32 %v2199, %v2307
      %v2309 = vpop.f32.mrb[0].mxu0
      %2310 = vmatprep.mubr.f32.mxu0 %v2067
      %2311 = vmatmul.mubr.f32.gmra.mrb[0].mxu0 %v2056
      %v2312 = vpop.f32.mrb[0].mxu0
      %v2313 = vadd.f32 %v2199, %v2312
      %v2314 = vpop.f32.mrb[0].mxu0
      %2315 = vmatprep.mubr.f32.mxu0 %v2078
      %2316 = vmatmul.mubr.f32.gmra.mrb[0].mxu0 %v2067
      %v2317 = vpop.f32.mrb[0].mxu0
      %v2318 = vadd.f32 %v2199, %v2317
      %v2319 = vpop.f32.mrb[0].mxu0
      %2320 = vmatprep.mubr.f32.mxu0 %v2089
      %2321 = vmatmul.mubr.f32.gmra.mrb[0].mxu0 %v2078
      %v2322 = vpop.f32.mrb[0].mxu0
      %v2323 = vadd.f32 %v2199, %v2322
      %v2324 = vpop.f32.mrb[0].mxu0
      %2325 = vmatprep.mubr.f32.mxu0 %v2100
      %2326 = vmatmul.mubr.f32.gmra.mrb[0].mxu0 %v2089
      %v2327 = vpop.f32.mrb[0].mxu0
      %v2328 = vadd.f32 %v2199, %v2327
      %v2329 = vpop.f32.mrb[0].mxu0
      %2330 = vmatprep.mubr.f32.mxu0 %v2111
      %2331 = vmatmul.mubr.f32.gmra.mrb[0].mxu0 %v2100
      %v2332 = vpop.f32.mrb[0].mxu0
      %v2333 = vadd.f32 %v2199, %v2332
      %v2334 = vpop.f32.mrb[0].mxu0
      %2335 = vmatprep.mubr.f32.mxu0 %v2122
      %2336 = vmatmul.mubr.f32.gmra.mrb[0].mxu0 %v2111
      %v2337 = vpop.f32.mrb[0].mxu0
      %v2338 = vadd.f32 %v2199, %v2337
      %v2339 = vpop.f32.mrb[0].mxu0
      %2340 = vmatprep.mubr.f32.mxu0 %v2133
      %2341 = vmatmul.mubr.f32.gmra.mrb[0].mxu0 %v2122
      %v2342 = vpop.f32.mrb[0].mxu0
      %v2343 = vadd.f32 %v2199, %v2342
      %v2344 = vpop.f32.mrb[0].mxu0
      %2345 = vdwg.mxu0
      %2346 = vmatprep.subr.mxu0 0.0
      %2347 = vmatpush1.msra.mxu0 %v2178
      %2348 = vmatprep.subr.mxu0 0.0
      %2349 = vmatpush1.msra.mxu0 %v2179
      %2350 = vmatprep.subr.mxu0 0.0
      %2351 = vmatpush1.msra.mxu0 %v2180
      %2352 = vmatprep.subr.mxu0 0.0
      %2353 = vmatpush1.msra.mxu0 %v2181
      %2354 = vmatprep.subr.mxu0 0.0
      %2355 = vmatpush1.msra.mxu0 %v2182
      %2356 = vmatprep.subr.mxu0 0.0
      %2357 = vmatpush1.msra.mxu0 %v2183
      %2358 = vmatprep.subr.mxu0 0.0
      %2359 = vmatpush1.msra.mxu0 %v2184
      %2360 = vmatprep.subr.mxu0 0.0
      %2361 = vmatpush1.msra.mxu0 %v2185
      %2362 = vmatprep.subr.mxu0 0.0
      %2363 = vmatpush1.msra.mxu0 %v2186
      %2364 = vmatprep.subr.mxu0 0.0
      %2365 = vmatpush1.msra.mxu0 %v2187
      %2366 = vmatprep.subr.mxu0 0.0
      %2367 = vmatpush1.msra.mxu0 %v2188
      %2368 = vmatprep.subr.mxu0 0.0
      %2369 = vmatpush1.msra.mxu0 %v2189
      %2370 = vmatprep.subr.mxu0 0.0
      %2371 = vmatpush1.msra.mxu0 %v2190
      %2372 = vmatprep.subr.mxu0 0.0
      %2373 = vmatpush1.msra.mxu0 %v2191
      %2374 = vmatprep.subr.mxu0 0.0
      %2375 = vmatpush1.msra.mxu0 %v2192
      %2376 = vmatprep.subr.mxu0 0.0
      %2377 = vmatpush1.msra.mxu0 %v2193
      %2378 = vmatprep.subr.mxu0 0.0
      %2379 = vmatpush1.msra.mxu0 0.0
      %2380 = vmatprep.subr.mxu0 0.0
      %2381 = vmatpush1.msra.mxu0 0.0
      %2382 = vmatprep.subr.mxu0 0.0
      %2383 = vmatpush1.msra.mxu0 0.0
      %2384 = vmatprep.subr.mxu0 0.0
      %2385 = vmatpush1.msra.mxu0 0.0
      %2386 = vmatprep.subr.mxu0 0.0
      %2387 = vmatpush1.msra.mxu0 0.0
      %2388 = vmatprep.subr.mxu0 0.0
      %2389 = vmatpush1.msra.mxu0 0.0
      %2390 = vmatprep.subr.mxu0 0.0
      %2391 = vmatpush1.msra.mxu0 0.0
      %2392 = vmatprep.subr.mxu0 0.0
      %2393 = vmatpush1.msra.mxu0 0.0
      %2394 = vmatprep.subr.mxu0 0.0
      %2395 = vmatpush1.msra.mxu0 0.0
      %2396 = vmatprep.subr.mxu0 0.0
      %2397 = vmatpush1.msra.mxu0 0.0
      %2398 = vmatprep.subr.mxu0 0.0
      %2399 = vmatpush1.msra.mxu0 0.0
      %2400 = vmatprep.subr.mxu0 0.0
      %2401 = vmatpush1.msra.mxu0 0.0
      %2402 = vmatprep.subr.mxu0 0.0
      %2403 = vmatpush1.msra.mxu0 0.0
      %2404 = vmatprep.subr.mxu0 0.0
      %2405 = vmatpush1.msra.mxu0 0.0
      %2406 = vmatprep.subr.mxu0 0.0
      %2407 = vmatpush1.msra.mxu0 0.0
      %2408 = vmatprep.subr.mxu0 0.0
      %2409 = vmatpush1.msra.mxu0 0.0
      %2410 = vmatprep.mubr.f32.mxu0 0.0
      %2411 = vmatmul.mubr.f32.gmra.mrb[0].mxu0 %v1979
      %v2412 = vpop.f32.mrb[0].mxu0
      %v2413 = vadd.f32 %v2268, %v2412
      %v2414 = vpop.f32.mrb[0].mxu0
      %2415 = vmatprep.mubr.f32.mxu0 0.0
      %2416 = vmatmul.mubr.f32.gmra.mrb[0].mxu0 %v1990
      %v2417 = vpop.f32.mrb[0].mxu0
      %v2418 = vadd.f32 %v2273, %v2417
      %v2419 = vpop.f32.mrb[0].mxu0
      %2420 = vmatprep.mubr.f32.mxu0 0.0
      %2421 = vmatmul.mubr.f32.gmra.mrb[0].mxu0 %v2001
      %v2422 = vpop.f32.mrb[0].mxu0
      %v2423 = vadd.f32 %v2278, %v2422
      %v2424 = vpop.f32.mrb[0].mxu0
      %2425 = vmatprep.mubr.f32.mxu0 0.0
      %2426 = vmatmul.mubr.f32.gmra.mrb[0].mxu0 %v2012
      %v2427 = vpop.f32.mrb[0].mxu0
      %v2428 = vadd.f32 %v2283, %v2427
      %v2429 = vpop.f32.mrb[0].mxu0
      %2430 = vmatprep.mubr.f32.mxu0 0.0
      %2431 = vmatmul.mubr.f32.gmra.mrb[0].mxu0 %v2023
      %v2432 = vpop.f32.mrb[0].mxu0
      %v2433 = vadd.f32 %v2288, %v2432
      %v2434 = vpop.f32.mrb[0].mxu0
      %2435 = vmatprep.mubr.f32.mxu0 0.0
      %2436 = vmatmul.mubr.f32.gmra.mrb[0].mxu0 %v2034
      %v2437 = vpop.f32.mrb[0].mxu0
      %v2438 = vadd.f32 %v2293, %v2437
      %v2439 = vpop.f32.mrb[0].mxu0
      %2440 = vmatprep.mubr.f32.mxu0 0.0
      %2441 = vmatmul.mubr.f32.gmra.mrb[0].mxu0 %v2045
      %v2442 = vpop.f32.mrb[0].mxu0
      %v2443 = vadd.f32 %v2298, %v2442
      %v2444 = vpop.f32.mrb[0].mxu0
      %2445 = vmatprep.mubr.f32.mxu0 0.0
      %2446 = vmatmul.mubr.f32.gmra.mrb[0].mxu0 %v2056
      %v2447 = vpop.f32.mrb[0].mxu0
      %v2448 = vadd.f32 %v2303, %v2447
      %v2449 = vpop.f32.mrb[0].mxu0
      %2450 = vmatprep.mubr.f32.mxu0 0.0
      %2451 = vmatmul.mubr.f32.gmra.mrb[0].mxu0 %v2067
      %v2452 = vpop.f32.mrb[0].mxu0
      %v2453 = vadd.f32 %v2308, %v2452
      %v2454 = vpop.f32.mrb[0].mxu0
      %2455 = vmatprep.mubr.f32.mxu0 0.0
      %2456 = vmatmul.mubr.f32.gmra.mrb[0].mxu0 %v2078
      %v2457 = vpop.f32.mrb[0].mxu0
      %v2458 = vadd.f32 %v2313, %v2457
      %v2459 = vpop.f32.mrb[0].mxu0
      %2460 = vmatprep.mubr.f32.mxu0 0.0
      %2461 = vmatmul.mubr.f32.gmra.mrb[0].mxu0 %v2089
      %v2462 = vpop.f32.mrb[0].mxu0
      %v2463 = vadd.f32 %v2318, %v2462
      %v2464 = vpop.f32.mrb[0].mxu0
      %2465 = vmatprep.mubr.f32.mxu0 0.0
      %2466 = vmatmul.mubr.f32.gmra.mrb[0].mxu0 %v2100
      %v2467 = vpop.f32.mrb[0].mxu0
      %v2468 = vadd.f32 %v2323, %v2467
      %v2469 = vpop.f32.mrb[0].mxu0
      %2470 = vmatprep.mubr.f32.mxu0 0.0
      %2471 = vmatmul.mubr.f32.gmra.mrb[0].mxu0 %v2111
      %v2472 = vpop.f32.mrb[0].mxu0
      %v2473 = vadd.f32 %v2328, %v2472
      %v2474 = vpop.f32.mrb[0].mxu0
      %2475 = vmatprep.mubr.f32.mxu0 0.0
      %2476 = vmatmul.mubr.f32.gmra.mrb[0].mxu0 %v2122
      %v2477 = vpop.f32.mrb[0].mxu0
      %v2478 = vadd.f32 %v2333, %v2477
      %v2479 = vpop.f32.mrb[0].mxu0
      %2480 = vmatprep.mubr.f32.mxu0 0.0
      %2481 = vmatmul.mubr.f32.gmra.mrb[0].mxu0 %v2133
      %v2482 = vpop.f32.mrb[0].mxu0
      %v2483 = vadd.f32 %v2338, %v2482
      %v2484 = vpop.f32.mrb[0].mxu0
      %2485 = vmatprep.mubr.f32.mxu0 0.0
      %2486 = vmatmul.mubr.f32.gmra.mrb[0].mxu0 %v2145
      %v2487 = vpop.f32.mrb[0].mxu0
      %v2488 = vadd.f32 %v2343, %v2487
      %v2489 = vpop.f32.mrb[0].mxu0
      %2490 = vdwg.mxu0
      %v2491 = vmax.f32 %v2413, %v2418
      %2493 = vrot.lane.b32.xlu0 %v2491, 64
      %v2494 = vpop.permute.xlu0 %2493
      %v2496 = vmax.f32 %v2491, %v2494
      %v2497 = vmax.f32 %v2496, 0.0
      %s2498 = scalar_lea.vmem [#allocation3], 16
      %2499 = vst.msk [vmem:[%s2498 + $0x1] sm:$0xff] %vm279, %v2497
      %v2500 = vmax.f32 %v2423, %v2428
      %2502 = vrot.lane.b32.xlu0 %v2500, 64
      %v2503 = vpop.permute.xlu0 %2502
      %v2505 = vmax.f32 %v2500, %v2503
      %v2506 = vmax.f32 %v2505, 0.0
      %s2507 = scalar_lea.vmem [#allocation3], 32
      %2508 = vst.msk [vmem:[%s2507 + $0x1] sm:$0xff] %vm279, %v2506
      %v2509 = vmax.f32 %v2433, %v2438
      %2511 = vrot.lane.b32.xlu0 %v2509, 64
      %v2512 = vpop.permute.xlu0 %2511
      %v2514 = vmax.f32 %v2509, %v2512
      %v2515 = vmax.f32 %v2514, 0.0
      %s2516 = scalar_lea.vmem [#allocation3], 48
      %2517 = vst.msk [vmem:[%s2516 + $0x1] sm:$0xff] %vm279, %v2515
      %v2518 = vmax.f32 %v2443, %v2448
      %2520 = vrot.lane.b32.xlu0 %v2518, 64
      %v2521 = vpop.permute.xlu0 %2520
      %v2523 = vmax.f32 %v2518, %v2521
      %v2524 = vmax.f32 %v2523, 0.0
      %s2525 = scalar_lea.vmem [#allocation3], 64
      %2526 = vst.msk [vmem:[%s2525 + $0x1] sm:$0xff] %vm279, %v2524
      %v2527 = vmax.f32 %v2453, %v2458
      %2529 = vrot.lane.b32.xlu0 %v2527, 64
      %v2530 = vpop.permute.xlu0 %2529
      %v2532 = vmax.f32 %v2527, %v2530
      %v2533 = vmax.f32 %v2532, 0.0
      %s2534 = scalar_lea.vmem [#allocation3], 80
      %2535 = vst.msk [vmem:[%s2534 + $0x1] sm:$0xff] %vm279, %v2533
      %v2536 = vmax.f32 %v2463, %v2468
      %2538 = vrot.lane.b32.xlu0 %v2536, 64
      %v2539 = vpop.permute.xlu0 %2538
      %v2541 = vmax.f32 %v2536, %v2539
      %v2542 = vmax.f32 %v2541, 0.0
      %s2543 = scalar_lea.vmem [#allocation3], 96
      %2544 = vst.msk [vmem:[%s2543 + $0x1] sm:$0xff] %vm279, %v2542
      %v2545 = vmax.f32 %v2473, %v2478
      %2547 = vrot.lane.b32.xlu0 %v2545, 64
      %v2548 = vpop.permute.xlu0 %2547
      %v2550 = vmax.f32 %v2545, %v2548
      %v2551 = vmax.f32 %v2550, 0.0
      %s2552 = scalar_lea.vmem [#allocation3], 112
      %2553 = vst.msk [vmem:[%s2552 + $0x1] sm:$0xff] %vm279, %v2551
      %v2554 = vmax.f32 %v2483, %v2488
      %2556 = vrot.lane.b32.xlu0 %v2554, 64
      %v2557 = vpop.permute.xlu0 %2556
      %v2559 = vmax.f32 %v2554, %v2557
      %v2560 = vmax.f32 %v2559, 0.0
      %s2561 = scalar_lea.vmem [#allocation3], 128
      %2562 = vst.msk [vmem:[%s2561 + $0x1] sm:$0xff] %vm279, %v2560
      %v2563 = vld [vmem:[#allocation3] sm:$0xff]
      %v2564 = vld [vmem:[#allocation3 + $0x8] sm:$0x3]
      %v2565 = vld [vmem:[%s2498] sm:$0xff]
      %v2566 = vld [vmem:[%s2498 + $0x8] sm:$0x3]
      %v2567 = vld [vmem:[%s2507] sm:$0xff]
      %v2568 = vld [vmem:[%s2507 + $0x8] sm:$0x3]
      %v2571 = vrot.slane %v2563, 1
      %v2572 = vrot.slane %v2564, 1
      %v2573 = vsel %vm348, %v2571, %v2572
      %2574 = vrot.lane.b32.xlu0 %v2573, 64
      %v2575 = vpop.permute.xlu0 %2574
      %vm2577 = vcmask 1045504
      %v2578 = vrot.slane %v2563, 2
      %v2579 = vrot.slane %v2564, 2
      %v2580 = vsel %vm2577, %v2578, %v2579
      %2583 = vrot.lane.b32.xlu0 %v2565, 64
      %v2584 = vpop.permute.xlu0 %2583
      %v2587 = vrot.slane %v2565, 1
      %v2588 = vrot.slane %v2566, 1
      %v2589 = vsel %vm348, %v2587, %v2588
      %v2591 = vrot.slane %v2565, 2
      %v2592 = vrot.slane %v2566, 2
      %v2593 = vsel %vm2577, %v2591, %v2592
      %2594 = vrot.lane.b32.xlu0 %v2593, 64
      %v2595 = vpop.permute.xlu0 %2594
      %v2599 = vrot.slane %v2567, 1
      %v2600 = vrot.slane %v2568, 1
      %v2601 = vsel %vm348, %v2599, %v2600
      %2602 = vrot.lane.b32.xlu0 %v2601, 64
      %v2603 = vpop.permute.xlu0 %2602
      %v2605 = vrot.slane %v2567, 2
      %v2606 = vrot.slane %v2568, 2
      %v2607 = vsel %vm2577, %v2605, %v2606
      %v2608 = vsel %vm279, %v2563, %v2575
      %v2609 = vsel %vm279, %v2580, %v2584
      %v2610 = vsel %vm279, %v2589, %v2595
      %v2611 = vsel %vm279, %v2567, %v2603
      %v2612 = vld [vmem:[%s2516] sm:$0xff]
      %v2613 = vld [vmem:[%s2516 + $0x8] sm:$0x3]
      %2614 = vrot.lane.b32.xlu0 %v2589, 64
      %v2615 = vpop.permute.xlu0 %2614
      %2618 = vrot.lane.b32.xlu0 %v2567, 64
      %v2619 = vpop.permute.xlu0 %2618
      %2622 = vrot.lane.b32.xlu0 %v2607, 64
      %v2623 = vpop.permute.xlu0 %2622
      %v2627 = vrot.slane %v2612, 1
      %v2628 = vrot.slane %v2613, 1
      %v2629 = vsel %vm348, %v2627, %v2628
      %2630 = vrot.lane.b32.xlu0 %v2629, 64
      %v2631 = vpop.permute.xlu0 %2630
      %v2633 = vrot.slane %v2612, 2
      %v2634 = vrot.slane %v2613, 2
      %v2635 = vsel %vm2577, %v2633, %v2634
      %v2636 = vsel %vm279, %v2565, %v2615
      %v2637 = vsel %vm279, %v2593, %v2619
      %v2638 = vsel %vm279, %v2601, %v2623
      %v2639 = vsel %vm279, %v2612, %v2631
      %v2640 = vld [vmem:[%s2525] sm:$0xff]
      %v2641 = vld [vmem:[%s2525 + $0x8] sm:$0x3]
      %2643 = vrot.lane.b32.xlu0 %v2612, 64
      %v2644 = vpop.permute.xlu0 %2643
      %2647 = vrot.lane.b32.xlu0 %v2635, 64
      %v2648 = vpop.permute.xlu0 %2647
      %v2652 = vrot.slane %v2640, 1
      %v2653 = vrot.slane %v2641, 1
      %v2654 = vsel %vm348, %v2652, %v2653
      %2655 = vrot.lane.b32.xlu0 %v2654, 64
      %v2656 = vpop.permute.xlu0 %2655
      %v2658 = vrot.slane %v2640, 2
      %v2659 = vrot.slane %v2641, 2
      %v2660 = vsel %vm2577, %v2658, %v2659
      %v2661 = vsel %vm279, %v2607, %v2644
      %v2662 = vsel %vm279, %v2629, %v2648
      %v2663 = vsel %vm279, %v2640, %v2656
      %v2664 = vld [vmem:[%s2534] sm:$0xff]
      %v2665 = vld [vmem:[%s2534 + $0x8] sm:$0x3]
      %2667 = vrot.lane.b32.xlu0 %v2640, 64
      %v2668 = vpop.permute.xlu0 %2667
      %2671 = vrot.lane.b32.xlu0 %v2660, 64
      %v2672 = vpop.permute.xlu0 %2671
      %v2676 = vrot.slane %v2664, 1
      %v2677 = vrot.slane %v2665, 1
      %v2678 = vsel %vm348, %v2676, %v2677
      %2679 = vrot.lane.b32.xlu0 %v2678, 64
      %v2680 = vpop.permute.xlu0 %2679
      %v2682 = vrot.slane %v2664, 2
      %v2683 = vrot.slane %v2665, 2
      %v2684 = vsel %vm2577, %v2682, %v2683
      %v2685 = vsel %vm279, %v2635, %v2668
      %v2686 = vsel %vm279, %v2654, %v2672
      %v2687 = vsel %vm279, %v2664, %v2680
      %v2688 = vld [vmem:[%s2543] sm:$0xff]
      %v2689 = vld [vmem:[%s2543 + $0x8] sm:$0x3]
      %2691 = vrot.lane.b32.xlu0 %v2664, 64
      %v2692 = vpop.permute.xlu0 %2691
      %2695 = vrot.lane.b32.xlu0 %v2684, 64
      %v2696 = vpop.permute.xlu0 %2695
      %v2700 = vrot.slane %v2688, 1
      %v2701 = vrot.slane %v2689, 1
      %v2702 = vsel %vm348, %v2700, %v2701
      %2703 = vrot.lane.b32.xlu0 %v2702, 64
      %v2704 = vpop.permute.xlu0 %2703
      %v2706 = vrot.slane %v2688, 2
      %v2707 = vrot.slane %v2689, 2
      %v2708 = vsel %vm2577, %v2706, %v2707
      %v2709 = vsel %vm279, %v2660, %v2692
      %v2710 = vsel %vm279, %v2678, %v2696
      %v2711 = vsel %vm279, %v2688, %v2704
      %v2712 = vld [vmem:[%s2552] sm:$0xff]
      %v2713 = vld [vmem:[%s2552 + $0x8] sm:$0x3]
      %2715 = vrot.lane.b32.xlu0 %v2688, 64
      %v2716 = vpop.permute.xlu0 %2715
      %2719 = vrot.lane.b32.xlu0 %v2708, 64
      %v2720 = vpop.permute.xlu0 %2719
      %v2724 = vrot.slane %v2712, 1
      %v2725 = vrot.slane %v2713, 1
      %v2726 = vsel %vm348, %v2724, %v2725
      %2727 = vrot.lane.b32.xlu0 %v2726, 64
      %v2728 = vpop.permute.xlu0 %2727
      %v2730 = vrot.slane %v2712, 2
      %v2731 = vrot.slane %v2713, 2
      %v2732 = vsel %vm2577, %v2730, %v2731
      %v2733 = vsel %vm279, %v2684, %v2716
      %v2734 = vsel %vm279, %v2702, %v2720
      %v2735 = vsel %vm279, %v2712, %v2728
      %v2736 = vld [vmem:[%s2561] sm:$0xff]
      %v2737 = vld [vmem:[%s2561 + $0x8] sm:$0x3]
      %2739 = vrot.lane.b32.xlu0 %v2712, 64
      %v2740 = vpop.permute.xlu0 %2739
      %2743 = vrot.lane.b32.xlu0 %v2732, 64
      %v2744 = vpop.permute.xlu0 %2743
      %v2748 = vrot.slane %v2736, 1
      %v2749 = vrot.slane %v2737, 1
      %v2750 = vsel %vm348, %v2748, %v2749
      %2751 = vrot.lane.b32.xlu0 %v2750, 64
      %v2752 = vpop.permute.xlu0 %2751
      %v2754 = vrot.slane %v2736, 2
      %v2755 = vrot.slane %v2737, 2
      %v2756 = vsel %vm2577, %v2754, %v2755
      %v2757 = vsel %vm279, %v2708, %v2740
      %v2758 = vsel %vm279, %v2726, %v2744
      %v2759 = vsel %vm279, %v2736, %v2752
      %s2760 = scalar_lea.vmem [#allocation3], 144
      %v2761 = vld [vmem:[%s2760] sm:$0xff]
      %v2762 = vld [vmem:[%s2760 + $0x8] sm:$0x3]
      %2764 = vrot.lane.b32.xlu0 %v2736, 64
      %v2765 = vpop.permute.xlu0 %2764
      %2768 = vrot.lane.b32.xlu0 %v2756, 64
      %v2769 = vpop.permute.xlu0 %2768
      %v2773 = vrot.slane %v2761, 1
      %v2774 = vrot.slane %v2762, 1
      %v2775 = vsel %vm348, %v2773, %v2774
      %2776 = vrot.lane.b32.xlu0 %v2775, 64
      %v2777 = vpop.permute.xlu0 %2776
      %v2779 = vrot.slane %v2761, 2
      %v2780 = vrot.slane %v2762, 2
      %v2781 = vsel %vm2577, %v2779, %v2780
      %v2782 = vsel %vm279, %v2732, %v2765
      %v2783 = vsel %vm279, %v2750, %v2769
      %v2784 = vsel %vm279, %v2761, %v2777
      %v2785 = vld [vmem:[%s5] sm:$0xff]
      %v2786 = vld [vmem:[%s5 + $0x8] sm:$0xff]
      %v2787 = vld [vmem:[%s5 + $0x10] sm:$0xff]
      %v2788 = vld [vmem:[%s5 + $0x18] sm:$0xff]
      %v2789 = vld [vmem:[%s5 + $0x20] sm:$0xff]
      %v2790 = vld [vmem:[%s5 + $0x28] sm:$0xff]
      %v2791 = vld [vmem:[%s5 + $0x30] sm:$0xff]
      %v2792 = vld [vmem:[%s5 + $0x38] sm:$0xff]
      %v2793 = vld [vmem:[%s5 + $0x40] sm:$0xff]
      %v2794 = vld [vmem:[%s5 + $0x48] sm:$0xff]
      %v2795 = vld [vmem:[%s5 + $0x50] sm:$0xff]
      %v2796 = vld [vmem:[%s5 + $0x58] sm:$0xff]
      %v2797 = vld [vmem:[%s5 + $0x60] sm:$0xff]
      %v2798 = vld [vmem:[%s5 + $0x68] sm:$0xff]
      %v2799 = vld [vmem:[%s5 + $0x70] sm:$0xff]
      %v2800 = vld [vmem:[%s5 + $0x78] sm:$0xff]
      %v2801 = vld [vmem:[%s5 + $0x80] sm:$0xff]
      %v2802 = vld [vmem:[%s5 + $0x88] sm:$0xff]
      %v2803 = vld [vmem:[%s5 + $0x90] sm:$0xff]
      %v2804 = vld [vmem:[%s5 + $0x98] sm:$0xff]
      %v2805 = vld [vmem:[%s5 + $0xa0] sm:$0xff]
      %v2806 = vld [vmem:[%s5 + $0xa8] sm:$0xff]
      %v2807 = vld [vmem:[%s5 + $0xb0] sm:$0xff]
      %v2808 = vld [vmem:[%s5 + $0xb8] sm:$0xff]
      %v2809 = vld [vmem:[%s5 + $0xc0] sm:$0xff]
      %v2810 = vld [vmem:[%s5 + $0xc8] sm:$0xff]
      %v2811 = vld [vmem:[%s5 + $0xd0] sm:$0xff]
      %v2812 = vld [vmem:[%s5 + $0xd8] sm:$0xff]
      %v2813 = vld [vmem:[%s5 + $0xe0] sm:$0xff]
      %v2814 = vld [vmem:[%s5 + $0xe8] sm:$0xff]
      %v2815 = vld [vmem:[%s5 + $0xf0] sm:$0xff]
      %v2816 = vld [vmem:[%s5 + $0xf8] sm:$0xff]
      %v2817 = vld [vmem:[%s5 + $0x100] sm:$0xff]
      %v2818 = vld [vmem:[%s5 + $0x108] sm:$0xff]
      %v2819 = vld [vmem:[%s5 + $0x110] sm:$0xff]
      %v2820 = vld [vmem:[%s5 + $0x118] sm:$0xff]
      %v2821 = vld [vmem:[%s5 + $0x120] sm:$0xff]
      %v2822 = vld [vmem:[%s5 + $0x128] sm:$0xff]
      %v2823 = vld [vmem:[%s5 + $0x130] sm:$0xff]
      %v2824 = vld [vmem:[%s5 + $0x138] sm:$0xff]
      %v2825 = vld [vmem:[%s5 + $0x140] sm:$0xff]
      %v2826 = vld [vmem:[%s5 + $0x148] sm:$0xff]
      %v2827 = vld [vmem:[%s5 + $0x150] sm:$0xff]
      %v2828 = vld [vmem:[%s5 + $0x158] sm:$0xff]
      %v2829 = vld [vmem:[%s5 + $0x160] sm:$0xff]
      %v2830 = vld [vmem:[%s5 + $0x168] sm:$0xff]
      %v2831 = vld [vmem:[%s5 + $0x170] sm:$0xff]
      %v2832 = vld [vmem:[%s5 + $0x178] sm:$0xff]
      %v2833 = vld [vmem:[%s5 + $0x180] sm:$0xff]
      %v2834 = vld [vmem:[%s5 + $0x188] sm:$0xff]
      %v2835 = vld [vmem:[%s5 + $0x190] sm:$0xff]
      %v2836 = vld [vmem:[%s5 + $0x198] sm:$0xff]
      %v2837 = vld [vmem:[%s5 + $0x1a0] sm:$0xff]
      %v2838 = vld [vmem:[%s5 + $0x1a8] sm:$0xff]
      %v2839 = vld [vmem:[%s5 + $0x1b0] sm:$0xff]
      %v2840 = vld [vmem:[%s5 + $0x1b8] sm:$0xff]
      %v2841 = vld [vmem:[%s5 + $0x1c0] sm:$0xff]
      %v2842 = vld [vmem:[%s5 + $0x1c8] sm:$0xff]
      %v2843 = vld [vmem:[%s5 + $0x1d0] sm:$0xff]
      %v2844 = vld [vmem:[%s5 + $0x1d8] sm:$0xff]
      %v2845 = vld [vmem:[%s5 + $0x1e0] sm:$0xff]
      %v2846 = vld [vmem:[%s5 + $0x1e8] sm:$0xff]
      %v2847 = vld [vmem:[%s5 + $0x1f0] sm:$0xff]
      %v2848 = vld [vmem:[%s5 + $0x1f8] sm:$0xff]
      %v2849 = vld [vmem:[%s5 + $0x200] sm:$0xff]
      %v2850 = vld [vmem:[%s5 + $0x208] sm:$0xff]
      %v2851 = vld [vmem:[%s5 + $0x210] sm:$0xff]
      %v2852 = vld [vmem:[%s5 + $0x218] sm:$0xff]
      %v2853 = vld [vmem:[%s5 + $0x220] sm:$0xff]
      %v2854 = vld [vmem:[%s5 + $0x228] sm:$0xff]
      %v2855 = vld [vmem:[%s5 + $0x230] sm:$0xff]
      %v2856 = vld [vmem:[%s5 + $0x238] sm:$0xff]
      %v2857 = vld [vmem:[%s6] sm:$0x1]
      %v2859 = vlaneseq
      %v2860 = vshrl.u32 %v2859, 7
      %v2861 = vsub.s32 0, %v2860
      %v2862 = vrot.slane %v2857, %v2861
      %v2864 = vsel %vm279, %v2607, 0
      %v2866 = vsel %vm279, %v2635, 0
      %v2868 = vsel %vm279, %v2660, 0
      %v2870 = vsel %vm279, %v2684, 0
      %v2872 = vsel %vm279, %v2708, 0
      %v2874 = vsel %vm279, %v2732, 0
      %v2876 = vsel %vm279, %v2756, 0
      %v2878 = vsel %vm279, %v2781, 0
      %2880 = vmatprep.subr.mxu0 0.0
      %2881 = vmatpush1.msra.mxu0 %v2785
      %2882 = vmatprep.subr.mxu0 0.0
      %2883 = vmatpush1.msra.mxu0 %v2786
      %2884 = vmatprep.subr.mxu0 0.0
      %2885 = vmatpush1.msra.mxu0 %v2787
      %2886 = vmatprep.subr.mxu0 0.0
      %2887 = vmatpush1.msra.mxu0 %v2788
      %2888 = vmatprep.subr.mxu0 0.0
      %2889 = vmatpush1.msra.mxu0 %v2789
      %2890 = vmatprep.subr.mxu0 0.0
      %2891 = vmatpush1.msra.mxu0 %v2790
      %2892 = vmatprep.subr.mxu0 0.0
      %2893 = vmatpush1.msra.mxu0 %v2791
      %2894 = vmatprep.subr.mxu0 0.0
      %2895 = vmatpush1.msra.mxu0 %v2792
      %2896 = vmatprep.subr.mxu0 0.0
      %2897 = vmatpush1.msra.mxu0 %v2793
      %2898 = vmatprep.subr.mxu0 0.0
      %2899 = vmatpush1.msra.mxu0 %v2794
      %2900 = vmatprep.subr.mxu0 0.0
      %2901 = vmatpush1.msra.mxu0 %v2795
      %2902 = vmatprep.subr.mxu0 0.0
      %2903 = vmatpush1.msra.mxu0 %v2796
      %2904 = vmatprep.subr.mxu0 0.0
      %2905 = vmatpush1.msra.mxu0 %v2797
      %2906 = vmatprep.subr.mxu0 0.0
      %2907 = vmatpush1.msra.mxu0 %v2798
      %2908 = vmatprep.subr.mxu0 0.0
      %2909 = vmatpush1.msra.mxu0 %v2799
      %2910 = vmatprep.subr.mxu0 0.0
      %2911 = vmatpush1.msra.mxu0 %v2800
      %2912 = vmatprep.subr.mxu0 0.0
      %2913 = vmatpush1.msra.mxu0 %v2801
      %2914 = vmatprep.subr.mxu0 0.0
      %2915 = vmatpush1.msra.mxu0 %v2802
      %2916 = vmatprep.subr.mxu0 0.0
      %2917 = vmatpush1.msra.mxu0 %v2803
      %2918 = vmatprep.subr.mxu0 0.0
      %2919 = vmatpush1.msra.mxu0 %v2804
      %2920 = vmatprep.subr.mxu0 0.0
      %2921 = vmatpush1.msra.mxu0 %v2805
      %2922 = vmatprep.subr.mxu0 0.0
      %2923 = vmatpush1.msra.mxu0 %v2806
      %2924 = vmatprep.subr.mxu0 0.0
      %2925 = vmatpush1.msra.mxu0 %v2807
      %2926 = vmatprep.subr.mxu0 0.0
      %2927 = vmatpush1.msra.mxu0 %v2808
      %2928 = vmatprep.subr.mxu0 0.0
      %2929 = vmatpush1.msra.mxu0 %v2809
      %2930 = vmatprep.subr.mxu0 0.0
      %2931 = vmatpush1.msra.mxu0 %v2810
      %2932 = vmatprep.subr.mxu0 0.0
      %2933 = vmatpush1.msra.mxu0 %v2811
      %2934 = vmatprep.subr.mxu0 0.0
      %2935 = vmatpush1.msra.mxu0 %v2812
      %2936 = vmatprep.subr.mxu0 0.0
      %2937 = vmatpush1.msra.mxu0 %v2813
      %2938 = vmatprep.subr.mxu0 0.0
      %2939 = vmatpush1.msra.mxu0 %v2814
      %2940 = vmatprep.subr.mxu0 0.0
      %2941 = vmatpush1.msra.mxu0 %v2815
      %2942 = vmatprep.subr.mxu0 0.0
      %2943 = vmatpush1.msra.mxu0 %v2816
      %2944 = vmatprep.mubr.f32.mxu0 %v2609
      %2945 = vmatmul.mubr.f32.gmra.mrb[0].mxu0 %v2608
      %v2946 = vpop.f32.mrb[0].mxu0
      %v2947 = vadd.f32 %v2862, %v2946
      %v2948 = vpop.f32.mrb[0].mxu0
      %2949 = vmatprep.mubr.f32.mxu0 %v2637
      %2950 = vmatmul.mubr.f32.gmra.mrb[0].mxu0 %v2636
      %v2951 = vpop.f32.mrb[0].mxu0
      %v2952 = vadd.f32 %v2862, %v2951
      %v2953 = vpop.f32.mrb[0].mxu0
      %2954 = vmatprep.mubr.f32.mxu0 %v2661
      %2955 = vmatmul.mubr.f32.gmra.mrb[0].mxu0 %v2611
      %v2956 = vpop.f32.mrb[0].mxu0
      %v2957 = vadd.f32 %v2862, %v2956
      %v2958 = vpop.f32.mrb[0].mxu0
      %2959 = vmatprep.mubr.f32.mxu0 %v2685
      %2960 = vmatmul.mubr.f32.gmra.mrb[0].mxu0 %v2639
      %v2961 = vpop.f32.mrb[0].mxu0
      %v2962 = vadd.f32 %v2862, %v2961
      %v2963 = vpop.f32.mrb[0].mxu0
      %2964 = vmatprep.mubr.f32.mxu0 %v2709
      %2965 = vmatmul.mubr.f32.gmra.mrb[0].mxu0 %v2663
      %v2966 = vpop.f32.mrb[0].mxu0
      %v2967 = vadd.f32 %v2862, %v2966
      %v2968 = vpop.f32.mrb[0].mxu0
      %2969 = vmatprep.mubr.f32.mxu0 %v2733
      %2970 = vmatmul.mubr.f32.gmra.mrb[0].mxu0 %v2687
      %v2971 = vpop.f32.mrb[0].mxu0
      %v2972 = vadd.f32 %v2862, %v2971
      %v2973 = vpop.f32.mrb[0].mxu0
      %2974 = vmatprep.mubr.f32.mxu0 %v2757
      %2975 = vmatmul.mubr.f32.gmra.mrb[0].mxu0 %v2711
      %v2976 = vpop.f32.mrb[0].mxu0
      %v2977 = vadd.f32 %v2862, %v2976
      %v2978 = vpop.f32.mrb[0].mxu0
      %2979 = vmatprep.mubr.f32.mxu0 %v2782
      %2980 = vmatmul.mubr.f32.gmra.mrb[0].mxu0 %v2735
      %v2981 = vpop.f32.mrb[0].mxu0
      %v2982 = vadd.f32 %v2862, %v2981
      %v2983 = vpop.f32.mrb[0].mxu0
      %2984 = vdwg.mxu0
      %2985 = vmatprep.subr.mxu0 0.0
      %2986 = vmatpush1.msra.mxu0 %v2817
      %2987 = vmatprep.subr.mxu0 0.0
      %2988 = vmatpush1.msra.mxu0 %v2818
      %2989 = vmatprep.subr.mxu0 0.0
      %2990 = vmatpush1.msra.mxu0 %v2819
      %2991 = vmatprep.subr.mxu0 0.0
      %2992 = vmatpush1.msra.mxu0 %v2820
      %2993 = vmatprep.subr.mxu0 0.0
      %2994 = vmatpush1.msra.mxu0 %v2821
      %2995 = vmatprep.subr.mxu0 0.0
      %2996 = vmatpush1.msra.mxu0 %v2822
      %2997 = vmatprep.subr.mxu0 0.0
      %2998 = vmatpush1.msra.mxu0 %v2823
      %2999 = vmatprep.subr.mxu0 0.0
      %3000 = vmatpush1.msra.mxu0 %v2824
      %3001 = vmatprep.subr.mxu0 0.0
      %3002 = vmatpush1.msra.mxu0 %v2825
      %3003 = vmatprep.subr.mxu0 0.0
      %3004 = vmatpush1.msra.mxu0 %v2826
      %3005 = vmatprep.subr.mxu0 0.0
      %3006 = vmatpush1.msra.mxu0 %v2827
      %3007 = vmatprep.subr.mxu0 0.0
      %3008 = vmatpush1.msra.mxu0 %v2828
      %3009 = vmatprep.subr.mxu0 0.0
      %3010 = vmatpush1.msra.mxu0 %v2829
      %3011 = vmatprep.subr.mxu0 0.0
      %3012 = vmatpush1.msra.mxu0 %v2830
      %3013 = vmatprep.subr.mxu0 0.0
      %3014 = vmatpush1.msra.mxu0 %v2831
      %3015 = vmatprep.subr.mxu0 0.0
      %3016 = vmatpush1.msra.mxu0 %v2832
      %3017 = vmatprep.subr.mxu0 0.0
      %3018 = vmatpush1.msra.mxu0 %v2833
      %3019 = vmatprep.subr.mxu0 0.0
      %3020 = vmatpush1.msra.mxu0 %v2834
      %3021 = vmatprep.subr.mxu0 0.0
      %3022 = vmatpush1.msra.mxu0 %v2835
      %3023 = vmatprep.subr.mxu0 0.0
      %3024 = vmatpush1.msra.mxu0 %v2836
      %3025 = vmatprep.subr.mxu0 0.0
      %3026 = vmatpush1.msra.mxu0 %v2837
      %3027 = vmatprep.subr.mxu0 0.0
      %3028 = vmatpush1.msra.mxu0 %v2838
      %3029 = vmatprep.subr.mxu0 0.0
      %3030 = vmatpush1.msra.mxu0 %v2839
      %3031 = vmatprep.subr.mxu0 0.0
      %3032 = vmatpush1.msra.mxu0 %v2840
      %3033 = vmatprep.subr.mxu0 0.0
      %3034 = vmatpush1.msra.mxu0 %v2841
      %3035 = vmatprep.subr.mxu0 0.0
      %3036 = vmatpush1.msra.mxu0 %v2842
      %3037 = vmatprep.subr.mxu0 0.0
      %3038 = vmatpush1.msra.mxu0 %v2843
      %3039 = vmatprep.subr.mxu0 0.0
      %3040 = vmatpush1.msra.mxu0 %v2844
      %3041 = vmatprep.subr.mxu0 0.0
      %3042 = vmatpush1.msra.mxu0 %v2845
      %3043 = vmatprep.subr.mxu0 0.0
      %3044 = vmatpush1.msra.mxu0 %v2846
      %3045 = vmatprep.subr.mxu0 0.0
      %3046 = vmatpush1.msra.mxu0 %v2847
      %3047 = vmatprep.subr.mxu0 0.0
      %3048 = vmatpush1.msra.mxu0 %v2848
      %3049 = vmatprep.mubr.f32.mxu0 %v2611
      %3050 = vmatmul.mubr.f32.gmra.mrb[0].mxu0 %v2610
      %v3051 = vpop.f32.mrb[0].mxu0
      %v3052 = vadd.f32 %v2947, %v3051
      %v3053 = vpop.f32.mrb[0].mxu0
      %3054 = vmatprep.mubr.f32.mxu0 %v2639
      %3055 = vmatmul.mubr.f32.gmra.mrb[0].mxu0 %v2638
      %v3056 = vpop.f32.mrb[0].mxu0
      %v3057 = vadd.f32 %v2952, %v3056
      %v3058 = vpop.f32.mrb[0].mxu0
      %3059 = vmatprep.mubr.f32.mxu0 %v2663
      %3060 = vmatmul.mubr.f32.gmra.mrb[0].mxu0 %v2662
      %v3061 = vpop.f32.mrb[0].mxu0
      %v3062 = vadd.f32 %v2957, %v3061
      %v3063 = vpop.f32.mrb[0].mxu0
      %3064 = vmatprep.mubr.f32.mxu0 %v2687
      %3065 = vmatmul.mubr.f32.gmra.mrb[0].mxu0 %v2686
      %v3066 = vpop.f32.mrb[0].mxu0
      %v3067 = vadd.f32 %v2962, %v3066
      %v3068 = vpop.f32.mrb[0].mxu0
      %3069 = vmatprep.mubr.f32.mxu0 %v2711
      %3070 = vmatmul.mubr.f32.gmra.mrb[0].mxu0 %v2710
      %v3071 = vpop.f32.mrb[0].mxu0
      %v3072 = vadd.f32 %v2967, %v3071
      %v3073 = vpop.f32.mrb[0].mxu0
      %3074 = vmatprep.mubr.f32.mxu0 %v2735
      %3075 = vmatmul.mubr.f32.gmra.mrb[0].mxu0 %v2734
      %v3076 = vpop.f32.mrb[0].mxu0
      %v3077 = vadd.f32 %v2972, %v3076
      %v3078 = vpop.f32.mrb[0].mxu0
      %3079 = vmatprep.mubr.f32.mxu0 %v2759
      %3080 = vmatmul.mubr.f32.gmra.mrb[0].mxu0 %v2758
      %v3081 = vpop.f32.mrb[0].mxu0
      %v3082 = vadd.f32 %v2977, %v3081
      %v3083 = vpop.f32.mrb[0].mxu0
      %3084 = vmatprep.mubr.f32.mxu0 %v2784
      %3085 = vmatmul.mubr.f32.gmra.mrb[0].mxu0 %v2783
      %v3086 = vpop.f32.mrb[0].mxu0
      %v3087 = vadd.f32 %v2982, %v3086
      %v3088 = vpop.f32.mrb[0].mxu0
      %3089 = vdwg.mxu0
      %3090 = vmatprep.subr.mxu0 0.0
      %3091 = vmatpush1.msra.mxu0 %v2849
      %3092 = vmatprep.subr.mxu0 0.0
      %3093 = vmatpush1.msra.mxu0 %v2850
      %3094 = vmatprep.subr.mxu0 0.0
      %3095 = vmatpush1.msra.mxu0 %v2851
      %3096 = vmatprep.subr.mxu0 0.0
      %3097 = vmatpush1.msra.mxu0 %v2852
      %3098 = vmatprep.subr.mxu0 0.0
      %3099 = vmatpush1.msra.mxu0 %v2853
      %3100 = vmatprep.subr.mxu0 0.0
      %3101 = vmatpush1.msra.mxu0 %v2854
      %3102 = vmatprep.subr.mxu0 0.0
      %3103 = vmatpush1.msra.mxu0 %v2855
      %3104 = vmatprep.subr.mxu0 0.0
      %3105 = vmatpush1.msra.mxu0 %v2856
      %3106 = vmatprep.subr.mxu0 0.0
      %3107 = vmatpush1.msra.mxu0 0.0
      %3108 = vmatprep.subr.mxu0 0.0
      %3109 = vmatpush1.msra.mxu0 0.0
      %3110 = vmatprep.subr.mxu0 0.0
      %3111 = vmatpush1.msra.mxu0 0.0
      %3112 = vmatprep.subr.mxu0 0.0
      %3113 = vmatpush1.msra.mxu0 0.0
      %3114 = vmatprep.subr.mxu0 0.0
      %3115 = vmatpush1.msra.mxu0 0.0
      %3116 = vmatprep.subr.mxu0 0.0
      %3117 = vmatpush1.msra.mxu0 0.0
      %3118 = vmatprep.subr.mxu0 0.0
      %3119 = vmatpush1.msra.mxu0 0.0
      %3120 = vmatprep.subr.mxu0 0.0
      %3121 = vmatpush1.msra.mxu0 0.0
      %3122 = vmatprep.subr.mxu0 0.0
      %3123 = vmatpush1.msra.mxu0 0.0
      %3124 = vmatprep.subr.mxu0 0.0
      %3125 = vmatpush1.msra.mxu0 0.0
      %3126 = vmatprep.subr.mxu0 0.0
      %3127 = vmatpush1.msra.mxu0 0.0
      %3128 = vmatprep.subr.mxu0 0.0
      %3129 = vmatpush1.msra.mxu0 0.0
      %3130 = vmatprep.subr.mxu0 0.0
      %3131 = vmatpush1.msra.mxu0 0.0
      %3132 = vmatprep.subr.mxu0 0.0
      %3133 = vmatpush1.msra.mxu0 0.0
      %3134 = vmatprep.subr.mxu0 0.0
      %3135 = vmatpush1.msra.mxu0 0.0
      %3136 = vmatprep.subr.mxu0 0.0
      %3137 = vmatpush1.msra.mxu0 0.0
      %3138 = vmatprep.subr.mxu0 0.0
      %3139 = vmatpush1.msra.mxu0 0.0
      %3140 = vmatprep.subr.mxu0 0.0
      %3141 = vmatpush1.msra.mxu0 0.0
      %3142 = vmatprep.subr.mxu0 0.0
      %3143 = vmatpush1.msra.mxu0 0.0
      %3144 = vmatprep.subr.mxu0 0.0
      %3145 = vmatpush1.msra.mxu0 0.0
      %3146 = vmatprep.subr.mxu0 0.0
      %3147 = vmatpush1.msra.mxu0 0.0
      %3148 = vmatprep.subr.mxu0 0.0
      %3149 = vmatpush1.msra.mxu0 0.0
      %3150 = vmatprep.subr.mxu0 0.0
      %3151 = vmatpush1.msra.mxu0 0.0
      %3152 = vmatprep.subr.mxu0 0.0
      %3153 = vmatpush1.msra.mxu0 0.0
      %3154 = vmatprep.mubr.f32.mxu0 0.0
      %3155 = vmatmul.mubr.f32.gmra.mrb[0].mxu0 %v2864
      %v3156 = vpop.f32.mrb[0].mxu0
      %v3157 = vadd.f32 %v3052, %v3156
      %v3158 = vpop.f32.mrb[0].mxu0
      %3159 = vmatprep.mubr.f32.mxu0 0.0
      %3160 = vmatmul.mubr.f32.gmra.mrb[0].mxu0 %v2866
      %v3161 = vpop.f32.mrb[0].mxu0
      %v3162 = vadd.f32 %v3057, %v3161
      %v3163 = vpop.f32.mrb[0].mxu0
      %3164 = vmatprep.mubr.f32.mxu0 0.0
      %3165 = vmatmul.mubr.f32.gmra.mrb[0].mxu0 %v2868
      %v3166 = vpop.f32.mrb[0].mxu0
      %v3167 = vadd.f32 %v3062, %v3166
      %v3168 = vpop.f32.mrb[0].mxu0
      %3169 = vmatprep.mubr.f32.mxu0 0.0
      %3170 = vmatmul.mubr.f32.gmra.mrb[0].mxu0 %v2870
      %v3171 = vpop.f32.mrb[0].mxu0
      %v3172 = vadd.f32 %v3067, %v3171
      %v3173 = vpop.f32.mrb[0].mxu0
      %3174 = vmatprep.mubr.f32.mxu0 0.0
      %3175 = vmatmul.mubr.f32.gmra.mrb[0].mxu0 %v2872
      %v3176 = vpop.f32.mrb[0].mxu0
      %v3177 = vadd.f32 %v3072, %v3176
      %v3178 = vpop.f32.mrb[0].mxu0
      %3179 = vmatprep.mubr.f32.mxu0 0.0
      %3180 = vmatmul.mubr.f32.gmra.mrb[0].mxu0 %v2874
      %v3181 = vpop.f32.mrb[0].mxu0
      %v3182 = vadd.f32 %v3077, %v3181
      %v3183 = vpop.f32.mrb[0].mxu0
      %3184 = vmatprep.mubr.f32.mxu0 0.0
      %3185 = vmatmul.mubr.f32.gmra.mrb[0].mxu0 %v2876
      %v3186 = vpop.f32.mrb[0].mxu0
      %v3187 = vadd.f32 %v3082, %v3186
      %v3188 = vpop.f32.mrb[0].mxu0
      %3189 = vmatprep.mubr.f32.mxu0 0.0
      %3190 = vmatmul.mubr.f32.gmra.mrb[0].mxu0 %v2878
      %v3191 = vpop.f32.mrb[0].mxu0
      %v3192 = vadd.f32 %v3087, %v3191
      %v3193 = vpop.f32.mrb[0].mxu0
      %3194 = vdwg.mxu0
      %v3195 = vmax.f32 %v3157, 0.0
      %v3196 = vmax.f32 %v3162, 0.0
      %v3197 = vmax.f32 %v3167, 0.0
      %v3198 = vmax.f32 %v3172, 0.0
      %v3199 = vmax.f32 %v3177, 0.0
      %v3200 = vmax.f32 %v3182, 0.0
      %v3201 = vmax.f32 %v3187, 0.0
      %v3202 = vmax.f32 %v3192, 0.0
      %3203 = vst.msk [vmem:[%s278] sm:$0xff] %vm279, %v3195
      %3204 = vst.msk [vmem:[%s278 + $0x8] sm:$0xff] %vm279, %v3196
      %3205 = vst.msk [vmem:[%s278 + $0x10] sm:$0xff] %vm279, %v3197
      %3206 = vst.msk [vmem:[%s278 + $0x18] sm:$0xff] %vm279, %v3198
      %3207 = vst.msk [vmem:[%s278 + $0x20] sm:$0xff] %vm279, %v3199
      %3208 = vst.msk [vmem:[%s278 + $0x28] sm:$0xff] %vm279, %v3200
      %3209 = vst.msk [vmem:[%s278 + $0x30] sm:$0xff] %vm279, %v3201
      %3210 = vst.msk [vmem:[%s278 + $0x38] sm:$0xff] %vm279, %v3202
      %p3211 = scmp.lt.s32.totalorder %s18, 1
      %s3212 = scalar_select %p3211, %s18, 1
      %s3213 = smul.addr %s3212, 8
      %s3214 = smul.addr %s3213, 8
      %s3215 = scalar_lea.vmem %s7, %s3214
      // Predicated region
      $region49: #{forward.2} parent=47 // pred_check
        %p3216 = pneg %p188
      $region50: #{forward.2} parent=47 // pred_check_branch
        %3218 = sbr.rel (%p3216) target = $region52
      $region51: #{forward.2} parent=47 // pred_region
        _
      $region52: #{forward.2} parent=47 // pred_fallthru
        _
    $region48: #{forward.2} parent=5 // pred_fallthru
      _
    %p3219 = scmp.le.s32.totalorder 2, %s13
    // Predicated region
    $region53: #{forward.2} parent=5 // pred_check
      %p3220 = pneg %p3219
    $region54: #{forward.2} parent=5 // pred_check_branch
      %3222 = sbr.rel (%p3220) target = $region56
    $region55: #{forward.2} parent=5 // pred_region
      %s3223 = ssub.s32 %s13, 2
      // Predicated region
      $region57: #{forward.2} parent=55 // pred_check
        %p3224 = pneg %p194
      $region58: #{forward.2} parent=55 // pred_check_branch
        %3226 = sbr.rel (%p3224) target = $region60
      $region59: #{forward.2} parent=55 // pred_region
        %p3227 = scmp.lt.s32.totalorder %s19, 1
        %s3228 = scalar_select %p3227, %s19, 1
        %s3229 = smul.addr %s3228, 8
        %s3230 = smul.addr %s3229, 8
        %s3231 = scalar_lea.vmem %s7, %s3230
      $region60: #{forward.2} parent=55 // pred_fallthru
        _
    $region56: #{forward.2} parent=5 // pred_fallthru
      _
  $region6: #{forward.2} parent=0 // loop_footer
    %s17 = sadd.s32 1, %s13
  $region7: #{forward.2} parent=0 // loop_footer_branch
    %12 = sbr.rel target = $region3
  $region8: #{forward.2} parent=0 // loop_exit
    _

</llo_original>
